<compile_context>
chip_gen: v7x
topology: tpu7x:2x2x1
jax: 0.10.0
libtpu: 0.0.40
codegen_flags: <defaults>
</compile_context>

<pallas_src>
import jax
import jax.numpy as jnp
from jax.experimental import pallas as pl
from jax.experimental.pallas import tpu as pltpu

# ---- small synthetic CLIP-text config (stands in for clip-vit-large-patch14) ----
VOCAB    = 100
MAX_LEN  = 77                    # matches the module's max_length=77
D_MODEL  = 256                   # stands in for hidden=768 (lane-aligned multiple of 128)
N_HEADS  = 2
HEAD_DIM = D_MODEL // N_HEADS    # 128 -> head slices are full-lane aligned
D_FF     = 4 * D_MODEL
N_LAYERS = 2
LN_EPS   = 1e-5
B_TILE   = 2                     # sequences per grid step (B_TILE*S rows feed the MXU)


def _layer_norm(v, w, b):
    mu = jnp.mean(v, axis=-1, keepdims=True)
    var = jnp.mean((v - mu) ** 2, axis=-1, keepdims=True)
    return (v - mu) * jax.lax.rsqrt(var + LN_EPS) * w + b


def clip_text_kernel(x_ref, wattn_ref, w1_ref, w2_ref, small_ref, b1_ref, lnf_ref,
                     out_ref):
    """Grid = (batch tiles, layers). One transformer layer per step, applied to a
    (B_TILE, S, D) activation tile kept resident in the output block across the
    layer axis. Per-layer bf16 weights are streamed via BlockSpec index maps."""
    l = pl.program_id(1)
    n_layers = pl.num_programs(1)
    Bt, S, D = x_ref.shape
    M = Bt * S

    # Layer 0: seed the resident residual stream from the embedded tokens.
    @pl.when(l == 0)
    def _():
        out_ref[...] = x_ref[...]

    x = out_ref[...].reshape(M, D)             # f32 residual stream

    sp = small_ref[0]                          # (9, D) packed f32 small params
    b1 = b1_ref[0]                             # (1, F) f32 fc1 bias

    # Causal mask (CLIP text model always applies one).
    row = jax.lax.broadcasted_iota(jnp.int32, (S, S), 0)
    col = jax.lax.broadcasted_iota(jnp.int32, (S, S), 1)
    causal = (col > row)[None]                 # (1, S, S)

    # ---------- causal multi-head self-attention (pre-LN) ----------
    resid = x
    h = _layer_norm(x, sp[0:1], sp[1:2]).astype(jnp.bfloat16)
    # q-scale (HEAD_DIM**-0.5) is folded into w_q / b_q at parameter-prep time.
    q = jnp.dot(h, wattn_ref[0, 0], preferred_element_type=jnp.float32) + sp[4:5]
    k = jnp.dot(h, wattn_ref[0, 1], preferred_element_type=jnp.float32) + sp[5:6]
    v = jnp.dot(h, wattn_ref[0, 2], preferred_element_type=jnp.float32) + sp[6:7]
    q3 = q.reshape(Bt, S, D).astype(jnp.bfloat16)
    k3 = k.reshape(Bt, S, D).astype(jnp.bfloat16)
    v3 = v.reshape(Bt, S, D).astype(jnp.bfloat16)

    heads = []
    for hh in range(N_HEADS):                  # HEAD_DIM=128 -> lane-aligned slices
        lo = hh * HEAD_DIM
        qh = q3[:, :, lo:lo + HEAD_DIM]
        kh = k3[:, :, lo:lo + HEAD_DIM]
        vh = v3[:, :, lo:lo + HEAD_DIM]
        s = jnp.einsum("bqd,bkd->bqk", qh, kh, preferred_element_type=jnp.float32)
        s = jnp.where(causal, jnp.float32(-1e9), s)
        s = s - jnp.max(s, axis=-1, keepdims=True)
        p = jnp.exp(s)
        p = p * pl.reciprocal(jnp.sum(p, axis=-1, keepdims=True), approx=True)
        heads.append(jnp.einsum("bqk,bkd->bqd", p.astype(jnp.bfloat16), vh,
                                preferred_element_type=jnp.float32))
    attn = jnp.concatenate(heads, axis=-1).reshape(M, D)
    attn = jnp.dot(attn.astype(jnp.bfloat16), wattn_ref[0, 3],
                   preferred_element_type=jnp.float32) + sp[7:8]
    x = resid + attn

    # ---------- MLP with quick_gelu (pre-LN) ----------
    resid = x
    hm = _layer_norm(x, sp[2:3], sp[3:4]).astype(jnp.bfloat16)
    hm = jnp.dot(hm, w1_ref[0], preferred_element_type=jnp.float32) + b1
    hm = hm * jax.nn.sigmoid(1.702 * hm)       # quick_gelu, f32
    hm = jnp.dot(hm.astype(jnp.bfloat16), w2_ref[0],
                 preferred_element_type=jnp.float32) + sp[8:9]
    x = resid + hm

    # Write back the residual; apply the final LayerNorm on the last layer.
    @pl.when(l < n_layers - 1)
    def _():
        out_ref[...] = x.reshape(Bt, S, D)

    @pl.when(l == n_layers - 1)
    def _():
        lnf = lnf_ref[...]
        out_ref[...] = _layer_norm(x, lnf[0:1], lnf[1:2]).reshape(Bt, S, D)


def prepare_pallas_params(params):
    """One-time (load-time) transform of the frozen f32 params:
    fold q-scale into w_q/b_q, cast matmul weights to bf16, pack small params."""
    scale = HEAD_DIM ** -0.5
    w_attn = params["w_attn"].at[:, 0].multiply(scale)     # (L, 4, D, D)
    b_attn = params["b_attn"].at[:, 0].multiply(scale)     # (L, 4, D)
    small = jnp.concatenate([
        params["ln_w"][:, 0:1], params["ln_b"][:, 0:1],     # rows 0,1: ln1 w,b
        params["ln_w"][:, 1:2], params["ln_b"][:, 1:2],     # rows 2,3: ln2 w,b
        b_attn,                                             # rows 4-7: bq,bk,bv,bo
        params["b2"][:, None, :],                           # row 8:    fc2 bias
    ], axis=1)                                              # (L, 9, D) f32
    return dict(
        w_attn=w_attn.astype(jnp.bfloat16),
        w1=params["w1"].astype(jnp.bfloat16),
        w2=params["w2"].astype(jnp.bfloat16),
        small=small.astype(jnp.float32),
        b1=params["b1"][:, None, :].astype(jnp.float32),    # (L, 1, F)
        lnf=jnp.concatenate([params["lnf_w"], params["lnf_b"]], axis=0).astype(jnp.float32),
    )


def clip_text_pallas(x_emb, pp):
    B, S, D = x_emb.shape
    L = pp["w_attn"].shape[0]
    F = pp["w1"].shape[-1]
    Bt = B_TILE
    grid = (B // Bt, L)
    in_specs = [
        pl.BlockSpec((Bt, S, D), lambda b, l: (b, 0, 0)),        # embedded tokens
        pl.BlockSpec((1, 4, D, D), lambda b, l: (l, 0, 0, 0)),   # q,k,v,out weights (bf16)
        pl.BlockSpec((1, D, F), lambda b, l: (l, 0, 0)),         # mlp fc1 weight (bf16)
        pl.BlockSpec((1, F, D), lambda b, l: (l, 0, 0)),         # mlp fc2 weight (bf16)
        pl.BlockSpec((1, 9, D), lambda b, l: (l, 0, 0)),         # packed small params
        pl.BlockSpec((1, 1, F), lambda b, l: (l, 0, 0)),         # mlp fc1 bias
        pl.BlockSpec((2, D), lambda b, l: (0, 0)),               # final LN w,b
    ]
    out_specs = pl.BlockSpec((Bt, S, D), lambda b, l: (b, 0, 0))
    return pl.pallas_call(
        clip_text_kernel,
        out_shape=jax.ShapeDtypeStruct((B, S, D), jnp.float32),
        grid=grid,
        in_specs=in_specs,
        out_specs=out_specs,
        compiler_params=pltpu.CompilerParams(
            dimension_semantics=("parallel", "arbitrary"),
            vmem_limit_bytes=64 * 1024 * 1024,
        ),
    )(x_emb, pp["w_attn"], pp["w1"], pp["w2"], pp["small"], pp["b1"], pp["lnf"])


def frozen_aligned_clip_text_embedder_forward(token_ids, params, pallas_params=None):
    """Equivalent of FrozenAlignedCLIPTextEmbedder.forward: returns last_hidden_state."""
    # TODO(synk): CLIPTokenizer (string -> padded ids) has no Pallas equivalent;
    # this forward takes pre-tokenized, max_length-padded token ids.
    if pallas_params is None:
        pallas_params = prepare_pallas_params(params)
    B, S = token_ids.shape
    x = params["tok_emb"][token_ids] + params["pos_emb"][:S][None]   # embedding gather (glue)
    x = x.astype(jnp.float32)

    # Pad sequence to a multiple of 8 sublanes and batch to a multiple of B_TILE.
    # Causal masking means trailing zero-padded rows never influence real tokens.
    S_pad = ((S + 7) // 8) * 8
    B_pad = ((B + B_TILE - 1) // B_TILE) * B_TILE
    if S_pad != S or B_pad != B:
        x = jnp.pad(x, ((0, B_pad - B), (0, S_pad - S), (0, 0)))

    z = clip_text_pallas(x, pallas_params)
    return z[:B, :S]                                                  # [B, S, D]


# ---------------- deterministic parameter init ----------------
def init_params(key):
    ks = jax.random.split(key, 5)
    s = 0.02
    return dict(
        tok_emb=jax.random.normal(ks[0], (VOCAB, D_MODEL), jnp.float32) * s,
        pos_emb=jax.random.normal(ks[1], (MAX_LEN, D_MODEL), jnp.float32) * s,
        ln_w=jnp.ones((N_LAYERS, 2, D_MODEL), jnp.float32),
        ln_b=jnp.zeros((N_LAYERS, 2, D_MODEL), jnp.float32),
        w_attn=jax.random.normal(ks[2], (N_LAYERS, 4, D_MODEL, D_MODEL), jnp.float32) * s,
        b_attn=jnp.zeros((N_LAYERS, 4, D_MODEL), jnp.float32),
        w1=jax.random.normal(ks[3], (N_LAYERS, D_MODEL, D_FF), jnp.float32) * s,
        b1=jnp.zeros((N_LAYERS, D_FF), jnp.float32),
        w2=jax.random.normal(ks[4], (N_LAYERS, D_FF, D_MODEL), jnp.float32) * s,
        b2=jnp.zeros((N_LAYERS, D_MODEL), jnp.float32),
        lnf_w=jnp.ones((1, D_MODEL), jnp.float32),
        lnf_b=jnp.zeros((1, D_MODEL), jnp.float32),
    )


# ---------------- plain-JAX f32 reference for correctness check ----------------
def reference_forward(token_ids, params):
    B, S = token_ids.shape
    x = params["tok_emb"][token_ids] + params["pos_emb"][:S][None]
    causal = jnp.where(jnp.arange(S)[None, :] > jnp.arange(S)[:, None],
                       -1e9, 0.0).astype(jnp.float32)

    def ln(v, w, b):
        mu = v.mean(-1, keepdims=True)
        var = ((v - mu) ** 2).mean(-1, keepdims=True)
        return (v - mu) * jax.lax.rsqrt(var + LN_EPS) * w + b

    for l in range(N_LAYERS):
        resid = x
        h = ln(x, params["ln_w"][l, 0], params["ln_b"][l, 0])
        q = h @ params["w_attn"][l, 0] + params["b_attn"][l, 0]
        k = h @ params["w_attn"][l, 1] + params["b_attn"][l, 1]
        v = h @ params["w_attn"][l, 2] + params["b_attn"][l, 2]
        q = q.reshape(B, S, N_HEADS, HEAD_DIM) * (HEAD_DIM ** -0.5)
        k = k.reshape(B, S, N_HEADS, HEAD_DIM)
        v = v.reshape(B, S, N_HEADS, HEAD_DIM)
        s = jnp.einsum("bqhd,bkhd->bhqk", q, k) + causal
        p = jax.nn.softmax(s, axis=-1)
        o = jnp.einsum("bhqk,bkhd->bqhd", p, v).reshape(B, S, D_MODEL)
        x = resid + o @ params["w_attn"][l, 3] + params["b_attn"][l, 3]
        resid = x
        h = ln(x, params["ln_w"][l, 1], params["ln_b"][l, 1])
        h = h @ params["w1"][l] + params["b1"][l]
        h = h * jax.nn.sigmoid(1.702 * h)
        x = resid + h @ params["w2"][l] + params["b2"][l]
    return ln(x, params["lnf_w"][0], params["lnf_b"][0])


if __name__ == "__main__":
    key = jax.random.PRNGKey(0)
    kp, kt = jax.random.split(key)
    params = init_params(kp)
    pallas_params = prepare_pallas_params(params)

    B = 4
    tokens = jax.random.randint(kt, (B, MAX_LEN), 0, VOCAB, dtype=jnp.int32)

    z = frozen_aligned_clip_text_embedder_forward(tokens, params, pallas_params)
    z = jax.block_until_ready(z)

    assert z.shape == (B, MAX_LEN, D_MODEL) and z.dtype == jnp.float32

    # Tolerance is looser than pure-f32 because the kernel uses bf16 weights /
    # matmul inputs (f32 accumulation) and an approximate softmax reciprocal.
    z_ref = reference_forward(tokens, params)
    if not jnp.allclose(z, z_ref, atol=5e-2, rtol=5e-2):
        raise AssertionError("Pallas kernel does not match JAX reference")
    print("KERNEL_OK")
</pallas_src>

<mosaic_0001>
module attributes {stable_mosaic.version = 11 : i64} {
  func.func @clip_text_kernel(%arg0: i32, %arg1: i32, %arg2: memref<2x80x256xf32, #tpu.memory_space<vmem>>, %arg3: memref<1x4x256x256xbf16, #tpu.memory_space<vmem>>, %arg4: memref<1x256x1024xbf16, #tpu.memory_space<vmem>>, %arg5: memref<1x1024x256xbf16, #tpu.memory_space<vmem>>, %arg6: memref<1x9x256xf32, #tpu.memory_space<vmem>>, %arg7: memref<1x1x1024xf32, #tpu.memory_space<vmem>>, %arg8: memref<2x256xf32, #tpu.memory_space<vmem>>, %arg9: memref<2x80x256xf32, #tpu.memory_space<vmem>>) attributes {dimension_semantics = [#tpu.dimension_semantics<parallel>, #tpu.dimension_semantics<arbitrary>], iteration_bounds = array<i64: 2, 2>, scalar_prefetch = 0 : i64, scratch_operands = 0 : i64, tpu.core_type = #tpu.core_type<tc>, window_params = [{transform_indices = @transform_0, window_bounds = array<i64: 2, 80, 256>}, {transform_indices = @transform_1, window_bounds = array<i64: 1, 4, 256, 256>}, {transform_indices = @transform_2, window_bounds = array<i64: 1, 256, 1024>}, {transform_indices = @transform_3, window_bounds = array<i64: 1, 1024, 256>}, {transform_indices = @transform_4, window_bounds = array<i64: 1, 9, 256>}, {transform_indices = @transform_5, window_bounds = array<i64: 1, 1, 1024>}, {pipeline_mode = #tpu.pipeline_mode<synchronous>, transform_indices = @transform_6, window_bounds = array<i64: 2, 256>}, {transform_indices = @transform_7, window_bounds = array<i64: 2, 80, 256>}]} {
    %c0_i32 = arith.constant 0 : i32
    %0 = arith.cmpi eq, %arg1, %c0_i32 : i32
    %1 = arith.extui %0 : i1 to i32
    %c0_i32_0 = arith.constant 0 : i32
    %2 = arith.cmpi ne, %1, %c0_i32_0 : i32
    scf.if %2 {
      %c0_58 = arith.constant 0 : index
      %c0_59 = arith.constant 0 : index
      %c0_60 = arith.constant 0 : index
      %164 = vector.load %arg2[%c0_58, %c0_59, %c0_60] : memref<2x80x256xf32, #tpu.memory_space<vmem>>, vector<2x80x256xf32>
      %c0_61 = arith.constant 0 : index
      %c0_62 = arith.constant 0 : index
      %c0_63 = arith.constant 0 : index
      %165 = vector.load %arg9[%c0_61, %c0_62, %c0_63] : memref<2x80x256xf32, #tpu.memory_space<vmem>>, vector<2x80x256xf32>
      tpu.vector_store %arg9[%c0_61, %c0_62, %c0_63], %164 {strides = array<i32>} : memref<2x80x256xf32, #tpu.memory_space<vmem>>, vector<2x80x256xf32>,
    } else {
    }
    %c0 = arith.constant 0 : index
    %c0_1 = arith.constant 0 : index
    %c0_2 = arith.constant 0 : index
    %3 = vector.load %arg9[%c0, %c0_1, %c0_2] : memref<2x80x256xf32, #tpu.memory_space<vmem>>, vector<2x80x256xf32>
    %4 = vector.shape_cast %3 : vector<2x80x256xf32> to vector<160x256xf32>
    %c0_3 = arith.constant 0 : index
    %c0_4 = arith.constant 0 : index
    %c0_5 = arith.constant 0 : index
    %5 = vector.load %arg6[%c0_3, %c0_4, %c0_5] : memref<1x9x256xf32, #tpu.memory_space<vmem>>, vector<1x9x256xf32>
    %6 = vector.shape_cast %5 : vector<1x9x256xf32> to vector<9x256xf32>
    %c0_6 = arith.constant 0 : index
    %c0_7 = arith.constant 0 : index
    %c0_8 = arith.constant 0 : index
    %7 = vector.load %arg7[%c0_6, %c0_7, %c0_8] : memref<1x1x1024xf32, #tpu.memory_space<vmem>>, vector<1x1x1024xf32>
    %8 = vector.shape_cast %7 : vector<1x1x1024xf32> to vector<1x1024xf32>
    %9 = tpu.iota {dimensions = array<i32: 0>} : vector<80x80xi32>
    %10 = tpu.iota {dimensions = array<i32: 1>} : vector<80x80xi32>
    %11 = arith.cmpi sgt, %10, %9 : vector<80x80xi32>
    %12 = vector.shape_cast %11 : vector<80x80xi1> to vector<1x80x80xi1>
    %13 = vector.extract_strided_slice %6 {offsets = [0, 0], sizes = [1, 256], strides = [1, 1]} : vector<9x256xf32> to vector<1x256xf32>
    %14 = vector.extract_strided_slice %6 {offsets = [1, 0], sizes = [1, 256], strides = [1, 1]} : vector<9x256xf32> to vector<1x256xf32>
    %cst = arith.constant dense<0.000000e+00> : vector<160xf32>
    %15 = vector.multi_reduction <add>, %4, %cst [1] : vector<160x256xf32> to vector<160xf32>
    %16 = vector.shape_cast %15 : vector<160xf32> to vector<160x1xf32>
    %cst_9 = arith.constant 2.560000e+02 : f32
    %17 = vector.broadcast %cst_9 : f32 to vector<160x1xf32>
    %18 = arith.divf %16, %17 : vector<160x1xf32>
    %19 = vector.broadcast %18 : vector<160x1xf32> to vector<160x256xf32>
    %20 = arith.subf %4, %19 : vector<160x256xf32>
    %21 = arith.mulf %20, %20 : vector<160x256xf32>
    %cst_10 = arith.constant dense<0.000000e+00> : vector<160xf32>
    %22 = vector.multi_reduction <add>, %21, %cst_10 [1] : vector<160x256xf32> to vector<160xf32>
    %23 = vector.shape_cast %22 : vector<160xf32> to vector<160x1xf32>
    %cst_11 = arith.constant 2.560000e+02 : f32
    %24 = vector.broadcast %cst_11 : f32 to vector<160x1xf32>
    %25 = arith.divf %23, %24 : vector<160x1xf32>
    %26 = vector.broadcast %18 : vector<160x1xf32> to vector<160x256xf32>
    %27 = arith.subf %4, %26 : vector<160x256xf32>
    %cst_12 = arith.constant 9.99999974E-6 : f32
    %28 = vector.broadcast %cst_12 : f32 to vector<160x1xf32>
    %29 = arith.addf %25, %28 : vector<160x1xf32>
    %30 = math.rsqrt %29 : vector<160x1xf32>
    %31 = vector.broadcast %30 : vector<160x1xf32> to vector<160x256xf32>
    %32 = arith.mulf %27, %31 : vector<160x256xf32>
    %33 = vector.broadcast %13 : vector<1x256xf32> to vector<160x256xf32>
    %34 = arith.mulf %32, %33 : vector<160x256xf32>
    %35 = vector.broadcast %14 : vector<1x256xf32> to vector<160x256xf32>
    %36 = arith.addf %34, %35 : vector<160x256xf32>
    %37 = arith.truncf %36 : vector<160x256xf32> to vector<160x256xbf16>
    %c0_13 = arith.constant 0 : index
    %c0_14 = arith.constant 0 : index
    %c0_15 = arith.constant 0 : index
    %c0_16 = arith.constant 0 : index
    %38 = vector.load %arg3[%c0_13, %c0_14, %c0_15, %c0_16] : memref<1x4x256x256xbf16, #tpu.memory_space<vmem>>, vector<1x1x256x256xbf16>
    %39 = vector.shape_cast %38 : vector<1x1x256x256xbf16> to vector<256x256xbf16>
    %cst_17 = arith.constant dense<0.000000e+00> : vector<160x256xf32>
    %40 = tpu.matmul %37, %39, %cst_17 {dimension_numbers = #tpu.dot_dimension_numbers<[1], [0], [0], [1], [0, 0, 1, 1], [], []>} : vector<160x256xbf16>, vector<256x256xbf16>, vector<160x256xf32> -> vector<160x256xf32>
    %41 = vector.extract_strided_slice %6 {offsets = [4, 0], sizes = [1, 256], strides = [1, 1]} : vector<9x256xf32> to vector<1x256xf32>
    %42 = vector.broadcast %41 : vector<1x256xf32> to vector<160x256xf32>
    %43 = arith.addf %40, %42 : vector<160x256xf32>
    %c0_18 = arith.constant 0 : index
    %c1 = arith.constant 1 : index
    %c0_19 = arith.constant 0 : index
    %c0_20 = arith.constant 0 : index
    %44 = vector.load %arg3[%c0_18, %c1, %c0_19, %c0_20] : memref<1x4x256x256xbf16, #tpu.memory_space<vmem>>, vector<1x1x256x256xbf16>
    %45 = vector.shape_cast %44 : vector<1x1x256x256xbf16> to vector<256x256xbf16>
    %cst_21 = arith.constant dense<0.000000e+00> : vector<160x256xf32>
    %46 = tpu.matmul %37, %45, %cst_21 {dimension_numbers = #tpu.dot_dimension_numbers<[1], [0], [0], [1], [0, 0, 1, 1], [], []>} : vector<160x256xbf16>, vector<256x256xbf16>, vector<160x256xf32> -> vector<160x256xf32>
    %47 = vector.extract_strided_slice %6 {offsets = [5, 0], sizes = [1, 256], strides = [1, 1]} : vector<9x256xf32> to vector<1x256xf32>
    %48 = vector.broadcast %47 : vector<1x256xf32> to vector<160x256xf32>
    %49 = arith.addf %46, %48 : vector<160x256xf32>
    %c0_22 = arith.constant 0 : index
    %c2 = arith.constant 2 : index
    %c0_23 = arith.constant 0 : index
    %c0_24 = arith.constant 0 : index
    %50 = vector.load %arg3[%c0_22, %c2, %c0_23, %c0_24] : memref<1x4x256x256xbf16, #tpu.memory_space<vmem>>, vector<1x1x256x256xbf16>
    %51 = vector.shape_cast %50 : vector<1x1x256x256xbf16> to vector<256x256xbf16>
    %cst_25 = arith.constant dense<0.000000e+00> : vector<160x256xf32>
    %52 = tpu.matmul %37, %51, %cst_25 {dimension_numbers = #tpu.dot_dimension_numbers<[1], [0], [0], [1], [0, 0, 1, 1], [], []>} : vector<160x256xbf16>, vector<256x256xbf16>, vector<160x256xf32> -> vector<160x256xf32>
    %53 = vector.extract_strided_slice %6 {offsets = [6, 0], sizes = [1, 256], strides = [1, 1]} : vector<9x256xf32> to vector<1x256xf32>
    %54 = vector.broadcast %53 : vector<1x256xf32> to vector<160x256xf32>
    %55 = arith.addf %52, %54 : vector<160x256xf32>
    %56 = vector.shape_cast %43 : vector<160x256xf32> to vector<2x80x256xf32>
    %57 = arith.truncf %56 : vector<2x80x256xf32> to vector<2x80x256xbf16>
    %58 = vector.shape_cast %49 : vector<160x256xf32> to vector<2x80x256xf32>
    %59 = arith.truncf %58 : vector<2x80x256xf32> to vector<2x80x256xbf16>
    %60 = vector.shape_cast %55 : vector<160x256xf32> to vector<2x80x256xf32>
    %61 = arith.truncf %60 : vector<2x80x256xf32> to vector<2x80x256xbf16>
    %62 = vector.extract_strided_slice %57 {offsets = [0, 0, 0], sizes = [2, 80, 128], strides = [1, 1, 1]} : vector<2x80x256xbf16> to vector<2x80x128xbf16>
    %63 = vector.extract_strided_slice %59 {offsets = [0, 0, 0], sizes = [2, 80, 128], strides = [1, 1, 1]} : vector<2x80x256xbf16> to vector<2x80x128xbf16>
    %64 = vector.extract_strided_slice %61 {offsets = [0, 0, 0], sizes = [2, 80, 128], strides = [1, 1, 1]} : vector<2x80x256xbf16> to vector<2x80x128xbf16>
    "tpu.trace_start"() <{level = 10 : i32, message = "bqd,bkd->bqk"}> : () -> ()
    %cst_26 = arith.constant dense<0.000000e+00> : vector<2x80x80xf32>
    %65 = tpu.matmul %62, %63, %cst_26 {dimension_numbers = #tpu.dot_dimension_numbers<[2], [2], [1], [1], [0, 0, 0, 1, 1, 1], [0], [0]>} : vector<2x80x128xbf16>, vector<2x80x128xbf16>, vector<2x80x80xf32> -> vector<2x80x80xf32>
    %cst_27 = arith.constant -1.000000e+09 : f32
    "tpu.trace_stop"() : () -> ()
    %66 = vector.shape_cast %12 : vector<1x80x80xi1> to vector<1x80x80xi1>
    %67 = vector.broadcast %66 : vector<1x80x80xi1> to vector<2x80x80xi1>
    %68 = vector.broadcast %cst_27 : f32 to vector<2x80x80xf32>
    %69 = arith.select %67, %68, %65 : vector<2x80x80xi1>, vector<2x80x80xf32>
    %cst_28 = arith.constant dense<0xFF800000> : vector<2x80xf32>
    %70 = vector.multi_reduction <maximumf>, %69, %cst_28 [2] : vector<2x80x80xf32> to vector<2x80xf32>
    %71 = vector.shape_cast %70 : vector<2x80xf32> to vector<2x80x1xf32>
    %72 = vector.broadcast %71 : vector<2x80x1xf32> to vector<2x80x80xf32>
    %73 = arith.subf %69, %72 : vector<2x80x80xf32>
    %74 = math.exp %73 : vector<2x80x80xf32>
    %cst_29 = arith.constant dense<0.000000e+00> : vector<2x80xf32>
    %75 = vector.multi_reduction <add>, %74, %cst_29 [2] : vector<2x80x80xf32> to vector<2x80xf32>
    %76 = vector.shape_cast %75 : vector<2x80xf32> to vector<2x80x1xf32>
    %77 = tpu.reciprocal %76 {approx = true} : vector<2x80x1xf32> -> vector<2x80x1xf32>
    %78 = vector.broadcast %77 : vector<2x80x1xf32> to vector<2x80x80xf32>
    %79 = arith.mulf %74, %78 : vector<2x80x80xf32>
    %80 = arith.truncf %79 : vector<2x80x80xf32> to vector<2x80x80xbf16>
    "tpu.trace_start"() <{level = 10 : i32, message = "bqk,bkd->bqd"}> : () -> ()
    %cst_30 = arith.constant dense<0.000000e+00> : vector<2x80x128xf32>
    %81 = tpu.matmul %80, %64, %cst_30 {dimension_numbers = #tpu.dot_dimension_numbers<[2], [1], [1], [2], [0, 0, 0, 1, 1, 2], [0], [0]>} : vector<2x80x80xbf16>, vector<2x80x128xbf16>, vector<2x80x128xf32> -> vector<2x80x128xf32>
    "tpu.trace_stop"() : () -> ()
    %82 = vector.extract_strided_slice %57 {offsets = [0, 0, 128], sizes = [2, 80, 128], strides = [1, 1, 1]} : vector<2x80x256xbf16> to vector<2x80x128xbf16>
    %83 = vector.extract_strided_slice %59 {offsets = [0, 0, 128], sizes = [2, 80, 128], strides = [1, 1, 1]} : vector<2x80x256xbf16> to vector<2x80x128xbf16>
    %84 = vector.extract_strided_slice %61 {offsets = [0, 0, 128], sizes = [2, 80, 128], strides = [1, 1, 1]} : vector<2x80x256xbf16> to vector<2x80x128xbf16>
    "tpu.trace_start"() <{level = 10 : i32, message = "bqd,bkd->bqk"}> : () -> ()
    %cst_31 = arith.constant dense<0.000000e+00> : vector<2x80x80xf32>
    %85 = tpu.matmul %82, %83, %cst_31 {dimension_numbers = #tpu.dot_dimension_numbers<[2], [2], [1], [1], [0, 0, 0, 1, 1, 1], [0], [0]>} : vector<2x80x128xbf16>, vector<2x80x128xbf16>, vector<2x80x80xf32> -> vector<2x80x80xf32>
    %cst_32 = arith.constant -1.000000e+09 : f32
    "tpu.trace_stop"() : () -> ()
    %86 = vector.shape_cast %12 : vector<1x80x80xi1> to vector<1x80x80xi1>
    %87 = vector.broadcast %86 : vector<1x80x80xi1> to vector<2x80x80xi1>
    %88 = vector.broadcast %cst_32 : f32 to vector<2x80x80xf32>
    %89 = arith.select %87, %88, %85 : vector<2x80x80xi1>, vector<2x80x80xf32>
    %cst_33 = arith.constant dense<0xFF800000> : vector<2x80xf32>
    %90 = vector.multi_reduction <maximumf>, %89, %cst_33 [2] : vector<2x80x80xf32> to vector<2x80xf32>
    %91 = vector.shape_cast %90 : vector<2x80xf32> to vector<2x80x1xf32>
    %92 = vector.broadcast %91 : vector<2x80x1xf32> to vector<2x80x80xf32>
    %93 = arith.subf %89, %92 : vector<2x80x80xf32>
    %94 = math.exp %93 : vector<2x80x80xf32>
    %cst_34 = arith.constant dense<0.000000e+00> : vector<2x80xf32>
    %95 = vector.multi_reduction <add>, %94, %cst_34 [2] : vector<2x80x80xf32> to vector<2x80xf32>
    %96 = vector.shape_cast %95 : vector<2x80xf32> to vector<2x80x1xf32>
    %97 = tpu.reciprocal %96 {approx = true} : vector<2x80x1xf32> -> vector<2x80x1xf32>
    %98 = vector.broadcast %97 : vector<2x80x1xf32> to vector<2x80x80xf32>
    %99 = arith.mulf %94, %98 : vector<2x80x80xf32>
    %100 = arith.truncf %99 : vector<2x80x80xf32> to vector<2x80x80xbf16>
    "tpu.trace_start"() <{level = 10 : i32, message = "bqk,bkd->bqd"}> : () -> ()
    %cst_35 = arith.constant dense<0.000000e+00> : vector<2x80x128xf32>
    %101 = tpu.matmul %100, %84, %cst_35 {dimension_numbers = #tpu.dot_dimension_numbers<[2], [1], [1], [2], [0, 0, 0, 1, 1, 2], [0], [0]>} : vector<2x80x80xbf16>, vector<2x80x128xbf16>, vector<2x80x128xf32> -> vector<2x80x128xf32>
    "tpu.trace_stop"() : () -> ()
    %102 = tpu.concatenate %81, %101 in 2 : vector<2x80x128xf32>, vector<2x80x128xf32> -> vector<2x80x256xf32>
    %103 = vector.shape_cast %102 : vector<2x80x256xf32> to vector<160x256xf32>
    %104 = arith.truncf %103 : vector<160x256xf32> to vector<160x256xbf16>
    %c0_36 = arith.constant 0 : index
    %c3 = arith.constant 3 : index
    %c0_37 = arith.constant 0 : index
    %c0_38 = arith.constant 0 : index
    %105 = vector.load %arg3[%c0_36, %c3, %c0_37, %c0_38] : memref<1x4x256x256xbf16, #tpu.memory_space<vmem>>, vector<1x1x256x256xbf16>
    %106 = vector.shape_cast %105 : vector<1x1x256x256xbf16> to vector<256x256xbf16>
    %cst_39 = arith.constant dense<0.000000e+00> : vector<160x256xf32>
    %107 = tpu.matmul %104, %106, %cst_39 {dimension_numbers = #tpu.dot_dimension_numbers<[1], [0], [0], [1], [0, 0, 1, 1], [], []>} : vector<160x256xbf16>, vector<256x256xbf16>, vector<160x256xf32> -> vector<160x256xf32>
    %108 = vector.extract_strided_slice %6 {offsets = [7, 0], sizes = [1, 256], strides = [1, 1]} : vector<9x256xf32> to vector<1x256xf32>
    %109 = vector.broadcast %108 : vector<1x256xf32> to vector<160x256xf32>
    %110 = arith.addf %107, %109 : vector<160x256xf32>
    %111 = arith.addf %4, %110 : vector<160x256xf32>
    %112 = vector.extract_strided_slice %6 {offsets = [2, 0], sizes = [1, 256], strides = [1, 1]} : vector<9x256xf32> to vector<1x256xf32>
    %113 = vector.extract_strided_slice %6 {offsets = [3, 0], sizes = [1, 256], strides = [1, 1]} : vector<9x256xf32> to vector<1x256xf32>
    %cst_40 = arith.constant dense<0.000000e+00> : vector<160xf32>
    %114 = vector.multi_reduction <add>, %111, %cst_40 [1] : vector<160x256xf32> to vector<160xf32>
    %115 = vector.shape_cast %114 : vector<160xf32> to vector<160x1xf32>
    %cst_41 = arith.constant 2.560000e+02 : f32
    %116 = vector.broadcast %cst_41 : f32 to vector<160x1xf32>
    %117 = arith.divf %115, %116 : vector<160x1xf32>
    %118 = vector.broadcast %117 : vector<160x1xf32> to vector<160x256xf32>
    %119 = arith.subf %111, %118 : vector<160x256xf32>
    %120 = arith.mulf %119, %119 : vector<160x256xf32>
    %cst_42 = arith.constant dense<0.000000e+00> : vector<160xf32>
    %121 = vector.multi_reduction <add>, %120, %cst_42 [1] : vector<160x256xf32> to vector<160xf32>
    %122 = vector.shape_cast %121 : vector<160xf32> to vector<160x1xf32>
    %cst_43 = arith.constant 2.560000e+02 : f32
    %123 = vector.broadcast %cst_43 : f32 to vector<160x1xf32>
    %124 = arith.divf %122, %123 : vector<160x1xf32>
    %125 = vector.broadcast %117 : vector<160x1xf32> to vector<160x256xf32>
    %126 = arith.subf %111, %125 : vector<160x256xf32>
    %cst_44 = arith.constant 9.99999974E-6 : f32
    %127 = vector.broadcast %cst_44 : f32 to vector<160x1xf32>
    %128 = arith.addf %124, %127 : vector<160x1xf32>
    %129 = math.rsqrt %128 : vector<160x1xf32>
    %130 = vector.broadcast %129 : vector<160x1xf32> to vector<160x256xf32>
    %131 = arith.mulf %126, %130 : vector<160x256xf32>
    %132 = vector.broadcast %112 : vector<1x256xf32> to vector<160x256xf32>
    %133 = arith.mulf %131, %132 : vector<160x256xf32>
    %134 = vector.broadcast %113 : vector<1x256xf32> to vector<160x256xf32>
    %135 = arith.addf %133, %134 : vector<160x256xf32>
    %136 = arith.truncf %135 : vector<160x256xf32> to vector<160x256xbf16>
    %c0_45 = arith.constant 0 : index
    %c0_46 = arith.constant 0 : index
    %c0_47 = arith.constant 0 : index
    %137 = vector.load %arg4[%c0_45, %c0_46, %c0_47] : memref<1x256x1024xbf16, #tpu.memory_space<vmem>>, vector<1x256x1024xbf16>
    %138 = vector.shape_cast %137 : vector<1x256x1024xbf16> to vector<256x1024xbf16>
    %cst_48 = arith.constant dense<0.000000e+00> : vector<160x1024xf32>
    %139 = tpu.matmul %136, %138, %cst_48 {dimension_numbers = #tpu.dot_dimension_numbers<[1], [0], [0], [1], [0, 0, 1, 1], [], []>} : vector<160x256xbf16>, vector<256x1024xbf16>, vector<160x1024xf32> -> vector<160x1024xf32>
    %140 = vector.broadcast %8 : vector<1x1024xf32> to vector<160x1024xf32>
    %141 = arith.addf %139, %140 : vector<160x1024xf32>
    %cst_49 = arith.constant 1.702000e+00 : f32
    %142 = vector.broadcast %cst_49 : f32 to vector<160x1024xf32>
    %143 = arith.mulf %142, %141 : vector<160x1024xf32>
    %144 = arith.negf %143 : vector<160x1024xf32>
    %145 = math.exp %144 : vector<160x1024xf32>
    %cst_50 = arith.constant 1.000000e+00 : f32
    %146 = vector.broadcast %cst_50 : f32 to vector<160x1024xf32>
    %147 = arith.addf %146, %145 : vector<160x1024xf32>
    %148 = arith.divf %146, %147 : vector<160x1024xf32>
    %149 = arith.mulf %141, %148 : vector<160x1024xf32>
    %150 = arith.truncf %149 : vector<160x1024xf32> to vector<160x1024xbf16>
    %c0_51 = arith.constant 0 : index
    %c0_52 = arith.constant 0 : index
    %c0_53 = arith.constant 0 : index
    %151 = vector.load %arg5[%c0_51, %c0_52, %c0_53] : memref<1x1024x256xbf16, #tpu.memory_space<vmem>>, vector<1x1024x256xbf16>
    %152 = vector.shape_cast %151 : vector<1x1024x256xbf16> to vector<1024x256xbf16>
    %cst_54 = arith.constant dense<0.000000e+00> : vector<160x256xf32>
    %153 = tpu.matmul %150, %152, %cst_54 {dimension_numbers = #tpu.dot_dimension_numbers<[1], [0], [0], [1], [0, 0, 1, 1], [], []>} : vector<160x1024xbf16>, vector<1024x256xbf16>, vector<160x256xf32> -> vector<160x256xf32>
    %154 = vector.extract_strided_slice %6 {offsets = [8, 0], sizes = [1, 256], strides = [1, 1]} : vector<9x256xf32> to vector<1x256xf32>
    %155 = vector.broadcast %154 : vector<1x256xf32> to vector<160x256xf32>
    %156 = arith.addf %153, %155 : vector<160x256xf32>
    %157 = arith.addf %111, %156 : vector<160x256xf32>
    %c1_i32 = arith.constant 1 : i32
    %158 = arith.cmpi slt, %arg1, %c1_i32 : i32
    %159 = arith.extui %158 : i1 to i32
    %c0_i32_55 = arith.constant 0 : i32
    %160 = arith.cmpi ne, %159, %c0_i32_55 : i32
    scf.if %160 {
      %164 = vector.shape_cast %157 : vector<160x256xf32> to vector<2x80x256xf32>
      %c0_58 = arith.constant 0 : index
      %c0_59 = arith.constant 0 : index
      %c0_60 = arith.constant 0 : index
      %165 = vector.load %arg9[%c0_58, %c0_59, %c0_60] : memref<2x80x256xf32, #tpu.memory_space<vmem>>, vector<2x80x256xf32>
      tpu.vector_store %arg9[%c0_58, %c0_59, %c0_60], %164 {strides = array<i32>} : memref<2x80x256xf32, #tpu.memory_space<vmem>>, vector<2x80x256xf32>,
    } else {
    }
    %c1_i32_56 = arith.constant 1 : i32
    %161 = arith.cmpi eq, %arg1, %c1_i32_56 : i32
    %162 = arith.extui %161 : i1 to i32
    %c0_i32_57 = arith.constant 0 : i32
    %163 = arith.cmpi ne, %162, %c0_i32_57 : i32
    scf.if %163 {
      %c0_58 = arith.constant 0 : index
      %c0_59 = arith.constant 0 : index
      %164 = vector.load %arg8[%c0_58, %c0_59] : memref<2x256xf32, #tpu.memory_space<vmem>>, vector<2x256xf32>
      %165 = vector.extract_strided_slice %164 {offsets = [0, 0], sizes = [1, 256], strides = [1, 1]} : vector<2x256xf32> to vector<1x256xf32>
      %166 = vector.extract_strided_slice %164 {offsets = [1, 0], sizes = [1, 256], strides = [1, 1]} : vector<2x256xf32> to vector<1x256xf32>
      %cst_60 = arith.constant dense<0.000000e+00> : vector<160xf32>
      %167 = vector.multi_reduction <add>, %157, %cst_60 [1] : vector<160x256xf32> to vector<160xf32>
      %168 = vector.shape_cast %167 : vector<160xf32> to vector<160x1xf32>
      %cst_61 = arith.constant 2.560000e+02 : f32
      %169 = vector.broadcast %cst_61 : f32 to vector<160x1xf32>
      %170 = arith.divf %168, %169 : vector<160x1xf32>
      %171 = vector.broadcast %170 : vector<160x1xf32> to vector<160x256xf32>
      %172 = arith.subf %157, %171 : vector<160x256xf32>
      %173 = arith.mulf %172, %172 : vector<160x256xf32>
      %cst_62 = arith.constant dense<0.000000e+00> : vector<160xf32>
      %174 = vector.multi_reduction <add>, %173, %cst_62 [1] : vector<160x256xf32> to vector<160xf32>
      %175 = vector.shape_cast %174 : vector<160xf32> to vector<160x1xf32>
      %cst_63 = arith.constant 2.560000e+02 : f32
      %176 = vector.broadcast %cst_63 : f32 to vector<160x1xf32>
      %177 = arith.divf %175, %176 : vector<160x1xf32>
      %178 = vector.broadcast %170 : vector<160x1xf32> to vector<160x256xf32>
      %179 = arith.subf %157, %178 : vector<160x256xf32>
      %cst_64 = arith.constant 9.99999974E-6 : f32
      %180 = vector.broadcast %cst_64 : f32 to vector<160x1xf32>
      %181 = arith.addf %177, %180 : vector<160x1xf32>
      %182 = math.rsqrt %181 : vector<160x1xf32>
      %183 = vector.broadcast %182 : vector<160x1xf32> to vector<160x256xf32>
      %184 = arith.mulf %179, %183 : vector<160x256xf32>
      %185 = vector.broadcast %165 : vector<1x256xf32> to vector<160x256xf32>
      %186 = arith.mulf %184, %185 : vector<160x256xf32>
      %187 = vector.broadcast %166 : vector<1x256xf32> to vector<160x256xf32>
      %188 = arith.addf %186, %187 : vector<160x256xf32>
      %189 = vector.shape_cast %188 : vector<160x256xf32> to vector<2x80x256xf32>
      %c0_65 = arith.constant 0 : index
      %c0_66 = arith.constant 0 : index
      %c0_67 = arith.constant 0 : index
      %190 = vector.load %arg9[%c0_65, %c0_66, %c0_67] : memref<2x80x256xf32, #tpu.memory_space<vmem>>, vector<2x80x256xf32>
      tpu.vector_store %arg9[%c0_65, %c0_66, %c0_67], %189 {strides = array<i32>} : memref<2x80x256xf32, #tpu.memory_space<vmem>>, vector<2x80x256xf32>,
    } else {
    }
    return
  }
  func.func @transform_0(%arg0: i32, %arg1: i32) -> (i32, i32, i32) {
    %c0_i32 = arith.constant 0 : i32
    %c0_i32_0 = arith.constant 0 : i32
    %c0_i32_1 = arith.constant 0 : i32
    return %arg0, %c0_i32, %c0_i32_0 : i32, i32, i32
  }
  func.func @transform_1(%arg0: i32, %arg1: i32) -> (i32, i32, i32, i32) {
    %c0_i32 = arith.constant 0 : i32
    %c0_i32_0 = arith.constant 0 : i32
    %c0_i32_1 = arith.constant 0 : i32
    %c0_i32_2 = arith.constant 0 : i32
    return %arg1, %c0_i32, %c0_i32_0, %c0_i32_1 : i32, i32, i32, i32
  }
  func.func @transform_2(%arg0: i32, %arg1: i32) -> (i32, i32, i32) {
    %c0_i32 = arith.constant 0 : i32
    %c0_i32_0 = arith.constant 0 : i32
    %c0_i32_1 = arith.constant 0 : i32
    return %arg1, %c0_i32, %c0_i32_0 : i32, i32, i32
  }
  func.func @transform_3(%arg0: i32, %arg1: i32) -> (i32, i32, i32) {
    %c0_i32 = arith.constant 0 : i32
    %c0_i32_0 = arith.constant 0 : i32
    %c0_i32_1 = arith.constant 0 : i32
    return %arg1, %c0_i32, %c0_i32_0 : i32, i32, i32
  }
  func.func @transform_4(%arg0: i32, %arg1: i32) -> (i32, i32, i32) {
    %c0_i32 = arith.constant 0 : i32
    %c0_i32_0 = arith.constant 0 : i32
    %c0_i32_1 = arith.constant 0 : i32
    return %arg1, %c0_i32, %c0_i32_0 : i32, i32, i32
  }
  func.func @transform_5(%arg0: i32, %arg1: i32) -> (i32, i32, i32) {
    %c0_i32 = arith.constant 0 : i32
    %c0_i32_0 = arith.constant 0 : i32
    %c0_i32_1 = arith.constant 0 : i32
    return %arg1, %c0_i32, %c0_i32_0 : i32, i32, i32
  }
  func.func @transform_6(%arg0: i32, %arg1: i32) -> (i32, i32) {
    %c0_i32 = arith.constant 0 : i32
    %c0_i32_0 = arith.constant 0 : i32
    %c0_i32_1 = arith.constant 0 : i32
    return %c0_i32, %c0_i32_0 : i32, i32
  }
  func.func @transform_7(%arg0: i32, %arg1: i32) -> (i32, i32, i32) {
    %c0_i32 = arith.constant 0 : i32
    %c0_i32_0 = arith.constant 0 : i32
    %c0_i32_1 = arith.constant 0 : i32
    return %arg0, %c0_i32, %c0_i32_0 : i32, i32, i32
  }
}

</mosaic_0001>

<llo_original>
// kernel: tpu_custom_call.1
$region0: #{tpu_custom_call.1}
  #allocation0 [shape = 'u32[]', space=smem, size = 0x4, offset = 0x4, fixed_abs, tag = 'smem constant byte address 0x4 - core index']
  #allocation1 [shape = 'u32[144,128]{1,0:T(1,128)}', space=vmem, size = 0x12000, scoped, tag = 'internal scratch']
  %s0 = inlined_call_operand.hbm [shape: f32[4,80,256], index: 0, kind: input, shape index: {}]
  %s1 = inlined_call_operand.hbm [shape: bf16[2,4,256,256], index: 1, kind: input, shape index: {}]
  %s2 = inlined_call_operand.hbm [shape: bf16[2,256,1024], index: 2, kind: input, shape index: {}]
  %s3 = inlined_call_operand.hbm [shape: bf16[2,1024,256], index: 3, kind: input, shape index: {}]
  %s4 = inlined_call_operand.hbm [shape: f32[2,9,256], index: 4, kind: input, shape index: {}]
  %s5 = inlined_call_operand.hbm [shape: f32[2,1,1024], index: 5, kind: input, shape index: {}]
  %s6 = inlined_call_operand.hbm [shape: f32[2,256], index: 6, kind: input, shape index: {}]
  %s7 = inlined_call_operand.hbm [shape: f32[4,80,256], index: 7, kind: output, shape index: {}]
  %s8 = sld [smem:[#allocation0]]
  $region101: #{tpu_custom_call.1} parent=0
    _
  %s10 = ssub.s32 1, %s8
  %s11 = scalar_select 0, %s10, %s8
  $region1: #{tpu_custom_call.1} parent=0
    #allocation2 [shape = 'u8[327680]{0}', space=vmem, size = 0x50000, scoped, tag = 'input window, operand 0']
    #allocation3 [shape = 's32[2]{0}', space=sflag, size = 0x8, scoped, tag = 'scoped memory for tpu_custom_call.1']
    #allocation4 [shape = 's32[2]{0}', space=sflag, size = 0x8, scoped, tag = 'scoped memory for tpu_custom_call.1']
    #allocation5 [shape = 'u8[1048576]{0}', space=vmem, size = 0x100000, scoped, tag = 'input window, operand 1']
    #allocation6 [shape = 's32[2]{0}', space=sflag, size = 0x8, scoped, tag = 'scoped memory for tpu_custom_call.1']
    #allocation7 [shape = 'u8[1048576]{0}', space=vmem, size = 0x100000, scoped, tag = 'input window, operand 2']
    #allocation8 [shape = 'u8[1048576]{0}', space=vmem, size = 0x100000, scoped, tag = 'input window, operand 3']
    #allocation9 [shape = 's32[2]{0}', space=sflag, size = 0x8, scoped, tag = 'scoped memory for tpu_custom_call.1']
    #allocation10 [shape = 'u8[32768]{0}', space=vmem, size = 0x8000, scoped, tag = 'input window, operand 4']
    #allocation11 [shape = 'u8[8192]{0}', space=vmem, size = 0x2000, scoped, tag = 'input window, operand 5']
    #allocation12 [shape = 's32[2]{0}', space=sflag, size = 0x8, scoped, tag = 'scoped memory for tpu_custom_call.1']
    #allocation13 [shape = 'u8[2048]{0}', space=vmem, size = 0x800, scoped, tag = 'input window, operand 6, single buffered']
    #allocation14 [shape = 'u8[327680]{0}', space=vmem, size = 0x50000, scoped, tag = 'output window, operand 0']
    %12 = vsyncpa [#allocation3], 0
    %s13 = scalar_lea.sflag [#allocation3], 1
    %14 = vsyncpa %s13, 0
    %15 = vsyncpa [#allocation6], 0
    %s16 = scalar_lea.sflag [#allocation6], 1
    %17 = vsyncpa %s16, 0
    %18 = vsyncpa [#allocation9], 0
    %s19 = scalar_lea.sflag [#allocation9], 1
    %20 = vsyncpa %s19, 0
    %21 = vsyncpa [#allocation12], 0
    %s22 = scalar_lea.sflag [#allocation12], 1
    %23 = vsyncpa %s22, 0
    %24 = vsyncpa [#allocation4], 0
    %s25 = scalar_lea.sflag [#allocation4], 1
    %26 = vsyncpa %s25, 0
    loop: start=0, step=1, limit=6
    $region2: #{tpu_custom_call.1} parent=1 // loop_pre_header
      _
    $region3: #{tpu_custom_call.1} parent=1 // loop_header
      %s28 = sphi 0, %s32
      %p29 = scmp.ge.s32.totalorder %s28, 6
      %s35 = sphi 0, %s47
      %s36 = sphi 0, %s43
      %s37 = sphi 0, %s35
      %s38 = sphi 0, %s36
      %s39 = sphi 0, %s37
      %s40 = sphi 0, %s38
      %s50 = sphi 0, %s52
      %s53 = sphi 0, %s50
      %s54 = sphi 0, %s53
      %s70 = sphi 0, %s54
      %s76 = sphi 0, %s78
      %s79 = sphi 0, %s76
      %s80 = sphi 0, %s79
      %s96 = sphi 0, %s80
      %s102 = sphi 0, %s104
      %s105 = sphi 0, %s102
      %s106 = sphi 0, %s105
      %s122 = sphi 0, %s106
      %s128 = sphi 0, %s130
      %s131 = sphi 0, %s128
      %s132 = sphi 0, %s131
      %s148 = sphi 0, %s132
      %s154 = sphi 0, %s156
      %s157 = sphi 0, %s154
      %s158 = sphi 0, %s157
      %s174 = sphi 0, %s158
      %s180 = sphi 0, %s182
      %s183 = sphi 0, %s180
      %s184 = sphi 0, %s183
      %s200 = sphi 0, %s184
      %s204 = sphi 0, %s204
      %s206 = sphi 0, %s204
      %s207 = sphi 0, %s206
      %s221 = sphi 0, %s207
      %s227 = sphi 0, %s229
      %s230 = sphi 0, %s227
      %s231 = sphi 0, %s230
      %s247 = sphi 0, %s231
    $region4: #{tpu_custom_call.1} parent=1 // loop_header_branch
      %31 = sbr.rel (%p29) target = $region8
    $region5: #{tpu_custom_call.1} parent=1 // loop_body
      %s33 = ssub.s32 %s28, 1
      %s34 = ssub.s32 %s28, 2
      %s41 = sadd.s32 1, %s36
      %p42 = scmp.ge.s32.totalorder %s41, 2
      %s43 = scalar_select %p42, 0, %s41
      %s44 = sadd.s32 1, %s35
      %s45 = scalar_select %p42, %s44, %s35
      %p46 = scmp.ge.s32.totalorder %s45, 2
      %s47 = scalar_select %p46, 0, %s45
      %s48 = ssub.s32 %s35, %s47
      %p49 = scmp.eq.s32.totalorder %s48, 0
      %s51 = sadd.s32 %s50, 1
      %s52 = scalar_select %p49, %s50, %s51
      %p55 = pneg %p49
      %p56 = scmp.eq.s32.totalorder %s28, 3
      %p57 = por %p55, %p56
      %p58 = scmp.ne.s32.totalorder %s50, %s53
      %p59 = scmp.eq.s32.totalorder %s28, 0
      %p60 = por %p58, %p59
      %p61 = scmp.ne.s32.totalorder %s50, %s53
      %p62 = scmp.eq.s32.totalorder %s33, 3
      %p63 = por %p61, %p62
      %p64 = scmp.ne.s32.totalorder %s53, %s54
      %p65 = scmp.eq.s32.totalorder %s33, 0
      %p66 = por %p64, %p65
      %p67 = scmp.ne.s32.totalorder %s53, %s54
      %p68 = scmp.eq.s32.totalorder %s34, 3
      %p69 = por %p67, %p68
      %p71 = scmp.ne.s32.totalorder %s54, %s70
      %p72 = scmp.eq.s32.totalorder %s34, 0
      %p73 = por %p71, %p72
      %s74 = ssub.s32 %s36, %s43
      %p75 = scmp.eq.s32.totalorder %s74, 0
      %s77 = sadd.s32 %s76, 1
      %s78 = scalar_select %p75, %s76, %s77
      %p81 = pneg %p75
      %p82 = scmp.eq.s32.totalorder %s28, 3
      %p83 = por %p81, %p82
      %p84 = scmp.ne.s32.totalorder %s76, %s79
      %p85 = scmp.eq.s32.totalorder %s28, 0
      %p86 = por %p84, %p85
      %p87 = scmp.ne.s32.totalorder %s76, %s79
      %p88 = scmp.eq.s32.totalorder %s33, 3
      %p89 = por %p87, %p88
      %p90 = scmp.ne.s32.totalorder %s79, %s80
      %p91 = scmp.eq.s32.totalorder %s33, 0
      %p92 = por %p90, %p91
      %p93 = scmp.ne.s32.totalorder %s79, %s80
      %p94 = scmp.eq.s32.totalorder %s34, 3
      %p95 = por %p93, %p94
      %p97 = scmp.ne.s32.totalorder %s80, %s96
      %p98 = scmp.eq.s32.totalorder %s34, 0
      %p99 = por %p97, %p98
      %s100 = ssub.s32 %s36, %s43
      %p101 = scmp.eq.s32.totalorder %s100, 0
      %s103 = sadd.s32 %s102, 1
      %s104 = scalar_select %p101, %s102, %s103
      %p107 = pneg %p101
      %p108 = scmp.eq.s32.totalorder %s28, 3
      %p109 = por %p107, %p108
      %p110 = scmp.ne.s32.totalorder %s102, %s105
      %p111 = scmp.eq.s32.totalorder %s28, 0
      %p112 = por %p110, %p111
      %p113 = scmp.ne.s32.totalorder %s102, %s105
      %p114 = scmp.eq.s32.totalorder %s33, 3
      %p115 = por %p113, %p114
      %p116 = scmp.ne.s32.totalorder %s105, %s106
      %p117 = scmp.eq.s32.totalorder %s33, 0
      %p118 = por %p116, %p117
      %p119 = scmp.ne.s32.totalorder %s105, %s106
      %p120 = scmp.eq.s32.totalorder %s34, 3
      %p121 = por %p119, %p120
      %p123 = scmp.ne.s32.totalorder %s106, %s122
      %p124 = scmp.eq.s32.totalorder %s34, 0
      %p125 = por %p123, %p124
      %s126 = ssub.s32 %s36, %s43
      %p127 = scmp.eq.s32.totalorder %s126, 0
      %s129 = sadd.s32 %s128, 1
      %s130 = scalar_select %p127, %s128, %s129
      %p133 = pneg %p127
      %p134 = scmp.eq.s32.totalorder %s28, 3
      %p135 = por %p133, %p134
      %p136 = scmp.ne.s32.totalorder %s128, %s131
      %p137 = scmp.eq.s32.totalorder %s28, 0
      %p138 = por %p136, %p137
      %p139 = scmp.ne.s32.totalorder %s128, %s131
      %p140 = scmp.eq.s32.totalorder %s33, 3
      %p141 = por %p139, %p140
      %p142 = scmp.ne.s32.totalorder %s131, %s132
      %p143 = scmp.eq.s32.totalorder %s33, 0
      %p144 = por %p142, %p143
      %p145 = scmp.ne.s32.totalorder %s131, %s132
      %p146 = scmp.eq.s32.totalorder %s34, 3
      %p147 = por %p145, %p146
      %p149 = scmp.ne.s32.totalorder %s132, %s148
      %p150 = scmp.eq.s32.totalorder %s34, 0
      %p151 = por %p149, %p150
      %s152 = ssub.s32 %s36, %s43
      %p153 = scmp.eq.s32.totalorder %s152, 0
      %s155 = sadd.s32 %s154, 1
      %s156 = scalar_select %p153, %s154, %s155
      %p159 = pneg %p153
      %p160 = scmp.eq.s32.totalorder %s28, 3
      %p161 = por %p159, %p160
      %p162 = scmp.ne.s32.totalorder %s154, %s157
      %p163 = scmp.eq.s32.totalorder %s28, 0
      %p164 = por %p162, %p163
      %p165 = scmp.ne.s32.totalorder %s154, %s157
      %p166 = scmp.eq.s32.totalorder %s33, 3
      %p167 = por %p165, %p166
      %p168 = scmp.ne.s32.totalorder %s157, %s158
      %p169 = scmp.eq.s32.totalorder %s33, 0
      %p170 = por %p168, %p169
      %p171 = scmp.ne.s32.totalorder %s157, %s158
      %p172 = scmp.eq.s32.totalorder %s34, 3
      %p173 = por %p171, %p172
      %p175 = scmp.ne.s32.totalorder %s158, %s174
      %p176 = scmp.eq.s32.totalorder %s34, 0
      %p177 = por %p175, %p176
      %s178 = ssub.s32 %s36, %s43
      %p179 = scmp.eq.s32.totalorder %s178, 0
      %s181 = sadd.s32 %s180, 1
      %s182 = scalar_select %p179, %s180, %s181
      %p185 = pneg %p179
      %p186 = scmp.eq.s32.totalorder %s28, 3
      %p187 = por %p185, %p186
      %p188 = scmp.ne.s32.totalorder %s180, %s183
      %p189 = scmp.eq.s32.totalorder %s28, 0
      %p190 = por %p188, %p189
      %p191 = scmp.ne.s32.totalorder %s180, %s183
      %p192 = scmp.eq.s32.totalorder %s33, 3
      %p193 = por %p191, %p192
      %p194 = scmp.ne.s32.totalorder %s183, %s184
      %p195 = scmp.eq.s32.totalorder %s33, 0
      %p196 = por %p194, %p195
      %p197 = scmp.ne.s32.totalorder %s183, %s184
      %p198 = scmp.eq.s32.totalorder %s34, 3
      %p199 = por %p197, %p198
      %p201 = scmp.ne.s32.totalorder %s184, %s200
      %p202 = scmp.eq.s32.totalorder %s34, 0
      %p203 = por %p201, %p202
      %s205 = sadd.s32 %s204, 1
      %p208 = scmp.eq.s32.totalorder %s28, 3
      %p209 = scmp.ne.s32.totalorder %s204, %s206
      %p210 = scmp.eq.s32.totalorder %s28, 0
      %p211 = por %p209, %p210
      %p212 = scmp.ne.s32.totalorder %s204, %s206
      %p213 = scmp.eq.s32.totalorder %s33, 3
      %p214 = por %p212, %p213
      %p215 = scmp.ne.s32.totalorder %s206, %s207
      %p216 = scmp.eq.s32.totalorder %s33, 0
      %p217 = por %p215, %p216
      %p218 = scmp.ne.s32.totalorder %s206, %s207
      %p219 = scmp.eq.s32.totalorder %s34, 3
      %p220 = por %p218, %p219
      %p222 = scmp.ne.s32.totalorder %s207, %s221
      %p223 = scmp.eq.s32.totalorder %s34, 0
      %p224 = por %p222, %p223
      %s225 = ssub.s32 %s35, %s47
      %p226 = scmp.eq.s32.totalorder %s225, 0
      %s228 = sadd.s32 %s227, 1
      %s229 = scalar_select %p226, %s227, %s228
      %p232 = pneg %p226
      %p233 = scmp.eq.s32.totalorder %s28, 3
      %p234 = por %p232, %p233
      %p235 = scmp.ne.s32.totalorder %s227, %s230
      %p236 = scmp.eq.s32.totalorder %s28, 0
      %p237 = por %p235, %p236
      %p238 = scmp.ne.s32.totalorder %s227, %s230
      %p239 = scmp.eq.s32.totalorder %s33, 3
      %p240 = por %p238, %p239
      %p241 = scmp.ne.s32.totalorder %s230, %s231
      %p242 = scmp.eq.s32.totalorder %s33, 0
      %p243 = por %p241, %p242
      %p244 = scmp.ne.s32.totalorder %s230, %s231
      %p245 = scmp.eq.s32.totalorder %s34, 3
      %p246 = por %p244, %p245
      %p248 = scmp.ne.s32.totalorder %s231, %s247
      %p249 = scmp.eq.s32.totalorder %s34, 0
      %p250 = por %p248, %p249
      %p251 = scmp.le.s32.totalorder 1, %s28
      %p252 = scmp.lt.s32.totalorder %s28, 5
      %p253 = pnand %p251, %p252
      %p254 = pneg %p253
      // Predicated region
      $region9: #{tpu_custom_call.1} parent=5 // pred_check
        _
      $region10: #{tpu_custom_call.1} parent=5 // pred_check_branch
        %256 = sbr.rel (%p253) target = $region12
      $region11: #{tpu_custom_call.1} parent=5 // pred_region
        %s257 = ssub.s32 %s28, 1
        // Predicated region
        $region13: #{tpu_custom_call.1} parent=11 // pred_check
          %p258 = pneg %p217
        $region14: #{tpu_custom_call.1} parent=11 // pred_check_branch
          %260 = sbr.rel (%p258) target = $region16
        $region15: #{tpu_custom_call.1} parent=11 // pred_region
          %s262 = ssub.s32 64, 64
          %263 = vsyncadd [#allocation12], %s262
          %s265 = sshll.u32 [#allocation13], 4
          %s266 = int_to_ptr.vmem [resolvable:$true] %s265
          %268 = dma.hbm_to_vmem [thread:$0]  %s6, 64, %s266, [#allocation12]
        $region16: #{tpu_custom_call.1} parent=11 // pred_fallthru
          _
      $region12: #{tpu_custom_call.1} parent=5 // pred_fallthru
        _
      %p269 = scmp.lt.s32.totalorder %s28, 4
      // Predicated region
      $region17: #{tpu_custom_call.1} parent=5 // pred_check
        %p270 = pneg %p269
      $region18: #{tpu_custom_call.1} parent=5 // pred_check_branch
        %272 = sbr.rel (%p270) target = $region20
      $region19: #{tpu_custom_call.1} parent=5 // pred_region
        // Predicated region
        $region21: #{tpu_custom_call.1} parent=19 // pred_check
          %p273 = pneg %p60
        $region22: #{tpu_custom_call.1} parent=19 // pred_check_branch
          %275 = sbr.rel (%p273) target = $region24
        $region23: #{tpu_custom_call.1} parent=19 // pred_region
          %s276 = sand.u32 %s50, 1
          %s277 = scalar_lea.sflag [#allocation3], %s276
          %s278 = sand.u32 %s50, 1
          %s279 = smul.addr %s278, 320
          %s280 = scalar_lea.vmem [#allocation2], %s279
          %s281 = smul.u32 2, %s35
          %s283 = ssub.s32 5120, 5120
          %284 = vsyncadd %s277, %s283
          %s285 = smul.addr %s281, 20
          %s286 = smul.addr %s285, 128
          %s287 = scalar_lea.hbm %s0, %s286
          %s288 = sshll.u32 %s280, 4
          %s289 = int_to_ptr.vmem [resolvable:$true] %s288
          %294 = dma.hbm_to_vmem [thread:$0]  %s287, 5120, %s289, %s277, 256, 256, 16
        $region24: #{tpu_custom_call.1} parent=19 // pred_fallthru
          _
        // Predicated region
        $region25: #{tpu_custom_call.1} parent=19 // pred_check
          %p295 = pneg %p86
        $region26: #{tpu_custom_call.1} parent=19 // pred_check_branch
          %297 = sbr.rel (%p295) target = $region28
        $region27: #{tpu_custom_call.1} parent=19 // pred_region
          %s298 = sand.u32 %s28, 1
          %s299 = scalar_lea.sflag [#allocation6], %s298
          %s300 = sand.u32 %s76, 1
          %s301 = smul.addr %s300, 1024
          %s302 = scalar_lea.vmem [#allocation5], %s301
          %s304 = ssub.s32 16384, 16384
          %305 = vsyncadd %s299, %s304
          %s306 = smul.addr %s36, 256
          %s307 = smul.addr %s306, 64
          %s308 = scalar_lea.hbm %s1, %s307
          %s309 = sshll.u32 %s302, 4
          %s310 = int_to_ptr.vmem [resolvable:$true] %s309
          %315 = dma.hbm_to_vmem [thread:$0]  %s308, 16384, %s310, %s299, 128, 128, 8
        $region28: #{tpu_custom_call.1} parent=19 // pred_fallthru
          _
        // Predicated region
        $region29: #{tpu_custom_call.1} parent=19 // pred_check
          %p316 = pneg %p112
        $region30: #{tpu_custom_call.1} parent=19 // pred_check_branch
          %318 = sbr.rel (%p316) target = $region32
        $region31: #{tpu_custom_call.1} parent=19 // pred_region
          %s319 = sand.u32 %s28, 1
          %s320 = scalar_lea.sflag [#allocation6], %s319
          %s321 = sand.u32 %s102, 1
          %s322 = smul.addr %s321, 1024
          %s323 = scalar_lea.vmem [#allocation7], %s322
          %s325 = ssub.s32 16384, 16384
          %326 = vsyncadd %s320, %s325
          %s327 = smul.addr %s36, 256
          %s328 = smul.addr %s327, 64
          %s329 = scalar_lea.hbm %s2, %s328
          %s330 = sshll.u32 %s323, 4
          %s331 = int_to_ptr.vmem [resolvable:$true] %s330
          %336 = dma.hbm_to_vmem [thread:$0]  %s329, 16384, %s331, %s320, 512, 512, 32
        $region32: #{tpu_custom_call.1} parent=19 // pred_fallthru
          _
        // Predicated region
        $region33: #{tpu_custom_call.1} parent=19 // pred_check
          %p337 = pneg %p138
        $region34: #{tpu_custom_call.1} parent=19 // pred_check_branch
          %339 = sbr.rel (%p337) target = $region36
        $region35: #{tpu_custom_call.1} parent=19 // pred_region
          %s340 = sand.u32 %s28, 1
          %s341 = scalar_lea.sflag [#allocation9], %s340
          %s342 = sand.u32 %s128, 1
          %s343 = smul.addr %s342, 1024
          %s344 = scalar_lea.vmem [#allocation8], %s343
          %s346 = ssub.s32 16384, 16384
          %347 = vsyncadd %s341, %s346
          %s348 = smul.addr %s36, 256
          %s349 = smul.addr %s348, 64
          %s350 = scalar_lea.hbm %s3, %s349
          %s351 = sshll.u32 %s344, 4
          %s352 = int_to_ptr.vmem [resolvable:$true] %s351
          %357 = dma.hbm_to_vmem [thread:$0]  %s350, 16384, %s352, %s341, 128, 128, 8
        $region36: #{tpu_custom_call.1} parent=19 // pred_fallthru
          _
        // Predicated region
        $region37: #{tpu_custom_call.1} parent=19 // pred_check
          %p358 = pneg %p164
        $region38: #{tpu_custom_call.1} parent=19 // pred_check_branch
          %360 = sbr.rel (%p358) target = $region40
        $region39: #{tpu_custom_call.1} parent=19 // pred_region
          %s361 = sand.u32 %s28, 1
          %s362 = scalar_lea.sflag [#allocation9], %s361
          %s363 = sand.u32 %s154, 1
          %s364 = smul.addr %s363, 32
          %s365 = scalar_lea.vmem [#allocation10], %s364
          %s367 = ssub.s32 512, 512
          %368 = vsyncadd %s362, %s367
          %s369 = smul.addr %s36, 4
          %s370 = smul.addr %s369, 128
          %s371 = scalar_lea.hbm %s4, %s370
          %s372 = sshll.u32 %s365, 4
          %s373 = int_to_ptr.vmem [resolvable:$true] %s372
          %378 = dma.hbm_to_vmem [thread:$0]  %s371, 512, %s373, %s362, 256, 256, 16
        $region40: #{tpu_custom_call.1} parent=19 // pred_fallthru
          _
        // Predicated region
        $region41: #{tpu_custom_call.1} parent=19 // pred_check
          %p379 = pneg %p190
        $region42: #{tpu_custom_call.1} parent=19 // pred_check_branch
          %381 = sbr.rel (%p379) target = $region44
        $region43: #{tpu_custom_call.1} parent=19 // pred_region
          %s382 = sand.u32 %s28, 1
          %s383 = scalar_lea.sflag [#allocation12], %s382
          %s384 = sand.u32 %s180, 1
          %s385 = smul.addr %s384, 8
          %s386 = scalar_lea.vmem [#allocation11], %s385
          %s388 = ssub.s32 128, 128
          %389 = vsyncadd %s383, %s388
          %s390 = smul.addr %s36, 8
          %s391 = smul.addr %s390, 16
          %s392 = scalar_lea.hbm %s5, %s391
          %s394 = sshll.u32 %s386, 4
          %s395 = int_to_ptr.vmem [resolvable:$true] %s394
          %397 = dma.hbm_to_vmem [thread:$0]  %s392, 128, %s395, %s383
        $region44: #{tpu_custom_call.1} parent=19 // pred_fallthru
          _
      $region20: #{tpu_custom_call.1} parent=5 // pred_fallthru
        _
      %p398 = scmp.le.s32.totalorder 1, %s28
      %p399 = scmp.lt.s32.totalorder %s28, 5
      %p400 = pnand %p398, %p399
      %p401 = pneg %p400
      // Predicated region
      $region45: #{tpu_custom_call.1} parent=5 // pred_check
        _
      $region46: #{tpu_custom_call.1} parent=5 // pred_check_branch
        %403 = sbr.rel (%p400) target = $region48
      $region47: #{tpu_custom_call.1} parent=5 // pred_region
        %s404 = ssub.s32 %s28, 1
        %s405 = sand.u32 %s53, 1
        %s406 = scalar_lea.sflag [#allocation3], %s405
        %s407 = sand.u32 %s53, 1
        %s408 = smul.addr %s407, 320
        %s409 = scalar_lea.vmem [#allocation2], %s408
        // Predicated region
        $region49: #{tpu_custom_call.1} parent=47 // pred_check
          %p410 = pneg %p66
        $region50: #{tpu_custom_call.1} parent=47 // pred_check_branch
          %412 = sbr.rel (%p410) target = $region52
        $region51: #{tpu_custom_call.1} parent=47 // pred_region
          %413 = dma.done %s406, 5120
        $region52: #{tpu_custom_call.1} parent=47 // pred_fallthru
          _
        %s414 = sand.u32 %s33, 1
        %s415 = scalar_lea.sflag [#allocation6], %s414
        %s416 = sand.u32 %s79, 1
        %s417 = smul.addr %s416, 1024
        %s418 = scalar_lea.vmem [#allocation5], %s417
        // Predicated region
        $region53: #{tpu_custom_call.1} parent=47 // pred_check
          %p419 = pneg %p92
        $region54: #{tpu_custom_call.1} parent=47 // pred_check_branch
          %421 = sbr.rel (%p419) target = $region56
        $region55: #{tpu_custom_call.1} parent=47 // pred_region
          %422 = dma.done %s415, 16384
        $region56: #{tpu_custom_call.1} parent=47 // pred_fallthru
          _
        %s423 = sand.u32 %s33, 1
        %s424 = scalar_lea.sflag [#allocation6], %s423
        %s425 = sand.u32 %s105, 1
        %s426 = smul.addr %s425, 1024
        %s427 = scalar_lea.vmem [#allocation7], %s426
        // Predicated region
        $region57: #{tpu_custom_call.1} parent=47 // pred_check
          %p428 = pneg %p118
        $region58: #{tpu_custom_call.1} parent=47 // pred_check_branch
          %430 = sbr.rel (%p428) target = $region60
        $region59: #{tpu_custom_call.1} parent=47 // pred_region
          %431 = dma.done %s424, 16384
        $region60: #{tpu_custom_call.1} parent=47 // pred_fallthru
          _
        %s432 = sand.u32 %s33, 1
        %s433 = scalar_lea.sflag [#allocation9], %s432
        %s434 = sand.u32 %s131, 1
        %s435 = smul.addr %s434, 1024
        %s436 = scalar_lea.vmem [#allocation8], %s435
        // Predicated region
        $region61: #{tpu_custom_call.1} parent=47 // pred_check
          %p437 = pneg %p144
        $region62: #{tpu_custom_call.1} parent=47 // pred_check_branch
          %439 = sbr.rel (%p437) target = $region64
        $region63: #{tpu_custom_call.1} parent=47 // pred_region
          %440 = dma.done %s433, 16384
        $region64: #{tpu_custom_call.1} parent=47 // pred_fallthru
          _
        %s441 = sand.u32 %s33, 1
        %s442 = scalar_lea.sflag [#allocation9], %s441
        %s443 = sand.u32 %s157, 1
        %s444 = smul.addr %s443, 32
        %s445 = scalar_lea.vmem [#allocation10], %s444
        // Predicated region
        $region65: #{tpu_custom_call.1} parent=47 // pred_check
          %p446 = pneg %p170
        $region66: #{tpu_custom_call.1} parent=47 // pred_check_branch
          %448 = sbr.rel (%p446) target = $region68
        $region67: #{tpu_custom_call.1} parent=47 // pred_region
          %449 = dma.done %s442, 512
        $region68: #{tpu_custom_call.1} parent=47 // pred_fallthru
          _
        %s450 = sand.u32 %s33, 1
        %s451 = scalar_lea.sflag [#allocation12], %s450
        %s452 = sand.u32 %s183, 1
        %s453 = smul.addr %s452, 8
        %s454 = scalar_lea.vmem [#allocation11], %s453
        // Predicated region
        $region69: #{tpu_custom_call.1} parent=47 // pred_check
          %p455 = pneg %p196
        $region70: #{tpu_custom_call.1} parent=47 // pred_check_branch
          %457 = sbr.rel (%p455) target = $region72
        $region71: #{tpu_custom_call.1} parent=47 // pred_region
          %458 = dma.done %s451, 128
        $region72: #{tpu_custom_call.1} parent=47 // pred_fallthru
          _
        // Predicated region
        $region73: #{tpu_custom_call.1} parent=47 // pred_check
          %p459 = pneg %p217
        $region74: #{tpu_custom_call.1} parent=47 // pred_check_branch
          %461 = sbr.rel (%p459) target = $region76
        $region75: #{tpu_custom_call.1} parent=47 // pred_region
          %462 = dma.done [#allocation12], 64
        $region76: #{tpu_custom_call.1} parent=47 // pred_fallthru
          _
        %s463 = sand.u32 %s53, 1
        %s464 = scalar_lea.sflag [#allocation3], %s463
        %s465 = sand.u32 %s53, 1
        %s466 = smul.addr %s465, 320
        %s467 = scalar_lea.vmem [#allocation2], %s466
        %p468 = pneg %p66
        %p469 = pneg %p63
        %s470 = sand.u32 %s33, 1
        %s471 = scalar_lea.sflag [#allocation6], %s470
        %s472 = sand.u32 %s79, 1
        %s473 = smul.addr %s472, 1024
        %s474 = scalar_lea.vmem [#allocation5], %s473
        %p475 = pneg %p92
        %p476 = pneg %p89
        %s477 = sand.u32 %s33, 1
        %s478 = scalar_lea.sflag [#allocation6], %s477
        %s479 = sand.u32 %s105, 1
        %s480 = smul.addr %s479, 1024
        %s481 = scalar_lea.vmem [#allocation7], %s480
        %p482 = pneg %p118
        %p483 = pneg %p115
        %s484 = sand.u32 %s33, 1
        %s485 = scalar_lea.sflag [#allocation9], %s484
        %s486 = sand.u32 %s131, 1
        %s487 = smul.addr %s486, 1024
        %s488 = scalar_lea.vmem [#allocation8], %s487
        %p489 = pneg %p144
        %p490 = pneg %p141
        %s491 = sand.u32 %s33, 1
        %s492 = scalar_lea.sflag [#allocation9], %s491
        %s493 = sand.u32 %s157, 1
        %s494 = smul.addr %s493, 32
        %s495 = scalar_lea.vmem [#allocation10], %s494
        %p496 = pneg %p170
        %p497 = pneg %p167
        %s498 = sand.u32 %s33, 1
        %s499 = scalar_lea.sflag [#allocation12], %s498
        %s500 = sand.u32 %s183, 1
        %s501 = smul.addr %s500, 8
        %s502 = scalar_lea.vmem [#allocation11], %s501
        %p503 = pneg %p196
        %p504 = pneg %p193
        %p505 = pneg %p217
        %p506 = pneg %p214
        %p507 = pneg %p243
        %p508 = pneg %p240
        %s509 = sand.u32 %s230, 1
        %s510 = scalar_lea.sflag [#allocation4], %s509
        %s511 = sand.u32 %s230, 1
        %s512 = smul.addr %s511, 320
        %s513 = scalar_lea.vmem [#allocation14], %s512
        %s514 = smul.u32 2, %s37
        %s515 = smul.u32 2, %s37
        %p517 = scmp.eq.s32.totalorder %s38, 0
        // Predicated region
        $region77: #{tpu_custom_call.1} parent=47 // pred_check
          %p518 = pneg %p517
        $region78: #{tpu_custom_call.1} parent=47 // pred_check_branch
          %520 = sbr.rel (%p518) target = $region80
        $region79: #{tpu_custom_call.1} parent=47 // pred_region
          %v521 = vld [vmem:[%s409] sm:$0xff]
          %v522 = vld [vmem:[%s409 + $0x8] sm:$0xff]
          %v523 = vld [vmem:[%s409 + $0x10] sm:$0xff]
          %v524 = vld [vmem:[%s409 + $0x18] sm:$0xff]
          %v525 = vld [vmem:[%s409 + $0x20] sm:$0xff]
          %v526 = vld [vmem:[%s409 + $0x28] sm:$0xff]
          %v527 = vld [vmem:[%s409 + $0x30] sm:$0xff]
          %v528 = vld [vmem:[%s409 + $0x38] sm:$0xff]
          %v529 = vld [vmem:[%s409 + $0x40] sm:$0xff]
          %v530 = vld [vmem:[%s409 + $0x48] sm:$0xff]
          %v531 = vld [vmem:[%s409 + $0x50] sm:$0xff]
          %v532 = vld [vmem:[%s409 + $0x58] sm:$0xff]
          %v533 = vld [vmem:[%s409 + $0x60] sm:$0xff]
          %v534 = vld [vmem:[%s409 + $0x68] sm:$0xff]
          %v535 = vld [vmem:[%s409 + $0x70] sm:$0xff]
          %v536 = vld [vmem:[%s409 + $0x78] sm:$0xff]
          %v537 = vld [vmem:[%s409 + $0x80] sm:$0xff]
          %v538 = vld [vmem:[%s409 + $0x88] sm:$0xff]
          %v539 = vld [vmem:[%s409 + $0x90] sm:$0xff]
          %v540 = vld [vmem:[%s409 + $0x98] sm:$0xff]
          %v541 = vld [vmem:[%s409 + $0xa0] sm:$0xff]
          %v542 = vld [vmem:[%s409 + $0xa8] sm:$0xff]
          %v543 = vld [vmem:[%s409 + $0xb0] sm:$0xff]
          %v544 = vld [vmem:[%s409 + $0xb8] sm:$0xff]
          %v545 = vld [vmem:[%s409 + $0xc0] sm:$0xff]
          %v546 = vld [vmem:[%s409 + $0xc8] sm:$0xff]
          %v547 = vld [vmem:[%s409 + $0xd0] sm:$0xff]
          %v548 = vld [vmem:[%s409 + $0xd8] sm:$0xff]
          %v549 = vld [vmem:[%s409 + $0xe0] sm:$0xff]
          %v550 = vld [vmem:[%s409 + $0xe8] sm:$0xff]
          %v551 = vld [vmem:[%s409 + $0xf0] sm:$0xff]
          %v552 = vld [vmem:[%s409 + $0xf8] sm:$0xff]
          %v553 = vld [vmem:[%s409 + $0x100] sm:$0xff]
          %v554 = vld [vmem:[%s409 + $0x108] sm:$0xff]
          %v555 = vld [vmem:[%s409 + $0x110] sm:$0xff]
          %v556 = vld [vmem:[%s409 + $0x118] sm:$0xff]
          %v557 = vld [vmem:[%s409 + $0x120] sm:$0xff]
          %v558 = vld [vmem:[%s409 + $0x128] sm:$0xff]
          %v559 = vld [vmem:[%s409 + $0x130] sm:$0xff]
          %v560 = vld [vmem:[%s409 + $0x138] sm:$0xff]
          %561 = vst [vmem:[%s513] sm:$0xff] %v521
          %562 = vst [vmem:[%s513 + $0x8] sm:$0xff] %v522
          %563 = vst [vmem:[%s513 + $0x10] sm:$0xff] %v523
          %564 = vst [vmem:[%s513 + $0x18] sm:$0xff] %v524
          %565 = vst [vmem:[%s513 + $0x20] sm:$0xff] %v525
          %566 = vst [vmem:[%s513 + $0x28] sm:$0xff] %v526
          %567 = vst [vmem:[%s513 + $0x30] sm:$0xff] %v527
          %568 = vst [vmem:[%s513 + $0x38] sm:$0xff] %v528
          %569 = vst [vmem:[%s513 + $0x40] sm:$0xff] %v529
          %570 = vst [vmem:[%s513 + $0x48] sm:$0xff] %v530
          %571 = vst [vmem:[%s513 + $0x50] sm:$0xff] %v531
          %572 = vst [vmem:[%s513 + $0x58] sm:$0xff] %v532
          %573 = vst [vmem:[%s513 + $0x60] sm:$0xff] %v533
          %574 = vst [vmem:[%s513 + $0x68] sm:$0xff] %v534
          %575 = vst [vmem:[%s513 + $0x70] sm:$0xff] %v535
          %576 = vst [vmem:[%s513 + $0x78] sm:$0xff] %v536
          %577 = vst [vmem:[%s513 + $0x80] sm:$0xff] %v537
          %578 = vst [vmem:[%s513 + $0x88] sm:$0xff] %v538
          %579 = vst [vmem:[%s513 + $0x90] sm:$0xff] %v539
          %580 = vst [vmem:[%s513 + $0x98] sm:$0xff] %v540
          %581 = vst [vmem:[%s513 + $0xa0] sm:$0xff] %v541
          %582 = vst [vmem:[%s513 + $0xa8] sm:$0xff] %v542
          %583 = vst [vmem:[%s513 + $0xb0] sm:$0xff] %v543
          %584 = vst [vmem:[%s513 + $0xb8] sm:$0xff] %v544
          %585 = vst [vmem:[%s513 + $0xc0] sm:$0xff] %v545
          %586 = vst [vmem:[%s513 + $0xc8] sm:$0xff] %v546
          %587 = vst [vmem:[%s513 + $0xd0] sm:$0xff] %v547
          %588 = vst [vmem:[%s513 + $0xd8] sm:$0xff] %v548
          %589 = vst [vmem:[%s513 + $0xe0] sm:$0xff] %v549
          %590 = vst [vmem:[%s513 + $0xe8] sm:$0xff] %v550
          %591 = vst [vmem:[%s513 + $0xf0] sm:$0xff] %v551
          %592 = vst [vmem:[%s513 + $0xf8] sm:$0xff] %v552
          %593 = vst [vmem:[%s513 + $0x100] sm:$0xff] %v553
          %594 = vst [vmem:[%s513 + $0x108] sm:$0xff] %v554
          %595 = vst [vmem:[%s513 + $0x110] sm:$0xff] %v555
          %596 = vst [vmem:[%s513 + $0x118] sm:$0xff] %v556
          %597 = vst [vmem:[%s513 + $0x120] sm:$0xff] %v557
          %598 = vst [vmem:[%s513 + $0x128] sm:$0xff] %v558
          %599 = vst [vmem:[%s513 + $0x130] sm:$0xff] %v559
          %600 = vst [vmem:[%s513 + $0x138] sm:$0xff] %v560
        $region80: #{tpu_custom_call.1} parent=47 // pred_fallthru
          _
        %v601 = vld [vmem:[%s513] sm:$0xff]
        %v602 = vld [vmem:[%s513 + $0x8] sm:$0xff]
        %v603 = vld [vmem:[%s513 + $0x10] sm:$0xff]
        %v604 = vld [vmem:[%s513 + $0x18] sm:$0xff]
        %v605 = vld [vmem:[%s513 + $0x20] sm:$0xff]
        %v606 = vld [vmem:[%s513 + $0x28] sm:$0xff]
        %v607 = vld [vmem:[%s513 + $0x30] sm:$0xff]
        %v608 = vld [vmem:[%s513 + $0x38] sm:$0xff]
        %v609 = vld [vmem:[%s513 + $0x40] sm:$0xff]
        %v610 = vld [vmem:[%s513 + $0x48] sm:$0xff]
        %v611 = vld [vmem:[%s513 + $0x50] sm:$0xff]
        %v612 = vld [vmem:[%s513 + $0x58] sm:$0xff]
        %v613 = vld [vmem:[%s513 + $0x60] sm:$0xff]
        %v614 = vld [vmem:[%s513 + $0x68] sm:$0xff]
        %v615 = vld [vmem:[%s513 + $0x70] sm:$0xff]
        %v616 = vld [vmem:[%s513 + $0x78] sm:$0xff]
        %v617 = vld [vmem:[%s513 + $0x80] sm:$0xff]
        %v618 = vld [vmem:[%s513 + $0x88] sm:$0xff]
        %v619 = vld [vmem:[%s513 + $0x90] sm:$0xff]
        %v620 = vld [vmem:[%s513 + $0x98] sm:$0xff]
        %v621 = vld [vmem:[%s513 + $0xa0] sm:$0xff]
        %v622 = vld [vmem:[%s513 + $0xa8] sm:$0xff]
        %v623 = vld [vmem:[%s513 + $0xb0] sm:$0xff]
        %v624 = vld [vmem:[%s513 + $0xb8] sm:$0xff]
        %v625 = vld [vmem:[%s513 + $0xc0] sm:$0xff]
        %v626 = vld [vmem:[%s513 + $0xc8] sm:$0xff]
        %v627 = vld [vmem:[%s513 + $0xd0] sm:$0xff]
        %v628 = vld [vmem:[%s513 + $0xd8] sm:$0xff]
        %v629 = vld [vmem:[%s513 + $0xe0] sm:$0xff]
        %v630 = vld [vmem:[%s513 + $0xe8] sm:$0xff]
        %v631 = vld [vmem:[%s513 + $0xf0] sm:$0xff]
        %v632 = vld [vmem:[%s513 + $0xf8] sm:$0xff]
        %v633 = vld [vmem:[%s513 + $0x100] sm:$0xff]
        %v634 = vld [vmem:[%s513 + $0x108] sm:$0xff]
        %v635 = vld [vmem:[%s513 + $0x110] sm:$0xff]
        %v636 = vld [vmem:[%s513 + $0x118] sm:$0xff]
        %v637 = vld [vmem:[%s513 + $0x120] sm:$0xff]
        %v638 = vld [vmem:[%s513 + $0x128] sm:$0xff]
        %v639 = vld [vmem:[%s513 + $0x130] sm:$0xff]
        %v640 = vld [vmem:[%s513 + $0x138] sm:$0xff]
        %v641 = vld [vmem:[%s445] sm:$0xff]
        %v642 = vld [vmem:[%s445 + $0x8] sm:$0xff]
        %v643 = vld [vmem:[%s445 + $0x10] sm:$0x1]
        %v644 = vld [vmem:[%s445 + $0x18] sm:$0x1]
        %v645 = vld [vmem:[%s454] sm:$0xff]
        %v646 = vlaneseq
        %v647 = vshrl.u32 %v646, 7
        %v648 = vadd.s32 %v647, 8
        %v649 = vadd.s32 %v647, 16
        %v650 = vadd.s32 %v647, 24
        %v651 = vadd.s32 %v647, 32
        %v652 = vadd.s32 %v647, 40
        %v653 = vadd.s32 %v647, 48
        %v654 = vadd.s32 %v647, 56
        %v655 = vadd.s32 %v647, 64
        %v656 = vadd.s32 %v647, 72
        %v657 = vlaneseq
        %v658 = vand.u32 %v657, 127
        %vm659 = vcmp.gt.s32.totalorder %v658, %v647
        %vm660 = vcmp.gt.s32.totalorder %v658, %v648
        %vm661 = vcmp.gt.s32.totalorder %v658, %v649
        %vm662 = vcmp.gt.s32.totalorder %v658, %v650
        %vm663 = vcmp.gt.s32.totalorder %v658, %v651
        %vm664 = vcmp.gt.s32.totalorder %v658, %v652
        %vm665 = vcmp.gt.s32.totalorder %v658, %v653
        %vm666 = vcmp.gt.s32.totalorder %v658, %v654
        %vm667 = vcmp.gt.s32.totalorder %v658, %v655
        %vm668 = vcmp.gt.s32.totalorder %v658, %v656
        %v669 = vadd.f32 %v601, %v602
        %670 = vadd.xlane.f32.xlu0 %v669
        %v671 = vpop.xlane.xlu0 %670
        %v672 = vadd.f32 %v603, %v604
        %673 = vadd.xlane.f32.xlu0 %v672
        %v674 = vpop.xlane.xlu0 %673
        %v675 = vadd.f32 %v605, %v606
        %676 = vadd.xlane.f32.xlu0 %v675
        %v677 = vpop.xlane.xlu0 %676
        %v678 = vadd.f32 %v607, %v608
        %679 = vadd.xlane.f32.xlu0 %v678
        %v680 = vpop.xlane.xlu0 %679
        %v681 = vadd.f32 %v609, %v610
        %682 = vadd.xlane.f32.xlu0 %v681
        %v683 = vpop.xlane.xlu0 %682
        %v684 = vadd.f32 %v611, %v612
        %685 = vadd.xlane.f32.xlu0 %v684
        %v686 = vpop.xlane.xlu0 %685
        %v687 = vadd.f32 %v613, %v614
        %688 = vadd.xlane.f32.xlu0 %v687
        %v689 = vpop.xlane.xlu0 %688
        %v690 = vadd.f32 %v615, %v616
        %691 = vadd.xlane.f32.xlu0 %v690
        %v692 = vpop.xlane.xlu0 %691
        %v693 = vadd.f32 %v617, %v618
        %694 = vadd.xlane.f32.xlu0 %v693
        %v695 = vpop.xlane.xlu0 %694
        %v696 = vadd.f32 %v619, %v620
        %697 = vadd.xlane.f32.xlu0 %v696
        %v698 = vpop.xlane.xlu0 %697
        %v699 = vadd.f32 %v621, %v622
        %700 = vadd.xlane.f32.xlu0 %v699
        %v701 = vpop.xlane.xlu0 %700
        %v702 = vadd.f32 %v623, %v624
        %703 = vadd.xlane.f32.xlu0 %v702
        %v704 = vpop.xlane.xlu0 %703
        %v705 = vadd.f32 %v625, %v626
        %706 = vadd.xlane.f32.xlu0 %v705
        %v707 = vpop.xlane.xlu0 %706
        %v708 = vadd.f32 %v627, %v628
        %709 = vadd.xlane.f32.xlu0 %v708
        %v710 = vpop.xlane.xlu0 %709
        %v711 = vadd.f32 %v629, %v630
        %712 = vadd.xlane.f32.xlu0 %v711
        %v713 = vpop.xlane.xlu0 %712
        %v714 = vadd.f32 %v631, %v632
        %715 = vadd.xlane.f32.xlu0 %v714
        %v716 = vpop.xlane.xlu0 %715
        %v717 = vadd.f32 %v633, %v634
        %718 = vadd.xlane.f32.xlu0 %v717
        %v719 = vpop.xlane.xlu0 %718
        %v720 = vadd.f32 %v635, %v636
        %721 = vadd.xlane.f32.xlu0 %v720
        %v722 = vpop.xlane.xlu0 %721
        %v723 = vadd.f32 %v637, %v638
        %724 = vadd.xlane.f32.xlu0 %v723
        %v725 = vpop.xlane.xlu0 %724
        %v726 = vadd.f32 %v639, %v640
        %727 = vadd.xlane.f32.xlu0 %v726
        %v728 = vpop.xlane.xlu0 %727
        %v729 = vrcp.pop 256.0
        %v730 = vmul.f32 %v671, %v729
        %v731 = vmul.f32 %v674, %v729
        %v732 = vmul.f32 %v677, %v729
        %v733 = vmul.f32 %v680, %v729
        %v734 = vmul.f32 %v683, %v729
        %v735 = vmul.f32 %v686, %v729
        %v736 = vmul.f32 %v689, %v729
        %v737 = vmul.f32 %v692, %v729
        %v738 = vmul.f32 %v695, %v729
        %v739 = vmul.f32 %v698, %v729
        %v740 = vmul.f32 %v701, %v729
        %v741 = vmul.f32 %v704, %v729
        %v742 = vmul.f32 %v707, %v729
        %v743 = vmul.f32 %v710, %v729
        %v744 = vmul.f32 %v713, %v729
        %v745 = vmul.f32 %v716, %v729
        %v746 = vmul.f32 %v719, %v729
        %v747 = vmul.f32 %v722, %v729
        %v748 = vmul.f32 %v725, %v729
        %v749 = vmul.f32 %v728, %v729
        %v750 = vsub.f32 %v601, %v730
        %v751 = vsub.f32 %v602, %v730
        %v752 = vsub.f32 %v603, %v731
        %v753 = vsub.f32 %v604, %v731
        %v754 = vsub.f32 %v605, %v732
        %v755 = vsub.f32 %v606, %v732
        %v756 = vsub.f32 %v607, %v733
        %v757 = vsub.f32 %v608, %v733
        %v758 = vsub.f32 %v609, %v734
        %v759 = vsub.f32 %v610, %v734
        %v760 = vsub.f32 %v611, %v735
        %v761 = vsub.f32 %v612, %v735
        %v762 = vsub.f32 %v613, %v736
        %v763 = vsub.f32 %v614, %v736
        %v764 = vsub.f32 %v615, %v737
        %v765 = vsub.f32 %v616, %v737
        %v766 = vsub.f32 %v617, %v738
        %v767 = vsub.f32 %v618, %v738
        %v768 = vsub.f32 %v619, %v739
        %v769 = vsub.f32 %v620, %v739
        %v770 = vsub.f32 %v621, %v740
        %v771 = vsub.f32 %v622, %v740
        %v772 = vsub.f32 %v623, %v741
        %v773 = vsub.f32 %v624, %v741
        %v774 = vsub.f32 %v625, %v742
        %v775 = vsub.f32 %v626, %v742
        %v776 = vsub.f32 %v627, %v743
        %v777 = vsub.f32 %v628, %v743
        %v778 = vsub.f32 %v629, %v744
        %v779 = vsub.f32 %v630, %v744
        %v780 = vsub.f32 %v631, %v745
        %v781 = vsub.f32 %v632, %v745
        %v782 = vsub.f32 %v633, %v746
        %v783 = vsub.f32 %v634, %v746
        %v784 = vsub.f32 %v635, %v747
        %v785 = vsub.f32 %v636, %v747
        %v786 = vsub.f32 %v637, %v748
        %v787 = vsub.f32 %v638, %v748
        %v788 = vsub.f32 %v639, %v749
        %v789 = vsub.f32 %v640, %v749
        %v790 = vmul.f32 %v750, %v750
        %v791 = vmul.f32 %v751, %v751
        %v792 = vmul.f32 %v752, %v752
        %v793 = vmul.f32 %v753, %v753
        %v794 = vmul.f32 %v754, %v754
        %v795 = vmul.f32 %v755, %v755
        %v796 = vmul.f32 %v756, %v756
        %v797 = vmul.f32 %v757, %v757
        %v798 = vmul.f32 %v758, %v758
        %v799 = vmul.f32 %v759, %v759
        %v800 = vmul.f32 %v760, %v760
        %v801 = vmul.f32 %v761, %v761
        %v802 = vmul.f32 %v762, %v762
        %v803 = vmul.f32 %v763, %v763
        %v804 = vmul.f32 %v764, %v764
        %v805 = vmul.f32 %v765, %v765
        %v806 = vmul.f32 %v766, %v766
        %v807 = vmul.f32 %v767, %v767
        %v808 = vmul.f32 %v768, %v768
        %v809 = vmul.f32 %v769, %v769
        %v810 = vmul.f32 %v770, %v770
        %v811 = vmul.f32 %v771, %v771
        %v812 = vmul.f32 %v772, %v772
        %v813 = vmul.f32 %v773, %v773
        %v814 = vmul.f32 %v774, %v774
        %v815 = vmul.f32 %v775, %v775
        %v816 = vmul.f32 %v776, %v776
        %v817 = vmul.f32 %v777, %v777
        %v818 = vmul.f32 %v778, %v778
        %v819 = vmul.f32 %v779, %v779
        %v820 = vmul.f32 %v780, %v780
        %v821 = vmul.f32 %v781, %v781
        %v822 = vmul.f32 %v782, %v782
        %v823 = vmul.f32 %v783, %v783
        %v824 = vmul.f32 %v784, %v784
        %v825 = vmul.f32 %v785, %v785
        %v826 = vmul.f32 %v786, %v786
        %v827 = vmul.f32 %v787, %v787
        %v828 = vmul.f32 %v788, %v788
        %v829 = vmul.f32 %v789, %v789
        %v830 = vadd.f32 %v790, %v791
        %831 = vadd.xlane.f32.xlu0 %v830
        %v832 = vpop.xlane.xlu0 %831
        %v833 = vadd.f32 %v792, %v793
        %834 = vadd.xlane.f32.xlu0 %v833
        %v835 = vpop.xlane.xlu0 %834
        %v836 = vadd.f32 %v794, %v795
        %837 = vadd.xlane.f32.xlu0 %v836
        %v838 = vpop.xlane.xlu0 %837
        %v839 = vadd.f32 %v796, %v797
        %840 = vadd.xlane.f32.xlu0 %v839
        %v841 = vpop.xlane.xlu0 %840
        %v842 = vadd.f32 %v798, %v799
        %843 = vadd.xlane.f32.xlu0 %v842
        %v844 = vpop.xlane.xlu0 %843
        %v845 = vadd.f32 %v800, %v801
        %846 = vadd.xlane.f32.xlu0 %v845
        %v847 = vpop.xlane.xlu0 %846
        %v848 = vadd.f32 %v802, %v803
        %849 = vadd.xlane.f32.xlu0 %v848
        %v850 = vpop.xlane.xlu0 %849
        %v851 = vadd.f32 %v804, %v805
        %852 = vadd.xlane.f32.xlu0 %v851
        %v853 = vpop.xlane.xlu0 %852
        %v854 = vadd.f32 %v806, %v807
        %855 = vadd.xlane.f32.xlu0 %v854
        %v856 = vpop.xlane.xlu0 %855
        %v857 = vadd.f32 %v808, %v809
        %858 = vadd.xlane.f32.xlu0 %v857
        %v859 = vpop.xlane.xlu0 %858
        %v860 = vadd.f32 %v810, %v811
        %861 = vadd.xlane.f32.xlu0 %v860
        %v862 = vpop.xlane.xlu0 %861
        %v863 = vadd.f32 %v812, %v813
        %864 = vadd.xlane.f32.xlu0 %v863
        %v865 = vpop.xlane.xlu0 %864
        %v866 = vadd.f32 %v814, %v815
        %867 = vadd.xlane.f32.xlu0 %v866
        %v868 = vpop.xlane.xlu0 %867
        %v869 = vadd.f32 %v816, %v817
        %870 = vadd.xlane.f32.xlu0 %v869
        %v871 = vpop.xlane.xlu0 %870
        %v872 = vadd.f32 %v818, %v819
        %873 = vadd.xlane.f32.xlu0 %v872
        %v874 = vpop.xlane.xlu0 %873
        %v875 = vadd.f32 %v820, %v821
        %876 = vadd.xlane.f32.xlu0 %v875
        %v877 = vpop.xlane.xlu0 %876
        %v878 = vadd.f32 %v822, %v823
        %879 = vadd.xlane.f32.xlu0 %v878
        %v880 = vpop.xlane.xlu0 %879
        %v881 = vadd.f32 %v824, %v825
        %882 = vadd.xlane.f32.xlu0 %v881
        %v883 = vpop.xlane.xlu0 %882
        %v884 = vadd.f32 %v826, %v827
        %885 = vadd.xlane.f32.xlu0 %v884
        %v886 = vpop.xlane.xlu0 %885
        %v887 = vadd.f32 %v828, %v829
        %888 = vadd.xlane.f32.xlu0 %v887
        %v889 = vpop.xlane.xlu0 %888
        %v890 = vmul.f32 %v832, %v729
        %v891 = vmul.f32 %v835, %v729
        %v892 = vmul.f32 %v838, %v729
        %v893 = vmul.f32 %v841, %v729
        %v894 = vmul.f32 %v844, %v729
        %v895 = vmul.f32 %v847, %v729
        %v896 = vmul.f32 %v850, %v729
        %v897 = vmul.f32 %v853, %v729
        %v898 = vmul.f32 %v856, %v729
        %v899 = vmul.f32 %v859, %v729
        %v900 = vmul.f32 %v862, %v729
        %v901 = vmul.f32 %v865, %v729
        %v902 = vmul.f32 %v868, %v729
        %v903 = vmul.f32 %v871, %v729
        %v904 = vmul.f32 %v874, %v729
        %v905 = vmul.f32 %v877, %v729
        %v906 = vmul.f32 %v880, %v729
        %v907 = vmul.f32 %v883, %v729
        %v908 = vmul.f32 %v886, %v729
        %v909 = vmul.f32 %v889, %v729
        %v910 = vadd.f32 %v890, 1e-05
        %v911 = vadd.f32 %v891, 1e-05
        %v912 = vadd.f32 %v892, 1e-05
        %v913 = vadd.f32 %v893, 1e-05
        %v914 = vadd.f32 %v894, 1e-05
        %v915 = vadd.f32 %v895, 1e-05
        %v916 = vadd.f32 %v896, 1e-05
        %v917 = vadd.f32 %v897, 1e-05
        %v918 = vadd.f32 %v898, 1e-05
        %v919 = vadd.f32 %v899, 1e-05
        %v920 = vadd.f32 %v900, 1e-05
        %v921 = vadd.f32 %v901, 1e-05
        %v922 = vadd.f32 %v902, 1e-05
        %v923 = vadd.f32 %v903, 1e-05
        %v924 = vadd.f32 %v904, 1e-05
        %v925 = vadd.f32 %v905, 1e-05
        %v926 = vadd.f32 %v906, 1e-05
        %v927 = vadd.f32 %v907, 1e-05
        %v928 = vadd.f32 %v908, 1e-05
        %v929 = vadd.f32 %v909, 1e-05
        %v930 = vrsqrt.pop %v910
        %v931 = vrsqrt.pop %v911
        %v932 = vrsqrt.pop %v912
        %v933 = vrsqrt.pop %v913
        %v934 = vrsqrt.pop %v914
        %v935 = vrsqrt.pop %v915
        %v936 = vrsqrt.pop %v916
        %v937 = vrsqrt.pop %v917
        %v938 = vrsqrt.pop %v918
        %v939 = vrsqrt.pop %v919
        %v940 = vrsqrt.pop %v920
        %v941 = vrsqrt.pop %v921
        %v942 = vrsqrt.pop %v922
        %v943 = vrsqrt.pop %v923
        %v944 = vrsqrt.pop %v924
        %v945 = vrsqrt.pop %v925
        %v946 = vrsqrt.pop %v926
        %v947 = vrsqrt.pop %v927
        %v948 = vrsqrt.pop %v928
        %v949 = vrsqrt.pop %v929
        %v950 = vmul.f32 %v750, %v930
        %v951 = vmul.f32 %v751, %v930
        %v952 = vmul.f32 %v752, %v931
        %v953 = vmul.f32 %v753, %v931
        %v954 = vmul.f32 %v754, %v932
        %v955 = vmul.f32 %v755, %v932
        %v956 = vmul.f32 %v756, %v933
        %v957 = vmul.f32 %v757, %v933
        %v958 = vmul.f32 %v758, %v934
        %v959 = vmul.f32 %v759, %v934
        %v960 = vmul.f32 %v760, %v935
        %v961 = vmul.f32 %v761, %v935
        %v962 = vmul.f32 %v762, %v936
        %v963 = vmul.f32 %v763, %v936
        %v964 = vmul.f32 %v764, %v937
        %v965 = vmul.f32 %v765, %v937
        %v966 = vmul.f32 %v766, %v938
        %v967 = vmul.f32 %v767, %v938
        %v968 = vmul.f32 %v768, %v939
        %v969 = vmul.f32 %v769, %v939
        %v970 = vmul.f32 %v770, %v940
        %v971 = vmul.f32 %v771, %v940
        %v972 = vmul.f32 %v772, %v941
        %v973 = vmul.f32 %v773, %v941
        %v974 = vmul.f32 %v774, %v942
        %v975 = vmul.f32 %v775, %v942
        %v976 = vmul.f32 %v776, %v943
        %v977 = vmul.f32 %v777, %v943
        %v978 = vmul.f32 %v778, %v944
        %v979 = vmul.f32 %v779, %v944
        %v980 = vmul.f32 %v780, %v945
        %v981 = vmul.f32 %v781, %v945
        %v982 = vmul.f32 %v782, %v946
        %v983 = vmul.f32 %v783, %v946
        %v984 = vmul.f32 %v784, %v947
        %v985 = vmul.f32 %v785, %v947
        %v986 = vmul.f32 %v786, %v948
        %v987 = vmul.f32 %v787, %v948
        %v988 = vmul.f32 %v788, %v949
        %v989 = vmul.f32 %v789, %v949
        %v990 = vlaneseq
        %v991 = vshrl.u32 %v990, 7
        %v992 = vsub.s32 0, %v991
        %v993 = vrot.slane %v641, %v992
        %v994 = vlaneseq
        %v995 = vshrl.u32 %v994, 7
        %v996 = vsub.s32 0, %v995
        %v997 = vrot.slane %v642, %v996
        %v998 = vmul.f32 %v950, %v993
        %v999 = vmul.f32 %v951, %v997
        %v1000 = vmul.f32 %v952, %v993
        %v1001 = vmul.f32 %v953, %v997
        %v1002 = vmul.f32 %v954, %v993
        %v1003 = vmul.f32 %v955, %v997
        %v1004 = vmul.f32 %v956, %v993
        %v1005 = vmul.f32 %v957, %v997
        %v1006 = vmul.f32 %v958, %v993
        %v1007 = vmul.f32 %v959, %v997
        %v1008 = vmul.f32 %v960, %v993
        %v1009 = vmul.f32 %v961, %v997
        %v1010 = vmul.f32 %v962, %v993
        %v1011 = vmul.f32 %v963, %v997
        %v1012 = vmul.f32 %v964, %v993
        %v1013 = vmul.f32 %v965, %v997
        %v1014 = vmul.f32 %v966, %v993
        %v1015 = vmul.f32 %v967, %v997
        %v1016 = vmul.f32 %v968, %v993
        %v1017 = vmul.f32 %v969, %v997
        %v1018 = vmul.f32 %v970, %v993
        %v1019 = vmul.f32 %v971, %v997
        %v1020 = vmul.f32 %v972, %v993
        %v1021 = vmul.f32 %v973, %v997
        %v1022 = vmul.f32 %v974, %v993
        %v1023 = vmul.f32 %v975, %v997
        %v1024 = vmul.f32 %v976, %v993
        %v1025 = vmul.f32 %v977, %v997
        %v1026 = vmul.f32 %v978, %v993
        %v1027 = vmul.f32 %v979, %v997
        %v1028 = vmul.f32 %v980, %v993
        %v1029 = vmul.f32 %v981, %v997
        %v1030 = vmul.f32 %v982, %v993
        %v1031 = vmul.f32 %v983, %v997
        %v1032 = vmul.f32 %v984, %v993
        %v1033 = vmul.f32 %v985, %v997
        %v1034 = vmul.f32 %v986, %v993
        %v1035 = vmul.f32 %v987, %v997
        %v1036 = vmul.f32 %v988, %v993
        %v1037 = vmul.f32 %v989, %v997
        %v1038 = vlaneseq
        %v1039 = vshrl.u32 %v1038, 7
        %v1040 = vsub.s32 1, %v1039
        %v1041 = vrot.slane %v641, %v1040
        %v1042 = vlaneseq
        %v1043 = vshrl.u32 %v1042, 7
        %v1044 = vsub.s32 1, %v1043
        %v1045 = vrot.slane %v642, %v1044
        %v1046 = vadd.f32 %v998, %v1041
        %v1047 = vadd.f32 %v999, %v1045
        %v1048 = vadd.f32 %v1000, %v1041
        %v1049 = vadd.f32 %v1001, %v1045
        %v1050 = vadd.f32 %v1002, %v1041
        %v1051 = vadd.f32 %v1003, %v1045
        %v1052 = vadd.f32 %v1004, %v1041
        %v1053 = vadd.f32 %v1005, %v1045
        %v1054 = vadd.f32 %v1006, %v1041
        %v1055 = vadd.f32 %v1007, %v1045
        %v1056 = vadd.f32 %v1008, %v1041
        %v1057 = vadd.f32 %v1009, %v1045
        %v1058 = vadd.f32 %v1010, %v1041
        %v1059 = vadd.f32 %v1011, %v1045
        %v1060 = vadd.f32 %v1012, %v1041
        %v1061 = vadd.f32 %v1013, %v1045
        %v1062 = vadd.f32 %v1014, %v1041
        %v1063 = vadd.f32 %v1015, %v1045
        %v1064 = vadd.f32 %v1016, %v1041
        %v1065 = vadd.f32 %v1017, %v1045
        %v1066 = vadd.f32 %v1018, %v1041
        %v1067 = vadd.f32 %v1019, %v1045
        %v1068 = vadd.f32 %v1020, %v1041
        %v1069 = vadd.f32 %v1021, %v1045
        %v1070 = vadd.f32 %v1022, %v1041
        %v1071 = vadd.f32 %v1023, %v1045
        %v1072 = vadd.f32 %v1024, %v1041
        %v1073 = vadd.f32 %v1025, %v1045
        %v1074 = vadd.f32 %v1026, %v1041
        %v1075 = vadd.f32 %v1027, %v1045
        %v1076 = vadd.f32 %v1028, %v1041
        %v1077 = vadd.f32 %v1029, %v1045
        %v1078 = vadd.f32 %v1030, %v1041
        %v1079 = vadd.f32 %v1031, %v1045
        %v1080 = vadd.f32 %v1032, %v1041
        %v1081 = vadd.f32 %v1033, %v1045
        %v1082 = vadd.f32 %v1034, %v1041
        %v1083 = vadd.f32 %v1035, %v1045
        %v1084 = vadd.f32 %v1036, %v1041
        %v1085 = vadd.f32 %v1037, %v1045
        %v1086 = vpack.c.bf16 %v1048, %v1046
        %v1087 = vpack.c.bf16 %v1049, %v1047
        %v1088 = vpack.c.bf16 %v1052, %v1050
        %v1089 = vpack.c.bf16 %v1053, %v1051
        %v1090 = vpack.c.bf16 %v1056, %v1054
        %v1091 = vpack.c.bf16 %v1057, %v1055
        %v1092 = vpack.c.bf16 %v1060, %v1058
        %v1093 = vpack.c.bf16 %v1061, %v1059
        %v1094 = vpack.c.bf16 %v1064, %v1062
        %v1095 = vpack.c.bf16 %v1065, %v1063
        %v1096 = vpack.c.bf16 %v1068, %v1066
        %v1097 = vpack.c.bf16 %v1069, %v1067
        %v1098 = vpack.c.bf16 %v1072, %v1070
        %v1099 = vpack.c.bf16 %v1073, %v1071
        %v1100 = vpack.c.bf16 %v1076, %v1074
        %v1101 = vpack.c.bf16 %v1077, %v1075
        %v1102 = vpack.c.bf16 %v1080, %v1078
        %v1103 = vpack.c.bf16 %v1081, %v1079
        %v1104 = vpack.c.bf16 %v1084, %v1082
        %v1105 = vpack.c.bf16 %v1085, %v1083
        %v1106 = vld [vmem:[%s418] sm:$0xff]
        %v1107 = vld [vmem:[%s418 + $0x8] sm:$0xff]
        %v1108 = vld [vmem:[%s418 + $0x10] sm:$0xff]
        %v1109 = vld [vmem:[%s418 + $0x18] sm:$0xff]
        %v1110 = vld [vmem:[%s418 + $0x20] sm:$0xff]
        %v1111 = vld [vmem:[%s418 + $0x28] sm:$0xff]
        %v1112 = vld [vmem:[%s418 + $0x30] sm:$0xff]
        %v1113 = vld [vmem:[%s418 + $0x38] sm:$0xff]
        %v1114 = vld [vmem:[%s418 + $0x40] sm:$0xff]
        %v1115 = vld [vmem:[%s418 + $0x48] sm:$0xff]
        %v1116 = vld [vmem:[%s418 + $0x50] sm:$0xff]
        %v1117 = vld [vmem:[%s418 + $0x58] sm:$0xff]
        %v1118 = vld [vmem:[%s418 + $0x60] sm:$0xff]
        %v1119 = vld [vmem:[%s418 + $0x68] sm:$0xff]
        %v1120 = vld [vmem:[%s418 + $0x70] sm:$0xff]
        %v1121 = vld [vmem:[%s418 + $0x78] sm:$0xff]
        %v1122 = vld [vmem:[%s418 + $0x80] sm:$0xff]
        %v1123 = vld [vmem:[%s418 + $0x88] sm:$0xff]
        %v1124 = vld [vmem:[%s418 + $0x90] sm:$0xff]
        %v1125 = vld [vmem:[%s418 + $0x98] sm:$0xff]
        %v1126 = vld [vmem:[%s418 + $0xa0] sm:$0xff]
        %v1127 = vld [vmem:[%s418 + $0xa8] sm:$0xff]
        %v1128 = vld [vmem:[%s418 + $0xb0] sm:$0xff]
        %v1129 = vld [vmem:[%s418 + $0xb8] sm:$0xff]
        %v1130 = vld [vmem:[%s418 + $0xc0] sm:$0xff]
        %v1131 = vld [vmem:[%s418 + $0xc8] sm:$0xff]
        %v1132 = vld [vmem:[%s418 + $0xd0] sm:$0xff]
        %v1133 = vld [vmem:[%s418 + $0xd8] sm:$0xff]
        %v1134 = vld [vmem:[%s418 + $0xe0] sm:$0xff]
        %v1135 = vld [vmem:[%s418 + $0xe8] sm:$0xff]
        %v1136 = vld [vmem:[%s418 + $0xf0] sm:$0xff]
        %v1137 = vld [vmem:[%s418 + $0xf8] sm:$0xff]
        %v1138 = vlaneseq
        %v1139 = vshrl.u32 %v1138, 7
        %v1140 = vsub.s32 4, %v1139
        %v1141 = vrot.slane %v641, %v1140
        %v1142 = vlaneseq
        %v1143 = vshrl.u32 %v1142, 7
        %v1144 = vsub.s32 4, %v1143
        %v1145 = vrot.slane %v642, %v1144
        %v1178 = vunpack.c.l.b16 %v1106
        %v1179 = vunpack.c.h.b16 %v1106
        %v1180 = vunpack.c.l.b16 %v1107
        %v1181 = vunpack.c.h.b16 %v1107
        %v1182 = vunpack.c.l.b16 %v1108
        %v1183 = vunpack.c.h.b16 %v1108
        %v1184 = vunpack.c.l.b16 %v1109
        %v1185 = vunpack.c.h.b16 %v1109
        %v1186 = vunpack.c.l.b16 %v1110
        %v1187 = vunpack.c.h.b16 %v1110
        %v1188 = vunpack.c.l.b16 %v1111
        %v1189 = vunpack.c.h.b16 %v1111
        %v1190 = vunpack.c.l.b16 %v1112
        %v1191 = vunpack.c.h.b16 %v1112
        %v1192 = vunpack.c.l.b16 %v1113
        %v1193 = vunpack.c.h.b16 %v1113
        %v1194 = vunpack.c.l.b16 %v1114
        %v1195 = vunpack.c.h.b16 %v1114
        %v1196 = vunpack.c.l.b16 %v1115
        %v1197 = vunpack.c.h.b16 %v1115
        %v1198 = vunpack.c.l.b16 %v1116
        %v1199 = vunpack.c.h.b16 %v1116
        %v1200 = vunpack.c.l.b16 %v1117
        %v1201 = vunpack.c.h.b16 %v1117
        %v1202 = vunpack.c.l.b16 %v1118
        %v1203 = vunpack.c.h.b16 %v1118
        %v1204 = vunpack.c.l.b16 %v1119
        %v1205 = vunpack.c.h.b16 %v1119
        %v1206 = vunpack.c.l.b16 %v1120
        %v1207 = vunpack.c.h.b16 %v1120
        %v1208 = vunpack.c.l.b16 %v1121
        %v1209 = vunpack.c.h.b16 %v1121
        %v1210 = vunpack.c.l.b16 %v1122
        %v1211 = vunpack.c.h.b16 %v1122
        %v1212 = vunpack.c.l.b16 %v1123
        %v1213 = vunpack.c.h.b16 %v1123
        %v1214 = vunpack.c.l.b16 %v1124
        %v1215 = vunpack.c.h.b16 %v1124
        %v1216 = vunpack.c.l.b16 %v1125
        %v1217 = vunpack.c.h.b16 %v1125
        %v1218 = vunpack.c.l.b16 %v1126
        %v1219 = vunpack.c.h.b16 %v1126
        %v1220 = vunpack.c.l.b16 %v1127
        %v1221 = vunpack.c.h.b16 %v1127
        %v1222 = vunpack.c.l.b16 %v1128
        %v1223 = vunpack.c.h.b16 %v1128
        %v1224 = vunpack.c.l.b16 %v1129
        %v1225 = vunpack.c.h.b16 %v1129
        %v1226 = vunpack.c.l.b16 %v1130
        %v1227 = vunpack.c.h.b16 %v1130
        %v1228 = vunpack.c.l.b16 %v1131
        %v1229 = vunpack.c.h.b16 %v1131
        %v1230 = vunpack.c.l.b16 %v1132
        %v1231 = vunpack.c.h.b16 %v1132
        %v1232 = vunpack.c.l.b16 %v1133
        %v1233 = vunpack.c.h.b16 %v1133
        %v1234 = vunpack.c.l.b16 %v1134
        %v1235 = vunpack.c.h.b16 %v1134
        %v1236 = vunpack.c.l.b16 %v1135
        %v1237 = vunpack.c.h.b16 %v1135
        %v1238 = vunpack.c.l.b16 %v1136
        %v1239 = vunpack.c.h.b16 %v1136
        %v1240 = vunpack.c.l.b16 %v1137
        %v1241 = vunpack.c.h.b16 %v1137
        %v1242 = vpack.c.b16 %v1180, %v1178
        %v1243 = vpack.c.b16 %v1181, %v1179
        %v1244 = vpack.c.b16 %v1184, %v1182
        %v1245 = vpack.c.b16 %v1185, %v1183
        %v1246 = vpack.c.b16 %v1188, %v1186
        %v1247 = vpack.c.b16 %v1189, %v1187
        %v1248 = vpack.c.b16 %v1192, %v1190
        %v1249 = vpack.c.b16 %v1193, %v1191
        %v1250 = vpack.c.b16 %v1196, %v1194
        %v1251 = vpack.c.b16 %v1197, %v1195
        %v1252 = vpack.c.b16 %v1200, %v1198
        %v1253 = vpack.c.b16 %v1201, %v1199
        %v1254 = vpack.c.b16 %v1204, %v1202
        %v1255 = vpack.c.b16 %v1205, %v1203
        %v1256 = vpack.c.b16 %v1208, %v1206
        %v1257 = vpack.c.b16 %v1209, %v1207
        %v1258 = vpack.c.b16 %v1212, %v1210
        %v1259 = vpack.c.b16 %v1213, %v1211
        %v1260 = vpack.c.b16 %v1216, %v1214
        %v1261 = vpack.c.b16 %v1217, %v1215
        %v1262 = vpack.c.b16 %v1220, %v1218
        %v1263 = vpack.c.b16 %v1221, %v1219
        %v1264 = vpack.c.b16 %v1224, %v1222
        %v1265 = vpack.c.b16 %v1225, %v1223
        %v1266 = vpack.c.b16 %v1228, %v1226
        %v1267 = vpack.c.b16 %v1229, %v1227
        %v1268 = vpack.c.b16 %v1232, %v1230
        %v1269 = vpack.c.b16 %v1233, %v1231
        %v1270 = vpack.c.b16 %v1236, %v1234
        %v1271 = vpack.c.b16 %v1237, %v1235
        %v1272 = vpack.c.b16 %v1240, %v1238
        %v1273 = vpack.c.b16 %v1241, %v1239
        %1306 = vmatprep.subr.bf16.mxu0 %v1243
        %1307 = vmatpush1.bf16.msra.mxu0 %v1242
        %1308 = vmatprep.subr.bf16.mxu0 %v1245
        %1309 = vmatpush1.bf16.msra.mxu0 %v1244
        %1310 = vmatprep.subr.bf16.mxu0 %v1247
        %1311 = vmatpush1.bf16.msra.mxu0 %v1246
        %1312 = vmatprep.subr.bf16.mxu0 %v1249
        %1313 = vmatpush1.bf16.msra.mxu0 %v1248
        %1314 = vmatprep.subr.bf16.mxu0 %v1251
        %1315 = vmatpush1.bf16.msra.mxu0 %v1250
        %1316 = vmatprep.subr.bf16.mxu0 %v1253
        %1317 = vmatpush1.bf16.msra.mxu0 %v1252
        %1318 = vmatprep.subr.bf16.mxu0 %v1255
        %1319 = vmatpush1.bf16.msra.mxu0 %v1254
        %1320 = vmatprep.subr.bf16.mxu0 %v1257
        %1321 = vmatpush1.bf16.msra.mxu0 %v1256
        %1322 = vmatprep.subr.bf16.mxu0 %v1259
        %1323 = vmatpush1.bf16.msra.mxu0 %v1258
        %1324 = vmatprep.subr.bf16.mxu0 %v1261
        %1325 = vmatpush1.bf16.msra.mxu0 %v1260
        %1326 = vmatprep.subr.bf16.mxu0 %v1263
        %1327 = vmatpush1.bf16.msra.mxu0 %v1262
        %1328 = vmatprep.subr.bf16.mxu0 %v1265
        %1329 = vmatpush1.bf16.msra.mxu0 %v1264
        %1330 = vmatprep.subr.bf16.mxu0 %v1267
        %1331 = vmatpush1.bf16.msra.mxu0 %v1266
        %1332 = vmatprep.subr.bf16.mxu0 %v1269
        %1333 = vmatpush1.bf16.msra.mxu0 %v1268
        %1334 = vmatprep.subr.bf16.mxu0 %v1271
        %1335 = vmatpush1.bf16.msra.mxu0 %v1270
        %1336 = vmatprep.subr.bf16.mxu0 %v1273
        %1337 = vmatpush1.bf16.msra.mxu0 %v1272
        %1338 = vmatprep.mubr.bf16.mxu0 %v1087
        %1339 = vmatmul.mubr.bf16.gmra.mrb[0].mxu0 %v1086
        %v1340 = vpop.f32.mrb[0].mxu0
        %v1341 = vadd.f32 %v1141, %v1340
        %v1342 = vpop.f32.mrb[0].mxu0
        %v1343 = vadd.f32 %v1145, %v1342
        %v1344 = vpop.f32.mrb[0].mxu0
        %v1345 = vadd.f32 %v1141, %v1344
        %v1346 = vpop.f32.mrb[0].mxu0
        %v1347 = vadd.f32 %v1145, %v1346
        %1348 = vmatprep.mubr.bf16.mxu0 %v1089
        %1349 = vmatmul.mubr.bf16.gmra.mrb[0].mxu0 %v1088
        %v1350 = vpop.f32.mrb[0].mxu0
        %v1351 = vadd.f32 %v1141, %v1350
        %v1352 = vpop.f32.mrb[0].mxu0
        %v1353 = vadd.f32 %v1145, %v1352
        %v1354 = vpop.f32.mrb[0].mxu0
        %v1355 = vadd.f32 %v1141, %v1354
        %v1356 = vpop.f32.mrb[0].mxu0
        %v1357 = vadd.f32 %v1145, %v1356
        %1358 = vmatprep.mubr.bf16.mxu0 %v1091
        %1359 = vmatmul.mubr.bf16.gmra.mrb[0].mxu0 %v1090
        %v1360 = vpop.f32.mrb[0].mxu0
        %v1361 = vadd.f32 %v1141, %v1360
        %v1362 = vpop.f32.mrb[0].mxu0
        %v1363 = vadd.f32 %v1145, %v1362
        %v1364 = vpop.f32.mrb[0].mxu0
        %v1365 = vadd.f32 %v1141, %v1364
        %v1366 = vpop.f32.mrb[0].mxu0
        %v1367 = vadd.f32 %v1145, %v1366
        %1368 = vmatprep.mubr.bf16.mxu0 %v1093
        %1369 = vmatmul.mubr.bf16.gmra.mrb[0].mxu0 %v1092
        %v1370 = vpop.f32.mrb[0].mxu0
        %v1371 = vadd.f32 %v1141, %v1370
        %v1372 = vpop.f32.mrb[0].mxu0
        %v1373 = vadd.f32 %v1145, %v1372
        %v1374 = vpop.f32.mrb[0].mxu0
        %v1375 = vadd.f32 %v1141, %v1374
        %v1376 = vpop.f32.mrb[0].mxu0
        %v1377 = vadd.f32 %v1145, %v1376
        %1378 = vmatprep.mubr.bf16.mxu0 %v1095
        %1379 = vmatmul.mubr.bf16.gmra.mrb[0].mxu0 %v1094
        %v1380 = vpop.f32.mrb[0].mxu0
        %v1381 = vadd.f32 %v1141, %v1380
        %v1382 = vpop.f32.mrb[0].mxu0
        %v1383 = vadd.f32 %v1145, %v1382
        %v1384 = vpop.f32.mrb[0].mxu0
        %v1385 = vadd.f32 %v1141, %v1384
        %v1386 = vpop.f32.mrb[0].mxu0
        %v1387 = vadd.f32 %v1145, %v1386
        %1388 = vmatprep.mubr.bf16.mxu0 %v1097
        %1389 = vmatmul.mubr.bf16.gmra.mrb[0].mxu0 %v1096
        %v1390 = vpop.f32.mrb[0].mxu0
        %v1391 = vadd.f32 %v1141, %v1390
        %v1392 = vpop.f32.mrb[0].mxu0
        %v1393 = vadd.f32 %v1145, %v1392
        %v1394 = vpop.f32.mrb[0].mxu0
        %v1395 = vadd.f32 %v1141, %v1394
        %v1396 = vpop.f32.mrb[0].mxu0
        %v1397 = vadd.f32 %v1145, %v1396
        %1398 = vmatprep.mubr.bf16.mxu0 %v1099
        %1399 = vmatmul.mubr.bf16.gmra.mrb[0].mxu0 %v1098
        %v1400 = vpop.f32.mrb[0].mxu0
        %v1401 = vadd.f32 %v1141, %v1400
        %v1402 = vpop.f32.mrb[0].mxu0
        %v1403 = vadd.f32 %v1145, %v1402
        %v1404 = vpop.f32.mrb[0].mxu0
        %v1405 = vadd.f32 %v1141, %v1404
        %v1406 = vpop.f32.mrb[0].mxu0
        %v1407 = vadd.f32 %v1145, %v1406
        %1408 = vmatprep.mubr.bf16.mxu0 %v1101
        %1409 = vmatmul.mubr.bf16.gmra.mrb[0].mxu0 %v1100
        %v1410 = vpop.f32.mrb[0].mxu0
        %v1411 = vadd.f32 %v1141, %v1410
        %v1412 = vpop.f32.mrb[0].mxu0
        %v1413 = vadd.f32 %v1145, %v1412
        %v1414 = vpop.f32.mrb[0].mxu0
        %v1415 = vadd.f32 %v1141, %v1414
        %v1416 = vpop.f32.mrb[0].mxu0
        %v1417 = vadd.f32 %v1145, %v1416
        %1418 = vmatprep.mubr.bf16.mxu0 %v1103
        %1419 = vmatmul.mubr.bf16.gmra.mrb[0].mxu0 %v1102
        %v1420 = vpop.f32.mrb[0].mxu0
        %v1421 = vadd.f32 %v1141, %v1420
        %v1422 = vpop.f32.mrb[0].mxu0
        %v1423 = vadd.f32 %v1145, %v1422
        %v1424 = vpop.f32.mrb[0].mxu0
        %v1425 = vadd.f32 %v1141, %v1424
        %v1426 = vpop.f32.mrb[0].mxu0
        %v1427 = vadd.f32 %v1145, %v1426
        %1428 = vmatprep.mubr.bf16.mxu0 %v1105
        %1429 = vmatmul.mubr.bf16.gmra.mrb[0].mxu0 %v1104
        %v1430 = vpop.f32.mrb[0].mxu0
        %v1431 = vadd.f32 %v1141, %v1430
        %v1432 = vpop.f32.mrb[0].mxu0
        %v1433 = vadd.f32 %v1145, %v1432
        %v1434 = vpop.f32.mrb[0].mxu0
        %v1435 = vadd.f32 %v1141, %v1434
        %v1436 = vpop.f32.mrb[0].mxu0
        %v1437 = vadd.f32 %v1145, %v1436
        %1438 = vdwg.mxu0
        %s1439 = scalar_lea.vmem %s418, 256 [#allocation5]
        %v1440 = vld [vmem:[%s1439] sm:$0xff]
        %v1441 = vld [vmem:[%s1439 + $0x8] sm:$0xff]
        %v1442 = vld [vmem:[%s1439 + $0x10] sm:$0xff]
        %v1443 = vld [vmem:[%s1439 + $0x18] sm:$0xff]
        %v1444 = vld [vmem:[%s1439 + $0x20] sm:$0xff]
        %v1445 = vld [vmem:[%s1439 + $0x28] sm:$0xff]
        %v1446 = vld [vmem:[%s1439 + $0x30] sm:$0xff]
        %v1447 = vld [vmem:[%s1439 + $0x38] sm:$0xff]
        %v1448 = vld [vmem:[%s1439 + $0x40] sm:$0xff]
        %v1449 = vld [vmem:[%s1439 + $0x48] sm:$0xff]
        %v1450 = vld [vmem:[%s1439 + $0x50] sm:$0xff]
        %v1451 = vld [vmem:[%s1439 + $0x58] sm:$0xff]
        %v1452 = vld [vmem:[%s1439 + $0x60] sm:$0xff]
        %v1453 = vld [vmem:[%s1439 + $0x68] sm:$0xff]
        %v1454 = vld [vmem:[%s1439 + $0x70] sm:$0xff]
        %v1455 = vld [vmem:[%s1439 + $0x78] sm:$0xff]
        %v1456 = vld [vmem:[%s1439 + $0x80] sm:$0xff]
        %v1457 = vld [vmem:[%s1439 + $0x88] sm:$0xff]
        %v1458 = vld [vmem:[%s1439 + $0x90] sm:$0xff]
        %v1459 = vld [vmem:[%s1439 + $0x98] sm:$0xff]
        %v1460 = vld [vmem:[%s1439 + $0xa0] sm:$0xff]
        %v1461 = vld [vmem:[%s1439 + $0xa8] sm:$0xff]
        %v1462 = vld [vmem:[%s1439 + $0xb0] sm:$0xff]
        %v1463 = vld [vmem:[%s1439 + $0xb8] sm:$0xff]
        %v1464 = vld [vmem:[%s1439 + $0xc0] sm:$0xff]
        %v1465 = vld [vmem:[%s1439 + $0xc8] sm:$0xff]
        %v1466 = vld [vmem:[%s1439 + $0xd0] sm:$0xff]
        %v1467 = vld [vmem:[%s1439 + $0xd8] sm:$0xff]
        %v1468 = vld [vmem:[%s1439 + $0xe0] sm:$0xff]
        %v1469 = vld [vmem:[%s1439 + $0xe8] sm:$0xff]
        %v1470 = vld [vmem:[%s1439 + $0xf0] sm:$0xff]
        %v1471 = vld [vmem:[%s1439 + $0xf8] sm:$0xff]
        %v1472 = vlaneseq
        %v1473 = vshrl.u32 %v1472, 7
        %v1474 = vsub.s32 5, %v1473
        %v1475 = vrot.slane %v641, %v1474
        %v1476 = vlaneseq
        %v1477 = vshrl.u32 %v1476, 7
        %v1478 = vsub.s32 5, %v1477
        %v1479 = vrot.slane %v642, %v1478
        %v1512 = vunpack.c.l.b16 %v1440
        %v1513 = vunpack.c.h.b16 %v1440
        %v1514 = vunpack.c.l.b16 %v1441
        %v1515 = vunpack.c.h.b16 %v1441
        %v1516 = vunpack.c.l.b16 %v1442
        %v1517 = vunpack.c.h.b16 %v1442
        %v1518 = vunpack.c.l.b16 %v1443
        %v1519 = vunpack.c.h.b16 %v1443
        %v1520 = vunpack.c.l.b16 %v1444
        %v1521 = vunpack.c.h.b16 %v1444
        %v1522 = vunpack.c.l.b16 %v1445
        %v1523 = vunpack.c.h.b16 %v1445
        %v1524 = vunpack.c.l.b16 %v1446
        %v1525 = vunpack.c.h.b16 %v1446
        %v1526 = vunpack.c.l.b16 %v1447
        %v1527 = vunpack.c.h.b16 %v1447
        %v1528 = vunpack.c.l.b16 %v1448
        %v1529 = vunpack.c.h.b16 %v1448
        %v1530 = vunpack.c.l.b16 %v1449
        %v1531 = vunpack.c.h.b16 %v1449
        %v1532 = vunpack.c.l.b16 %v1450
        %v1533 = vunpack.c.h.b16 %v1450
        %v1534 = vunpack.c.l.b16 %v1451
        %v1535 = vunpack.c.h.b16 %v1451
        %v1536 = vunpack.c.l.b16 %v1452
        %v1537 = vunpack.c.h.b16 %v1452
        %v1538 = vunpack.c.l.b16 %v1453
        %v1539 = vunpack.c.h.b16 %v1453
        %v1540 = vunpack.c.l.b16 %v1454
        %v1541 = vunpack.c.h.b16 %v1454
        %v1542 = vunpack.c.l.b16 %v1455
        %v1543 = vunpack.c.h.b16 %v1455
        %v1544 = vunpack.c.l.b16 %v1456
        %v1545 = vunpack.c.h.b16 %v1456
        %v1546 = vunpack.c.l.b16 %v1457
        %v1547 = vunpack.c.h.b16 %v1457
        %v1548 = vunpack.c.l.b16 %v1458
        %v1549 = vunpack.c.h.b16 %v1458
        %v1550 = vunpack.c.l.b16 %v1459
        %v1551 = vunpack.c.h.b16 %v1459
        %v1552 = vunpack.c.l.b16 %v1460
        %v1553 = vunpack.c.h.b16 %v1460
        %v1554 = vunpack.c.l.b16 %v1461
        %v1555 = vunpack.c.h.b16 %v1461
        %v1556 = vunpack.c.l.b16 %v1462
        %v1557 = vunpack.c.h.b16 %v1462
        %v1558 = vunpack.c.l.b16 %v1463
        %v1559 = vunpack.c.h.b16 %v1463
        %v1560 = vunpack.c.l.b16 %v1464
        %v1561 = vunpack.c.h.b16 %v1464
        %v1562 = vunpack.c.l.b16 %v1465
        %v1563 = vunpack.c.h.b16 %v1465
        %v1564 = vunpack.c.l.b16 %v1466
        %v1565 = vunpack.c.h.b16 %v1466
        %v1566 = vunpack.c.l.b16 %v1467
        %v1567 = vunpack.c.h.b16 %v1467
        %v1568 = vunpack.c.l.b16 %v1468
        %v1569 = vunpack.c.h.b16 %v1468
        %v1570 = vunpack.c.l.b16 %v1469
        %v1571 = vunpack.c.h.b16 %v1469
        %v1572 = vunpack.c.l.b16 %v1470
        %v1573 = vunpack.c.h.b16 %v1470
        %v1574 = vunpack.c.l.b16 %v1471
        %v1575 = vunpack.c.h.b16 %v1471
        %v1576 = vpack.c.b16 %v1514, %v1512
        %v1577 = vpack.c.b16 %v1515, %v1513
        %v1578 = vpack.c.b16 %v1518, %v1516
        %v1579 = vpack.c.b16 %v1519, %v1517
        %v1580 = vpack.c.b16 %v1522, %v1520
        %v1581 = vpack.c.b16 %v1523, %v1521
        %v1582 = vpack.c.b16 %v1526, %v1524
        %v1583 = vpack.c.b16 %v1527, %v1525
        %v1584 = vpack.c.b16 %v1530, %v1528
        %v1585 = vpack.c.b16 %v1531, %v1529
        %v1586 = vpack.c.b16 %v1534, %v1532
        %v1587 = vpack.c.b16 %v1535, %v1533
        %v1588 = vpack.c.b16 %v1538, %v1536
        %v1589 = vpack.c.b16 %v1539, %v1537
        %v1590 = vpack.c.b16 %v1542, %v1540
        %v1591 = vpack.c.b16 %v1543, %v1541
        %v1592 = vpack.c.b16 %v1546, %v1544
        %v1593 = vpack.c.b16 %v1547, %v1545
        %v1594 = vpack.c.b16 %v1550, %v1548
        %v1595 = vpack.c.b16 %v1551, %v1549
        %v1596 = vpack.c.b16 %v1554, %v1552
        %v1597 = vpack.c.b16 %v1555, %v1553
        %v1598 = vpack.c.b16 %v1558, %v1556
        %v1599 = vpack.c.b16 %v1559, %v1557
        %v1600 = vpack.c.b16 %v1562, %v1560
        %v1601 = vpack.c.b16 %v1563, %v1561
        %v1602 = vpack.c.b16 %v1566, %v1564
        %v1603 = vpack.c.b16 %v1567, %v1565
        %v1604 = vpack.c.b16 %v1570, %v1568
        %v1605 = vpack.c.b16 %v1571, %v1569
        %v1606 = vpack.c.b16 %v1574, %v1572
        %v1607 = vpack.c.b16 %v1575, %v1573
        %1640 = vmatprep.subr.bf16.mxu0 %v1577
        %1641 = vmatpush1.bf16.msra.mxu0 %v1576
        %1642 = vmatprep.subr.bf16.mxu0 %v1579
        %1643 = vmatpush1.bf16.msra.mxu0 %v1578
        %1644 = vmatprep.subr.bf16.mxu0 %v1581
        %1645 = vmatpush1.bf16.msra.mxu0 %v1580
        %1646 = vmatprep.subr.bf16.mxu0 %v1583
        %1647 = vmatpush1.bf16.msra.mxu0 %v1582
        %1648 = vmatprep.subr.bf16.mxu0 %v1585
        %1649 = vmatpush1.bf16.msra.mxu0 %v1584
        %1650 = vmatprep.subr.bf16.mxu0 %v1587
        %1651 = vmatpush1.bf16.msra.mxu0 %v1586
        %1652 = vmatprep.subr.bf16.mxu0 %v1589
        %1653 = vmatpush1.bf16.msra.mxu0 %v1588
        %1654 = vmatprep.subr.bf16.mxu0 %v1591
        %1655 = vmatpush1.bf16.msra.mxu0 %v1590
        %1656 = vmatprep.subr.bf16.mxu0 %v1593
        %1657 = vmatpush1.bf16.msra.mxu0 %v1592
        %1658 = vmatprep.subr.bf16.mxu0 %v1595
        %1659 = vmatpush1.bf16.msra.mxu0 %v1594
        %1660 = vmatprep.subr.bf16.mxu0 %v1597
        %1661 = vmatpush1.bf16.msra.mxu0 %v1596
        %1662 = vmatprep.subr.bf16.mxu0 %v1599
        %1663 = vmatpush1.bf16.msra.mxu0 %v1598
        %1664 = vmatprep.subr.bf16.mxu0 %v1601
        %1665 = vmatpush1.bf16.msra.mxu0 %v1600
        %1666 = vmatprep.subr.bf16.mxu0 %v1603
        %1667 = vmatpush1.bf16.msra.mxu0 %v1602
        %1668 = vmatprep.subr.bf16.mxu0 %v1605
        %1669 = vmatpush1.bf16.msra.mxu0 %v1604
        %1670 = vmatprep.subr.bf16.mxu0 %v1607
        %1671 = vmatpush1.bf16.msra.mxu0 %v1606
        %1672 = vmatprep.mubr.bf16.mxu0 %v1087
        %1673 = vmatmul.mubr.bf16.gmra.mrb[0].mxu0 %v1086
        %v1674 = vpop.f32.mrb[0].mxu0
        %v1675 = vadd.f32 %v1475, %v1674
        %v1676 = vpop.f32.mrb[0].mxu0
        %v1677 = vadd.f32 %v1479, %v1676
        %v1678 = vpop.f32.mrb[0].mxu0
        %v1679 = vadd.f32 %v1475, %v1678
        %v1680 = vpop.f32.mrb[0].mxu0
        %v1681 = vadd.f32 %v1479, %v1680
        %1682 = vmatprep.mubr.bf16.mxu0 %v1089
        %1683 = vmatmul.mubr.bf16.gmra.mrb[0].mxu0 %v1088
        %v1684 = vpop.f32.mrb[0].mxu0
        %v1685 = vadd.f32 %v1475, %v1684
        %v1686 = vpop.f32.mrb[0].mxu0
        %v1687 = vadd.f32 %v1479, %v1686
        %v1688 = vpop.f32.mrb[0].mxu0
        %v1689 = vadd.f32 %v1475, %v1688
        %v1690 = vpop.f32.mrb[0].mxu0
        %v1691 = vadd.f32 %v1479, %v1690
        %1692 = vmatprep.mubr.bf16.mxu0 %v1091
        %1693 = vmatmul.mubr.bf16.gmra.mrb[0].mxu0 %v1090
        %v1694 = vpop.f32.mrb[0].mxu0
        %v1695 = vadd.f32 %v1475, %v1694
        %v1696 = vpop.f32.mrb[0].mxu0
        %v1697 = vadd.f32 %v1479, %v1696
        %v1698 = vpop.f32.mrb[0].mxu0
        %v1699 = vadd.f32 %v1475, %v1698
        %v1700 = vpop.f32.mrb[0].mxu0
        %v1701 = vadd.f32 %v1479, %v1700
        %1702 = vmatprep.mubr.bf16.mxu0 %v1093
        %1703 = vmatmul.mubr.bf16.gmra.mrb[0].mxu0 %v1092
        %v1704 = vpop.f32.mrb[0].mxu0
        %v1705 = vadd.f32 %v1475, %v1704
        %v1706 = vpop.f32.mrb[0].mxu0
        %v1707 = vadd.f32 %v1479, %v1706
        %v1708 = vpop.f32.mrb[0].mxu0
        %v1709 = vadd.f32 %v1475, %v1708
        %v1710 = vpop.f32.mrb[0].mxu0
        %v1711 = vadd.f32 %v1479, %v1710
        %1712 = vmatprep.mubr.bf16.mxu0 %v1095
        %1713 = vmatmul.mubr.bf16.gmra.mrb[0].mxu0 %v1094
        %v1714 = vpop.f32.mrb[0].mxu0
        %v1715 = vadd.f32 %v1475, %v1714
        %v1716 = vpop.f32.mrb[0].mxu0
        %v1717 = vadd.f32 %v1479, %v1716
        %v1718 = vpop.f32.mrb[0].mxu0
        %v1719 = vadd.f32 %v1475, %v1718
        %v1720 = vpop.f32.mrb[0].mxu0
        %v1721 = vadd.f32 %v1479, %v1720
        %1722 = vmatprep.mubr.bf16.mxu0 %v1097
        %1723 = vmatmul.mubr.bf16.gmra.mrb[0].mxu0 %v1096
        %v1724 = vpop.f32.mrb[0].mxu0
        %v1725 = vadd.f32 %v1475, %v1724
        %v1726 = vpop.f32.mrb[0].mxu0
        %v1727 = vadd.f32 %v1479, %v1726
        %v1728 = vpop.f32.mrb[0].mxu0
        %v1729 = vadd.f32 %v1475, %v1728
        %v1730 = vpop.f32.mrb[0].mxu0
        %v1731 = vadd.f32 %v1479, %v1730
        %1732 = vmatprep.mubr.bf16.mxu0 %v1099
        %1733 = vmatmul.mubr.bf16.gmra.mrb[0].mxu0 %v1098
        %v1734 = vpop.f32.mrb[0].mxu0
        %v1735 = vadd.f32 %v1475, %v1734
        %v1736 = vpop.f32.mrb[0].mxu0
        %v1737 = vadd.f32 %v1479, %v1736
        %v1738 = vpop.f32.mrb[0].mxu0
        %v1739 = vadd.f32 %v1475, %v1738
        %v1740 = vpop.f32.mrb[0].mxu0
        %v1741 = vadd.f32 %v1479, %v1740
        %1742 = vmatprep.mubr.bf16.mxu0 %v1101
        %1743 = vmatmul.mubr.bf16.gmra.mrb[0].mxu0 %v1100
        %v1744 = vpop.f32.mrb[0].mxu0
        %v1745 = vadd.f32 %v1475, %v1744
        %v1746 = vpop.f32.mrb[0].mxu0
        %v1747 = vadd.f32 %v1479, %v1746
        %v1748 = vpop.f32.mrb[0].mxu0
        %v1749 = vadd.f32 %v1475, %v1748
        %v1750 = vpop.f32.mrb[0].mxu0
        %v1751 = vadd.f32 %v1479, %v1750
        %1752 = vmatprep.mubr.bf16.mxu0 %v1103
        %1753 = vmatmul.mubr.bf16.gmra.mrb[0].mxu0 %v1102
        %v1754 = vpop.f32.mrb[0].mxu0
        %v1755 = vadd.f32 %v1475, %v1754
        %v1756 = vpop.f32.mrb[0].mxu0
        %v1757 = vadd.f32 %v1479, %v1756
        %v1758 = vpop.f32.mrb[0].mxu0
        %v1759 = vadd.f32 %v1475, %v1758
        %v1760 = vpop.f32.mrb[0].mxu0
        %v1761 = vadd.f32 %v1479, %v1760
        %1762 = vmatprep.mubr.bf16.mxu0 %v1105
        %1763 = vmatmul.mubr.bf16.gmra.mrb[0].mxu0 %v1104
        %v1764 = vpop.f32.mrb[0].mxu0
        %v1765 = vadd.f32 %v1475, %v1764
        %v1766 = vpop.f32.mrb[0].mxu0
        %v1767 = vadd.f32 %v1479, %v1766
        %v1768 = vpop.f32.mrb[0].mxu0
        %v1769 = vadd.f32 %v1475, %v1768
        %v1770 = vpop.f32.mrb[0].mxu0
        %v1771 = vadd.f32 %v1479, %v1770
        %1772 = vdwg.mxu0
        %s1773 = scalar_lea.vmem %s418, 512 [#allocation5]
        %v1774 = vld [vmem:[%s1773] sm:$0xff]
        %v1775 = vld [vmem:[%s1773 + $0x8] sm:$0xff]
        %v1776 = vld [vmem:[%s1773 + $0x10] sm:$0xff]
        %v1777 = vld [vmem:[%s1773 + $0x18] sm:$0xff]
        %v1778 = vld [vmem:[%s1773 + $0x20] sm:$0xff]
        %v1779 = vld [vmem:[%s1773 + $0x28] sm:$0xff]
        %v1780 = vld [vmem:[%s1773 + $0x30] sm:$0xff]
        %v1781 = vld [vmem:[%s1773 + $0x38] sm:$0xff]
        %v1782 = vld [vmem:[%s1773 + $0x40] sm:$0xff]
        %v1783 = vld [vmem:[%s1773 + $0x48] sm:$0xff]
        %v1784 = vld [vmem:[%s1773 + $0x50] sm:$0xff]
        %v1785 = vld [vmem:[%s1773 + $0x58] sm:$0xff]
        %v1786 = vld [vmem:[%s1773 + $0x60] sm:$0xff]
        %v1787 = vld [vmem:[%s1773 + $0x68] sm:$0xff]
        %v1788 = vld [vmem:[%s1773 + $0x70] sm:$0xff]
        %v1789 = vld [vmem:[%s1773 + $0x78] sm:$0xff]
        %v1790 = vld [vmem:[%s1773 + $0x80] sm:$0xff]
        %v1791 = vld [vmem:[%s1773 + $0x88] sm:$0xff]
        %v1792 = vld [vmem:[%s1773 + $0x90] sm:$0xff]
        %v1793 = vld [vmem:[%s1773 + $0x98] sm:$0xff]
        %v1794 = vld [vmem:[%s1773 + $0xa0] sm:$0xff]
        %v1795 = vld [vmem:[%s1773 + $0xa8] sm:$0xff]
        %v1796 = vld [vmem:[%s1773 + $0xb0] sm:$0xff]
        %v1797 = vld [vmem:[%s1773 + $0xb8] sm:$0xff]
        %v1798 = vld [vmem:[%s1773 + $0xc0] sm:$0xff]
        %v1799 = vld [vmem:[%s1773 + $0xc8] sm:$0xff]
        %v1800 = vld [vmem:[%s1773 + $0xd0] sm:$0xff]
        %v1801 = vld [vmem:[%s1773 + $0xd8] sm:$0xff]
        %v1802 = vld [vmem:[%s1773 + $0xe0] sm:$0xff]
        %v1803 = vld [vmem:[%s1773 + $0xe8] sm:$0xff]
        %v1804 = vld [vmem:[%s1773 + $0xf0] sm:$0xff]
        %v1805 = vld [vmem:[%s1773 + $0xf8] sm:$0xff]
        %v1806 = vlaneseq
        %v1807 = vshrl.u32 %v1806, 7
        %v1808 = vsub.s32 6, %v1807
        %v1809 = vrot.slane %v641, %v1808
        %v1810 = vlaneseq
        %v1811 = vshrl.u32 %v1810, 7
        %v1812 = vsub.s32 6, %v1811
        %v1813 = vrot.slane %v642, %v1812
        %v1846 = vunpack.c.l.b16 %v1774
        %v1847 = vunpack.c.h.b16 %v1774
        %v1848 = vunpack.c.l.b16 %v1775
        %v1849 = vunpack.c.h.b16 %v1775
        %v1850 = vunpack.c.l.b16 %v1776
        %v1851 = vunpack.c.h.b16 %v1776
        %v1852 = vunpack.c.l.b16 %v1777
        %v1853 = vunpack.c.h.b16 %v1777
        %v1854 = vunpack.c.l.b16 %v1778
        %v1855 = vunpack.c.h.b16 %v1778
        %v1856 = vunpack.c.l.b16 %v1779
        %v1857 = vunpack.c.h.b16 %v1779
        %v1858 = vunpack.c.l.b16 %v1780
        %v1859 = vunpack.c.h.b16 %v1780
        %v1860 = vunpack.c.l.b16 %v1781
        %v1861 = vunpack.c.h.b16 %v1781
        %v1862 = vunpack.c.l.b16 %v1782
        %v1863 = vunpack.c.h.b16 %v1782
        %v1864 = vunpack.c.l.b16 %v1783
        %v1865 = vunpack.c.h.b16 %v1783
        %v1866 = vunpack.c.l.b16 %v1784
        %v1867 = vunpack.c.h.b16 %v1784
        %v1868 = vunpack.c.l.b16 %v1785
        %v1869 = vunpack.c.h.b16 %v1785
        %v1870 = vunpack.c.l.b16 %v1786
        %v1871 = vunpack.c.h.b16 %v1786
        %v1872 = vunpack.c.l.b16 %v1787
        %v1873 = vunpack.c.h.b16 %v1787
        %v1874 = vunpack.c.l.b16 %v1788
        %v1875 = vunpack.c.h.b16 %v1788
        %v1876 = vunpack.c.l.b16 %v1789
        %v1877 = vunpack.c.h.b16 %v1789
        %v1878 = vunpack.c.l.b16 %v1790
        %v1879 = vunpack.c.h.b16 %v1790
        %v1880 = vunpack.c.l.b16 %v1791
        %v1881 = vunpack.c.h.b16 %v1791
        %v1882 = vunpack.c.l.b16 %v1792
        %v1883 = vunpack.c.h.b16 %v1792
        %v1884 = vunpack.c.l.b16 %v1793
        %v1885 = vunpack.c.h.b16 %v1793
        %v1886 = vunpack.c.l.b16 %v1794
        %v1887 = vunpack.c.h.b16 %v1794
        %v1888 = vunpack.c.l.b16 %v1795
        %v1889 = vunpack.c.h.b16 %v1795
        %v1890 = vunpack.c.l.b16 %v1796
        %v1891 = vunpack.c.h.b16 %v1796
        %v1892 = vunpack.c.l.b16 %v1797
        %v1893 = vunpack.c.h.b16 %v1797
        %v1894 = vunpack.c.l.b16 %v1798
        %v1895 = vunpack.c.h.b16 %v1798
        %v1896 = vunpack.c.l.b16 %v1799
        %v1897 = vunpack.c.h.b16 %v1799
        %v1898 = vunpack.c.l.b16 %v1800
        %v1899 = vunpack.c.h.b16 %v1800
        %v1900 = vunpack.c.l.b16 %v1801
        %v1901 = vunpack.c.h.b16 %v1801
        %v1902 = vunpack.c.l.b16 %v1802
        %v1903 = vunpack.c.h.b16 %v1802
        %v1904 = vunpack.c.l.b16 %v1803
        %v1905 = vunpack.c.h.b16 %v1803
        %v1906 = vunpack.c.l.b16 %v1804
        %v1907 = vunpack.c.h.b16 %v1804
        %v1908 = vunpack.c.l.b16 %v1805
        %v1909 = vunpack.c.h.b16 %v1805
        %v1910 = vpack.c.b16 %v1848, %v1846
        %v1911 = vpack.c.b16 %v1849, %v1847
        %v1912 = vpack.c.b16 %v1852, %v1850
        %v1913 = vpack.c.b16 %v1853, %v1851
        %v1914 = vpack.c.b16 %v1856, %v1854
        %v1915 = vpack.c.b16 %v1857, %v1855
        %v1916 = vpack.c.b16 %v1860, %v1858
        %v1917 = vpack.c.b16 %v1861, %v1859
        %v1918 = vpack.c.b16 %v1864, %v1862
        %v1919 = vpack.c.b16 %v1865, %v1863
        %v1920 = vpack.c.b16 %v1868, %v1866
        %v1921 = vpack.c.b16 %v1869, %v1867
        %v1922 = vpack.c.b16 %v1872, %v1870
        %v1923 = vpack.c.b16 %v1873, %v1871
        %v1924 = vpack.c.b16 %v1876, %v1874
        %v1925 = vpack.c.b16 %v1877, %v1875
        %v1926 = vpack.c.b16 %v1880, %v1878
        %v1927 = vpack.c.b16 %v1881, %v1879
        %v1928 = vpack.c.b16 %v1884, %v1882
        %v1929 = vpack.c.b16 %v1885, %v1883
        %v1930 = vpack.c.b16 %v1888, %v1886
        %v1931 = vpack.c.b16 %v1889, %v1887
        %v1932 = vpack.c.b16 %v1892, %v1890
        %v1933 = vpack.c.b16 %v1893, %v1891
        %v1934 = vpack.c.b16 %v1896, %v1894
        %v1935 = vpack.c.b16 %v1897, %v1895
        %v1936 = vpack.c.b16 %v1900, %v1898
        %v1937 = vpack.c.b16 %v1901, %v1899
        %v1938 = vpack.c.b16 %v1904, %v1902
        %v1939 = vpack.c.b16 %v1905, %v1903
        %v1940 = vpack.c.b16 %v1908, %v1906
        %v1941 = vpack.c.b16 %v1909, %v1907
        %1974 = vmatprep.subr.bf16.mxu0 %v1911
        %1975 = vmatpush1.bf16.msra.mxu0 %v1910
        %1976 = vmatprep.subr.bf16.mxu0 %v1913
        %1977 = vmatpush1.bf16.msra.mxu0 %v1912
        %1978 = vmatprep.subr.bf16.mxu0 %v1915
        %1979 = vmatpush1.bf16.msra.mxu0 %v1914
        %1980 = vmatprep.subr.bf16.mxu0 %v1917
        %1981 = vmatpush1.bf16.msra.mxu0 %v1916
        %1982 = vmatprep.subr.bf16.mxu0 %v1919
        %1983 = vmatpush1.bf16.msra.mxu0 %v1918
        %1984 = vmatprep.subr.bf16.mxu0 %v1921
        %1985 = vmatpush1.bf16.msra.mxu0 %v1920
        %1986 = vmatprep.subr.bf16.mxu0 %v1923
        %1987 = vmatpush1.bf16.msra.mxu0 %v1922
        %1988 = vmatprep.subr.bf16.mxu0 %v1925
        %1989 = vmatpush1.bf16.msra.mxu0 %v1924
        %1990 = vmatprep.subr.bf16.mxu0 %v1927
        %1991 = vmatpush1.bf16.msra.mxu0 %v1926
        %1992 = vmatprep.subr.bf16.mxu0 %v1929
        %1993 = vmatpush1.bf16.msra.mxu0 %v1928
        %1994 = vmatprep.subr.bf16.mxu0 %v1931
        %1995 = vmatpush1.bf16.msra.mxu0 %v1930
        %1996 = vmatprep.subr.bf16.mxu0 %v1933
        %1997 = vmatpush1.bf16.msra.mxu0 %v1932
        %1998 = vmatprep.subr.bf16.mxu0 %v1935
        %1999 = vmatpush1.bf16.msra.mxu0 %v1934
        %2000 = vmatprep.subr.bf16.mxu0 %v1937
        %2001 = vmatpush1.bf16.msra.mxu0 %v1936
        %2002 = vmatprep.subr.bf16.mxu0 %v1939
        %2003 = vmatpush1.bf16.msra.mxu0 %v1938
        %2004 = vmatprep.subr.bf16.mxu0 %v1941
        %2005 = vmatpush1.bf16.msra.mxu0 %v1940
        %2006 = vmatprep.mubr.bf16.mxu0 %v1087
        %2007 = vmatmul.mubr.bf16.gmra.mrb[0].mxu0 %v1086
        %v2008 = vpop.f32.mrb[0].mxu0
        %v2009 = vadd.f32 %v1809, %v2008
        %v2010 = vpop.f32.mrb[0].mxu0
        %v2011 = vadd.f32 %v1813, %v2010
        %v2012 = vpop.f32.mrb[0].mxu0
        %v2013 = vadd.f32 %v1809, %v2012
        %v2014 = vpop.f32.mrb[0].mxu0
        %v2015 = vadd.f32 %v1813, %v2014
        %2016 = vmatprep.mubr.bf16.mxu0 %v1089
        %2017 = vmatmul.mubr.bf16.gmra.mrb[0].mxu0 %v1088
        %v2018 = vpop.f32.mrb[0].mxu0
        %v2019 = vadd.f32 %v1809, %v2018
        %v2020 = vpop.f32.mrb[0].mxu0
        %v2021 = vadd.f32 %v1813, %v2020
        %v2022 = vpop.f32.mrb[0].mxu0
        %v2023 = vadd.f32 %v1809, %v2022
        %v2024 = vpop.f32.mrb[0].mxu0
        %v2025 = vadd.f32 %v1813, %v2024
        %2026 = vmatprep.mubr.bf16.mxu0 %v1091
        %2027 = vmatmul.mubr.bf16.gmra.mrb[0].mxu0 %v1090
        %v2028 = vpop.f32.mrb[0].mxu0
        %v2029 = vadd.f32 %v1809, %v2028
        %v2030 = vpop.f32.mrb[0].mxu0
        %v2031 = vadd.f32 %v1813, %v2030
        %v2032 = vpop.f32.mrb[0].mxu0
        %v2033 = vadd.f32 %v1809, %v2032
        %v2034 = vpop.f32.mrb[0].mxu0
        %v2035 = vadd.f32 %v1813, %v2034
        %2036 = vmatprep.mubr.bf16.mxu0 %v1093
        %2037 = vmatmul.mubr.bf16.gmra.mrb[0].mxu0 %v1092
        %v2038 = vpop.f32.mrb[0].mxu0
        %v2039 = vadd.f32 %v1809, %v2038
        %v2040 = vpop.f32.mrb[0].mxu0
        %v2041 = vadd.f32 %v1813, %v2040
        %v2042 = vpop.f32.mrb[0].mxu0
        %v2043 = vadd.f32 %v1809, %v2042
        %v2044 = vpop.f32.mrb[0].mxu0
        %v2045 = vadd.f32 %v1813, %v2044
        %2046 = vmatprep.mubr.bf16.mxu0 %v1095
        %2047 = vmatmul.mubr.bf16.gmra.mrb[0].mxu0 %v1094
        %v2048 = vpop.f32.mrb[0].mxu0
        %v2049 = vadd.f32 %v1809, %v2048
        %v2050 = vpop.f32.mrb[0].mxu0
        %v2051 = vadd.f32 %v1813, %v2050
        %v2052 = vpop.f32.mrb[0].mxu0
        %v2053 = vadd.f32 %v1809, %v2052
        %v2054 = vpop.f32.mrb[0].mxu0
        %v2055 = vadd.f32 %v1813, %v2054
        %2056 = vmatprep.mubr.bf16.mxu0 %v1097
        %2057 = vmatmul.mubr.bf16.gmra.mrb[0].mxu0 %v1096
        %v2058 = vpop.f32.mrb[0].mxu0
        %v2059 = vadd.f32 %v1809, %v2058
        %v2060 = vpop.f32.mrb[0].mxu0
        %v2061 = vadd.f32 %v1813, %v2060
        %v2062 = vpop.f32.mrb[0].mxu0
        %v2063 = vadd.f32 %v1809, %v2062
        %v2064 = vpop.f32.mrb[0].mxu0
        %v2065 = vadd.f32 %v1813, %v2064
        %2066 = vmatprep.mubr.bf16.mxu0 %v1099
        %2067 = vmatmul.mubr.bf16.gmra.mrb[0].mxu0 %v1098
        %v2068 = vpop.f32.mrb[0].mxu0
        %v2069 = vadd.f32 %v1809, %v2068
        %v2070 = vpop.f32.mrb[0].mxu0
        %v2071 = vadd.f32 %v1813, %v2070
        %v2072 = vpop.f32.mrb[0].mxu0
        %v2073 = vadd.f32 %v1809, %v2072
        %v2074 = vpop.f32.mrb[0].mxu0
        %v2075 = vadd.f32 %v1813, %v2074
        %2076 = vmatprep.mubr.bf16.mxu0 %v1101
        %2077 = vmatmul.mubr.bf16.gmra.mrb[0].mxu0 %v1100
        %v2078 = vpop.f32.mrb[0].mxu0
        %v2079 = vadd.f32 %v1809, %v2078
        %v2080 = vpop.f32.mrb[0].mxu0
        %v2081 = vadd.f32 %v1813, %v2080
        %v2082 = vpop.f32.mrb[0].mxu0
        %v2083 = vadd.f32 %v1809, %v2082
        %v2084 = vpop.f32.mrb[0].mxu0
        %v2085 = vadd.f32 %v1813, %v2084
        %2086 = vmatprep.mubr.bf16.mxu0 %v1103
        %2087 = vmatmul.mubr.bf16.gmra.mrb[0].mxu0 %v1102
        %v2088 = vpop.f32.mrb[0].mxu0
        %v2089 = vadd.f32 %v1809, %v2088
        %v2090 = vpop.f32.mrb[0].mxu0
        %v2091 = vadd.f32 %v1813, %v2090
        %v2092 = vpop.f32.mrb[0].mxu0
        %v2093 = vadd.f32 %v1809, %v2092
        %v2094 = vpop.f32.mrb[0].mxu0
        %v2095 = vadd.f32 %v1813, %v2094
        %2096 = vmatprep.mubr.bf16.mxu0 %v1105
        %2097 = vmatmul.mubr.bf16.gmra.mrb[0].mxu0 %v1104
        %v2098 = vpop.f32.mrb[0].mxu0
        %v2099 = vadd.f32 %v1809, %v2098
        %v2100 = vpop.f32.mrb[0].mxu0
        %v2101 = vadd.f32 %v1813, %v2100
        %v2102 = vpop.f32.mrb[0].mxu0
        %v2103 = vadd.f32 %v1809, %v2102
        %v2104 = vpop.f32.mrb[0].mxu0
        %v2105 = vadd.f32 %v1813, %v2104
        %2106 = vdwg.mxu0
        %v2107 = vpack.c.bf16 %v1345, %v1341
        %v2108 = vpack.c.bf16 %v1347, %v1343
        %v2109 = vpack.c.bf16 %v1355, %v1351
        %v2110 = vpack.c.bf16 %v1357, %v1353
        %v2111 = vpack.c.bf16 %v1365, %v1361
        %v2112 = vpack.c.bf16 %v1367, %v1363
        %v2113 = vpack.c.bf16 %v1375, %v1371
        %v2114 = vpack.c.bf16 %v1377, %v1373
        %v2115 = vpack.c.bf16 %v1385, %v1381
        %v2116 = vpack.c.bf16 %v1387, %v1383
        %v2117 = vpack.c.bf16 %v1395, %v1391
        %v2118 = vpack.c.bf16 %v1397, %v1393
        %v2119 = vpack.c.bf16 %v1405, %v1401
        %v2120 = vpack.c.bf16 %v1407, %v1403
        %v2121 = vpack.c.bf16 %v1415, %v1411
        %v2122 = vpack.c.bf16 %v1417, %v1413
        %v2123 = vpack.c.bf16 %v1425, %v1421
        %v2124 = vpack.c.bf16 %v1427, %v1423
        %v2125 = vpack.c.bf16 %v1435, %v1431
        %v2126 = vpack.c.bf16 %v1437, %v1433
        %v2127 = vpack.c.bf16 %v1679, %v1675
        %v2128 = vpack.c.bf16 %v1681, %v1677
        %v2129 = vpack.c.bf16 %v1689, %v1685
        %v2130 = vpack.c.bf16 %v1691, %v1687
        %v2131 = vpack.c.bf16 %v1699, %v1695
        %v2132 = vpack.c.bf16 %v1701, %v1697
        %v2133 = vpack.c.bf16 %v1709, %v1705
        %v2134 = vpack.c.bf16 %v1711, %v1707
        %v2135 = vpack.c.bf16 %v1719, %v1715
        %v2136 = vpack.c.bf16 %v1721, %v1717
        %v2137 = vpack.c.bf16 %v1729, %v1725
        %v2138 = vpack.c.bf16 %v1731, %v1727
        %v2139 = vpack.c.bf16 %v1739, %v1735
        %v2140 = vpack.c.bf16 %v1741, %v1737
        %v2141 = vpack.c.bf16 %v1749, %v1745
        %v2142 = vpack.c.bf16 %v1751, %v1747
        %v2143 = vpack.c.bf16 %v1759, %v1755
        %v2144 = vpack.c.bf16 %v1761, %v1757
        %v2145 = vpack.c.bf16 %v1769, %v1765
        %v2146 = vpack.c.bf16 %v1771, %v1767
        %v2147 = vpack.c.bf16 %v2013, %v2009
        %v2148 = vpack.c.bf16 %v2015, %v2011
        %v2149 = vpack.c.bf16 %v2023, %v2019
        %v2150 = vpack.c.bf16 %v2025, %v2021
        %v2151 = vpack.c.bf16 %v2033, %v2029
        %v2152 = vpack.c.bf16 %v2035, %v2031
        %v2153 = vpack.c.bf16 %v2043, %v2039
        %v2154 = vpack.c.bf16 %v2045, %v2041
        %v2155 = vpack.c.bf16 %v2053, %v2049
        %v2156 = vpack.c.bf16 %v2055, %v2051
        %v2157 = vpack.c.bf16 %v2063, %v2059
        %v2158 = vpack.c.bf16 %v2065, %v2061
        %v2159 = vpack.c.bf16 %v2073, %v2069
        %v2160 = vpack.c.bf16 %v2075, %v2071
        %v2161 = vpack.c.bf16 %v2083, %v2079
        %v2162 = vpack.c.bf16 %v2085, %v2081
        %v2163 = vpack.c.bf16 %v2093, %v2089
        %v2164 = vpack.c.bf16 %v2095, %v2091
        %v2165 = vpack.c.bf16 %v2103, %v2099
        %v2166 = vpack.c.bf16 %v2105, %v2101
        %2167 = vmatprep.subr.bf16.mxu0 0
        %2168 = vmatpush1.bf16.xpose.msra.mxu0 %v2127
        %2169 = vmatprep.subr.bf16.mxu0 0
        %2170 = vmatpush1.bf16.xpose.msra.mxu0 %v2129
        %2171 = vmatprep.subr.bf16.mxu0 0
        %2172 = vmatpush1.bf16.xpose.msra.mxu0 %v2131
        %2173 = vmatprep.subr.bf16.mxu0 0
        %2174 = vmatpush1.bf16.xpose.msra.mxu0 %v2133
        %2175 = vmatprep.subr.bf16.mxu0 0
        %2176 = vmatpush1.bf16.xpose.msra.mxu0 %v2135
        %2177 = vmatprep.subr.bf16.mxu0 0
        %2178 = vmatpush1.bf16.xpose.msra.mxu0 0
        %2179 = vmatprep.subr.bf16.mxu0 0
        %2180 = vmatpush1.bf16.xpose.msra.mxu0 0
        %2181 = vmatprep.subr.bf16.mxu0 0
        %2182 = vmatpush1.bf16.xpose.msra.mxu0 0
        %2183 = vmatprep.subr.bf16.mxu0 0
        %2184 = vmatpush1.bf16.xpose.msra.mxu0 0
        %2185 = vmatprep.subr.bf16.mxu0 0
        %2186 = vmatpush1.bf16.xpose.msra.mxu0 0
        %2187 = vmatprep.subr.bf16.mxu0 0
        %2188 = vmatpush1.bf16.xpose.msra.mxu0 0
        %2189 = vmatprep.subr.bf16.mxu0 0
        %2190 = vmatpush1.bf16.xpose.msra.mxu0 0
        %2191 = vmatprep.subr.bf16.mxu0 0
        %2192 = vmatpush1.bf16.xpose.msra.mxu0 0
        %2193 = vmatprep.subr.bf16.mxu0 0
        %2194 = vmatpush1.bf16.xpose.msra.mxu0 0
        %2195 = vmatprep.subr.bf16.mxu0 0
        %2196 = vmatpush1.bf16.xpose.msra.mxu0 0
        %2197 = vmatprep.subr.bf16.mxu0 0
        %2198 = vmatpush1.bf16.xpose.msra.mxu0 0
        %2199 = vmatprep.mubr.bf16.mxu0 0
        %2200 = vmatmul.mubr.bf16.gmra.mrb[0].mxu0 %v2107
        %v2201 = vpop.f32.mrb[0].mxu0
        %v2202 = vadd.f32 0.0, %v2201
        %v2203 = vpop.f32.mrb[0].mxu0
        %v2204 = vpop.f32.mrb[0].mxu0
        %v2205 = vadd.f32 0.0, %v2204
        %v2206 = vpop.f32.mrb[0].mxu0
        %2207 = vmatprep.mubr.bf16.mxu0 0
        %2208 = vmatmul.mubr.bf16.gmra.mrb[0].mxu0 %v2109
        %v2209 = vpop.f32.mrb[0].mxu0
        %v2210 = vadd.f32 0.0, %v2209
        %v2211 = vpop.f32.mrb[0].mxu0
        %v2212 = vpop.f32.mrb[0].mxu0
        %v2213 = vadd.f32 0.0, %v2212
        %v2214 = vpop.f32.mrb[0].mxu0
        %2215 = vmatprep.mubr.bf16.mxu0 0
        %2216 = vmatmul.mubr.bf16.gmra.mrb[0].mxu0 %v2111
        %v2217 = vpop.f32.mrb[0].mxu0
        %v2218 = vadd.f32 0.0, %v2217
        %v2219 = vpop.f32.mrb[0].mxu0
        %v2220 = vpop.f32.mrb[0].mxu0
        %v2221 = vadd.f32 0.0, %v2220
        %v2222 = vpop.f32.mrb[0].mxu0
        %2223 = vmatprep.mubr.bf16.mxu0 0
        %2224 = vmatmul.mubr.bf16.gmra.mrb[0].mxu0 %v2113
        %v2225 = vpop.f32.mrb[0].mxu0
        %v2226 = vadd.f32 0.0, %v2225
        %v2227 = vpop.f32.mrb[0].mxu0
        %v2228 = vpop.f32.mrb[0].mxu0
        %v2229 = vadd.f32 0.0, %v2228
        %v2230 = vpop.f32.mrb[0].mxu0
        %2231 = vmatprep.mubr.bf16.mxu0 0
        %2232 = vmatmul.mubr.bf16.gmra.mrb[0].mxu0 %v2115
        %v2233 = vpop.f32.mrb[0].mxu0
        %v2234 = vadd.f32 0.0, %v2233
        %v2235 = vpop.f32.mrb[0].mxu0
        %v2236 = vpop.f32.mrb[0].mxu0
        %v2237 = vadd.f32 0.0, %v2236
        %v2238 = vpop.f32.mrb[0].mxu0
        %2239 = vdwg.mxu0
        %2240 = vmatprep.subr.bf16.mxu0 0
        %2241 = vmatpush1.bf16.xpose.msra.mxu0 %v2137
        %2242 = vmatprep.subr.bf16.mxu0 0
        %2243 = vmatpush1.bf16.xpose.msra.mxu0 %v2139
        %2244 = vmatprep.subr.bf16.mxu0 0
        %2245 = vmatpush1.bf16.xpose.msra.mxu0 %v2141
        %2246 = vmatprep.subr.bf16.mxu0 0
        %2247 = vmatpush1.bf16.xpose.msra.mxu0 %v2143
        %2248 = vmatprep.subr.bf16.mxu0 0
        %2249 = vmatpush1.bf16.xpose.msra.mxu0 %v2145
        %2250 = vmatprep.subr.bf16.mxu0 0
        %2251 = vmatpush1.bf16.xpose.msra.mxu0 0
        %2252 = vmatprep.subr.bf16.mxu0 0
        %2253 = vmatpush1.bf16.xpose.msra.mxu0 0
        %2254 = vmatprep.subr.bf16.mxu0 0
        %2255 = vmatpush1.bf16.xpose.msra.mxu0 0
        %2256 = vmatprep.subr.bf16.mxu0 0
        %2257 = vmatpush1.bf16.xpose.msra.mxu0 0
        %2258 = vmatprep.subr.bf16.mxu0 0
        %2259 = vmatpush1.bf16.xpose.msra.mxu0 0
        %2260 = vmatprep.subr.bf16.mxu0 0
        %2261 = vmatpush1.bf16.xpose.msra.mxu0 0
        %2262 = vmatprep.subr.bf16.mxu0 0
        %2263 = vmatpush1.bf16.xpose.msra.mxu0 0
        %2264 = vmatprep.subr.bf16.mxu0 0
        %2265 = vmatpush1.bf16.xpose.msra.mxu0 0
        %2266 = vmatprep.subr.bf16.mxu0 0
        %2267 = vmatpush1.bf16.xpose.msra.mxu0 0
        %2268 = vmatprep.subr.bf16.mxu0 0
        %2269 = vmatpush1.bf16.xpose.msra.mxu0 0
        %2270 = vmatprep.subr.bf16.mxu0 0
        %2271 = vmatpush1.bf16.xpose.msra.mxu0 0
        %2272 = vmatprep.mubr.bf16.mxu0 0
        %2273 = vmatmul.mubr.bf16.gmra.mrb[0].mxu0 %v2117
        %v2274 = vpop.f32.mrb[0].mxu0
        %v2275 = vadd.f32 0.0, %v2274
        %v2276 = vpop.f32.mrb[0].mxu0
        %v2277 = vpop.f32.mrb[0].mxu0
        %v2278 = vadd.f32 0.0, %v2277
        %v2279 = vpop.f32.mrb[0].mxu0
        %2280 = vmatprep.mubr.bf16.mxu0 0
        %2281 = vmatmul.mubr.bf16.gmra.mrb[0].mxu0 %v2119
        %v2282 = vpop.f32.mrb[0].mxu0
        %v2283 = vadd.f32 0.0, %v2282
        %v2284 = vpop.f32.mrb[0].mxu0
        %v2285 = vpop.f32.mrb[0].mxu0
        %v2286 = vadd.f32 0.0, %v2285
        %v2287 = vpop.f32.mrb[0].mxu0
        %2288 = vmatprep.mubr.bf16.mxu0 0
        %2289 = vmatmul.mubr.bf16.gmra.mrb[0].mxu0 %v2121
        %v2290 = vpop.f32.mrb[0].mxu0
        %v2291 = vadd.f32 0.0, %v2290
        %v2292 = vpop.f32.mrb[0].mxu0
        %v2293 = vpop.f32.mrb[0].mxu0
        %v2294 = vadd.f32 0.0, %v2293
        %v2295 = vpop.f32.mrb[0].mxu0
        %2296 = vmatprep.mubr.bf16.mxu0 0
        %2297 = vmatmul.mubr.bf16.gmra.mrb[0].mxu0 %v2123
        %v2298 = vpop.f32.mrb[0].mxu0
        %v2299 = vadd.f32 0.0, %v2298
        %v2300 = vpop.f32.mrb[0].mxu0
        %v2301 = vpop.f32.mrb[0].mxu0
        %v2302 = vadd.f32 0.0, %v2301
        %v2303 = vpop.f32.mrb[0].mxu0
        %2304 = vmatprep.mubr.bf16.mxu0 0
        %2305 = vmatmul.mubr.bf16.gmra.mrb[0].mxu0 %v2125
        %v2306 = vpop.f32.mrb[0].mxu0
        %v2307 = vadd.f32 0.0, %v2306
        %v2308 = vpop.f32.mrb[0].mxu0
        %v2309 = vpop.f32.mrb[0].mxu0
        %v2310 = vadd.f32 0.0, %v2309
        %v2311 = vpop.f32.mrb[0].mxu0
        %2312 = vdwg.mxu0
        %v2313 = vsel %vm659, 1, 0
        %v2314 = vsel %vm660, 1, 0
        %v2315 = vsel %vm661, 1, 0
        %v2316 = vsel %vm662, 1, 0
        %v2317 = vsel %vm663, 1, 0
        %v2318 = vsel %vm664, 1, 0
        %v2319 = vsel %vm665, 1, 0
        %v2320 = vsel %vm666, 1, 0
        %v2321 = vsel %vm667, 1, 0
        %v2322 = vsel %vm668, 1, 0
        %vm2323 = vcmp.eq.s32.totalorder %v2313, 1
        %vm2324 = vcmp.eq.s32.totalorder %v2314, 1
        %vm2325 = vcmp.eq.s32.totalorder %v2315, 1
        %vm2326 = vcmp.eq.s32.totalorder %v2316, 1
        %vm2327 = vcmp.eq.s32.totalorder %v2317, 1
        %vm2328 = vcmp.eq.s32.totalorder %v2318, 1
        %vm2329 = vcmp.eq.s32.totalorder %v2319, 1
        %vm2330 = vcmp.eq.s32.totalorder %v2320, 1
        %vm2331 = vcmp.eq.s32.totalorder %v2321, 1
        %vm2332 = vcmp.eq.s32.totalorder %v2322, 1
        %v2333 = vsel %vm2323, -1e+09, %v2202
        %v2334 = vsel %vm2324, -1e+09, %v2205
        %v2335 = vsel %vm2325, -1e+09, %v2210
        %v2336 = vsel %vm2326, -1e+09, %v2213
        %v2337 = vsel %vm2327, -1e+09, %v2218
        %v2338 = vsel %vm2328, -1e+09, %v2221
        %v2339 = vsel %vm2329, -1e+09, %v2226
        %v2340 = vsel %vm2330, -1e+09, %v2229
        %v2341 = vsel %vm2331, -1e+09, %v2234
        %v2342 = vsel %vm2332, -1e+09, %v2237
        %v2343 = vsel %vm2323, -1e+09, %v2275
        %v2344 = vsel %vm2324, -1e+09, %v2278
        %v2345 = vsel %vm2325, -1e+09, %v2283
        %v2346 = vsel %vm2326, -1e+09, %v2286
        %v2347 = vsel %vm2327, -1e+09, %v2291
        %v2348 = vsel %vm2328, -1e+09, %v2294
        %v2349 = vsel %vm2329, -1e+09, %v2299
        %v2350 = vsel %vm2330, -1e+09, %v2302
        %v2351 = vsel %vm2331, -1e+09, %v2307
        %v2352 = vsel %vm2332, -1e+09, %v2310
        %vm2353 = vcmask 654336
        %v2354 = vsel %vm2353, %v2333, -inf
        %2355 = vmax.xlane.f32.xlu0 %v2354
        %v2356 = vpop.xlane.xlu0 %2355
        %v2357 = vsel %vm2353, %v2334, -inf
        %2358 = vmax.xlane.f32.xlu0 %v2357
        %v2359 = vpop.xlane.xlu0 %2358
        %v2360 = vsel %vm2353, %v2335, -inf
        %2361 = vmax.xlane.f32.xlu0 %v2360
        %v2362 = vpop.xlane.xlu0 %2361
        %v2363 = vsel %vm2353, %v2336, -inf
        %2364 = vmax.xlane.f32.xlu0 %v2363
        %v2365 = vpop.xlane.xlu0 %2364
        %v2366 = vsel %vm2353, %v2337, -inf
        %2367 = vmax.xlane.f32.xlu0 %v2366
        %v2368 = vpop.xlane.xlu0 %2367
        %v2369 = vsel %vm2353, %v2338, -inf
        %2370 = vmax.xlane.f32.xlu0 %v2369
        %v2371 = vpop.xlane.xlu0 %2370
        %v2372 = vsel %vm2353, %v2339, -inf
        %2373 = vmax.xlane.f32.xlu0 %v2372
        %v2374 = vpop.xlane.xlu0 %2373
        %v2375 = vsel %vm2353, %v2340, -inf
        %2376 = vmax.xlane.f32.xlu0 %v2375
        %v2377 = vpop.xlane.xlu0 %2376
        %v2378 = vsel %vm2353, %v2341, -inf
        %2379 = vmax.xlane.f32.xlu0 %v2378
        %v2380 = vpop.xlane.xlu0 %2379
        %v2381 = vsel %vm2353, %v2342, -inf
        %2382 = vmax.xlane.f32.xlu0 %v2381
        %v2383 = vpop.xlane.xlu0 %2382
        %v2384 = vsel %vm2353, %v2343, -inf
        %2385 = vmax.xlane.f32.xlu0 %v2384
        %v2386 = vpop.xlane.xlu0 %2385
        %v2387 = vsel %vm2353, %v2344, -inf
        %2388 = vmax.xlane.f32.xlu0 %v2387
        %v2389 = vpop.xlane.xlu0 %2388
        %v2390 = vsel %vm2353, %v2345, -inf
        %2391 = vmax.xlane.f32.xlu0 %v2390
        %v2392 = vpop.xlane.xlu0 %2391
        %v2393 = vsel %vm2353, %v2346, -inf
        %2394 = vmax.xlane.f32.xlu0 %v2393
        %v2395 = vpop.xlane.xlu0 %2394
        %v2396 = vsel %vm2353, %v2347, -inf
        %2397 = vmax.xlane.f32.xlu0 %v2396
        %v2398 = vpop.xlane.xlu0 %2397
        %v2399 = vsel %vm2353, %v2348, -inf
        %2400 = vmax.xlane.f32.xlu0 %v2399
        %v2401 = vpop.xlane.xlu0 %2400
        %v2402 = vsel %vm2353, %v2349, -inf
        %2403 = vmax.xlane.f32.xlu0 %v2402
        %v2404 = vpop.xlane.xlu0 %2403
        %v2405 = vsel %vm2353, %v2350, -inf
        %2406 = vmax.xlane.f32.xlu0 %v2405
        %v2407 = vpop.xlane.xlu0 %2406
        %v2408 = vsel %vm2353, %v2351, -inf
        %2409 = vmax.xlane.f32.xlu0 %v2408
        %v2410 = vpop.xlane.xlu0 %2409
        %v2411 = vsel %vm2353, %v2352, -inf
        %2412 = vmax.xlane.f32.xlu0 %v2411
        %v2413 = vpop.xlane.xlu0 %2412
        %v2414 = vsub.f32 %v2333, %v2356
        %v2415 = vsub.f32 %v2334, %v2359
        %v2416 = vsub.f32 %v2335, %v2362
        %v2417 = vsub.f32 %v2336, %v2365
        %v2418 = vsub.f32 %v2337, %v2368
        %v2419 = vsub.f32 %v2338, %v2371
        %v2420 = vsub.f32 %v2339, %v2374
        %v2421 = vsub.f32 %v2340, %v2377
        %v2422 = vsub.f32 %v2341, %v2380
        %v2423 = vsub.f32 %v2342, %v2383
        %v2424 = vsub.f32 %v2343, %v2386
        %v2425 = vsub.f32 %v2344, %v2389
        %v2426 = vsub.f32 %v2345, %v2392
        %v2427 = vsub.f32 %v2346, %v2395
        %v2428 = vsub.f32 %v2347, %v2398
        %v2429 = vsub.f32 %v2348, %v2401
        %v2430 = vsub.f32 %v2349, %v2404
        %v2431 = vsub.f32 %v2350, %v2407
        %v2432 = vsub.f32 %v2351, %v2410
        %v2433 = vsub.f32 %v2352, %v2413
        %v2434 = vmul.f32 %v2414, 1.442695
        %v2435 = vpow.pop %v2434
        %v2436 = vmul.f32 %v2415, 1.442695
        %v2437 = vpow.pop %v2436
        %v2438 = vmul.f32 %v2416, 1.442695
        %v2439 = vpow.pop %v2438
        %v2440 = vmul.f32 %v2417, 1.442695
        %v2441 = vpow.pop %v2440
        %v2442 = vmul.f32 %v2418, 1.442695
        %v2443 = vpow.pop %v2442
        %v2444 = vmul.f32 %v2419, 1.442695
        %v2445 = vpow.pop %v2444
        %v2446 = vmul.f32 %v2420, 1.442695
        %v2447 = vpow.pop %v2446
        %v2448 = vmul.f32 %v2421, 1.442695
        %v2449 = vpow.pop %v2448
        %v2450 = vmul.f32 %v2422, 1.442695
        %v2451 = vpow.pop %v2450
        %v2452 = vmul.f32 %v2423, 1.442695
        %v2453 = vpow.pop %v2452
        %v2454 = vmul.f32 %v2424, 1.442695
        %v2455 = vpow.pop %v2454
        %v2456 = vmul.f32 %v2425, 1.442695
        %v2457 = vpow.pop %v2456
        %v2458 = vmul.f32 %v2426, 1.442695
        %v2459 = vpow.pop %v2458
        %v2460 = vmul.f32 %v2427, 1.442695
        %v2461 = vpow.pop %v2460
        %v2462 = vmul.f32 %v2428, 1.442695
        %v2463 = vpow.pop %v2462
        %v2464 = vmul.f32 %v2429, 1.442695
        %v2465 = vpow.pop %v2464
        %v2466 = vmul.f32 %v2430, 1.442695
        %v2467 = vpow.pop %v2466
        %v2468 = vmul.f32 %v2431, 1.442695
        %v2469 = vpow.pop %v2468
        %v2470 = vmul.f32 %v2432, 1.442695
        %v2471 = vpow.pop %v2470
        %v2472 = vmul.f32 %v2433, 1.442695
        %v2473 = vpow.pop %v2472
        %v2474 = vsel %vm2353, %v2435, 0.0
        %2475 = vadd.xlane.f32.xlu0 %v2474
        %v2476 = vpop.xlane.xlu0 %2475
        %v2477 = vsel %vm2353, %v2437, 0.0
        %2478 = vadd.xlane.f32.xlu0 %v2477
        %v2479 = vpop.xlane.xlu0 %2478
        %v2480 = vsel %vm2353, %v2439, 0.0
        %2481 = vadd.xlane.f32.xlu0 %v2480
        %v2482 = vpop.xlane.xlu0 %2481
        %v2483 = vsel %vm2353, %v2441, 0.0
        %2484 = vadd.xlane.f32.xlu0 %v2483
        %v2485 = vpop.xlane.xlu0 %2484
        %v2486 = vsel %vm2353, %v2443, 0.0
        %2487 = vadd.xlane.f32.xlu0 %v2486
        %v2488 = vpop.xlane.xlu0 %2487
        %v2489 = vsel %vm2353, %v2445, 0.0
        %2490 = vadd.xlane.f32.xlu0 %v2489
        %v2491 = vpop.xlane.xlu0 %2490
        %v2492 = vsel %vm2353, %v2447, 0.0
        %2493 = vadd.xlane.f32.xlu0 %v2492
        %v2494 = vpop.xlane.xlu0 %2493
        %v2495 = vsel %vm2353, %v2449, 0.0
        %2496 = vadd.xlane.f32.xlu0 %v2495
        %v2497 = vpop.xlane.xlu0 %2496
        %v2498 = vsel %vm2353, %v2451, 0.0
        %2499 = vadd.xlane.f32.xlu0 %v2498
        %v2500 = vpop.xlane.xlu0 %2499
        %v2501 = vsel %vm2353, %v2453, 0.0
        %2502 = vadd.xlane.f32.xlu0 %v2501
        %v2503 = vpop.xlane.xlu0 %2502
        %v2504 = vsel %vm2353, %v2455, 0.0
        %2505 = vadd.xlane.f32.xlu0 %v2504
        %v2506 = vpop.xlane.xlu0 %2505
        %v2507 = vsel %vm2353, %v2457, 0.0
        %2508 = vadd.xlane.f32.xlu0 %v2507
        %v2509 = vpop.xlane.xlu0 %2508
        %v2510 = vsel %vm2353, %v2459, 0.0
        %2511 = vadd.xlane.f32.xlu0 %v2510
        %v2512 = vpop.xlane.xlu0 %2511
        %v2513 = vsel %vm2353, %v2461, 0.0
        %2514 = vadd.xlane.f32.xlu0 %v2513
        %v2515 = vpop.xlane.xlu0 %2514
        %v2516 = vsel %vm2353, %v2463, 0.0
        %2517 = vadd.xlane.f32.xlu0 %v2516
        %v2518 = vpop.xlane.xlu0 %2517
        %v2519 = vsel %vm2353, %v2465, 0.0
        %2520 = vadd.xlane.f32.xlu0 %v2519
        %v2521 = vpop.xlane.xlu0 %2520
        %v2522 = vsel %vm2353, %v2467, 0.0
        %2523 = vadd.xlane.f32.xlu0 %v2522
        %v2524 = vpop.xlane.xlu0 %2523
        %v2525 = vsel %vm2353, %v2469, 0.0
        %2526 = vadd.xlane.f32.xlu0 %v2525
        %v2527 = vpop.xlane.xlu0 %2526
        %v2528 = vsel %vm2353, %v2471, 0.0
        %2529 = vadd.xlane.f32.xlu0 %v2528
        %v2530 = vpop.xlane.xlu0 %2529
        %v2531 = vsel %vm2353, %v2473, 0.0
        %2532 = vadd.xlane.f32.xlu0 %v2531
        %v2533 = vpop.xlane.xlu0 %2532
        %v2534 = vrcp.pop %v2476
        %v2535 = vrcp.pop %v2479
        %v2536 = vrcp.pop %v2482
        %v2537 = vrcp.pop %v2485
        %v2538 = vrcp.pop %v2488
        %v2539 = vrcp.pop %v2491
        %v2540 = vrcp.pop %v2494
        %v2541 = vrcp.pop %v2497
        %v2542 = vrcp.pop %v2500
        %v2543 = vrcp.pop %v2503
        %v2544 = vrcp.pop %v2506
        %v2545 = vrcp.pop %v2509
        %v2546 = vrcp.pop %v2512
        %v2547 = vrcp.pop %v2515
        %v2548 = vrcp.pop %v2518
        %v2549 = vrcp.pop %v2521
        %v2550 = vrcp.pop %v2524
        %v2551 = vrcp.pop %v2527
        %v2552 = vrcp.pop %v2530
        %v2553 = vrcp.pop %v2533
        %v2554 = vmul.f32 %v2435, %v2534
        %v2555 = vmul.f32 %v2437, %v2535
        %v2556 = vmul.f32 %v2439, %v2536
        %v2557 = vmul.f32 %v2441, %v2537
        %v2558 = vmul.f32 %v2443, %v2538
        %v2559 = vmul.f32 %v2445, %v2539
        %v2560 = vmul.f32 %v2447, %v2540
        %v2561 = vmul.f32 %v2449, %v2541
        %v2562 = vmul.f32 %v2451, %v2542
        %v2563 = vmul.f32 %v2453, %v2543
        %v2564 = vmul.f32 %v2455, %v2544
        %v2565 = vmul.f32 %v2457, %v2545
        %v2566 = vmul.f32 %v2459, %v2546
        %v2567 = vmul.f32 %v2461, %v2547
        %v2568 = vmul.f32 %v2463, %v2548
        %v2569 = vmul.f32 %v2465, %v2549
        %v2570 = vmul.f32 %v2467, %v2550
        %v2571 = vmul.f32 %v2469, %v2551
        %v2572 = vmul.f32 %v2471, %v2552
        %v2573 = vmul.f32 %v2473, %v2553
        %v2574 = vpack.c.bf16 %v2555, %v2554
        %v2575 = vpack.c.bf16 %v2557, %v2556
        %v2576 = vpack.c.bf16 %v2559, %v2558
        %v2577 = vpack.c.bf16 %v2561, %v2560
        %v2578 = vpack.c.bf16 %v2563, %v2562
        %v2579 = vpack.c.bf16 %v2565, %v2564
        %v2580 = vpack.c.bf16 %v2567, %v2566
        %v2581 = vpack.c.bf16 %v2569, %v2568
        %v2582 = vpack.c.bf16 %v2571, %v2570
        %v2583 = vpack.c.bf16 %v2573, %v2572
        %v2585 = vsel %vm2353, %v2574, 0
        %v2588 = vsel %vm2353, %v2575, 0
        %v2591 = vsel %vm2353, %v2576, 0
        %v2594 = vsel %vm2353, %v2577, 0
        %v2597 = vsel %vm2353, %v2578, 0
        %2599 = vmatprep.subr.bf16.mxu0 0
        %2600 = vmatpush1.bf16.msra.mxu0 %v2147
        %2601 = vmatprep.subr.bf16.mxu0 0
        %2602 = vmatpush1.bf16.msra.mxu0 %v2149
        %2603 = vmatprep.subr.bf16.mxu0 0
        %2604 = vmatpush1.bf16.msra.mxu0 %v2151
        %2605 = vmatprep.subr.bf16.mxu0 0
        %2606 = vmatpush1.bf16.msra.mxu0 %v2153
        %2607 = vmatprep.subr.bf16.mxu0 0
        %2608 = vmatpush1.bf16.msra.mxu0 %v2155
        %2609 = vmatprep.subr.bf16.mxu0 0
        %2610 = vmatpush1.bf16.msra.mxu0 0
        %2611 = vmatprep.subr.bf16.mxu0 0
        %2612 = vmatpush1.bf16.msra.mxu0 0
        %2613 = vmatprep.subr.bf16.mxu0 0
        %2614 = vmatpush1.bf16.msra.mxu0 0
        %2615 = vmatprep.subr.bf16.mxu0 0
        %2616 = vmatpush1.bf16.msra.mxu0 0
        %2617 = vmatprep.subr.bf16.mxu0 0
        %2618 = vmatpush1.bf16.msra.mxu0 0
        %2619 = vmatprep.subr.bf16.mxu0 0
        %2620 = vmatpush1.bf16.msra.mxu0 0
        %2621 = vmatprep.subr.bf16.mxu0 0
        %2622 = vmatpush1.bf16.msra.mxu0 0
        %2623 = vmatprep.subr.bf16.mxu0 0
        %2624 = vmatpush1.bf16.msra.mxu0 0
        %2625 = vmatprep.subr.bf16.mxu0 0
        %2626 = vmatpush1.bf16.msra.mxu0 0
        %2627 = vmatprep.subr.bf16.mxu0 0
        %2628 = vmatpush1.bf16.msra.mxu0 0
        %2629 = vmatprep.subr.bf16.mxu0 0
        %2630 = vmatpush1.bf16.msra.mxu0 0
        %2631 = vmatprep.mubr.bf16.mxu0 0
        %2632 = vmatmul.mubr.bf16.gmra.mrb[0].mxu0 %v2585
        %v2633 = vpop.f32.mrb[0].mxu0
        %v2634 = vadd.f32 0.0, %v2633
        %v2635 = vpop.f32.mrb[0].mxu0
        %v2636 = vpop.f32.mrb[0].mxu0
        %v2637 = vadd.f32 0.0, %v2636
        %v2638 = vpop.f32.mrb[0].mxu0
        %2639 = vmatprep.mubr.bf16.mxu0 0
        %2640 = vmatmul.mubr.bf16.gmra.mrb[0].mxu0 %v2588
        %v2641 = vpop.f32.mrb[0].mxu0
        %v2642 = vadd.f32 0.0, %v2641
        %v2643 = vpop.f32.mrb[0].mxu0
        %v2644 = vpop.f32.mrb[0].mxu0
        %v2645 = vadd.f32 0.0, %v2644
        %v2646 = vpop.f32.mrb[0].mxu0
        %2647 = vmatprep.mubr.bf16.mxu0 0
        %2648 = vmatmul.mubr.bf16.gmra.mrb[0].mxu0 %v2591
        %v2649 = vpop.f32.mrb[0].mxu0
        %v2650 = vadd.f32 0.0, %v2649
        %v2651 = vpop.f32.mrb[0].mxu0
        %v2652 = vpop.f32.mrb[0].mxu0
        %v2653 = vadd.f32 0.0, %v2652
        %v2654 = vpop.f32.mrb[0].mxu0
        %2655 = vmatprep.mubr.bf16.mxu0 0
        %2656 = vmatmul.mubr.bf16.gmra.mrb[0].mxu0 %v2594
        %v2657 = vpop.f32.mrb[0].mxu0
        %v2658 = vadd.f32 0.0, %v2657
        %v2659 = vpop.f32.mrb[0].mxu0
        %v2660 = vpop.f32.mrb[0].mxu0
        %v2661 = vadd.f32 0.0, %v2660
        %v2662 = vpop.f32.mrb[0].mxu0
        %2663 = vmatprep.mubr.bf16.mxu0 0
        %2664 = vmatmul.mubr.bf16.gmra.mrb[0].mxu0 %v2597
        %v2665 = vpop.f32.mrb[0].mxu0
        %v2666 = vadd.f32 0.0, %v2665
        %v2667 = vpop.f32.mrb[0].mxu0
        %v2668 = vpop.f32.mrb[0].mxu0
        %v2669 = vadd.f32 0.0, %v2668
        %v2670 = vpop.f32.mrb[0].mxu0
        %2671 = vdwg.mxu0
        %v2673 = vsel %vm2353, %v2579, 0
        %v2676 = vsel %vm2353, %v2580, 0
        %v2679 = vsel %vm2353, %v2581, 0
        %v2682 = vsel %vm2353, %v2582, 0
        %v2685 = vsel %vm2353, %v2583, 0
        %2687 = vmatprep.subr.bf16.mxu0 0
        %2688 = vmatpush1.bf16.msra.mxu0 %v2157
        %2689 = vmatprep.subr.bf16.mxu0 0
        %2690 = vmatpush1.bf16.msra.mxu0 %v2159
        %2691 = vmatprep.subr.bf16.mxu0 0
        %2692 = vmatpush1.bf16.msra.mxu0 %v2161
        %2693 = vmatprep.subr.bf16.mxu0 0
        %2694 = vmatpush1.bf16.msra.mxu0 %v2163
        %2695 = vmatprep.subr.bf16.mxu0 0
        %2696 = vmatpush1.bf16.msra.mxu0 %v2165
        %2697 = vmatprep.subr.bf16.mxu0 0
        %2698 = vmatpush1.bf16.msra.mxu0 0
        %2699 = vmatprep.subr.bf16.mxu0 0
        %2700 = vmatpush1.bf16.msra.mxu0 0
        %2701 = vmatprep.subr.bf16.mxu0 0
        %2702 = vmatpush1.bf16.msra.mxu0 0
        %2703 = vmatprep.subr.bf16.mxu0 0
        %2704 = vmatpush1.bf16.msra.mxu0 0
        %2705 = vmatprep.subr.bf16.mxu0 0
        %2706 = vmatpush1.bf16.msra.mxu0 0
        %2707 = vmatprep.subr.bf16.mxu0 0
        %2708 = vmatpush1.bf16.msra.mxu0 0
        %2709 = vmatprep.subr.bf16.mxu0 0
        %2710 = vmatpush1.bf16.msra.mxu0 0
        %2711 = vmatprep.subr.bf16.mxu0 0
        %2712 = vmatpush1.bf16.msra.mxu0 0
        %2713 = vmatprep.subr.bf16.mxu0 0
        %2714 = vmatpush1.bf16.msra.mxu0 0
        %2715 = vmatprep.subr.bf16.mxu0 0
        %2716 = vmatpush1.bf16.msra.mxu0 0
        %2717 = vmatprep.subr.bf16.mxu0 0
        %2718 = vmatpush1.bf16.msra.mxu0 0
        %2719 = vmatprep.mubr.bf16.mxu0 0
        %2720 = vmatmul.mubr.bf16.gmra.mrb[0].mxu0 %v2673
        %v2721 = vpop.f32.mrb[0].mxu0
        %v2722 = vadd.f32 0.0, %v2721
        %v2723 = vpop.f32.mrb[0].mxu0
        %v2724 = vpop.f32.mrb[0].mxu0
        %v2725 = vadd.f32 0.0, %v2724
        %v2726 = vpop.f32.mrb[0].mxu0
        %2727 = vmatprep.mubr.bf16.mxu0 0
        %2728 = vmatmul.mubr.bf16.gmra.mrb[0].mxu0 %v2676
        %v2729 = vpop.f32.mrb[0].mxu0
        %v2730 = vadd.f32 0.0, %v2729
        %v2731 = vpop.f32.mrb[0].mxu0
        %v2732 = vpop.f32.mrb[0].mxu0
        %v2733 = vadd.f32 0.0, %v2732
        %v2734 = vpop.f32.mrb[0].mxu0
        %2735 = vmatprep.mubr.bf16.mxu0 0
        %2736 = vmatmul.mubr.bf16.gmra.mrb[0].mxu0 %v2679
        %v2737 = vpop.f32.mrb[0].mxu0
        %v2738 = vadd.f32 0.0, %v2737
        %v2739 = vpop.f32.mrb[0].mxu0
        %v2740 = vpop.f32.mrb[0].mxu0
        %v2741 = vadd.f32 0.0, %v2740
        %v2742 = vpop.f32.mrb[0].mxu0
        %2743 = vmatprep.mubr.bf16.mxu0 0
        %2744 = vmatmul.mubr.bf16.gmra.mrb[0].mxu0 %v2682
        %v2745 = vpop.f32.mrb[0].mxu0
        %v2746 = vadd.f32 0.0, %v2745
        %v2747 = vpop.f32.mrb[0].mxu0
        %v2748 = vpop.f32.mrb[0].mxu0
        %v2749 = vadd.f32 0.0, %v2748
        %v2750 = vpop.f32.mrb[0].mxu0
        %2751 = vmatprep.mubr.bf16.mxu0 0
        %2752 = vmatmul.mubr.bf16.gmra.mrb[0].mxu0 %v2685
        %v2753 = vpop.f32.mrb[0].mxu0
        %v2754 = vadd.f32 0.0, %v2753
        %v2755 = vpop.f32.mrb[0].mxu0
        %v2756 = vpop.f32.mrb[0].mxu0
        %v2757 = vadd.f32 0.0, %v2756
        %v2758 = vpop.f32.mrb[0].mxu0
        %2759 = vdwg.mxu0
        %2760 = vmatprep.subr.bf16.mxu0 0
        %2761 = vmatpush1.bf16.xpose.msra.mxu0 %v2128
        %2762 = vmatprep.subr.bf16.mxu0 0
        %2763 = vmatpush1.bf16.xpose.msra.mxu0 %v2130
        %2764 = vmatprep.subr.bf16.mxu0 0
        %2765 = vmatpush1.bf16.xpose.msra.mxu0 %v2132
        %2766 = vmatprep.subr.bf16.mxu0 0
        %2767 = vmatpush1.bf16.xpose.msra.mxu0 %v2134
        %2768 = vmatprep.subr.bf16.mxu0 0
        %2769 = vmatpush1.bf16.xpose.msra.mxu0 %v2136
        %2770 = vmatprep.subr.bf16.mxu0 0
        %2771 = vmatpush1.bf16.xpose.msra.mxu0 0
        %2772 = vmatprep.subr.bf16.mxu0 0
        %2773 = vmatpush1.bf16.xpose.msra.mxu0 0
        %2774 = vmatprep.subr.bf16.mxu0 0
        %2775 = vmatpush1.bf16.xpose.msra.mxu0 0
        %2776 = vmatprep.subr.bf16.mxu0 0
        %2777 = vmatpush1.bf16.xpose.msra.mxu0 0
        %2778 = vmatprep.subr.bf16.mxu0 0
        %2779 = vmatpush1.bf16.xpose.msra.mxu0 0
        %2780 = vmatprep.subr.bf16.mxu0 0
        %2781 = vmatpush1.bf16.xpose.msra.mxu0 0
        %2782 = vmatprep.subr.bf16.mxu0 0
        %2783 = vmatpush1.bf16.xpose.msra.mxu0 0
        %2784 = vmatprep.subr.bf16.mxu0 0
        %2785 = vmatpush1.bf16.xpose.msra.mxu0 0
        %2786 = vmatprep.subr.bf16.mxu0 0
        %2787 = vmatpush1.bf16.xpose.msra.mxu0 0
        %2788 = vmatprep.subr.bf16.mxu0 0
        %2789 = vmatpush1.bf16.xpose.msra.mxu0 0
        %2790 = vmatprep.subr.bf16.mxu0 0
        %2791 = vmatpush1.bf16.xpose.msra.mxu0 0
        %2792 = vmatprep.mubr.bf16.mxu0 0
        %2793 = vmatmul.mubr.bf16.gmra.mrb[0].mxu0 %v2108
        %v2794 = vpop.f32.mrb[0].mxu0
        %v2795 = vadd.f32 0.0, %v2794
        %v2796 = vpop.f32.mrb[0].mxu0
        %v2797 = vpop.f32.mrb[0].mxu0
        %v2798 = vadd.f32 0.0, %v2797
        %v2799 = vpop.f32.mrb[0].mxu0
        %2800 = vmatprep.mubr.bf16.mxu0 0
        %2801 = vmatmul.mubr.bf16.gmra.mrb[0].mxu0 %v2110
        %v2802 = vpop.f32.mrb[0].mxu0
        %v2803 = vadd.f32 0.0, %v2802
        %v2804 = vpop.f32.mrb[0].mxu0
        %v2805 = vpop.f32.mrb[0].mxu0
        %v2806 = vadd.f32 0.0, %v2805
        %v2807 = vpop.f32.mrb[0].mxu0
        %2808 = vmatprep.mubr.bf16.mxu0 0
        %2809 = vmatmul.mubr.bf16.gmra.mrb[0].mxu0 %v2112
        %v2810 = vpop.f32.mrb[0].mxu0
        %v2811 = vadd.f32 0.0, %v2810
        %v2812 = vpop.f32.mrb[0].mxu0
        %v2813 = vpop.f32.mrb[0].mxu0
        %v2814 = vadd.f32 0.0, %v2813
        %v2815 = vpop.f32.mrb[0].mxu0
        %2816 = vmatprep.mubr.bf16.mxu0 0
        %2817 = vmatmul.mubr.bf16.gmra.mrb[0].mxu0 %v2114
        %v2818 = vpop.f32.mrb[0].mxu0
        %v2819 = vadd.f32 0.0, %v2818
        %v2820 = vpop.f32.mrb[0].mxu0
        %v2821 = vpop.f32.mrb[0].mxu0
        %v2822 = vadd.f32 0.0, %v2821
        %v2823 = vpop.f32.mrb[0].mxu0
        %2824 = vmatprep.mubr.bf16.mxu0 0
        %2825 = vmatmul.mubr.bf16.gmra.mrb[0].mxu0 %v2116
        %v2826 = vpop.f32.mrb[0].mxu0
        %v2827 = vadd.f32 0.0, %v2826
        %v2828 = vpop.f32.mrb[0].mxu0
        %v2829 = vpop.f32.mrb[0].mxu0
        %v2830 = vadd.f32 0.0, %v2829
        %v2831 = vpop.f32.mrb[0].mxu0
        %2832 = vdwg.mxu0
        %2833 = vmatprep.subr.bf16.mxu0 0
        %2834 = vmatpush1.bf16.xpose.msra.mxu0 %v2138
        %2835 = vmatprep.subr.bf16.mxu0 0
        %2836 = vmatpush1.bf16.xpose.msra.mxu0 %v2140
        %2837 = vmatprep.subr.bf16.mxu0 0
        %2838 = vmatpush1.bf16.xpose.msra.mxu0 %v2142
        %2839 = vmatprep.subr.bf16.mxu0 0
        %2840 = vmatpush1.bf16.xpose.msra.mxu0 %v2144
        %2841 = vmatprep.subr.bf16.mxu0 0
        %2842 = vmatpush1.bf16.xpose.msra.mxu0 %v2146
        %2843 = vmatprep.subr.bf16.mxu0 0
        %2844 = vmatpush1.bf16.xpose.msra.mxu0 0
        %2845 = vmatprep.subr.bf16.mxu0 0
        %2846 = vmatpush1.bf16.xpose.msra.mxu0 0
        %2847 = vmatprep.subr.bf16.mxu0 0
        %2848 = vmatpush1.bf16.xpose.msra.mxu0 0
        %2849 = vmatprep.subr.bf16.mxu0 0
        %2850 = vmatpush1.bf16.xpose.msra.mxu0 0
        %2851 = vmatprep.subr.bf16.mxu0 0
        %2852 = vmatpush1.bf16.xpose.msra.mxu0 0
        %2853 = vmatprep.subr.bf16.mxu0 0
        %2854 = vmatpush1.bf16.xpose.msra.mxu0 0
        %2855 = vmatprep.subr.bf16.mxu0 0
        %2856 = vmatpush1.bf16.xpose.msra.mxu0 0
        %2857 = vmatprep.subr.bf16.mxu0 0
        %2858 = vmatpush1.bf16.xpose.msra.mxu0 0
        %2859 = vmatprep.subr.bf16.mxu0 0
        %2860 = vmatpush1.bf16.xpose.msra.mxu0 0
        %2861 = vmatprep.subr.bf16.mxu0 0
        %2862 = vmatpush1.bf16.xpose.msra.mxu0 0
        %2863 = vmatprep.subr.bf16.mxu0 0
        %2864 = vmatpush1.bf16.xpose.msra.mxu0 0
        %2865 = vmatprep.mubr.bf16.mxu0 0
        %2866 = vmatmul.mubr.bf16.gmra.mrb[0].mxu0 %v2118
        %v2867 = vpop.f32.mrb[0].mxu0
        %v2868 = vadd.f32 0.0, %v2867
        %v2869 = vpop.f32.mrb[0].mxu0
        %v2870 = vpop.f32.mrb[0].mxu0
        %v2871 = vadd.f32 0.0, %v2870
        %v2872 = vpop.f32.mrb[0].mxu0
        %2873 = vmatprep.mubr.bf16.mxu0 0
        %2874 = vmatmul.mubr.bf16.gmra.mrb[0].mxu0 %v2120
        %v2875 = vpop.f32.mrb[0].mxu0
        %v2876 = vadd.f32 0.0, %v2875
        %v2877 = vpop.f32.mrb[0].mxu0
        %v2878 = vpop.f32.mrb[0].mxu0
        %v2879 = vadd.f32 0.0, %v2878
        %v2880 = vpop.f32.mrb[0].mxu0
        %2881 = vmatprep.mubr.bf16.mxu0 0
        %2882 = vmatmul.mubr.bf16.gmra.mrb[0].mxu0 %v2122
        %v2883 = vpop.f32.mrb[0].mxu0
        %v2884 = vadd.f32 0.0, %v2883
        %v2885 = vpop.f32.mrb[0].mxu0
        %v2886 = vpop.f32.mrb[0].mxu0
        %v2887 = vadd.f32 0.0, %v2886
        %v2888 = vpop.f32.mrb[0].mxu0
        %2889 = vmatprep.mubr.bf16.mxu0 0
        %2890 = vmatmul.mubr.bf16.gmra.mrb[0].mxu0 %v2124
        %v2891 = vpop.f32.mrb[0].mxu0
        %v2892 = vadd.f32 0.0, %v2891
        %v2893 = vpop.f32.mrb[0].mxu0
        %v2894 = vpop.f32.mrb[0].mxu0
        %v2895 = vadd.f32 0.0, %v2894
        %v2896 = vpop.f32.mrb[0].mxu0
        %2897 = vmatprep.mubr.bf16.mxu0 0
        %2898 = vmatmul.mubr.bf16.gmra.mrb[0].mxu0 %v2126
        %v2899 = vpop.f32.mrb[0].mxu0
        %v2900 = vadd.f32 0.0, %v2899
        %v2901 = vpop.f32.mrb[0].mxu0
        %v2902 = vpop.f32.mrb[0].mxu0
        %v2903 = vadd.f32 0.0, %v2902
        %v2904 = vpop.f32.mrb[0].mxu0
        %2905 = vdwg.mxu0
        %v2906 = vsel %vm2323, -1e+09, %v2795
        %v2907 = vsel %vm2324, -1e+09, %v2798
        %v2908 = vsel %vm2325, -1e+09, %v2803
        %v2909 = vsel %vm2326, -1e+09, %v2806
        %v2910 = vsel %vm2327, -1e+09, %v2811
        %v2911 = vsel %vm2328, -1e+09, %v2814
        %v2912 = vsel %vm2329, -1e+09, %v2819
        %v2913 = vsel %vm2330, -1e+09, %v2822
        %v2914 = vsel %vm2331, -1e+09, %v2827
        %v2915 = vsel %vm2332, -1e+09, %v2830
        %v2916 = vsel %vm2323, -1e+09, %v2868
        %v2917 = vsel %vm2324, -1e+09, %v2871
        %v2918 = vsel %vm2325, -1e+09, %v2876
        %v2919 = vsel %vm2326, -1e+09, %v2879
        %v2920 = vsel %vm2327, -1e+09, %v2884
        %v2921 = vsel %vm2328, -1e+09, %v2887
        %v2922 = vsel %vm2329, -1e+09, %v2892
        %v2923 = vsel %vm2330, -1e+09, %v2895
        %v2924 = vsel %vm2331, -1e+09, %v2900
        %v2925 = vsel %vm2332, -1e+09, %v2903
        %v2926 = vsel %vm2353, %v2906, -inf
        %2927 = vmax.xlane.f32.xlu0 %v2926
        %v2928 = vpop.xlane.xlu0 %2927
        %v2929 = vsel %vm2353, %v2907, -inf
        %2930 = vmax.xlane.f32.xlu0 %v2929
        %v2931 = vpop.xlane.xlu0 %2930
        %v2932 = vsel %vm2353, %v2908, -inf
        %2933 = vmax.xlane.f32.xlu0 %v2932
        %v2934 = vpop.xlane.xlu0 %2933
        %v2935 = vsel %vm2353, %v2909, -inf
        %2936 = vmax.xlane.f32.xlu0 %v2935
        %v2937 = vpop.xlane.xlu0 %2936
        %v2938 = vsel %vm2353, %v2910, -inf
        %2939 = vmax.xlane.f32.xlu0 %v2938
        %v2940 = vpop.xlane.xlu0 %2939
        %v2941 = vsel %vm2353, %v2911, -inf
        %2942 = vmax.xlane.f32.xlu0 %v2941
        %v2943 = vpop.xlane.xlu0 %2942
        %v2944 = vsel %vm2353, %v2912, -inf
        %2945 = vmax.xlane.f32.xlu0 %v2944
        %v2946 = vpop.xlane.xlu0 %2945
        %v2947 = vsel %vm2353, %v2913, -inf
        %2948 = vmax.xlane.f32.xlu0 %v2947
        %v2949 = vpop.xlane.xlu0 %2948
        %v2950 = vsel %vm2353, %v2914, -inf
        %2951 = vmax.xlane.f32.xlu0 %v2950
        %v2952 = vpop.xlane.xlu0 %2951
        %v2953 = vsel %vm2353, %v2915, -inf
        %2954 = vmax.xlane.f32.xlu0 %v2953
        %v2955 = vpop.xlane.xlu0 %2954
        %v2956 = vsel %vm2353, %v2916, -inf
        %2957 = vmax.xlane.f32.xlu0 %v2956
        %v2958 = vpop.xlane.xlu0 %2957
        %v2959 = vsel %vm2353, %v2917, -inf
        %2960 = vmax.xlane.f32.xlu0 %v2959
        %v2961 = vpop.xlane.xlu0 %2960
        %v2962 = vsel %vm2353, %v2918, -inf
        %2963 = vmax.xlane.f32.xlu0 %v2962
        %v2964 = vpop.xlane.xlu0 %2963
        %v2965 = vsel %vm2353, %v2919, -inf
        %2966 = vmax.xlane.f32.xlu0 %v2965
        %v2967 = vpop.xlane.xlu0 %2966
        %v2968 = vsel %vm2353, %v2920, -inf
        %2969 = vmax.xlane.f32.xlu0 %v2968
        %v2970 = vpop.xlane.xlu0 %2969
        %v2971 = vsel %vm2353, %v2921, -inf
        %2972 = vmax.xlane.f32.xlu0 %v2971
        %v2973 = vpop.xlane.xlu0 %2972
        %v2974 = vsel %vm2353, %v2922, -inf
        %2975 = vmax.xlane.f32.xlu0 %v2974
        %v2976 = vpop.xlane.xlu0 %2975
        %v2977 = vsel %vm2353, %v2923, -inf
        %2978 = vmax.xlane.f32.xlu0 %v2977
        %v2979 = vpop.xlane.xlu0 %2978
        %v2980 = vsel %vm2353, %v2924, -inf
        %2981 = vmax.xlane.f32.xlu0 %v2980
        %v2982 = vpop.xlane.xlu0 %2981
        %v2983 = vsel %vm2353, %v2925, -inf
        %2984 = vmax.xlane.f32.xlu0 %v2983
        %v2985 = vpop.xlane.xlu0 %2984
        %v2986 = vsub.f32 %v2906, %v2928
        %v2987 = vsub.f32 %v2907, %v2931
        %v2988 = vsub.f32 %v2908, %v2934
        %v2989 = vsub.f32 %v2909, %v2937
        %v2990 = vsub.f32 %v2910, %v2940
        %v2991 = vsub.f32 %v2911, %v2943
        %v2992 = vsub.f32 %v2912, %v2946
        %v2993 = vsub.f32 %v2913, %v2949
        %v2994 = vsub.f32 %v2914, %v2952
        %v2995 = vsub.f32 %v2915, %v2955
        %v2996 = vsub.f32 %v2916, %v2958
        %v2997 = vsub.f32 %v2917, %v2961
        %v2998 = vsub.f32 %v2918, %v2964
        %v2999 = vsub.f32 %v2919, %v2967
        %v3000 = vsub.f32 %v2920, %v2970
        %v3001 = vsub.f32 %v2921, %v2973
        %v3002 = vsub.f32 %v2922, %v2976
        %v3003 = vsub.f32 %v2923, %v2979
        %v3004 = vsub.f32 %v2924, %v2982
        %v3005 = vsub.f32 %v2925, %v2985
        %v3006 = vmul.f32 %v2986, 1.442695
        %v3007 = vpow.pop %v3006
        %v3008 = vmul.f32 %v2987, 1.442695
        %v3009 = vpow.pop %v3008
        %v3010 = vmul.f32 %v2988, 1.442695
        %v3011 = vpow.pop %v3010
        %v3012 = vmul.f32 %v2989, 1.442695
        %v3013 = vpow.pop %v3012
        %v3014 = vmul.f32 %v2990, 1.442695
        %v3015 = vpow.pop %v3014
        %v3016 = vmul.f32 %v2991, 1.442695
        %v3017 = vpow.pop %v3016
        %v3018 = vmul.f32 %v2992, 1.442695
        %v3019 = vpow.pop %v3018
        %v3020 = vmul.f32 %v2993, 1.442695
        %v3021 = vpow.pop %v3020
        %v3022 = vmul.f32 %v2994, 1.442695
        %v3023 = vpow.pop %v3022
        %v3024 = vmul.f32 %v2995, 1.442695
        %v3025 = vpow.pop %v3024
        %v3026 = vmul.f32 %v2996, 1.442695
        %v3027 = vpow.pop %v3026
        %v3028 = vmul.f32 %v2997, 1.442695
        %v3029 = vpow.pop %v3028
        %v3030 = vmul.f32 %v2998, 1.442695
        %v3031 = vpow.pop %v3030
        %v3032 = vmul.f32 %v2999, 1.442695
        %v3033 = vpow.pop %v3032
        %v3034 = vmul.f32 %v3000, 1.442695
        %v3035 = vpow.pop %v3034
        %v3036 = vmul.f32 %v3001, 1.442695
        %v3037 = vpow.pop %v3036
        %v3038 = vmul.f32 %v3002, 1.442695
        %v3039 = vpow.pop %v3038
        %v3040 = vmul.f32 %v3003, 1.442695
        %v3041 = vpow.pop %v3040
        %v3042 = vmul.f32 %v3004, 1.442695
        %v3043 = vpow.pop %v3042
        %v3044 = vmul.f32 %v3005, 1.442695
        %v3045 = vpow.pop %v3044
        %v3046 = vsel %vm2353, %v3007, 0.0
        %3047 = vadd.xlane.f32.xlu0 %v3046
        %v3048 = vpop.xlane.xlu0 %3047
        %v3049 = vsel %vm2353, %v3009, 0.0
        %3050 = vadd.xlane.f32.xlu0 %v3049
        %v3051 = vpop.xlane.xlu0 %3050
        %v3052 = vsel %vm2353, %v3011, 0.0
        %3053 = vadd.xlane.f32.xlu0 %v3052
        %v3054 = vpop.xlane.xlu0 %3053
        %v3055 = vsel %vm2353, %v3013, 0.0
        %3056 = vadd.xlane.f32.xlu0 %v3055
        %v3057 = vpop.xlane.xlu0 %3056
        %v3058 = vsel %vm2353, %v3015, 0.0
        %3059 = vadd.xlane.f32.xlu0 %v3058
        %v3060 = vpop.xlane.xlu0 %3059
        %v3061 = vsel %vm2353, %v3017, 0.0
        %3062 = vadd.xlane.f32.xlu0 %v3061
        %v3063 = vpop.xlane.xlu0 %3062
        %v3064 = vsel %vm2353, %v3019, 0.0
        %3065 = vadd.xlane.f32.xlu0 %v3064
        %v3066 = vpop.xlane.xlu0 %3065
        %v3067 = vsel %vm2353, %v3021, 0.0
        %3068 = vadd.xlane.f32.xlu0 %v3067
        %v3069 = vpop.xlane.xlu0 %3068
        %v3070 = vsel %vm2353, %v3023, 0.0
        %3071 = vadd.xlane.f32.xlu0 %v3070
        %v3072 = vpop.xlane.xlu0 %3071
        %v3073 = vsel %vm2353, %v3025, 0.0
        %3074 = vadd.xlane.f32.xlu0 %v3073
        %v3075 = vpop.xlane.xlu0 %3074
        %v3076 = vsel %vm2353, %v3027, 0.0
        %3077 = vadd.xlane.f32.xlu0 %v3076
        %v3078 = vpop.xlane.xlu0 %3077
        %v3079 = vsel %vm2353, %v3029, 0.0
        %3080 = vadd.xlane.f32.xlu0 %v3079
        %v3081 = vpop.xlane.xlu0 %3080
        %v3082 = vsel %vm2353, %v3031, 0.0
        %3083 = vadd.xlane.f32.xlu0 %v3082
        %v3084 = vpop.xlane.xlu0 %3083
        %v3085 = vsel %vm2353, %v3033, 0.0
        %3086 = vadd.xlane.f32.xlu0 %v3085
        %v3087 = vpop.xlane.xlu0 %3086
        %v3088 = vsel %vm2353, %v3035, 0.0
        %3089 = vadd.xlane.f32.xlu0 %v3088
        %v3090 = vpop.xlane.xlu0 %3089
        %v3091 = vsel %vm2353, %v3037, 0.0
        %3092 = vadd.xlane.f32.xlu0 %v3091
        %v3093 = vpop.xlane.xlu0 %3092
        %v3094 = vsel %vm2353, %v3039, 0.0
        %3095 = vadd.xlane.f32.xlu0 %v3094
        %v3096 = vpop.xlane.xlu0 %3095
        %v3097 = vsel %vm2353, %v3041, 0.0
        %3098 = vadd.xlane.f32.xlu0 %v3097
        %v3099 = vpop.xlane.xlu0 %3098
        %v3100 = vsel %vm2353, %v3043, 0.0
        %3101 = vadd.xlane.f32.xlu0 %v3100
        %v3102 = vpop.xlane.xlu0 %3101
        %v3103 = vsel %vm2353, %v3045, 0.0
        %3104 = vadd.xlane.f32.xlu0 %v3103
        %v3105 = vpop.xlane.xlu0 %3104
        %v3106 = vrcp.pop %v3048
        %v3107 = vrcp.pop %v3051
        %v3108 = vrcp.pop %v3054
        %v3109 = vrcp.pop %v3057
        %v3110 = vrcp.pop %v3060
        %v3111 = vrcp.pop %v3063
        %v3112 = vrcp.pop %v3066
        %v3113 = vrcp.pop %v3069
        %v3114 = vrcp.pop %v3072
        %v3115 = vrcp.pop %v3075
        %v3116 = vrcp.pop %v3078
        %v3117 = vrcp.pop %v3081
        %v3118 = vrcp.pop %v3084
        %v3119 = vrcp.pop %v3087
        %v3120 = vrcp.pop %v3090
        %v3121 = vrcp.pop %v3093
        %v3122 = vrcp.pop %v3096
        %v3123 = vrcp.pop %v3099
        %v3124 = vrcp.pop %v3102
        %v3125 = vrcp.pop %v3105
        %v3126 = vmul.f32 %v3007, %v3106
        %v3127 = vmul.f32 %v3009, %v3107
        %v3128 = vmul.f32 %v3011, %v3108
        %v3129 = vmul.f32 %v3013, %v3109
        %v3130 = vmul.f32 %v3015, %v3110
        %v3131 = vmul.f32 %v3017, %v3111
        %v3132 = vmul.f32 %v3019, %v3112
        %v3133 = vmul.f32 %v3021, %v3113
        %v3134 = vmul.f32 %v3023, %v3114
        %v3135 = vmul.f32 %v3025, %v3115
        %v3136 = vmul.f32 %v3027, %v3116
        %v3137 = vmul.f32 %v3029, %v3117
        %v3138 = vmul.f32 %v3031, %v3118
        %v3139 = vmul.f32 %v3033, %v3119
        %v3140 = vmul.f32 %v3035, %v3120
        %v3141 = vmul.f32 %v3037, %v3121
        %v3142 = vmul.f32 %v3039, %v3122
        %v3143 = vmul.f32 %v3041, %v3123
        %v3144 = vmul.f32 %v3043, %v3124
        %v3145 = vmul.f32 %v3045, %v3125
        %v3146 = vpack.c.bf16 %v3127, %v3126
        %v3147 = vpack.c.bf16 %v3129, %v3128
        %v3148 = vpack.c.bf16 %v3131, %v3130
        %v3149 = vpack.c.bf16 %v3133, %v3132
        %v3150 = vpack.c.bf16 %v3135, %v3134
        %v3151 = vpack.c.bf16 %v3137, %v3136
        %v3152 = vpack.c.bf16 %v3139, %v3138
        %v3153 = vpack.c.bf16 %v3141, %v3140
        %v3154 = vpack.c.bf16 %v3143, %v3142
        %v3155 = vpack.c.bf16 %v3145, %v3144
        %v3157 = vsel %vm2353, %v3146, 0
        %v3160 = vsel %vm2353, %v3147, 0
        %v3163 = vsel %vm2353, %v3148, 0
        %v3166 = vsel %vm2353, %v3149, 0
        %v3169 = vsel %vm2353, %v3150, 0
        %3171 = vmatprep.subr.bf16.mxu0 0
        %3172 = vmatpush1.bf16.msra.mxu0 %v2148
        %3173 = vmatprep.subr.bf16.mxu0 0
        %3174 = vmatpush1.bf16.msra.mxu0 %v2150
        %3175 = vmatprep.subr.bf16.mxu0 0
        %3176 = vmatpush1.bf16.msra.mxu0 %v2152
        %3177 = vmatprep.subr.bf16.mxu0 0
        %3178 = vmatpush1.bf16.msra.mxu0 %v2154
        %3179 = vmatprep.subr.bf16.mxu0 0
        %3180 = vmatpush1.bf16.msra.mxu0 %v2156
        %3181 = vmatprep.subr.bf16.mxu0 0
        %3182 = vmatpush1.bf16.msra.mxu0 0
        %3183 = vmatprep.subr.bf16.mxu0 0
        %3184 = vmatpush1.bf16.msra.mxu0 0
        %3185 = vmatprep.subr.bf16.mxu0 0
        %3186 = vmatpush1.bf16.msra.mxu0 0
        %3187 = vmatprep.subr.bf16.mxu0 0
        %3188 = vmatpush1.bf16.msra.mxu0 0
        %3189 = vmatprep.subr.bf16.mxu0 0
        %3190 = vmatpush1.bf16.msra.mxu0 0
        %3191 = vmatprep.subr.bf16.mxu0 0
        %3192 = vmatpush1.bf16.msra.mxu0 0
        %3193 = vmatprep.subr.bf16.mxu0 0
        %3194 = vmatpush1.bf16.msra.mxu0 0
        %3195 = vmatprep.subr.bf16.mxu0 0
        %3196 = vmatpush1.bf16.msra.mxu0 0
        %3197 = vmatprep.subr.bf16.mxu0 0
        %3198 = vmatpush1.bf16.msra.mxu0 0
        %3199 = vmatprep.subr.bf16.mxu0 0
        %3200 = vmatpush1.bf16.msra.mxu0 0
        %3201 = vmatprep.subr.bf16.mxu0 0
        %3202 = vmatpush1.bf16.msra.mxu0 0
        %3203 = vmatprep.mubr.bf16.mxu0 0
        %3204 = vmatmul.mubr.bf16.gmra.mrb[0].mxu0 %v3157
        %v3205 = vpop.f32.mrb[0].mxu0
        %v3206 = vadd.f32 0.0, %v3205
        %v3207 = vpop.f32.mrb[0].mxu0
        %v3208 = vpop.f32.mrb[0].mxu0
        %v3209 = vadd.f32 0.0, %v3208
        %v3210 = vpop.f32.mrb[0].mxu0
        %3211 = vmatprep.mubr.bf16.mxu0 0
        %3212 = vmatmul.mubr.bf16.gmra.mrb[0].mxu0 %v3160
        %v3213 = vpop.f32.mrb[0].mxu0
        %v3214 = vadd.f32 0.0, %v3213
        %v3215 = vpop.f32.mrb[0].mxu0
        %v3216 = vpop.f32.mrb[0].mxu0
        %v3217 = vadd.f32 0.0, %v3216
        %v3218 = vpop.f32.mrb[0].mxu0
        %3219 = vmatprep.mubr.bf16.mxu0 0
        %3220 = vmatmul.mubr.bf16.gmra.mrb[0].mxu0 %v3163
        %v3221 = vpop.f32.mrb[0].mxu0
        %v3222 = vadd.f32 0.0, %v3221
        %v3223 = vpop.f32.mrb[0].mxu0
        %v3224 = vpop.f32.mrb[0].mxu0
        %v3225 = vadd.f32 0.0, %v3224
        %v3226 = vpop.f32.mrb[0].mxu0
        %3227 = vmatprep.mubr.bf16.mxu0 0
        %3228 = vmatmul.mubr.bf16.gmra.mrb[0].mxu0 %v3166
        %v3229 = vpop.f32.mrb[0].mxu0
        %v3230 = vadd.f32 0.0, %v3229
        %v3231 = vpop.f32.mrb[0].mxu0
        %v3232 = vpop.f32.mrb[0].mxu0
        %v3233 = vadd.f32 0.0, %v3232
        %v3234 = vpop.f32.mrb[0].mxu0
        %3235 = vmatprep.mubr.bf16.mxu0 0
        %3236 = vmatmul.mubr.bf16.gmra.mrb[0].mxu0 %v3169
        %v3237 = vpop.f32.mrb[0].mxu0
        %v3238 = vadd.f32 0.0, %v3237
        %v3239 = vpop.f32.mrb[0].mxu0
        %v3240 = vpop.f32.mrb[0].mxu0
        %v3241 = vadd.f32 0.0, %v3240
        %v3242 = vpop.f32.mrb[0].mxu0
        %3243 = vdwg.mxu0
        %v3245 = vsel %vm2353, %v3151, 0
        %v3248 = vsel %vm2353, %v3152, 0
        %v3251 = vsel %vm2353, %v3153, 0
        %v3254 = vsel %vm2353, %v3154, 0
        %v3257 = vsel %vm2353, %v3155, 0
        %3259 = vmatprep.subr.bf16.mxu0 0
        %3260 = vmatpush1.bf16.msra.mxu0 %v2158
        %3261 = vmatprep.subr.bf16.mxu0 0
        %3262 = vmatpush1.bf16.msra.mxu0 %v2160
        %3263 = vmatprep.subr.bf16.mxu0 0
        %3264 = vmatpush1.bf16.msra.mxu0 %v2162
        %3265 = vmatprep.subr.bf16.mxu0 0
        %3266 = vmatpush1.bf16.msra.mxu0 %v2164
        %3267 = vmatprep.subr.bf16.mxu0 0
        %3268 = vmatpush1.bf16.msra.mxu0 %v2166
        %3269 = vmatprep.subr.bf16.mxu0 0
        %3270 = vmatpush1.bf16.msra.mxu0 0
        %3271 = vmatprep.subr.bf16.mxu0 0
        %3272 = vmatpush1.bf16.msra.mxu0 0
        %3273 = vmatprep.subr.bf16.mxu0 0
        %3274 = vmatpush1.bf16.msra.mxu0 0
        %3275 = vmatprep.subr.bf16.mxu0 0
        %3276 = vmatpush1.bf16.msra.mxu0 0
        %3277 = vmatprep.subr.bf16.mxu0 0
        %3278 = vmatpush1.bf16.msra.mxu0 0
        %3279 = vmatprep.subr.bf16.mxu0 0
        %3280 = vmatpush1.bf16.msra.mxu0 0
        %3281 = vmatprep.subr.bf16.mxu0 0
        %3282 = vmatpush1.bf16.msra.mxu0 0
        %3283 = vmatprep.subr.bf16.mxu0 0
        %3284 = vmatpush1.bf16.msra.mxu0 0
        %3285 = vmatprep.subr.bf16.mxu0 0
        %3286 = vmatpush1.bf16.msra.mxu0 0
        %3287 = vmatprep.subr.bf16.mxu0 0
        %3288 = vmatpush1.bf16.msra.mxu0 0
        %3289 = vmatprep.subr.bf16.mxu0 0
        %3290 = vmatpush1.bf16.msra.mxu0 0
        %3291 = vmatprep.mubr.bf16.mxu0 0
        %3292 = vmatmul.mubr.bf16.gmra.mrb[0].mxu0 %v3245
        %v3293 = vpop.f32.mrb[0].mxu0
        %v3294 = vadd.f32 0.0, %v3293
        %v3295 = vpop.f32.mrb[0].mxu0
        %v3296 = vpop.f32.mrb[0].mxu0
        %v3297 = vadd.f32 0.0, %v3296
        %v3298 = vpop.f32.mrb[0].mxu0
        %3299 = vmatprep.mubr.bf16.mxu0 0
        %3300 = vmatmul.mubr.bf16.gmra.mrb[0].mxu0 %v3248
        %v3301 = vpop.f32.mrb[0].mxu0
        %v3302 = vadd.f32 0.0, %v3301
        %v3303 = vpop.f32.mrb[0].mxu0
        %v3304 = vpop.f32.mrb[0].mxu0
        %v3305 = vadd.f32 0.0, %v3304
        %v3306 = vpop.f32.mrb[0].mxu0
        %3307 = vmatprep.mubr.bf16.mxu0 0
        %3308 = vmatmul.mubr.bf16.gmra.mrb[0].mxu0 %v3251
        %v3309 = vpop.f32.mrb[0].mxu0
        %v3310 = vadd.f32 0.0, %v3309
        %v3311 = vpop.f32.mrb[0].mxu0
        %v3312 = vpop.f32.mrb[0].mxu0
        %v3313 = vadd.f32 0.0, %v3312
        %v3314 = vpop.f32.mrb[0].mxu0
        %3315 = vmatprep.mubr.bf16.mxu0 0
        %3316 = vmatmul.mubr.bf16.gmra.mrb[0].mxu0 %v3254
        %v3317 = vpop.f32.mrb[0].mxu0
        %v3318 = vadd.f32 0.0, %v3317
        %v3319 = vpop.f32.mrb[0].mxu0
        %v3320 = vpop.f32.mrb[0].mxu0
        %v3321 = vadd.f32 0.0, %v3320
        %v3322 = vpop.f32.mrb[0].mxu0
        %3323 = vmatprep.mubr.bf16.mxu0 0
        %3324 = vmatmul.mubr.bf16.gmra.mrb[0].mxu0 %v3257
        %v3325 = vpop.f32.mrb[0].mxu0
        %v3326 = vadd.f32 0.0, %v3325
        %v3327 = vpop.f32.mrb[0].mxu0
        %v3328 = vpop.f32.mrb[0].mxu0
        %v3329 = vadd.f32 0.0, %v3328
        %v3330 = vpop.f32.mrb[0].mxu0
        %3331 = vdwg.mxu0
        %v3332 = vpack.c.bf16 %v2637, %v2634
        %v3333 = vpack.c.bf16 %v3209, %v3206
        %v3334 = vpack.c.bf16 %v2645, %v2642
        %v3335 = vpack.c.bf16 %v3217, %v3214
        %v3336 = vpack.c.bf16 %v2653, %v2650
        %v3337 = vpack.c.bf16 %v3225, %v3222
        %v3338 = vpack.c.bf16 %v2661, %v2658
        %v3339 = vpack.c.bf16 %v3233, %v3230
        %v3340 = vpack.c.bf16 %v2669, %v2666
        %v3341 = vpack.c.bf16 %v3241, %v3238
        %v3342 = vpack.c.bf16 %v2725, %v2722
        %v3343 = vpack.c.bf16 %v3297, %v3294
        %v3344 = vpack.c.bf16 %v2733, %v2730
        %v3345 = vpack.c.bf16 %v3305, %v3302
        %v3346 = vpack.c.bf16 %v2741, %v2738
        %v3347 = vpack.c.bf16 %v3313, %v3310
        %v3348 = vpack.c.bf16 %v2749, %v2746
        %v3349 = vpack.c.bf16 %v3321, %v3318
        %v3350 = vpack.c.bf16 %v2757, %v2754
        %v3351 = vpack.c.bf16 %v3329, %v3326
        %s3352 = scalar_lea.vmem %s418, 768 [#allocation5]
        %v3353 = vld [vmem:[%s3352] sm:$0xff]
        %v3354 = vld [vmem:[%s3352 + $0x8] sm:$0xff]
        %v3355 = vld [vmem:[%s3352 + $0x10] sm:$0xff]
        %v3356 = vld [vmem:[%s3352 + $0x18] sm:$0xff]
        %v3357 = vld [vmem:[%s3352 + $0x20] sm:$0xff]
        %v3358 = vld [vmem:[%s3352 + $0x28] sm:$0xff]
        %v3359 = vld [vmem:[%s3352 + $0x30] sm:$0xff]
        %v3360 = vld [vmem:[%s3352 + $0x38] sm:$0xff]
        %v3361 = vld [vmem:[%s3352 + $0x40] sm:$0xff]
        %v3362 = vld [vmem:[%s3352 + $0x48] sm:$0xff]
        %v3363 = vld [vmem:[%s3352 + $0x50] sm:$0xff]
        %v3364 = vld [vmem:[%s3352 + $0x58] sm:$0xff]
        %v3365 = vld [vmem:[%s3352 + $0x60] sm:$0xff]
        %v3366 = vld [vmem:[%s3352 + $0x68] sm:$0xff]
        %v3367 = vld [vmem:[%s3352 + $0x70] sm:$0xff]
        %v3368 = vld [vmem:[%s3352 + $0x78] sm:$0xff]
        %v3369 = vld [vmem:[%s3352 + $0x80] sm:$0xff]
        %v3370 = vld [vmem:[%s3352 + $0x88] sm:$0xff]
        %v3371 = vld [vmem:[%s3352 + $0x90] sm:$0xff]
        %v3372 = vld [vmem:[%s3352 + $0x98] sm:$0xff]
        %v3373 = vld [vmem:[%s3352 + $0xa0] sm:$0xff]
        %v3374 = vld [vmem:[%s3352 + $0xa8] sm:$0xff]
        %v3375 = vld [vmem:[%s3352 + $0xb0] sm:$0xff]
        %v3376 = vld [vmem:[%s3352 + $0xb8] sm:$0xff]
        %v3377 = vld [vmem:[%s3352 + $0xc0] sm:$0xff]
        %v3378 = vld [vmem:[%s3352 + $0xc8] sm:$0xff]
        %v3379 = vld [vmem:[%s3352 + $0xd0] sm:$0xff]
        %v3380 = vld [vmem:[%s3352 + $0xd8] sm:$0xff]
        %v3381 = vld [vmem:[%s3352 + $0xe0] sm:$0xff]
        %v3382 = vld [vmem:[%s3352 + $0xe8] sm:$0xff]
        %v3383 = vld [vmem:[%s3352 + $0xf0] sm:$0xff]
        %v3384 = vld [vmem:[%s3352 + $0xf8] sm:$0xff]
        %v3385 = vlaneseq
        %v3386 = vshrl.u32 %v3385, 7
        %v3387 = vsub.s32 7, %v3386
        %v3388 = vrot.slane %v641, %v3387
        %v3389 = vlaneseq
        %v3390 = vshrl.u32 %v3389, 7
        %v3391 = vsub.s32 7, %v3390
        %v3392 = vrot.slane %v642, %v3391
        %v3425 = vunpack.c.l.b16 %v3353
        %v3426 = vunpack.c.h.b16 %v3353
        %v3427 = vunpack.c.l.b16 %v3354
        %v3428 = vunpack.c.h.b16 %v3354
        %v3429 = vunpack.c.l.b16 %v3355
        %v3430 = vunpack.c.h.b16 %v3355
        %v3431 = vunpack.c.l.b16 %v3356
        %v3432 = vunpack.c.h.b16 %v3356
        %v3433 = vunpack.c.l.b16 %v3357
        %v3434 = vunpack.c.h.b16 %v3357
        %v3435 = vunpack.c.l.b16 %v3358
        %v3436 = vunpack.c.h.b16 %v3358
        %v3437 = vunpack.c.l.b16 %v3359
        %v3438 = vunpack.c.h.b16 %v3359
        %v3439 = vunpack.c.l.b16 %v3360
        %v3440 = vunpack.c.h.b16 %v3360
        %v3441 = vunpack.c.l.b16 %v3361
        %v3442 = vunpack.c.h.b16 %v3361
        %v3443 = vunpack.c.l.b16 %v3362
        %v3444 = vunpack.c.h.b16 %v3362
        %v3445 = vunpack.c.l.b16 %v3363
        %v3446 = vunpack.c.h.b16 %v3363
        %v3447 = vunpack.c.l.b16 %v3364
        %v3448 = vunpack.c.h.b16 %v3364
        %v3449 = vunpack.c.l.b16 %v3365
        %v3450 = vunpack.c.h.b16 %v3365
        %v3451 = vunpack.c.l.b16 %v3366
        %v3452 = vunpack.c.h.b16 %v3366
        %v3453 = vunpack.c.l.b16 %v3367
        %v3454 = vunpack.c.h.b16 %v3367
        %v3455 = vunpack.c.l.b16 %v3368
        %v3456 = vunpack.c.h.b16 %v3368
        %v3457 = vunpack.c.l.b16 %v3369
        %v3458 = vunpack.c.h.b16 %v3369
        %v3459 = vunpack.c.l.b16 %v3370
        %v3460 = vunpack.c.h.b16 %v3370
        %v3461 = vunpack.c.l.b16 %v3371
        %v3462 = vunpack.c.h.b16 %v3371
        %v3463 = vunpack.c.l.b16 %v3372
        %v3464 = vunpack.c.h.b16 %v3372
        %v3465 = vunpack.c.l.b16 %v3373
        %v3466 = vunpack.c.h.b16 %v3373
        %v3467 = vunpack.c.l.b16 %v3374
        %v3468 = vunpack.c.h.b16 %v3374
        %v3469 = vunpack.c.l.b16 %v3375
        %v3470 = vunpack.c.h.b16 %v3375
        %v3471 = vunpack.c.l.b16 %v3376
        %v3472 = vunpack.c.h.b16 %v3376
        %v3473 = vunpack.c.l.b16 %v3377
        %v3474 = vunpack.c.h.b16 %v3377
        %v3475 = vunpack.c.l.b16 %v3378
        %v3476 = vunpack.c.h.b16 %v3378
        %v3477 = vunpack.c.l.b16 %v3379
        %v3478 = vunpack.c.h.b16 %v3379
        %v3479 = vunpack.c.l.b16 %v3380
        %v3480 = vunpack.c.h.b16 %v3380
        %v3481 = vunpack.c.l.b16 %v3381
        %v3482 = vunpack.c.h.b16 %v3381
        %v3483 = vunpack.c.l.b16 %v3382
        %v3484 = vunpack.c.h.b16 %v3382
        %v3485 = vunpack.c.l.b16 %v3383
        %v3486 = vunpack.c.h.b16 %v3383
        %v3487 = vunpack.c.l.b16 %v3384
        %v3488 = vunpack.c.h.b16 %v3384
        %v3489 = vpack.c.b16 %v3427, %v3425
        %v3490 = vpack.c.b16 %v3428, %v3426
        %v3491 = vpack.c.b16 %v3431, %v3429
        %v3492 = vpack.c.b16 %v3432, %v3430
        %v3493 = vpack.c.b16 %v3435, %v3433
        %v3494 = vpack.c.b16 %v3436, %v3434
        %v3495 = vpack.c.b16 %v3439, %v3437
        %v3496 = vpack.c.b16 %v3440, %v3438
        %v3497 = vpack.c.b16 %v3443, %v3441
        %v3498 = vpack.c.b16 %v3444, %v3442
        %v3499 = vpack.c.b16 %v3447, %v3445
        %v3500 = vpack.c.b16 %v3448, %v3446
        %v3501 = vpack.c.b16 %v3451, %v3449
        %v3502 = vpack.c.b16 %v3452, %v3450
        %v3503 = vpack.c.b16 %v3455, %v3453
        %v3504 = vpack.c.b16 %v3456, %v3454
        %v3505 = vpack.c.b16 %v3459, %v3457
        %v3506 = vpack.c.b16 %v3460, %v3458
        %v3507 = vpack.c.b16 %v3463, %v3461
        %v3508 = vpack.c.b16 %v3464, %v3462
        %v3509 = vpack.c.b16 %v3467, %v3465
        %v3510 = vpack.c.b16 %v3468, %v3466
        %v3511 = vpack.c.b16 %v3471, %v3469
        %v3512 = vpack.c.b16 %v3472, %v3470
        %v3513 = vpack.c.b16 %v3475, %v3473
        %v3514 = vpack.c.b16 %v3476, %v3474
        %v3515 = vpack.c.b16 %v3479, %v3477
        %v3516 = vpack.c.b16 %v3480, %v3478
        %v3517 = vpack.c.b16 %v3483, %v3481
        %v3518 = vpack.c.b16 %v3484, %v3482
        %v3519 = vpack.c.b16 %v3487, %v3485
        %v3520 = vpack.c.b16 %v3488, %v3486
        %3553 = vmatprep.subr.bf16.mxu0 %v3490
        %3554 = vmatpush1.bf16.msra.mxu0 %v3489
        %3555 = vmatprep.subr.bf16.mxu0 %v3492
        %3556 = vmatpush1.bf16.msra.mxu0 %v3491
        %3557 = vmatprep.subr.bf16.mxu0 %v3494
        %3558 = vmatpush1.bf16.msra.mxu0 %v3493
        %3559 = vmatprep.subr.bf16.mxu0 %v3496
        %3560 = vmatpush1.bf16.msra.mxu0 %v3495
        %3561 = vmatprep.subr.bf16.mxu0 %v3498
        %3562 = vmatpush1.bf16.msra.mxu0 %v3497
        %3563 = vmatprep.subr.bf16.mxu0 %v3500
        %3564 = vmatpush1.bf16.msra.mxu0 %v3499
        %3565 = vmatprep.subr.bf16.mxu0 %v3502
        %3566 = vmatpush1.bf16.msra.mxu0 %v3501
        %3567 = vmatprep.subr.bf16.mxu0 %v3504
        %3568 = vmatpush1.bf16.msra.mxu0 %v3503
        %3569 = vmatprep.subr.bf16.mxu0 %v3506
        %3570 = vmatpush1.bf16.msra.mxu0 %v3505
        %3571 = vmatprep.subr.bf16.mxu0 %v3508
        %3572 = vmatpush1.bf16.msra.mxu0 %v3507
        %3573 = vmatprep.subr.bf16.mxu0 %v3510
        %3574 = vmatpush1.bf16.msra.mxu0 %v3509
        %3575 = vmatprep.subr.bf16.mxu0 %v3512
        %3576 = vmatpush1.bf16.msra.mxu0 %v3511
        %3577 = vmatprep.subr.bf16.mxu0 %v3514
        %3578 = vmatpush1.bf16.msra.mxu0 %v3513
        %3579 = vmatprep.subr.bf16.mxu0 %v3516
        %3580 = vmatpush1.bf16.msra.mxu0 %v3515
        %3581 = vmatprep.subr.bf16.mxu0 %v3518
        %3582 = vmatpush1.bf16.msra.mxu0 %v3517
        %3583 = vmatprep.subr.bf16.mxu0 %v3520
        %3584 = vmatpush1.bf16.msra.mxu0 %v3519
        %3585 = vmatprep.mubr.bf16.mxu0 %v3333
        %3586 = vmatmul.mubr.bf16.gmra.mrb[0].mxu0 %v3332
        %v3587 = vpop.f32.mrb[0].mxu0
        %v3588 = vadd.f32 %v3388, %v3587
        %v3589 = vpop.f32.mrb[0].mxu0
        %v3590 = vadd.f32 %v3392, %v3589
        %v3591 = vpop.f32.mrb[0].mxu0
        %v3592 = vadd.f32 %v3388, %v3591
        %v3593 = vpop.f32.mrb[0].mxu0
        %v3594 = vadd.f32 %v3392, %v3593
        %3595 = vmatprep.mubr.bf16.mxu0 %v3335
        %3596 = vmatmul.mubr.bf16.gmra.mrb[0].mxu0 %v3334
        %v3597 = vpop.f32.mrb[0].mxu0
        %v3598 = vadd.f32 %v3388, %v3597
        %v3599 = vpop.f32.mrb[0].mxu0
        %v3600 = vadd.f32 %v3392, %v3599
        %v3601 = vpop.f32.mrb[0].mxu0
        %v3602 = vadd.f32 %v3388, %v3601
        %v3603 = vpop.f32.mrb[0].mxu0
        %v3604 = vadd.f32 %v3392, %v3603
        %3605 = vmatprep.mubr.bf16.mxu0 %v3337
        %3606 = vmatmul.mubr.bf16.gmra.mrb[0].mxu0 %v3336
        %v3607 = vpop.f32.mrb[0].mxu0
        %v3608 = vadd.f32 %v3388, %v3607
        %v3609 = vpop.f32.mrb[0].mxu0
        %v3610 = vadd.f32 %v3392, %v3609
        %v3611 = vpop.f32.mrb[0].mxu0
        %v3612 = vadd.f32 %v3388, %v3611
        %v3613 = vpop.f32.mrb[0].mxu0
        %v3614 = vadd.f32 %v3392, %v3613
        %3615 = vmatprep.mubr.bf16.mxu0 %v3339
        %3616 = vmatmul.mubr.bf16.gmra.mrb[0].mxu0 %v3338
        %v3617 = vpop.f32.mrb[0].mxu0
        %v3618 = vadd.f32 %v3388, %v3617
        %v3619 = vpop.f32.mrb[0].mxu0
        %v3620 = vadd.f32 %v3392, %v3619
        %v3621 = vpop.f32.mrb[0].mxu0
        %v3622 = vadd.f32 %v3388, %v3621
        %v3623 = vpop.f32.mrb[0].mxu0
        %v3624 = vadd.f32 %v3392, %v3623
        %3625 = vmatprep.mubr.bf16.mxu0 %v3341
        %3626 = vmatmul.mubr.bf16.gmra.mrb[0].mxu0 %v3340
        %v3627 = vpop.f32.mrb[0].mxu0
        %v3628 = vadd.f32 %v3388, %v3627
        %v3629 = vpop.f32.mrb[0].mxu0
        %v3630 = vadd.f32 %v3392, %v3629
        %v3631 = vpop.f32.mrb[0].mxu0
        %v3632 = vadd.f32 %v3388, %v3631
        %v3633 = vpop.f32.mrb[0].mxu0
        %v3634 = vadd.f32 %v3392, %v3633
        %3635 = vmatprep.mubr.bf16.mxu0 %v3343
        %3636 = vmatmul.mubr.bf16.gmra.mrb[0].mxu0 %v3342
        %v3637 = vpop.f32.mrb[0].mxu0
        %v3638 = vadd.f32 %v3388, %v3637
        %v3639 = vpop.f32.mrb[0].mxu0
        %v3640 = vadd.f32 %v3392, %v3639
        %v3641 = vpop.f32.mrb[0].mxu0
        %v3642 = vadd.f32 %v3388, %v3641
        %v3643 = vpop.f32.mrb[0].mxu0
        %v3644 = vadd.f32 %v3392, %v3643
        %3645 = vmatprep.mubr.bf16.mxu0 %v3345
        %3646 = vmatmul.mubr.bf16.gmra.mrb[0].mxu0 %v3344
        %v3647 = vpop.f32.mrb[0].mxu0
        %v3648 = vadd.f32 %v3388, %v3647
        %v3649 = vpop.f32.mrb[0].mxu0
        %v3650 = vadd.f32 %v3392, %v3649
        %v3651 = vpop.f32.mrb[0].mxu0
        %v3652 = vadd.f32 %v3388, %v3651
        %v3653 = vpop.f32.mrb[0].mxu0
        %v3654 = vadd.f32 %v3392, %v3653
        %3655 = vmatprep.mubr.bf16.mxu0 %v3347
        %3656 = vmatmul.mubr.bf16.gmra.mrb[0].mxu0 %v3346
        %v3657 = vpop.f32.mrb[0].mxu0
        %v3658 = vadd.f32 %v3388, %v3657
        %v3659 = vpop.f32.mrb[0].mxu0
        %v3660 = vadd.f32 %v3392, %v3659
        %v3661 = vpop.f32.mrb[0].mxu0
        %v3662 = vadd.f32 %v3388, %v3661
        %v3663 = vpop.f32.mrb[0].mxu0
        %v3664 = vadd.f32 %v3392, %v3663
        %3665 = vmatprep.mubr.bf16.mxu0 %v3349
        %3666 = vmatmul.mubr.bf16.gmra.mrb[0].mxu0 %v3348
        %v3667 = vpop.f32.mrb[0].mxu0
        %v3668 = vadd.f32 %v3388, %v3667
        %v3669 = vpop.f32.mrb[0].mxu0
        %v3670 = vadd.f32 %v3392, %v3669
        %v3671 = vpop.f32.mrb[0].mxu0
        %v3672 = vadd.f32 %v3388, %v3671
        %v3673 = vpop.f32.mrb[0].mxu0
        %v3674 = vadd.f32 %v3392, %v3673
        %3675 = vmatprep.mubr.bf16.mxu0 %v3351
        %3676 = vmatmul.mubr.bf16.gmra.mrb[0].mxu0 %v3350
        %v3677 = vpop.f32.mrb[0].mxu0
        %v3678 = vadd.f32 %v3388, %v3677
        %v3679 = vpop.f32.mrb[0].mxu0
        %v3680 = vadd.f32 %v3392, %v3679
        %v3681 = vpop.f32.mrb[0].mxu0
        %v3682 = vadd.f32 %v3388, %v3681
        %v3683 = vpop.f32.mrb[0].mxu0
        %v3684 = vadd.f32 %v3392, %v3683
        %3685 = vdwg.mxu0
        %v3686 = vadd.f32 %v601, %v3588
        %v3687 = vadd.f32 %v602, %v3590
        %v3688 = vadd.f32 %v603, %v3592
        %v3689 = vadd.f32 %v604, %v3594
        %v3690 = vadd.f32 %v605, %v3598
        %v3691 = vadd.f32 %v606, %v3600
        %v3692 = vadd.f32 %v607, %v3602
        %v3693 = vadd.f32 %v608, %v3604
        %v3694 = vadd.f32 %v609, %v3608
        %v3695 = vadd.f32 %v610, %v3610
        %v3696 = vadd.f32 %v611, %v3612
        %v3697 = vadd.f32 %v612, %v3614
        %v3698 = vadd.f32 %v613, %v3618
        %v3699 = vadd.f32 %v614, %v3620
        %v3700 = vadd.f32 %v615, %v3622
        %v3701 = vadd.f32 %v616, %v3624
        %v3702 = vadd.f32 %v617, %v3628
        %v3703 = vadd.f32 %v618, %v3630
        %v3704 = vadd.f32 %v619, %v3632
        %v3705 = vadd.f32 %v620, %v3634
        %v3706 = vadd.f32 %v621, %v3638
        %v3707 = vadd.f32 %v622, %v3640
        %v3708 = vadd.f32 %v623, %v3642
        %v3709 = vadd.f32 %v624, %v3644
        %v3710 = vadd.f32 %v625, %v3648
        %v3711 = vadd.f32 %v626, %v3650
        %v3712 = vadd.f32 %v627, %v3652
        %v3713 = vadd.f32 %v628, %v3654
        %v3714 = vadd.f32 %v629, %v3658
        %v3715 = vadd.f32 %v630, %v3660
        %v3716 = vadd.f32 %v631, %v3662
        %v3717 = vadd.f32 %v632, %v3664
        %v3718 = vadd.f32 %v633, %v3668
        %v3719 = vadd.f32 %v634, %v3670
        %v3720 = vadd.f32 %v635, %v3672
        %v3721 = vadd.f32 %v636, %v3674
        %v3722 = vadd.f32 %v637, %v3678
        %v3723 = vadd.f32 %v638, %v3680
        %v3724 = vadd.f32 %v639, %v3682
        %v3725 = vadd.f32 %v640, %v3684
        %v3726 = vadd.f32 %v3686, %v3687
        %3727 = vadd.xlane.f32.xlu0 %v3726
        %v3728 = vpop.xlane.xlu0 %3727
        %v3729 = vadd.f32 %v3688, %v3689
        %3730 = vadd.xlane.f32.xlu0 %v3729
        %v3731 = vpop.xlane.xlu0 %3730
        %v3732 = vadd.f32 %v3690, %v3691
        %3733 = vadd.xlane.f32.xlu0 %v3732
        %v3734 = vpop.xlane.xlu0 %3733
        %v3735 = vadd.f32 %v3692, %v3693
        %3736 = vadd.xlane.f32.xlu0 %v3735
        %v3737 = vpop.xlane.xlu0 %3736
        %v3738 = vadd.f32 %v3694, %v3695
        %3739 = vadd.xlane.f32.xlu0 %v3738
        %v3740 = vpop.xlane.xlu0 %3739
        %v3741 = vadd.f32 %v3696, %v3697
        %3742 = vadd.xlane.f32.xlu0 %v3741
        %v3743 = vpop.xlane.xlu0 %3742
        %v3744 = vadd.f32 %v3698, %v3699
        %3745 = vadd.xlane.f32.xlu0 %v3744
        %v3746 = vpop.xlane.xlu0 %3745
        %v3747 = vadd.f32 %v3700, %v3701
        %3748 = vadd.xlane.f32.xlu0 %v3747
        %v3749 = vpop.xlane.xlu0 %3748
        %v3750 = vadd.f32 %v3702, %v3703
        %3751 = vadd.xlane.f32.xlu0 %v3750
        %v3752 = vpop.xlane.xlu0 %3751
        %v3753 = vadd.f32 %v3704, %v3705
        %3754 = vadd.xlane.f32.xlu0 %v3753
        %v3755 = vpop.xlane.xlu0 %3754
        %v3756 = vadd.f32 %v3706, %v3707
        %3757 = vadd.xlane.f32.xlu0 %v3756
        %v3758 = vpop.xlane.xlu0 %3757
        %v3759 = vadd.f32 %v3708, %v3709
        %3760 = vadd.xlane.f32.xlu0 %v3759
        %v3761 = vpop.xlane.xlu0 %3760
        %v3762 = vadd.f32 %v3710, %v3711
        %3763 = vadd.xlane.f32.xlu0 %v3762
        %v3764 = vpop.xlane.xlu0 %3763
        %v3765 = vadd.f32 %v3712, %v3713
        %3766 = vadd.xlane.f32.xlu0 %v3765
        %v3767 = vpop.xlane.xlu0 %3766
        %v3768 = vadd.f32 %v3714, %v3715
        %3769 = vadd.xlane.f32.xlu0 %v3768
        %v3770 = vpop.xlane.xlu0 %3769
        %v3771 = vadd.f32 %v3716, %v3717
        %3772 = vadd.xlane.f32.xlu0 %v3771
        %v3773 = vpop.xlane.xlu0 %3772
        %v3774 = vadd.f32 %v3718, %v3719
        %3775 = vadd.xlane.f32.xlu0 %v3774
        %v3776 = vpop.xlane.xlu0 %3775
        %v3777 = vadd.f32 %v3720, %v3721
        %3778 = vadd.xlane.f32.xlu0 %v3777
        %v3779 = vpop.xlane.xlu0 %3778
        %v3780 = vadd.f32 %v3722, %v3723
        %3781 = vadd.xlane.f32.xlu0 %v3780
        %v3782 = vpop.xlane.xlu0 %3781
        %v3783 = vadd.f32 %v3724, %v3725
        %3784 = vadd.xlane.f32.xlu0 %v3783
        %v3785 = vpop.xlane.xlu0 %3784
        %v3786 = vmul.f32 %v3728, %v729
        %v3787 = vmul.f32 %v3731, %v729
        %v3788 = vmul.f32 %v3734, %v729
        %v3789 = vmul.f32 %v3737, %v729
        %v3790 = vmul.f32 %v3740, %v729
        %v3791 = vmul.f32 %v3743, %v729
        %v3792 = vmul.f32 %v3746, %v729
        %v3793 = vmul.f32 %v3749, %v729
        %v3794 = vmul.f32 %v3752, %v729
        %v3795 = vmul.f32 %v3755, %v729
        %v3796 = vmul.f32 %v3758, %v729
        %v3797 = vmul.f32 %v3761, %v729
        %v3798 = vmul.f32 %v3764, %v729
        %v3799 = vmul.f32 %v3767, %v729
        %v3800 = vmul.f32 %v3770, %v729
        %v3801 = vmul.f32 %v3773, %v729
        %v3802 = vmul.f32 %v3776, %v729
        %v3803 = vmul.f32 %v3779, %v729
        %v3804 = vmul.f32 %v3782, %v729
        %v3805 = vmul.f32 %v3785, %v729
        %v3806 = vsub.f32 %v3686, %v3786
        %v3807 = vsub.f32 %v3687, %v3786
        %v3808 = vsub.f32 %v3688, %v3787
        %v3809 = vsub.f32 %v3689, %v3787
        %v3810 = vsub.f32 %v3690, %v3788
        %v3811 = vsub.f32 %v3691, %v3788
        %v3812 = vsub.f32 %v3692, %v3789
        %v3813 = vsub.f32 %v3693, %v3789
        %v3814 = vsub.f32 %v3694, %v3790
        %v3815 = vsub.f32 %v3695, %v3790
        %v3816 = vsub.f32 %v3696, %v3791
        %v3817 = vsub.f32 %v3697, %v3791
        %v3818 = vsub.f32 %v3698, %v3792
        %v3819 = vsub.f32 %v3699, %v3792
        %v3820 = vsub.f32 %v3700, %v3793
        %v3821 = vsub.f32 %v3701, %v3793
        %v3822 = vsub.f32 %v3702, %v3794
        %v3823 = vsub.f32 %v3703, %v3794
        %v3824 = vsub.f32 %v3704, %v3795
        %v3825 = vsub.f32 %v3705, %v3795
        %v3826 = vsub.f32 %v3706, %v3796
        %v3827 = vsub.f32 %v3707, %v3796
        %v3828 = vsub.f32 %v3708, %v3797
        %v3829 = vsub.f32 %v3709, %v3797
        %v3830 = vsub.f32 %v3710, %v3798
        %v3831 = vsub.f32 %v3711, %v3798
        %v3832 = vsub.f32 %v3712, %v3799
        %v3833 = vsub.f32 %v3713, %v3799
        %v3834 = vsub.f32 %v3714, %v3800
        %v3835 = vsub.f32 %v3715, %v3800
        %v3836 = vsub.f32 %v3716, %v3801
        %v3837 = vsub.f32 %v3717, %v3801
        %v3838 = vsub.f32 %v3718, %v3802
        %v3839 = vsub.f32 %v3719, %v3802
        %v3840 = vsub.f32 %v3720, %v3803
        %v3841 = vsub.f32 %v3721, %v3803
        %v3842 = vsub.f32 %v3722, %v3804
        %v3843 = vsub.f32 %v3723, %v3804
        %v3844 = vsub.f32 %v3724, %v3805
        %v3845 = vsub.f32 %v3725, %v3805
        %v3846 = vmul.f32 %v3806, %v3806
        %v3847 = vmul.f32 %v3807, %v3807
        %v3848 = vmul.f32 %v3808, %v3808
        %v3849 = vmul.f32 %v3809, %v3809
        %v3850 = vmul.f32 %v3810, %v3810
        %v3851 = vmul.f32 %v3811, %v3811
        %v3852 = vmul.f32 %v3812, %v3812
        %v3853 = vmul.f32 %v3813, %v3813
        %v3854 = vmul.f32 %v3814, %v3814
        %v3855 = vmul.f32 %v3815, %v3815
        %v3856 = vmul.f32 %v3816, %v3816
        %v3857 = vmul.f32 %v3817, %v3817
        %v3858 = vmul.f32 %v3818, %v3818
        %v3859 = vmul.f32 %v3819, %v3819
        %v3860 = vmul.f32 %v3820, %v3820
        %v3861 = vmul.f32 %v3821, %v3821
        %v3862 = vmul.f32 %v3822, %v3822
        %v3863 = vmul.f32 %v3823, %v3823
        %v3864 = vmul.f32 %v3824, %v3824
        %v3865 = vmul.f32 %v3825, %v3825
        %v3866 = vmul.f32 %v3826, %v3826
        %v3867 = vmul.f32 %v3827, %v3827
        %v3868 = vmul.f32 %v3828, %v3828
        %v3869 = vmul.f32 %v3829, %v3829
        %v3870 = vmul.f32 %v3830, %v3830
        %v3871 = vmul.f32 %v3831, %v3831
        %v3872 = vmul.f32 %v3832, %v3832
        %v3873 = vmul.f32 %v3833, %v3833
        %v3874 = vmul.f32 %v3834, %v3834
        %v3875 = vmul.f32 %v3835, %v3835
        %v3876 = vmul.f32 %v3836, %v3836
        %v3877 = vmul.f32 %v3837, %v3837
        %v3878 = vmul.f32 %v3838, %v3838
        %v3879 = vmul.f32 %v3839, %v3839
        %v3880 = vmul.f32 %v3840, %v3840
        %v3881 = vmul.f32 %v3841, %v3841
        %v3882 = vmul.f32 %v3842, %v3842
        %v3883 = vmul.f32 %v3843, %v3843
        %v3884 = vmul.f32 %v3844, %v3844
        %v3885 = vmul.f32 %v3845, %v3845
        %v3886 = vadd.f32 %v3846, %v3847
        %3887 = vadd.xlane.f32.xlu0 %v3886
        %v3888 = vpop.xlane.xlu0 %3887
        %v3889 = vadd.f32 %v3848, %v3849
        %3890 = vadd.xlane.f32.xlu0 %v3889
        %v3891 = vpop.xlane.xlu0 %3890
        %v3892 = vadd.f32 %v3850, %v3851
        %3893 = vadd.xlane.f32.xlu0 %v3892
        %v3894 = vpop.xlane.xlu0 %3893
        %v3895 = vadd.f32 %v3852, %v3853
        %3896 = vadd.xlane.f32.xlu0 %v3895
        %v3897 = vpop.xlane.xlu0 %3896
        %v3898 = vadd.f32 %v3854, %v3855
        %3899 = vadd.xlane.f32.xlu0 %v3898
        %v3900 = vpop.xlane.xlu0 %3899
        %v3901 = vadd.f32 %v3856, %v3857
        %3902 = vadd.xlane.f32.xlu0 %v3901
        %v3903 = vpop.xlane.xlu0 %3902
        %v3904 = vadd.f32 %v3858, %v3859
        %3905 = vadd.xlane.f32.xlu0 %v3904
        %v3906 = vpop.xlane.xlu0 %3905
        %v3907 = vadd.f32 %v3860, %v3861
        %3908 = vadd.xlane.f32.xlu0 %v3907
        %v3909 = vpop.xlane.xlu0 %3908
        %v3910 = vadd.f32 %v3862, %v3863
        %3911 = vadd.xlane.f32.xlu0 %v3910
        %v3912 = vpop.xlane.xlu0 %3911
        %v3913 = vadd.f32 %v3864, %v3865
        %3914 = vadd.xlane.f32.xlu0 %v3913
        %v3915 = vpop.xlane.xlu0 %3914
        %v3916 = vadd.f32 %v3866, %v3867
        %3917 = vadd.xlane.f32.xlu0 %v3916
        %v3918 = vpop.xlane.xlu0 %3917
        %v3919 = vadd.f32 %v3868, %v3869
        %3920 = vadd.xlane.f32.xlu0 %v3919
        %v3921 = vpop.xlane.xlu0 %3920
        %v3922 = vadd.f32 %v3870, %v3871
        %3923 = vadd.xlane.f32.xlu0 %v3922
        %v3924 = vpop.xlane.xlu0 %3923
        %v3925 = vadd.f32 %v3872, %v3873
        %3926 = vadd.xlane.f32.xlu0 %v3925
        %v3927 = vpop.xlane.xlu0 %3926
        %v3928 = vadd.f32 %v3874, %v3875
        %3929 = vadd.xlane.f32.xlu0 %v3928
        %v3930 = vpop.xlane.xlu0 %3929
        %v3931 = vadd.f32 %v3876, %v3877
        %3932 = vadd.xlane.f32.xlu0 %v3931
        %v3933 = vpop.xlane.xlu0 %3932
        %v3934 = vadd.f32 %v3878, %v3879
        %3935 = vadd.xlane.f32.xlu0 %v3934
        %v3936 = vpop.xlane.xlu0 %3935
        %v3937 = vadd.f32 %v3880, %v3881
        %3938 = vadd.xlane.f32.xlu0 %v3937
        %v3939 = vpop.xlane.xlu0 %3938
        %v3940 = vadd.f32 %v3882, %v3883
        %3941 = vadd.xlane.f32.xlu0 %v3940
        %v3942 = vpop.xlane.xlu0 %3941
        %v3943 = vadd.f32 %v3884, %v3885
        %3944 = vadd.xlane.f32.xlu0 %v3943
        %v3945 = vpop.xlane.xlu0 %3944
        %v3946 = vmul.f32 %v3888, %v729
        %v3947 = vmul.f32 %v3891, %v729
        %v3948 = vmul.f32 %v3894, %v729
        %v3949 = vmul.f32 %v3897, %v729
        %v3950 = vmul.f32 %v3900, %v729
        %v3951 = vmul.f32 %v3903, %v729
        %v3952 = vmul.f32 %v3906, %v729
        %v3953 = vmul.f32 %v3909, %v729
        %v3954 = vmul.f32 %v3912, %v729
        %v3955 = vmul.f32 %v3915, %v729
        %v3956 = vmul.f32 %v3918, %v729
        %v3957 = vmul.f32 %v3921, %v729
        %v3958 = vmul.f32 %v3924, %v729
        %v3959 = vmul.f32 %v3927, %v729
        %v3960 = vmul.f32 %v3930, %v729
        %v3961 = vmul.f32 %v3933, %v729
        %v3962 = vmul.f32 %v3936, %v729
        %v3963 = vmul.f32 %v3939, %v729
        %v3964 = vmul.f32 %v3942, %v729
        %v3965 = vmul.f32 %v3945, %v729
        %v3966 = vadd.f32 %v3946, 1e-05
        %v3967 = vadd.f32 %v3947, 1e-05
        %v3968 = vadd.f32 %v3948, 1e-05
        %v3969 = vadd.f32 %v3949, 1e-05
        %v3970 = vadd.f32 %v3950, 1e-05
        %v3971 = vadd.f32 %v3951, 1e-05
        %v3972 = vadd.f32 %v3952, 1e-05
        %v3973 = vadd.f32 %v3953, 1e-05
        %v3974 = vadd.f32 %v3954, 1e-05
        %v3975 = vadd.f32 %v3955, 1e-05
        %v3976 = vadd.f32 %v3956, 1e-05
        %v3977 = vadd.f32 %v3957, 1e-05
        %v3978 = vadd.f32 %v3958, 1e-05
        %v3979 = vadd.f32 %v3959, 1e-05
        %v3980 = vadd.f32 %v3960, 1e-05
        %v3981 = vadd.f32 %v3961, 1e-05
        %v3982 = vadd.f32 %v3962, 1e-05
        %v3983 = vadd.f32 %v3963, 1e-05
        %v3984 = vadd.f32 %v3964, 1e-05
        %v3985 = vadd.f32 %v3965, 1e-05
        %v3986 = vrsqrt.pop %v3966
        %v3987 = vrsqrt.pop %v3967
        %v3988 = vrsqrt.pop %v3968
        %v3989 = vrsqrt.pop %v3969
        %v3990 = vrsqrt.pop %v3970
        %v3991 = vrsqrt.pop %v3971
        %v3992 = vrsqrt.pop %v3972
        %v3993 = vrsqrt.pop %v3973
        %v3994 = vrsqrt.pop %v3974
        %v3995 = vrsqrt.pop %v3975
        %v3996 = vrsqrt.pop %v3976
        %v3997 = vrsqrt.pop %v3977
        %v3998 = vrsqrt.pop %v3978
        %v3999 = vrsqrt.pop %v3979
        %v4000 = vrsqrt.pop %v3980
        %v4001 = vrsqrt.pop %v3981
        %v4002 = vrsqrt.pop %v3982
        %v4003 = vrsqrt.pop %v3983
        %v4004 = vrsqrt.pop %v3984
        %v4005 = vrsqrt.pop %v3985
        %v4006 = vmul.f32 %v3806, %v3986
        %v4007 = vmul.f32 %v3807, %v3986
        %v4008 = vmul.f32 %v3808, %v3987
        %v4009 = vmul.f32 %v3809, %v3987
        %v4010 = vmul.f32 %v3810, %v3988
        %v4011 = vmul.f32 %v3811, %v3988
        %v4012 = vmul.f32 %v3812, %v3989
        %v4013 = vmul.f32 %v3813, %v3989
        %v4014 = vmul.f32 %v3814, %v3990
        %v4015 = vmul.f32 %v3815, %v3990
        %v4016 = vmul.f32 %v3816, %v3991
        %v4017 = vmul.f32 %v3817, %v3991
        %v4018 = vmul.f32 %v3818, %v3992
        %v4019 = vmul.f32 %v3819, %v3992
        %v4020 = vmul.f32 %v3820, %v3993
        %v4021 = vmul.f32 %v3821, %v3993
        %v4022 = vmul.f32 %v3822, %v3994
        %v4023 = vmul.f32 %v3823, %v3994
        %v4024 = vmul.f32 %v3824, %v3995
        %v4025 = vmul.f32 %v3825, %v3995
        %v4026 = vmul.f32 %v3826, %v3996
        %v4027 = vmul.f32 %v3827, %v3996
        %v4028 = vmul.f32 %v3828, %v3997
        %v4029 = vmul.f32 %v3829, %v3997
        %v4030 = vmul.f32 %v3830, %v3998
        %v4031 = vmul.f32 %v3831, %v3998
        %v4032 = vmul.f32 %v3832, %v3999
        %v4033 = vmul.f32 %v3833, %v3999
        %v4034 = vmul.f32 %v3834, %v4000
        %v4035 = vmul.f32 %v3835, %v4000
        %v4036 = vmul.f32 %v3836, %v4001
        %v4037 = vmul.f32 %v3837, %v4001
        %v4038 = vmul.f32 %v3838, %v4002
        %v4039 = vmul.f32 %v3839, %v4002
        %v4040 = vmul.f32 %v3840, %v4003
        %v4041 = vmul.f32 %v3841, %v4003
        %v4042 = vmul.f32 %v3842, %v4004
        %v4043 = vmul.f32 %v3843, %v4004
        %v4044 = vmul.f32 %v3844, %v4005
        %v4045 = vmul.f32 %v3845, %v4005
        %v4046 = vlaneseq
        %v4047 = vshrl.u32 %v4046, 7
        %v4048 = vsub.s32 2, %v4047
        %v4049 = vrot.slane %v641, %v4048
        %v4050 = vlaneseq
        %v4051 = vshrl.u32 %v4050, 7
        %v4052 = vsub.s32 2, %v4051
        %v4053 = vrot.slane %v642, %v4052
        %v4054 = vmul.f32 %v4006, %v4049
        %v4055 = vmul.f32 %v4007, %v4053
        %v4056 = vmul.f32 %v4008, %v4049
        %v4057 = vmul.f32 %v4009, %v4053
        %v4058 = vmul.f32 %v4010, %v4049
        %v4059 = vmul.f32 %v4011, %v4053
        %v4060 = vmul.f32 %v4012, %v4049
        %v4061 = vmul.f32 %v4013, %v4053
        %v4062 = vmul.f32 %v4014, %v4049
        %v4063 = vmul.f32 %v4015, %v4053
        %v4064 = vmul.f32 %v4016, %v4049
        %v4065 = vmul.f32 %v4017, %v4053
        %v4066 = vmul.f32 %v4018, %v4049
        %v4067 = vmul.f32 %v4019, %v4053
        %v4068 = vmul.f32 %v4020, %v4049
        %v4069 = vmul.f32 %v4021, %v4053
        %v4070 = vmul.f32 %v4022, %v4049
        %v4071 = vmul.f32 %v4023, %v4053
        %v4072 = vmul.f32 %v4024, %v4049
        %v4073 = vmul.f32 %v4025, %v4053
        %v4074 = vmul.f32 %v4026, %v4049
        %v4075 = vmul.f32 %v4027, %v4053
        %v4076 = vmul.f32 %v4028, %v4049
        %v4077 = vmul.f32 %v4029, %v4053
        %v4078 = vmul.f32 %v4030, %v4049
        %v4079 = vmul.f32 %v4031, %v4053
        %v4080 = vmul.f32 %v4032, %v4049
        %v4081 = vmul.f32 %v4033, %v4053
        %v4082 = vmul.f32 %v4034, %v4049
        %v4083 = vmul.f32 %v4035, %v4053
        %v4084 = vmul.f32 %v4036, %v4049
        %v4085 = vmul.f32 %v4037, %v4053
        %v4086 = vmul.f32 %v4038, %v4049
        %v4087 = vmul.f32 %v4039, %v4053
        %v4088 = vmul.f32 %v4040, %v4049
        %v4089 = vmul.f32 %v4041, %v4053
        %v4090 = vmul.f32 %v4042, %v4049
        %v4091 = vmul.f32 %v4043, %v4053
        %v4092 = vmul.f32 %v4044, %v4049
        %v4093 = vmul.f32 %v4045, %v4053
        %v4094 = vlaneseq
        %v4095 = vshrl.u32 %v4094, 7
        %v4096 = vsub.s32 3, %v4095
        %v4097 = vrot.slane %v641, %v4096
        %v4098 = vlaneseq
        %v4099 = vshrl.u32 %v4098, 7
        %v4100 = vsub.s32 3, %v4099
        %v4101 = vrot.slane %v642, %v4100
        %v4102 = vadd.f32 %v4054, %v4097
        %v4103 = vadd.f32 %v4055, %v4101
        %v4104 = vadd.f32 %v4056, %v4097
        %v4105 = vadd.f32 %v4057, %v4101
        %v4106 = vadd.f32 %v4058, %v4097
        %v4107 = vadd.f32 %v4059, %v4101
        %v4108 = vadd.f32 %v4060, %v4097
        %v4109 = vadd.f32 %v4061, %v4101
        %v4110 = vadd.f32 %v4062, %v4097
        %v4111 = vadd.f32 %v4063, %v4101
        %v4112 = vadd.f32 %v4064, %v4097
        %v4113 = vadd.f32 %v4065, %v4101
        %v4114 = vadd.f32 %v4066, %v4097
        %v4115 = vadd.f32 %v4067, %v4101
        %v4116 = vadd.f32 %v4068, %v4097
        %v4117 = vadd.f32 %v4069, %v4101
        %v4118 = vadd.f32 %v4070, %v4097
        %v4119 = vadd.f32 %v4071, %v4101
        %v4120 = vadd.f32 %v4072, %v4097
        %v4121 = vadd.f32 %v4073, %v4101
        %v4122 = vadd.f32 %v4074, %v4097
        %v4123 = vadd.f32 %v4075, %v4101
        %v4124 = vadd.f32 %v4076, %v4097
        %v4125 = vadd.f32 %v4077, %v4101
        %v4126 = vadd.f32 %v4078, %v4097
        %v4127 = vadd.f32 %v4079, %v4101
        %v4128 = vadd.f32 %v4080, %v4097
        %v4129 = vadd.f32 %v4081, %v4101
        %v4130 = vadd.f32 %v4082, %v4097
        %v4131 = vadd.f32 %v4083, %v4101
        %v4132 = vadd.f32 %v4084, %v4097
        %v4133 = vadd.f32 %v4085, %v4101
        %v4134 = vadd.f32 %v4086, %v4097
        %v4135 = vadd.f32 %v4087, %v4101
        %v4136 = vadd.f32 %v4088, %v4097
        %v4137 = vadd.f32 %v4089, %v4101
        %v4138 = vadd.f32 %v4090, %v4097
        %v4139 = vadd.f32 %v4091, %v4101
        %v4140 = vadd.f32 %v4092, %v4097
        %v4141 = vadd.f32 %v4093, %v4101
        %v4142 = vpack.c.bf16 %v4104, %v4102
        %v4143 = vpack.c.bf16 %v4105, %v4103
        %v4144 = vpack.c.bf16 %v4108, %v4106
        %v4145 = vpack.c.bf16 %v4109, %v4107
        %v4146 = vpack.c.bf16 %v4112, %v4110
        %v4147 = vpack.c.bf16 %v4113, %v4111
        %v4148 = vpack.c.bf16 %v4116, %v4114
        %v4149 = vpack.c.bf16 %v4117, %v4115
        %v4150 = vpack.c.bf16 %v4120, %v4118
        %v4151 = vpack.c.bf16 %v4121, %v4119
        %v4152 = vpack.c.bf16 %v4124, %v4122
        %v4153 = vpack.c.bf16 %v4125, %v4123
        %v4154 = vpack.c.bf16 %v4128, %v4126
        %v4155 = vpack.c.bf16 %v4129, %v4127
        %v4156 = vpack.c.bf16 %v4132, %v4130
        %v4157 = vpack.c.bf16 %v4133, %v4131
        %v4158 = vpack.c.bf16 %v4136, %v4134
        %v4159 = vpack.c.bf16 %v4137, %v4135
        %v4160 = vpack.c.bf16 %v4140, %v4138
        %v4161 = vpack.c.bf16 %v4141, %v4139
        %v4162 = vld [vmem:[%s427] sm:$0xff]
        %v4163 = vld [vmem:[%s427 + $0x8] sm:$0xff]
        %v4164 = vld [vmem:[%s427 + $0x10] sm:$0xff]
        %v4165 = vld [vmem:[%s427 + $0x18] sm:$0xff]
        %v4166 = vld [vmem:[%s427 + $0x20] sm:$0xff]
        %v4167 = vld [vmem:[%s427 + $0x28] sm:$0xff]
        %v4168 = vld [vmem:[%s427 + $0x30] sm:$0xff]
        %v4169 = vld [vmem:[%s427 + $0x38] sm:$0xff]
        %v4170 = vld [vmem:[%s427 + $0x40] sm:$0xff]
        %v4171 = vld [vmem:[%s427 + $0x48] sm:$0xff]
        %v4172 = vld [vmem:[%s427 + $0x50] sm:$0xff]
        %v4173 = vld [vmem:[%s427 + $0x58] sm:$0xff]
        %v4174 = vld [vmem:[%s427 + $0x60] sm:$0xff]
        %v4175 = vld [vmem:[%s427 + $0x68] sm:$0xff]
        %v4176 = vld [vmem:[%s427 + $0x70] sm:$0xff]
        %v4177 = vld [vmem:[%s427 + $0x78] sm:$0xff]
        %v4178 = vld [vmem:[%s427 + $0x80] sm:$0xff]
        %v4179 = vld [vmem:[%s427 + $0x88] sm:$0xff]
        %v4180 = vld [vmem:[%s427 + $0x90] sm:$0xff]
        %v4181 = vld [vmem:[%s427 + $0x98] sm:$0xff]
        %v4182 = vld [vmem:[%s427 + $0xa0] sm:$0xff]
        %v4183 = vld [vmem:[%s427 + $0xa8] sm:$0xff]
        %v4184 = vld [vmem:[%s427 + $0xb0] sm:$0xff]
        %v4185 = vld [vmem:[%s427 + $0xb8] sm:$0xff]
        %v4186 = vld [vmem:[%s427 + $0xc0] sm:$0xff]
        %v4187 = vld [vmem:[%s427 + $0xc8] sm:$0xff]
        %v4188 = vld [vmem:[%s427 + $0xd0] sm:$0xff]
        %v4189 = vld [vmem:[%s427 + $0xd8] sm:$0xff]
        %v4190 = vld [vmem:[%s427 + $0xe0] sm:$0xff]
        %v4191 = vld [vmem:[%s427 + $0xe8] sm:$0xff]
        %v4192 = vld [vmem:[%s427 + $0xf0] sm:$0xff]
        %v4193 = vld [vmem:[%s427 + $0xf8] sm:$0xff]
        %v4194 = vld [vmem:[%s427 + $0x100] sm:$0xff]
        %v4195 = vld [vmem:[%s427 + $0x108] sm:$0xff]
        %v4196 = vld [vmem:[%s427 + $0x110] sm:$0xff]
        %v4197 = vld [vmem:[%s427 + $0x118] sm:$0xff]
        %v4198 = vld [vmem:[%s427 + $0x120] sm:$0xff]
        %v4199 = vld [vmem:[%s427 + $0x128] sm:$0xff]
        %v4200 = vld [vmem:[%s427 + $0x130] sm:$0xff]
        %v4201 = vld [vmem:[%s427 + $0x138] sm:$0xff]
        %v4202 = vld [vmem:[%s427 + $0x140] sm:$0xff]
        %v4203 = vld [vmem:[%s427 + $0x148] sm:$0xff]
        %v4204 = vld [vmem:[%s427 + $0x150] sm:$0xff]
        %v4205 = vld [vmem:[%s427 + $0x158] sm:$0xff]
        %v4206 = vld [vmem:[%s427 + $0x160] sm:$0xff]
        %v4207 = vld [vmem:[%s427 + $0x168] sm:$0xff]
        %v4208 = vld [vmem:[%s427 + $0x170] sm:$0xff]
        %v4209 = vld [vmem:[%s427 + $0x178] sm:$0xff]
        %v4210 = vld [vmem:[%s427 + $0x180] sm:$0xff]
        %v4211 = vld [vmem:[%s427 + $0x188] sm:$0xff]
        %v4212 = vld [vmem:[%s427 + $0x190] sm:$0xff]
        %v4213 = vld [vmem:[%s427 + $0x198] sm:$0xff]
        %v4214 = vld [vmem:[%s427 + $0x1a0] sm:$0xff]
        %v4215 = vld [vmem:[%s427 + $0x1a8] sm:$0xff]
        %v4216 = vld [vmem:[%s427 + $0x1b0] sm:$0xff]
        %v4217 = vld [vmem:[%s427 + $0x1b8] sm:$0xff]
        %v4218 = vld [vmem:[%s427 + $0x1c0] sm:$0xff]
        %v4219 = vld [vmem:[%s427 + $0x1c8] sm:$0xff]
        %v4220 = vld [vmem:[%s427 + $0x1d0] sm:$0xff]
        %v4221 = vld [vmem:[%s427 + $0x1d8] sm:$0xff]
        %v4222 = vld [vmem:[%s427 + $0x1e0] sm:$0xff]
        %v4223 = vld [vmem:[%s427 + $0x1e8] sm:$0xff]
        %v4224 = vld [vmem:[%s427 + $0x1f0] sm:$0xff]
        %v4225 = vld [vmem:[%s427 + $0x1f8] sm:$0xff]
        %v4226 = vld [vmem:[%s427 + $0x200] sm:$0xff]
        %v4227 = vld [vmem:[%s427 + $0x208] sm:$0xff]
        %v4228 = vld [vmem:[%s427 + $0x210] sm:$0xff]
        %v4229 = vld [vmem:[%s427 + $0x218] sm:$0xff]
        %v4230 = vld [vmem:[%s427 + $0x220] sm:$0xff]
        %v4231 = vld [vmem:[%s427 + $0x228] sm:$0xff]
        %v4232 = vld [vmem:[%s427 + $0x230] sm:$0xff]
        %v4233 = vld [vmem:[%s427 + $0x238] sm:$0xff]
        %v4234 = vld [vmem:[%s427 + $0x240] sm:$0xff]
        %v4235 = vld [vmem:[%s427 + $0x248] sm:$0xff]
        %v4236 = vld [vmem:[%s427 + $0x250] sm:$0xff]
        %v4237 = vld [vmem:[%s427 + $0x258] sm:$0xff]
        %v4238 = vld [vmem:[%s427 + $0x260] sm:$0xff]
        %v4239 = vld [vmem:[%s427 + $0x268] sm:$0xff]
        %v4240 = vld [vmem:[%s427 + $0x270] sm:$0xff]
        %v4241 = vld [vmem:[%s427 + $0x278] sm:$0xff]
        %v4242 = vld [vmem:[%s427 + $0x280] sm:$0xff]
        %v4243 = vld [vmem:[%s427 + $0x288] sm:$0xff]
        %v4244 = vld [vmem:[%s427 + $0x290] sm:$0xff]
        %v4245 = vld [vmem:[%s427 + $0x298] sm:$0xff]
        %v4246 = vld [vmem:[%s427 + $0x2a0] sm:$0xff]
        %v4247 = vld [vmem:[%s427 + $0x2a8] sm:$0xff]
        %v4248 = vld [vmem:[%s427 + $0x2b0] sm:$0xff]
        %v4249 = vld [vmem:[%s427 + $0x2b8] sm:$0xff]
        %v4250 = vld [vmem:[%s427 + $0x2c0] sm:$0xff]
        %v4251 = vld [vmem:[%s427 + $0x2c8] sm:$0xff]
        %v4252 = vld [vmem:[%s427 + $0x2d0] sm:$0xff]
        %v4253 = vld [vmem:[%s427 + $0x2d8] sm:$0xff]
        %v4254 = vld [vmem:[%s427 + $0x2e0] sm:$0xff]
        %v4255 = vld [vmem:[%s427 + $0x2e8] sm:$0xff]
        %v4256 = vld [vmem:[%s427 + $0x2f0] sm:$0xff]
        %v4257 = vld [vmem:[%s427 + $0x2f8] sm:$0xff]
        %v4258 = vld [vmem:[%s427 + $0x300] sm:$0xff]
        %v4259 = vld [vmem:[%s427 + $0x308] sm:$0xff]
        %v4260 = vld [vmem:[%s427 + $0x310] sm:$0xff]
        %v4261 = vld [vmem:[%s427 + $0x318] sm:$0xff]
        %v4262 = vld [vmem:[%s427 + $0x320] sm:$0xff]
        %v4263 = vld [vmem:[%s427 + $0x328] sm:$0xff]
        %v4264 = vld [vmem:[%s427 + $0x330] sm:$0xff]
        %v4265 = vld [vmem:[%s427 + $0x338] sm:$0xff]
        %v4266 = vld [vmem:[%s427 + $0x340] sm:$0xff]
        %v4267 = vld [vmem:[%s427 + $0x348] sm:$0xff]
        %v4268 = vld [vmem:[%s427 + $0x350] sm:$0xff]
        %v4269 = vld [vmem:[%s427 + $0x358] sm:$0xff]
        %v4270 = vld [vmem:[%s427 + $0x360] sm:$0xff]
        %v4271 = vld [vmem:[%s427 + $0x368] sm:$0xff]
        %v4272 = vld [vmem:[%s427 + $0x370] sm:$0xff]
        %v4273 = vld [vmem:[%s427 + $0x378] sm:$0xff]
        %v4274 = vld [vmem:[%s427 + $0x380] sm:$0xff]
        %v4275 = vld [vmem:[%s427 + $0x388] sm:$0xff]
        %v4276 = vld [vmem:[%s427 + $0x390] sm:$0xff]
        %v4277 = vld [vmem:[%s427 + $0x398] sm:$0xff]
        %v4278 = vld [vmem:[%s427 + $0x3a0] sm:$0xff]
        %v4279 = vld [vmem:[%s427 + $0x3a8] sm:$0xff]
        %v4280 = vld [vmem:[%s427 + $0x3b0] sm:$0xff]
        %v4281 = vld [vmem:[%s427 + $0x3b8] sm:$0xff]
        %v4282 = vld [vmem:[%s427 + $0x3c0] sm:$0xff]
        %v4283 = vld [vmem:[%s427 + $0x3c8] sm:$0xff]
        %v4284 = vld [vmem:[%s427 + $0x3d0] sm:$0xff]
        %v4285 = vld [vmem:[%s427 + $0x3d8] sm:$0xff]
        %v4286 = vld [vmem:[%s427 + $0x3e0] sm:$0xff]
        %v4287 = vld [vmem:[%s427 + $0x3e8] sm:$0xff]
        %v4288 = vld [vmem:[%s427 + $0x3f0] sm:$0xff]
        %v4289 = vld [vmem:[%s427 + $0x3f8] sm:$0xff]
        %v4291 = vlaneseq
        %v4292 = vshrl.u32 %v4291, 7
        %v4293 = vsub.s32 0, %v4292
        %v4294 = vrot.slane %v645, %v4293
        %v4295 = vlaneseq
        %v4296 = vshrl.u32 %v4295, 7
        %v4297 = vsub.s32 1, %v4296
        %v4298 = vrot.slane %v645, %v4297
        %v4299 = vlaneseq
        %v4300 = vshrl.u32 %v4299, 7
        %v4301 = vsub.s32 2, %v4300
        %v4302 = vrot.slane %v645, %v4301
        %v4303 = vlaneseq
        %v4304 = vshrl.u32 %v4303, 7
        %v4305 = vsub.s32 3, %v4304
        %v4306 = vrot.slane %v645, %v4305
        %v4307 = vlaneseq
        %v4308 = vshrl.u32 %v4307, 7
        %v4309 = vsub.s32 4, %v4308
        %v4310 = vrot.slane %v645, %v4309
        %v4311 = vlaneseq
        %v4312 = vshrl.u32 %v4311, 7
        %v4313 = vsub.s32 5, %v4312
        %v4314 = vrot.slane %v645, %v4313
        %v4315 = vlaneseq
        %v4316 = vshrl.u32 %v4315, 7
        %v4317 = vsub.s32 6, %v4316
        %v4318 = vrot.slane %v645, %v4317
        %v4319 = vlaneseq
        %v4320 = vshrl.u32 %v4319, 7
        %v4321 = vsub.s32 7, %v4320
        %v4322 = vrot.slane %v645, %v4321
        %v4459 = vunpack.c.l.b16 %v4162
        %v4460 = vunpack.c.h.b16 %v4162
        %v4461 = vunpack.c.l.b16 %v4163
        %v4462 = vunpack.c.h.b16 %v4163
        %v4463 = vunpack.c.l.b16 %v4164
        %v4464 = vunpack.c.h.b16 %v4164
        %v4465 = vunpack.c.l.b16 %v4165
        %v4466 = vunpack.c.h.b16 %v4165
        %v4467 = vunpack.c.l.b16 %v4166
        %v4468 = vunpack.c.h.b16 %v4166
        %v4469 = vunpack.c.l.b16 %v4167
        %v4470 = vunpack.c.h.b16 %v4167
        %v4471 = vunpack.c.l.b16 %v4168
        %v4472 = vunpack.c.h.b16 %v4168
        %v4473 = vunpack.c.l.b16 %v4169
        %v4474 = vunpack.c.h.b16 %v4169
        %v4475 = vunpack.c.l.b16 %v4170
        %v4476 = vunpack.c.h.b16 %v4170
        %v4477 = vunpack.c.l.b16 %v4171
        %v4478 = vunpack.c.h.b16 %v4171
        %v4479 = vunpack.c.l.b16 %v4172
        %v4480 = vunpack.c.h.b16 %v4172
        %v4481 = vunpack.c.l.b16 %v4173
        %v4482 = vunpack.c.h.b16 %v4173
        %v4483 = vunpack.c.l.b16 %v4174
        %v4484 = vunpack.c.h.b16 %v4174
        %v4485 = vunpack.c.l.b16 %v4175
        %v4486 = vunpack.c.h.b16 %v4175
        %v4487 = vunpack.c.l.b16 %v4176
        %v4488 = vunpack.c.h.b16 %v4176
        %v4489 = vunpack.c.l.b16 %v4177
        %v4490 = vunpack.c.h.b16 %v4177
        %v4491 = vunpack.c.l.b16 %v4178
        %v4492 = vunpack.c.h.b16 %v4178
        %v4493 = vunpack.c.l.b16 %v4179
        %v4494 = vunpack.c.h.b16 %v4179
        %v4495 = vunpack.c.l.b16 %v4180
        %v4496 = vunpack.c.h.b16 %v4180
        %v4497 = vunpack.c.l.b16 %v4181
        %v4498 = vunpack.c.h.b16 %v4181
        %v4499 = vunpack.c.l.b16 %v4182
        %v4500 = vunpack.c.h.b16 %v4182
        %v4501 = vunpack.c.l.b16 %v4183
        %v4502 = vunpack.c.h.b16 %v4183
        %v4503 = vunpack.c.l.b16 %v4184
        %v4504 = vunpack.c.h.b16 %v4184
        %v4505 = vunpack.c.l.b16 %v4185
        %v4506 = vunpack.c.h.b16 %v4185
        %v4507 = vunpack.c.l.b16 %v4186
        %v4508 = vunpack.c.h.b16 %v4186
        %v4509 = vunpack.c.l.b16 %v4187
        %v4510 = vunpack.c.h.b16 %v4187
        %v4511 = vunpack.c.l.b16 %v4188
        %v4512 = vunpack.c.h.b16 %v4188
        %v4513 = vunpack.c.l.b16 %v4189
        %v4514 = vunpack.c.h.b16 %v4189
        %v4515 = vunpack.c.l.b16 %v4190
        %v4516 = vunpack.c.h.b16 %v4190
        %v4517 = vunpack.c.l.b16 %v4191
        %v4518 = vunpack.c.h.b16 %v4191
        %v4519 = vunpack.c.l.b16 %v4192
        %v4520 = vunpack.c.h.b16 %v4192
        %v4521 = vunpack.c.l.b16 %v4193
        %v4522 = vunpack.c.h.b16 %v4193
        %v4523 = vunpack.c.l.b16 %v4194
        %v4524 = vunpack.c.h.b16 %v4194
        %v4525 = vunpack.c.l.b16 %v4195
        %v4526 = vunpack.c.h.b16 %v4195
        %v4527 = vunpack.c.l.b16 %v4196
        %v4528 = vunpack.c.h.b16 %v4196
        %v4529 = vunpack.c.l.b16 %v4197
        %v4530 = vunpack.c.h.b16 %v4197
        %v4531 = vunpack.c.l.b16 %v4198
        %v4532 = vunpack.c.h.b16 %v4198
        %v4533 = vunpack.c.l.b16 %v4199
        %v4534 = vunpack.c.h.b16 %v4199
        %v4535 = vunpack.c.l.b16 %v4200
        %v4536 = vunpack.c.h.b16 %v4200
        %v4537 = vunpack.c.l.b16 %v4201
        %v4538 = vunpack.c.h.b16 %v4201
        %v4539 = vunpack.c.l.b16 %v4202
        %v4540 = vunpack.c.h.b16 %v4202
        %v4541 = vunpack.c.l.b16 %v4203
        %v4542 = vunpack.c.h.b16 %v4203
        %v4543 = vunpack.c.l.b16 %v4204
        %v4544 = vunpack.c.h.b16 %v4204
        %v4545 = vunpack.c.l.b16 %v4205
        %v4546 = vunpack.c.h.b16 %v4205
        %v4547 = vunpack.c.l.b16 %v4206
        %v4548 = vunpack.c.h.b16 %v4206
        %v4549 = vunpack.c.l.b16 %v4207
        %v4550 = vunpack.c.h.b16 %v4207
        %v4551 = vunpack.c.l.b16 %v4208
        %v4552 = vunpack.c.h.b16 %v4208
        %v4553 = vunpack.c.l.b16 %v4209
        %v4554 = vunpack.c.h.b16 %v4209
        %v4555 = vunpack.c.l.b16 %v4210
        %v4556 = vunpack.c.h.b16 %v4210
        %v4557 = vunpack.c.l.b16 %v4211
        %v4558 = vunpack.c.h.b16 %v4211
        %v4559 = vunpack.c.l.b16 %v4212
        %v4560 = vunpack.c.h.b16 %v4212
        %v4561 = vunpack.c.l.b16 %v4213
        %v4562 = vunpack.c.h.b16 %v4213
        %v4563 = vunpack.c.l.b16 %v4214
        %v4564 = vunpack.c.h.b16 %v4214
        %v4565 = vunpack.c.l.b16 %v4215
        %v4566 = vunpack.c.h.b16 %v4215
        %v4567 = vunpack.c.l.b16 %v4216
        %v4568 = vunpack.c.h.b16 %v4216
        %v4569 = vunpack.c.l.b16 %v4217
        %v4570 = vunpack.c.h.b16 %v4217
        %v4571 = vunpack.c.l.b16 %v4218
        %v4572 = vunpack.c.h.b16 %v4218
        %v4573 = vunpack.c.l.b16 %v4219
        %v4574 = vunpack.c.h.b16 %v4219
        %v4575 = vunpack.c.l.b16 %v4220
        %v4576 = vunpack.c.h.b16 %v4220
        %v4577 = vunpack.c.l.b16 %v4221
        %v4578 = vunpack.c.h.b16 %v4221
        %v4579 = vunpack.c.l.b16 %v4222
        %v4580 = vunpack.c.h.b16 %v4222
        %v4581 = vunpack.c.l.b16 %v4223
        %v4582 = vunpack.c.h.b16 %v4223
        %v4583 = vunpack.c.l.b16 %v4224
        %v4584 = vunpack.c.h.b16 %v4224
        %v4585 = vunpack.c.l.b16 %v4225
        %v4586 = vunpack.c.h.b16 %v4225
        %v4587 = vunpack.c.l.b16 %v4226
        %v4588 = vunpack.c.h.b16 %v4226
        %v4589 = vunpack.c.l.b16 %v4227
        %v4590 = vunpack.c.h.b16 %v4227
        %v4591 = vunpack.c.l.b16 %v4228
        %v4592 = vunpack.c.h.b16 %v4228
        %v4593 = vunpack.c.l.b16 %v4229
        %v4594 = vunpack.c.h.b16 %v4229
        %v4595 = vunpack.c.l.b16 %v4230
        %v4596 = vunpack.c.h.b16 %v4230
        %v4597 = vunpack.c.l.b16 %v4231
        %v4598 = vunpack.c.h.b16 %v4231
        %v4599 = vunpack.c.l.b16 %v4232
        %v4600 = vunpack.c.h.b16 %v4232
        %v4601 = vunpack.c.l.b16 %v4233
        %v4602 = vunpack.c.h.b16 %v4233
        %v4603 = vunpack.c.l.b16 %v4234
        %v4604 = vunpack.c.h.b16 %v4234
        %v4605 = vunpack.c.l.b16 %v4235
        %v4606 = vunpack.c.h.b16 %v4235
        %v4607 = vunpack.c.l.b16 %v4236
        %v4608 = vunpack.c.h.b16 %v4236
        %v4609 = vunpack.c.l.b16 %v4237
        %v4610 = vunpack.c.h.b16 %v4237
        %v4611 = vunpack.c.l.b16 %v4238
        %v4612 = vunpack.c.h.b16 %v4238
        %v4613 = vunpack.c.l.b16 %v4239
        %v4614 = vunpack.c.h.b16 %v4239
        %v4615 = vunpack.c.l.b16 %v4240
        %v4616 = vunpack.c.h.b16 %v4240
        %v4617 = vunpack.c.l.b16 %v4241
        %v4618 = vunpack.c.h.b16 %v4241
        %v4619 = vunpack.c.l.b16 %v4242
        %v4620 = vunpack.c.h.b16 %v4242
        %v4621 = vunpack.c.l.b16 %v4243
        %v4622 = vunpack.c.h.b16 %v4243
        %v4623 = vunpack.c.l.b16 %v4244
        %v4624 = vunpack.c.h.b16 %v4244
        %v4625 = vunpack.c.l.b16 %v4245
        %v4626 = vunpack.c.h.b16 %v4245
        %v4627 = vunpack.c.l.b16 %v4246
        %v4628 = vunpack.c.h.b16 %v4246
        %v4629 = vunpack.c.l.b16 %v4247
        %v4630 = vunpack.c.h.b16 %v4247
        %v4631 = vunpack.c.l.b16 %v4248
        %v4632 = vunpack.c.h.b16 %v4248
        %v4633 = vunpack.c.l.b16 %v4249
        %v4634 = vunpack.c.h.b16 %v4249
        %v4635 = vunpack.c.l.b16 %v4250
        %v4636 = vunpack.c.h.b16 %v4250
        %v4637 = vunpack.c.l.b16 %v4251
        %v4638 = vunpack.c.h.b16 %v4251
        %v4639 = vunpack.c.l.b16 %v4252
        %v4640 = vunpack.c.h.b16 %v4252
        %v4641 = vunpack.c.l.b16 %v4253
        %v4642 = vunpack.c.h.b16 %v4253
        %v4643 = vunpack.c.l.b16 %v4254
        %v4644 = vunpack.c.h.b16 %v4254
        %v4645 = vunpack.c.l.b16 %v4255
        %v4646 = vunpack.c.h.b16 %v4255
        %v4647 = vunpack.c.l.b16 %v4256
        %v4648 = vunpack.c.h.b16 %v4256
        %v4649 = vunpack.c.l.b16 %v4257
        %v4650 = vunpack.c.h.b16 %v4257
        %v4651 = vunpack.c.l.b16 %v4258
        %v4652 = vunpack.c.h.b16 %v4258
        %v4653 = vunpack.c.l.b16 %v4259
        %v4654 = vunpack.c.h.b16 %v4259
        %v4655 = vunpack.c.l.b16 %v4260
        %v4656 = vunpack.c.h.b16 %v4260
        %v4657 = vunpack.c.l.b16 %v4261
        %v4658 = vunpack.c.h.b16 %v4261
        %v4659 = vunpack.c.l.b16 %v4262
        %v4660 = vunpack.c.h.b16 %v4262
        %v4661 = vunpack.c.l.b16 %v4263
        %v4662 = vunpack.c.h.b16 %v4263
        %v4663 = vunpack.c.l.b16 %v4264
        %v4664 = vunpack.c.h.b16 %v4264
        %v4665 = vunpack.c.l.b16 %v4265
        %v4666 = vunpack.c.h.b16 %v4265
        %v4667 = vunpack.c.l.b16 %v4266
        %v4668 = vunpack.c.h.b16 %v4266
        %v4669 = vunpack.c.l.b16 %v4267
        %v4670 = vunpack.c.h.b16 %v4267
        %v4671 = vunpack.c.l.b16 %v4268
        %v4672 = vunpack.c.h.b16 %v4268
        %v4673 = vunpack.c.l.b16 %v4269
        %v4674 = vunpack.c.h.b16 %v4269
        %v4675 = vunpack.c.l.b16 %v4270
        %v4676 = vunpack.c.h.b16 %v4270
        %v4677 = vunpack.c.l.b16 %v4271
        %v4678 = vunpack.c.h.b16 %v4271
        %v4679 = vunpack.c.l.b16 %v4272
        %v4680 = vunpack.c.h.b16 %v4272
        %v4681 = vunpack.c.l.b16 %v4273
        %v4682 = vunpack.c.h.b16 %v4273
        %v4683 = vunpack.c.l.b16 %v4274
        %v4684 = vunpack.c.h.b16 %v4274
        %v4685 = vunpack.c.l.b16 %v4275
        %v4686 = vunpack.c.h.b16 %v4275
        %v4687 = vunpack.c.l.b16 %v4276
        %v4688 = vunpack.c.h.b16 %v4276
        %v4689 = vunpack.c.l.b16 %v4277
        %v4690 = vunpack.c.h.b16 %v4277
        %v4691 = vunpack.c.l.b16 %v4278
        %v4692 = vunpack.c.h.b16 %v4278
        %v4693 = vunpack.c.l.b16 %v4279
        %v4694 = vunpack.c.h.b16 %v4279
        %v4695 = vunpack.c.l.b16 %v4280
        %v4696 = vunpack.c.h.b16 %v4280
        %v4697 = vunpack.c.l.b16 %v4281
        %v4698 = vunpack.c.h.b16 %v4281
        %v4699 = vunpack.c.l.b16 %v4282
        %v4700 = vunpack.c.h.b16 %v4282
        %v4701 = vunpack.c.l.b16 %v4283
        %v4702 = vunpack.c.h.b16 %v4283
        %v4703 = vunpack.c.l.b16 %v4284
        %v4704 = vunpack.c.h.b16 %v4284
        %v4705 = vunpack.c.l.b16 %v4285
        %v4706 = vunpack.c.h.b16 %v4285
        %v4707 = vunpack.c.l.b16 %v4286
        %v4708 = vunpack.c.h.b16 %v4286
        %v4709 = vunpack.c.l.b16 %v4287
        %v4710 = vunpack.c.h.b16 %v4287
        %v4711 = vunpack.c.l.b16 %v4288
        %v4712 = vunpack.c.h.b16 %v4288
        %v4713 = vunpack.c.l.b16 %v4289
        %v4714 = vunpack.c.h.b16 %v4289
        %v4715 = vpack.c.b16 %v4467, %v4459
        %v4716 = vpack.c.b16 %v4468, %v4460
        %v4717 = vpack.c.b16 %v4469, %v4461
        %v4718 = vpack.c.b16 %v4470, %v4462
        %v4719 = vpack.c.b16 %v4471, %v4463
        %v4720 = vpack.c.b16 %v4472, %v4464
        %v4721 = vpack.c.b16 %v4473, %v4465
        %v4722 = vpack.c.b16 %v4474, %v4466
        %v4723 = vpack.c.b16 %v4483, %v4475
        %v4724 = vpack.c.b16 %v4484, %v4476
        %v4725 = vpack.c.b16 %v4485, %v4477
        %v4726 = vpack.c.b16 %v4486, %v4478
        %v4727 = vpack.c.b16 %v4487, %v4479
        %v4728 = vpack.c.b16 %v4488, %v4480
        %v4729 = vpack.c.b16 %v4489, %v4481
        %v4730 = vpack.c.b16 %v4490, %v4482
        %v4731 = vpack.c.b16 %v4499, %v4491
        %v4732 = vpack.c.b16 %v4500, %v4492
        %v4733 = vpack.c.b16 %v4501, %v4493
        %v4734 = vpack.c.b16 %v4502, %v4494
        %v4735 = vpack.c.b16 %v4503, %v4495
        %v4736 = vpack.c.b16 %v4504, %v4496
        %v4737 = vpack.c.b16 %v4505, %v4497
        %v4738 = vpack.c.b16 %v4506, %v4498
        %v4739 = vpack.c.b16 %v4515, %v4507
        %v4740 = vpack.c.b16 %v4516, %v4508
        %v4741 = vpack.c.b16 %v4517, %v4509
        %v4742 = vpack.c.b16 %v4518, %v4510
        %v4743 = vpack.c.b16 %v4519, %v4511
        %v4744 = vpack.c.b16 %v4520, %v4512
        %v4745 = vpack.c.b16 %v4521, %v4513
        %v4746 = vpack.c.b16 %v4522, %v4514
        %v4747 = vpack.c.b16 %v4531, %v4523
        %v4748 = vpack.c.b16 %v4532, %v4524
        %v4749 = vpack.c.b16 %v4533, %v4525
        %v4750 = vpack.c.b16 %v4534, %v4526
        %v4751 = vpack.c.b16 %v4535, %v4527
        %v4752 = vpack.c.b16 %v4536, %v4528
        %v4753 = vpack.c.b16 %v4537, %v4529
        %v4754 = vpack.c.b16 %v4538, %v4530
        %v4755 = vpack.c.b16 %v4547, %v4539
        %v4756 = vpack.c.b16 %v4548, %v4540
        %v4757 = vpack.c.b16 %v4549, %v4541
        %v4758 = vpack.c.b16 %v4550, %v4542
        %v4759 = vpack.c.b16 %v4551, %v4543
        %v4760 = vpack.c.b16 %v4552, %v4544
        %v4761 = vpack.c.b16 %v4553, %v4545
        %v4762 = vpack.c.b16 %v4554, %v4546
        %v4763 = vpack.c.b16 %v4563, %v4555
        %v4764 = vpack.c.b16 %v4564, %v4556
        %v4765 = vpack.c.b16 %v4565, %v4557
        %v4766 = vpack.c.b16 %v4566, %v4558
        %v4767 = vpack.c.b16 %v4567, %v4559
        %v4768 = vpack.c.b16 %v4568, %v4560
        %v4769 = vpack.c.b16 %v4569, %v4561
        %v4770 = vpack.c.b16 %v4570, %v4562
        %v4771 = vpack.c.b16 %v4579, %v4571
        %v4772 = vpack.c.b16 %v4580, %v4572
        %v4773 = vpack.c.b16 %v4581, %v4573
        %v4774 = vpack.c.b16 %v4582, %v4574
        %v4775 = vpack.c.b16 %v4583, %v4575
        %v4776 = vpack.c.b16 %v4584, %v4576
        %v4777 = vpack.c.b16 %v4585, %v4577
        %v4778 = vpack.c.b16 %v4586, %v4578
        %v4779 = vpack.c.b16 %v4595, %v4587
        %v4780 = vpack.c.b16 %v4596, %v4588
        %v4781 = vpack.c.b16 %v4597, %v4589
        %v4782 = vpack.c.b16 %v4598, %v4590
        %v4783 = vpack.c.b16 %v4599, %v4591
        %v4784 = vpack.c.b16 %v4600, %v4592
        %v4785 = vpack.c.b16 %v4601, %v4593
        %v4786 = vpack.c.b16 %v4602, %v4594
        %v4787 = vpack.c.b16 %v4611, %v4603
        %v4788 = vpack.c.b16 %v4612, %v4604
        %v4789 = vpack.c.b16 %v4613, %v4605
        %v4790 = vpack.c.b16 %v4614, %v4606
        %v4791 = vpack.c.b16 %v4615, %v4607
        %v4792 = vpack.c.b16 %v4616, %v4608
        %v4793 = vpack.c.b16 %v4617, %v4609
        %v4794 = vpack.c.b16 %v4618, %v4610
        %v4795 = vpack.c.b16 %v4627, %v4619
        %v4796 = vpack.c.b16 %v4628, %v4620
        %v4797 = vpack.c.b16 %v4629, %v4621
        %v4798 = vpack.c.b16 %v4630, %v4622
        %v4799 = vpack.c.b16 %v4631, %v4623
        %v4800 = vpack.c.b16 %v4632, %v4624
        %v4801 = vpack.c.b16 %v4633, %v4625
        %v4802 = vpack.c.b16 %v4634, %v4626
        %v4803 = vpack.c.b16 %v4643, %v4635
        %v4804 = vpack.c.b16 %v4644, %v4636
        %v4805 = vpack.c.b16 %v4645, %v4637
        %v4806 = vpack.c.b16 %v4646, %v4638
        %v4807 = vpack.c.b16 %v4647, %v4639
        %v4808 = vpack.c.b16 %v4648, %v4640
        %v4809 = vpack.c.b16 %v4649, %v4641
        %v4810 = vpack.c.b16 %v4650, %v4642
        %v4811 = vpack.c.b16 %v4659, %v4651
        %v4812 = vpack.c.b16 %v4660, %v4652
        %v4813 = vpack.c.b16 %v4661, %v4653
        %v4814 = vpack.c.b16 %v4662, %v4654
        %v4815 = vpack.c.b16 %v4663, %v4655
        %v4816 = vpack.c.b16 %v4664, %v4656
        %v4817 = vpack.c.b16 %v4665, %v4657
        %v4818 = vpack.c.b16 %v4666, %v4658
        %v4819 = vpack.c.b16 %v4675, %v4667
        %v4820 = vpack.c.b16 %v4676, %v4668
        %v4821 = vpack.c.b16 %v4677, %v4669
        %v4822 = vpack.c.b16 %v4678, %v4670
        %v4823 = vpack.c.b16 %v4679, %v4671
        %v4824 = vpack.c.b16 %v4680, %v4672
        %v4825 = vpack.c.b16 %v4681, %v4673
        %v4826 = vpack.c.b16 %v4682, %v4674
        %v4827 = vpack.c.b16 %v4691, %v4683
        %v4828 = vpack.c.b16 %v4692, %v4684
        %v4829 = vpack.c.b16 %v4693, %v4685
        %v4830 = vpack.c.b16 %v4694, %v4686
        %v4831 = vpack.c.b16 %v4695, %v4687
        %v4832 = vpack.c.b16 %v4696, %v4688
        %v4833 = vpack.c.b16 %v4697, %v4689
        %v4834 = vpack.c.b16 %v4698, %v4690
        %v4835 = vpack.c.b16 %v4707, %v4699
        %v4836 = vpack.c.b16 %v4708, %v4700
        %v4837 = vpack.c.b16 %v4709, %v4701
        %v4838 = vpack.c.b16 %v4710, %v4702
        %v4839 = vpack.c.b16 %v4711, %v4703
        %v4840 = vpack.c.b16 %v4712, %v4704
        %v4841 = vpack.c.b16 %v4713, %v4705
        %v4842 = vpack.c.b16 %v4714, %v4706
        %4971 = vmatprep.subr.bf16.mxu0 %v4716
        %4972 = vmatpush1.bf16.msra.mxu0 %v4715
        %4973 = vmatprep.subr.bf16.mxu0 %v4724
        %4974 = vmatpush1.bf16.msra.mxu0 %v4723
        %4975 = vmatprep.subr.bf16.mxu0 %v4732
        %4976 = vmatpush1.bf16.msra.mxu0 %v4731
        %4977 = vmatprep.subr.bf16.mxu0 %v4740
        %4978 = vmatpush1.bf16.msra.mxu0 %v4739
        %4979 = vmatprep.subr.bf16.mxu0 %v4748
        %4980 = vmatpush1.bf16.msra.mxu0 %v4747
        %4981 = vmatprep.subr.bf16.mxu0 %v4756
        %4982 = vmatpush1.bf16.msra.mxu0 %v4755
        %4983 = vmatprep.subr.bf16.mxu0 %v4764
        %4984 = vmatpush1.bf16.msra.mxu0 %v4763
        %4985 = vmatprep.subr.bf16.mxu0 %v4772
        %4986 = vmatpush1.bf16.msra.mxu0 %v4771
        %4987 = vmatprep.subr.bf16.mxu0 %v4780
        %4988 = vmatpush1.bf16.msra.mxu0 %v4779
        %4989 = vmatprep.subr.bf16.mxu0 %v4788
        %4990 = vmatpush1.bf16.msra.mxu0 %v4787
        %4991 = vmatprep.subr.bf16.mxu0 %v4796
        %4992 = vmatpush1.bf16.msra.mxu0 %v4795
        %4993 = vmatprep.subr.bf16.mxu0 %v4804
        %4994 = vmatpush1.bf16.msra.mxu0 %v4803
        %4995 = vmatprep.subr.bf16.mxu0 %v4812
        %4996 = vmatpush1.bf16.msra.mxu0 %v4811
        %4997 = vmatprep.subr.bf16.mxu0 %v4820
        %4998 = vmatpush1.bf16.msra.mxu0 %v4819
        %4999 = vmatprep.subr.bf16.mxu0 %v4828
        %5000 = vmatpush1.bf16.msra.mxu0 %v4827
        %5001 = vmatprep.subr.bf16.mxu0 %v4836
        %5002 = vmatpush1.bf16.msra.mxu0 %v4835
        %5003 = vmatprep.mubr.bf16.mxu0 %v4143
        %5004 = vmatmul.mubr.bf16.gmra.mrb[0].mxu0 %v4142
        %v5005 = vpop.f32.mrb[0].mxu0
        %v5006 = vadd.f32 %v4294, %v5005
        %v5007 = vpop.f32.mrb[0].mxu0
        %v5008 = vadd.f32 %v4298, %v5007
        %v5009 = vpop.f32.mrb[0].mxu0
        %v5010 = vadd.f32 %v4294, %v5009
        %v5011 = vpop.f32.mrb[0].mxu0
        %v5012 = vadd.f32 %v4298, %v5011
        %5013 = vmatprep.mubr.bf16.mxu0 %v4145
        %5014 = vmatmul.mubr.bf16.gmra.mrb[0].mxu0 %v4144
        %v5015 = vpop.f32.mrb[0].mxu0
        %v5016 = vadd.f32 %v4294, %v5015
        %v5017 = vpop.f32.mrb[0].mxu0
        %v5018 = vadd.f32 %v4298, %v5017
        %v5019 = vpop.f32.mrb[0].mxu0
        %v5020 = vadd.f32 %v4294, %v5019
        %v5021 = vpop.f32.mrb[0].mxu0
        %v5022 = vadd.f32 %v4298, %v5021
        %5023 = vmatprep.mubr.bf16.mxu0 %v4147
        %5024 = vmatmul.mubr.bf16.gmra.mrb[0].mxu0 %v4146
        %v5025 = vpop.f32.mrb[0].mxu0
        %v5026 = vadd.f32 %v4294, %v5025
        %v5027 = vpop.f32.mrb[0].mxu0
        %v5028 = vadd.f32 %v4298, %v5027
        %v5029 = vpop.f32.mrb[0].mxu0
        %v5030 = vadd.f32 %v4294, %v5029
        %v5031 = vpop.f32.mrb[0].mxu0
        %v5032 = vadd.f32 %v4298, %v5031
        %5033 = vmatprep.mubr.bf16.mxu0 %v4149
        %5034 = vmatmul.mubr.bf16.gmra.mrb[0].mxu0 %v4148
        %v5035 = vpop.f32.mrb[0].mxu0
        %v5036 = vadd.f32 %v4294, %v5035
        %v5037 = vpop.f32.mrb[0].mxu0
        %v5038 = vadd.f32 %v4298, %v5037
        %v5039 = vpop.f32.mrb[0].mxu0
        %v5040 = vadd.f32 %v4294, %v5039
        %v5041 = vpop.f32.mrb[0].mxu0
        %v5042 = vadd.f32 %v4298, %v5041
        %5043 = vmatprep.mubr.bf16.mxu0 %v4151
        %5044 = vmatmul.mubr.bf16.gmra.mrb[0].mxu0 %v4150
        %v5045 = vpop.f32.mrb[0].mxu0
        %v5046 = vadd.f32 %v4294, %v5045
        %v5047 = vpop.f32.mrb[0].mxu0
        %v5048 = vadd.f32 %v4298, %v5047
        %v5049 = vpop.f32.mrb[0].mxu0
        %v5050 = vadd.f32 %v4294, %v5049
        %v5051 = vpop.f32.mrb[0].mxu0
        %v5052 = vadd.f32 %v4298, %v5051
        %5053 = vmatprep.mubr.bf16.mxu0 %v4153
        %5054 = vmatmul.mubr.bf16.gmra.mrb[0].mxu0 %v4152
        %v5055 = vpop.f32.mrb[0].mxu0
        %v5056 = vadd.f32 %v4294, %v5055
        %v5057 = vpop.f32.mrb[0].mxu0
        %v5058 = vadd.f32 %v4298, %v5057
        %v5059 = vpop.f32.mrb[0].mxu0
        %v5060 = vadd.f32 %v4294, %v5059
        %v5061 = vpop.f32.mrb[0].mxu0
        %v5062 = vadd.f32 %v4298, %v5061
        %5063 = vmatprep.mubr.bf16.mxu0 %v4155
        %5064 = vmatmul.mubr.bf16.gmra.mrb[0].mxu0 %v4154
        %v5065 = vpop.f32.mrb[0].mxu0
        %v5066 = vadd.f32 %v4294, %v5065
        %v5067 = vpop.f32.mrb[0].mxu0
        %v5068 = vadd.f32 %v4298, %v5067
        %v5069 = vpop.f32.mrb[0].mxu0
        %v5070 = vadd.f32 %v4294, %v5069
        %v5071 = vpop.f32.mrb[0].mxu0
        %v5072 = vadd.f32 %v4298, %v5071
        %5073 = vmatprep.mubr.bf16.mxu0 %v4157
        %5074 = vmatmul.mubr.bf16.gmra.mrb[0].mxu0 %v4156
        %v5075 = vpop.f32.mrb[0].mxu0
        %v5076 = vadd.f32 %v4294, %v5075
        %v5077 = vpop.f32.mrb[0].mxu0
        %v5078 = vadd.f32 %v4298, %v5077
        %v5079 = vpop.f32.mrb[0].mxu0
        %v5080 = vadd.f32 %v4294, %v5079
        %v5081 = vpop.f32.mrb[0].mxu0
        %v5082 = vadd.f32 %v4298, %v5081
        %5083 = vmatprep.mubr.bf16.mxu0 %v4159
        %5084 = vmatmul.mubr.bf16.gmra.mrb[0].mxu0 %v4158
        %v5085 = vpop.f32.mrb[0].mxu0
        %v5086 = vadd.f32 %v4294, %v5085
        %v5087 = vpop.f32.mrb[0].mxu0
        %v5088 = vadd.f32 %v4298, %v5087
        %v5089 = vpop.f32.mrb[0].mxu0
        %v5090 = vadd.f32 %v4294, %v5089
        %v5091 = vpop.f32.mrb[0].mxu0
        %v5092 = vadd.f32 %v4298, %v5091
        %5093 = vmatprep.mubr.bf16.mxu0 %v4161
        %5094 = vmatmul.mubr.bf16.gmra.mrb[0].mxu0 %v4160
        %v5095 = vpop.f32.mrb[0].mxu0
        %v5096 = vadd.f32 %v4294, %v5095
        %v5097 = vpop.f32.mrb[0].mxu0
        %v5098 = vadd.f32 %v4298, %v5097
        %v5099 = vpop.f32.mrb[0].mxu0
        %v5100 = vadd.f32 %v4294, %v5099
        %v5101 = vpop.f32.mrb[0].mxu0
        %v5102 = vadd.f32 %v4298, %v5101
        %5103 = vdwg.mxu0
        %5104 = vmatprep.subr.bf16.mxu0 %v4718
        %5105 = vmatpush1.bf16.msra.mxu0 %v4717
        %5106 = vmatprep.subr.bf16.mxu0 %v4726
        %5107 = vmatpush1.bf16.msra.mxu0 %v4725
        %5108 = vmatprep.subr.bf16.mxu0 %v4734
        %5109 = vmatpush1.bf16.msra.mxu0 %v4733
        %5110 = vmatprep.subr.bf16.mxu0 %v4742
        %5111 = vmatpush1.bf16.msra.mxu0 %v4741
        %5112 = vmatprep.subr.bf16.mxu0 %v4750
        %5113 = vmatpush1.bf16.msra.mxu0 %v4749
        %5114 = vmatprep.subr.bf16.mxu0 %v4758
        %5115 = vmatpush1.bf16.msra.mxu0 %v4757
        %5116 = vmatprep.subr.bf16.mxu0 %v4766
        %5117 = vmatpush1.bf16.msra.mxu0 %v4765
        %5118 = vmatprep.subr.bf16.mxu0 %v4774
        %5119 = vmatpush1.bf16.msra.mxu0 %v4773
        %5120 = vmatprep.subr.bf16.mxu0 %v4782
        %5121 = vmatpush1.bf16.msra.mxu0 %v4781
        %5122 = vmatprep.subr.bf16.mxu0 %v4790
        %5123 = vmatpush1.bf16.msra.mxu0 %v4789
        %5124 = vmatprep.subr.bf16.mxu0 %v4798
        %5125 = vmatpush1.bf16.msra.mxu0 %v4797
        %5126 = vmatprep.subr.bf16.mxu0 %v4806
        %5127 = vmatpush1.bf16.msra.mxu0 %v4805
        %5128 = vmatprep.subr.bf16.mxu0 %v4814
        %5129 = vmatpush1.bf16.msra.mxu0 %v4813
        %5130 = vmatprep.subr.bf16.mxu0 %v4822
        %5131 = vmatpush1.bf16.msra.mxu0 %v4821
        %5132 = vmatprep.subr.bf16.mxu0 %v4830
        %5133 = vmatpush1.bf16.msra.mxu0 %v4829
        %5134 = vmatprep.subr.bf16.mxu0 %v4838
        %5135 = vmatpush1.bf16.msra.mxu0 %v4837
        %5136 = vmatprep.mubr.bf16.mxu0 %v4143
        %5137 = vmatmul.mubr.bf16.gmra.mrb[0].mxu0 %v4142
        %v5138 = vpop.f32.mrb[0].mxu0
        %v5139 = vadd.f32 %v4302, %v5138
        %v5140 = vpop.f32.mrb[0].mxu0
        %v5141 = vadd.f32 %v4306, %v5140
        %v5142 = vpop.f32.mrb[0].mxu0
        %v5143 = vadd.f32 %v4302, %v5142
        %v5144 = vpop.f32.mrb[0].mxu0
        %v5145 = vadd.f32 %v4306, %v5144
        %5146 = vmatprep.mubr.bf16.mxu0 %v4145
        %5147 = vmatmul.mubr.bf16.gmra.mrb[0].mxu0 %v4144
        %v5148 = vpop.f32.mrb[0].mxu0
        %v5149 = vadd.f32 %v4302, %v5148
        %v5150 = vpop.f32.mrb[0].mxu0
        %v5151 = vadd.f32 %v4306, %v5150
        %v5152 = vpop.f32.mrb[0].mxu0
        %v5153 = vadd.f32 %v4302, %v5152
        %v5154 = vpop.f32.mrb[0].mxu0
        %v5155 = vadd.f32 %v4306, %v5154
        %5156 = vmatprep.mubr.bf16.mxu0 %v4147
        %5157 = vmatmul.mubr.bf16.gmra.mrb[0].mxu0 %v4146
        %v5158 = vpop.f32.mrb[0].mxu0
        %v5159 = vadd.f32 %v4302, %v5158
        %v5160 = vpop.f32.mrb[0].mxu0
        %v5161 = vadd.f32 %v4306, %v5160
        %v5162 = vpop.f32.mrb[0].mxu0
        %v5163 = vadd.f32 %v4302, %v5162
        %v5164 = vpop.f32.mrb[0].mxu0
        %v5165 = vadd.f32 %v4306, %v5164
        %5166 = vmatprep.mubr.bf16.mxu0 %v4149
        %5167 = vmatmul.mubr.bf16.gmra.mrb[0].mxu0 %v4148
        %v5168 = vpop.f32.mrb[0].mxu0
        %v5169 = vadd.f32 %v4302, %v5168
        %v5170 = vpop.f32.mrb[0].mxu0
        %v5171 = vadd.f32 %v4306, %v5170
        %v5172 = vpop.f32.mrb[0].mxu0
        %v5173 = vadd.f32 %v4302, %v5172
        %v5174 = vpop.f32.mrb[0].mxu0
        %v5175 = vadd.f32 %v4306, %v5174
        %5176 = vmatprep.mubr.bf16.mxu0 %v4151
        %5177 = vmatmul.mubr.bf16.gmra.mrb[0].mxu0 %v4150
        %v5178 = vpop.f32.mrb[0].mxu0
        %v5179 = vadd.f32 %v4302, %v5178
        %v5180 = vpop.f32.mrb[0].mxu0
        %v5181 = vadd.f32 %v4306, %v5180
        %v5182 = vpop.f32.mrb[0].mxu0
        %v5183 = vadd.f32 %v4302, %v5182
        %v5184 = vpop.f32.mrb[0].mxu0
        %v5185 = vadd.f32 %v4306, %v5184
        %5186 = vmatprep.mubr.bf16.mxu0 %v4153
        %5187 = vmatmul.mubr.bf16.gmra.mrb[0].mxu0 %v4152
        %v5188 = vpop.f32.mrb[0].mxu0
        %v5189 = vadd.f32 %v4302, %v5188
        %v5190 = vpop.f32.mrb[0].mxu0
        %v5191 = vadd.f32 %v4306, %v5190
        %v5192 = vpop.f32.mrb[0].mxu0
        %v5193 = vadd.f32 %v4302, %v5192
        %v5194 = vpop.f32.mrb[0].mxu0
        %v5195 = vadd.f32 %v4306, %v5194
        %5196 = vmatprep.mubr.bf16.mxu0 %v4155
        %5197 = vmatmul.mubr.bf16.gmra.mrb[0].mxu0 %v4154
        %v5198 = vpop.f32.mrb[0].mxu0
        %v5199 = vadd.f32 %v4302, %v5198
        %v5200 = vpop.f32.mrb[0].mxu0
        %v5201 = vadd.f32 %v4306, %v5200
        %v5202 = vpop.f32.mrb[0].mxu0
        %v5203 = vadd.f32 %v4302, %v5202
        %v5204 = vpop.f32.mrb[0].mxu0
        %v5205 = vadd.f32 %v4306, %v5204
        %5206 = vmatprep.mubr.bf16.mxu0 %v4157
        %5207 = vmatmul.mubr.bf16.gmra.mrb[0].mxu0 %v4156
        %v5208 = vpop.f32.mrb[0].mxu0
        %v5209 = vadd.f32 %v4302, %v5208
        %v5210 = vpop.f32.mrb[0].mxu0
        %v5211 = vadd.f32 %v4306, %v5210
        %v5212 = vpop.f32.mrb[0].mxu0
        %v5213 = vadd.f32 %v4302, %v5212
        %v5214 = vpop.f32.mrb[0].mxu0
        %v5215 = vadd.f32 %v4306, %v5214
        %5216 = vmatprep.mubr.bf16.mxu0 %v4159
        %5217 = vmatmul.mubr.bf16.gmra.mrb[0].mxu0 %v4158
        %v5218 = vpop.f32.mrb[0].mxu0
        %v5219 = vadd.f32 %v4302, %v5218
        %v5220 = vpop.f32.mrb[0].mxu0
        %v5221 = vadd.f32 %v4306, %v5220
        %v5222 = vpop.f32.mrb[0].mxu0
        %v5223 = vadd.f32 %v4302, %v5222
        %v5224 = vpop.f32.mrb[0].mxu0
        %v5225 = vadd.f32 %v4306, %v5224
        %5226 = vmatprep.mubr.bf16.mxu0 %v4161
        %5227 = vmatmul.mubr.bf16.gmra.mrb[0].mxu0 %v4160
        %v5228 = vpop.f32.mrb[0].mxu0
        %v5229 = vadd.f32 %v4302, %v5228
        %v5230 = vpop.f32.mrb[0].mxu0
        %v5231 = vadd.f32 %v4306, %v5230
        %v5232 = vpop.f32.mrb[0].mxu0
        %v5233 = vadd.f32 %v4302, %v5232
        %v5234 = vpop.f32.mrb[0].mxu0
        %v5235 = vadd.f32 %v4306, %v5234
        %5236 = vdwg.mxu0
        %5237 = vmatprep.subr.bf16.mxu0 %v4720
        %5238 = vmatpush1.bf16.msra.mxu0 %v4719
        %5239 = vmatprep.subr.bf16.mxu0 %v4728
        %5240 = vmatpush1.bf16.msra.mxu0 %v4727
        %5241 = vmatprep.subr.bf16.mxu0 %v4736
        %5242 = vmatpush1.bf16.msra.mxu0 %v4735
        %5243 = vmatprep.subr.bf16.mxu0 %v4744
        %5244 = vmatpush1.bf16.msra.mxu0 %v4743
        %5245 = vmatprep.subr.bf16.mxu0 %v4752
        %5246 = vmatpush1.bf16.msra.mxu0 %v4751
        %5247 = vmatprep.subr.bf16.mxu0 %v4760
        %5248 = vmatpush1.bf16.msra.mxu0 %v4759
        %5249 = vmatprep.subr.bf16.mxu0 %v4768
        %5250 = vmatpush1.bf16.msra.mxu0 %v4767
        %5251 = vmatprep.subr.bf16.mxu0 %v4776
        %5252 = vmatpush1.bf16.msra.mxu0 %v4775
        %5253 = vmatprep.subr.bf16.mxu0 %v4784
        %5254 = vmatpush1.bf16.msra.mxu0 %v4783
        %5255 = vmatprep.subr.bf16.mxu0 %v4792
        %5256 = vmatpush1.bf16.msra.mxu0 %v4791
        %5257 = vmatprep.subr.bf16.mxu0 %v4800
        %5258 = vmatpush1.bf16.msra.mxu0 %v4799
        %5259 = vmatprep.subr.bf16.mxu0 %v4808
        %5260 = vmatpush1.bf16.msra.mxu0 %v4807
        %5261 = vmatprep.subr.bf16.mxu0 %v4816
        %5262 = vmatpush1.bf16.msra.mxu0 %v4815
        %5263 = vmatprep.subr.bf16.mxu0 %v4824
        %5264 = vmatpush1.bf16.msra.mxu0 %v4823
        %5265 = vmatprep.subr.bf16.mxu0 %v4832
        %5266 = vmatpush1.bf16.msra.mxu0 %v4831
        %5267 = vmatprep.subr.bf16.mxu0 %v4840
        %5268 = vmatpush1.bf16.msra.mxu0 %v4839
        %5269 = vmatprep.mubr.bf16.mxu0 %v4143
        %5270 = vmatmul.mubr.bf16.gmra.mrb[0].mxu0 %v4142
        %v5271 = vpop.f32.mrb[0].mxu0
        %v5272 = vadd.f32 %v4310, %v5271
        %v5273 = vpop.f32.mrb[0].mxu0
        %v5274 = vadd.f32 %v4314, %v5273
        %v5275 = vpop.f32.mrb[0].mxu0
        %v5276 = vadd.f32 %v4310, %v5275
        %v5277 = vpop.f32.mrb[0].mxu0
        %v5278 = vadd.f32 %v4314, %v5277
        %5279 = vmatprep.mubr.bf16.mxu0 %v4145
        %5280 = vmatmul.mubr.bf16.gmra.mrb[0].mxu0 %v4144
        %v5281 = vpop.f32.mrb[0].mxu0
        %v5282 = vadd.f32 %v4310, %v5281
        %v5283 = vpop.f32.mrb[0].mxu0
        %v5284 = vadd.f32 %v4314, %v5283
        %v5285 = vpop.f32.mrb[0].mxu0
        %v5286 = vadd.f32 %v4310, %v5285
        %v5287 = vpop.f32.mrb[0].mxu0
        %v5288 = vadd.f32 %v4314, %v5287
        %5289 = vmatprep.mubr.bf16.mxu0 %v4147
        %5290 = vmatmul.mubr.bf16.gmra.mrb[0].mxu0 %v4146
        %v5291 = vpop.f32.mrb[0].mxu0
        %v5292 = vadd.f32 %v4310, %v5291
        %v5293 = vpop.f32.mrb[0].mxu0
        %v5294 = vadd.f32 %v4314, %v5293
        %v5295 = vpop.f32.mrb[0].mxu0
        %v5296 = vadd.f32 %v4310, %v5295
        %v5297 = vpop.f32.mrb[0].mxu0
        %v5298 = vadd.f32 %v4314, %v5297
        %5299 = vmatprep.mubr.bf16.mxu0 %v4149
        %5300 = vmatmul.mubr.bf16.gmra.mrb[0].mxu0 %v4148
        %v5301 = vpop.f32.mrb[0].mxu0
        %v5302 = vadd.f32 %v4310, %v5301
        %v5303 = vpop.f32.mrb[0].mxu0
        %v5304 = vadd.f32 %v4314, %v5303
        %v5305 = vpop.f32.mrb[0].mxu0
        %v5306 = vadd.f32 %v4310, %v5305
        %v5307 = vpop.f32.mrb[0].mxu0
        %v5308 = vadd.f32 %v4314, %v5307
        %5309 = vmatprep.mubr.bf16.mxu0 %v4151
        %5310 = vmatmul.mubr.bf16.gmra.mrb[0].mxu0 %v4150
        %v5311 = vpop.f32.mrb[0].mxu0
        %v5312 = vadd.f32 %v4310, %v5311
        %v5313 = vpop.f32.mrb[0].mxu0
        %v5314 = vadd.f32 %v4314, %v5313
        %v5315 = vpop.f32.mrb[0].mxu0
        %v5316 = vadd.f32 %v4310, %v5315
        %v5317 = vpop.f32.mrb[0].mxu0
        %v5318 = vadd.f32 %v4314, %v5317
        %5319 = vmatprep.mubr.bf16.mxu0 %v4153
        %5320 = vmatmul.mubr.bf16.gmra.mrb[0].mxu0 %v4152
        %v5321 = vpop.f32.mrb[0].mxu0
        %v5322 = vadd.f32 %v4310, %v5321
        %v5323 = vpop.f32.mrb[0].mxu0
        %v5324 = vadd.f32 %v4314, %v5323
        %v5325 = vpop.f32.mrb[0].mxu0
        %v5326 = vadd.f32 %v4310, %v5325
        %v5327 = vpop.f32.mrb[0].mxu0
        %v5328 = vadd.f32 %v4314, %v5327
        %5329 = vmatprep.mubr.bf16.mxu0 %v4155
        %5330 = vmatmul.mubr.bf16.gmra.mrb[0].mxu0 %v4154
        %v5331 = vpop.f32.mrb[0].mxu0
        %v5332 = vadd.f32 %v4310, %v5331
        %v5333 = vpop.f32.mrb[0].mxu0
        %v5334 = vadd.f32 %v4314, %v5333
        %v5335 = vpop.f32.mrb[0].mxu0
        %v5336 = vadd.f32 %v4310, %v5335
        %v5337 = vpop.f32.mrb[0].mxu0
        %v5338 = vadd.f32 %v4314, %v5337
        %5339 = vmatprep.mubr.bf16.mxu0 %v4157
        %5340 = vmatmul.mubr.bf16.gmra.mrb[0].mxu0 %v4156
        %v5341 = vpop.f32.mrb[0].mxu0
        %v5342 = vadd.f32 %v4310, %v5341
        %v5343 = vpop.f32.mrb[0].mxu0
        %v5344 = vadd.f32 %v4314, %v5343
        %v5345 = vpop.f32.mrb[0].mxu0
        %v5346 = vadd.f32 %v4310, %v5345
        %v5347 = vpop.f32.mrb[0].mxu0
        %v5348 = vadd.f32 %v4314, %v5347
        %5349 = vmatprep.mubr.bf16.mxu0 %v4159
        %5350 = vmatmul.mubr.bf16.gmra.mrb[0].mxu0 %v4158
        %v5351 = vpop.f32.mrb[0].mxu0
        %v5352 = vadd.f32 %v4310, %v5351
        %v5353 = vpop.f32.mrb[0].mxu0
        %v5354 = vadd.f32 %v4314, %v5353
        %v5355 = vpop.f32.mrb[0].mxu0
        %v5356 = vadd.f32 %v4310, %v5355
        %v5357 = vpop.f32.mrb[0].mxu0
        %v5358 = vadd.f32 %v4314, %v5357
        %5359 = vmatprep.mubr.bf16.mxu0 %v4161
        %5360 = vmatmul.mubr.bf16.gmra.mrb[0].mxu0 %v4160
        %v5361 = vpop.f32.mrb[0].mxu0
        %v5362 = vadd.f32 %v4310, %v5361
        %v5363 = vpop.f32.mrb[0].mxu0
        %v5364 = vadd.f32 %v4314, %v5363
        %v5365 = vpop.f32.mrb[0].mxu0
        %v5366 = vadd.f32 %v4310, %v5365
        %v5367 = vpop.f32.mrb[0].mxu0
        %v5368 = vadd.f32 %v4314, %v5367
        %5369 = vdwg.mxu0
        %5370 = vmatprep.subr.bf16.mxu0 %v4722
        %5371 = vmatpush1.bf16.msra.mxu0 %v4721
        %5372 = vmatprep.subr.bf16.mxu0 %v4730
        %5373 = vmatpush1.bf16.msra.mxu0 %v4729
        %5374 = vmatprep.subr.bf16.mxu0 %v4738
        %5375 = vmatpush1.bf16.msra.mxu0 %v4737
        %5376 = vmatprep.subr.bf16.mxu0 %v4746
        %5377 = vmatpush1.bf16.msra.mxu0 %v4745
        %5378 = vmatprep.subr.bf16.mxu0 %v4754
        %5379 = vmatpush1.bf16.msra.mxu0 %v4753
        %5380 = vmatprep.subr.bf16.mxu0 %v4762
        %5381 = vmatpush1.bf16.msra.mxu0 %v4761
        %5382 = vmatprep.subr.bf16.mxu0 %v4770
        %5383 = vmatpush1.bf16.msra.mxu0 %v4769
        %5384 = vmatprep.subr.bf16.mxu0 %v4778
        %5385 = vmatpush1.bf16.msra.mxu0 %v4777
        %5386 = vmatprep.subr.bf16.mxu0 %v4786
        %5387 = vmatpush1.bf16.msra.mxu0 %v4785
        %5388 = vmatprep.subr.bf16.mxu0 %v4794
        %5389 = vmatpush1.bf16.msra.mxu0 %v4793
        %5390 = vmatprep.subr.bf16.mxu0 %v4802
        %5391 = vmatpush1.bf16.msra.mxu0 %v4801
        %5392 = vmatprep.subr.bf16.mxu0 %v4810
        %5393 = vmatpush1.bf16.msra.mxu0 %v4809
        %5394 = vmatprep.subr.bf16.mxu0 %v4818
        %5395 = vmatpush1.bf16.msra.mxu0 %v4817
        %5396 = vmatprep.subr.bf16.mxu0 %v4826
        %5397 = vmatpush1.bf16.msra.mxu0 %v4825
        %5398 = vmatprep.subr.bf16.mxu0 %v4834
        %5399 = vmatpush1.bf16.msra.mxu0 %v4833
        %5400 = vmatprep.subr.bf16.mxu0 %v4842
        %5401 = vmatpush1.bf16.msra.mxu0 %v4841
        %5402 = vmatprep.mubr.bf16.mxu0 %v4143
        %5403 = vmatmul.mubr.bf16.gmra.mrb[0].mxu0 %v4142
        %v5404 = vpop.f32.mrb[0].mxu0
        %v5405 = vadd.f32 %v4318, %v5404
        %v5406 = vpop.f32.mrb[0].mxu0
        %v5407 = vadd.f32 %v4322, %v5406
        %v5408 = vpop.f32.mrb[0].mxu0
        %v5409 = vadd.f32 %v4318, %v5408
        %v5410 = vpop.f32.mrb[0].mxu0
        %v5411 = vadd.f32 %v4322, %v5410
        %5412 = vmatprep.mubr.bf16.mxu0 %v4145
        %5413 = vmatmul.mubr.bf16.gmra.mrb[0].mxu0 %v4144
        %v5414 = vpop.f32.mrb[0].mxu0
        %v5415 = vadd.f32 %v4318, %v5414
        %v5416 = vpop.f32.mrb[0].mxu0
        %v5417 = vadd.f32 %v4322, %v5416
        %v5418 = vpop.f32.mrb[0].mxu0
        %v5419 = vadd.f32 %v4318, %v5418
        %v5420 = vpop.f32.mrb[0].mxu0
        %v5421 = vadd.f32 %v4322, %v5420
        %5422 = vmatprep.mubr.bf16.mxu0 %v4147
        %5423 = vmatmul.mubr.bf16.gmra.mrb[0].mxu0 %v4146
        %v5424 = vpop.f32.mrb[0].mxu0
        %v5425 = vadd.f32 %v4318, %v5424
        %v5426 = vpop.f32.mrb[0].mxu0
        %v5427 = vadd.f32 %v4322, %v5426
        %v5428 = vpop.f32.mrb[0].mxu0
        %v5429 = vadd.f32 %v4318, %v5428
        %v5430 = vpop.f32.mrb[0].mxu0
        %v5431 = vadd.f32 %v4322, %v5430
        %5432 = vmatprep.mubr.bf16.mxu0 %v4149
        %5433 = vmatmul.mubr.bf16.gmra.mrb[0].mxu0 %v4148
        %v5434 = vpop.f32.mrb[0].mxu0
        %v5435 = vadd.f32 %v4318, %v5434
        %v5436 = vpop.f32.mrb[0].mxu0
        %v5437 = vadd.f32 %v4322, %v5436
        %v5438 = vpop.f32.mrb[0].mxu0
        %v5439 = vadd.f32 %v4318, %v5438
        %v5440 = vpop.f32.mrb[0].mxu0
        %v5441 = vadd.f32 %v4322, %v5440
        %5442 = vmatprep.mubr.bf16.mxu0 %v4151
        %5443 = vmatmul.mubr.bf16.gmra.mrb[0].mxu0 %v4150
        %v5444 = vpop.f32.mrb[0].mxu0
        %v5445 = vadd.f32 %v4318, %v5444
        %v5446 = vpop.f32.mrb[0].mxu0
        %v5447 = vadd.f32 %v4322, %v5446
        %v5448 = vpop.f32.mrb[0].mxu0
        %v5449 = vadd.f32 %v4318, %v5448
        %v5450 = vpop.f32.mrb[0].mxu0
        %v5451 = vadd.f32 %v4322, %v5450
        %5452 = vmatprep.mubr.bf16.mxu0 %v4153
        %5453 = vmatmul.mubr.bf16.gmra.mrb[0].mxu0 %v4152
        %v5454 = vpop.f32.mrb[0].mxu0
        %v5455 = vadd.f32 %v4318, %v5454
        %v5456 = vpop.f32.mrb[0].mxu0
        %v5457 = vadd.f32 %v4322, %v5456
        %v5458 = vpop.f32.mrb[0].mxu0
        %v5459 = vadd.f32 %v4318, %v5458
        %v5460 = vpop.f32.mrb[0].mxu0
        %v5461 = vadd.f32 %v4322, %v5460
        %5462 = vmatprep.mubr.bf16.mxu0 %v4155
        %5463 = vmatmul.mubr.bf16.gmra.mrb[0].mxu0 %v4154
        %v5464 = vpop.f32.mrb[0].mxu0
        %v5465 = vadd.f32 %v4318, %v5464
        %v5466 = vpop.f32.mrb[0].mxu0
        %v5467 = vadd.f32 %v4322, %v5466
        %v5468 = vpop.f32.mrb[0].mxu0
        %v5469 = vadd.f32 %v4318, %v5468
        %v5470 = vpop.f32.mrb[0].mxu0
        %v5471 = vadd.f32 %v4322, %v5470
        %5472 = vmatprep.mubr.bf16.mxu0 %v4157
        %5473 = vmatmul.mubr.bf16.gmra.mrb[0].mxu0 %v4156
        %v5474 = vpop.f32.mrb[0].mxu0
        %v5475 = vadd.f32 %v4318, %v5474
        %v5476 = vpop.f32.mrb[0].mxu0
        %v5477 = vadd.f32 %v4322, %v5476
        %v5478 = vpop.f32.mrb[0].mxu0
        %v5479 = vadd.f32 %v4318, %v5478
        %v5480 = vpop.f32.mrb[0].mxu0
        %v5481 = vadd.f32 %v4322, %v5480
        %5482 = vmatprep.mubr.bf16.mxu0 %v4159
        %5483 = vmatmul.mubr.bf16.gmra.mrb[0].mxu0 %v4158
        %v5484 = vpop.f32.mrb[0].mxu0
        %v5485 = vadd.f32 %v4318, %v5484
        %v5486 = vpop.f32.mrb[0].mxu0
        %v5487 = vadd.f32 %v4322, %v5486
        %v5488 = vpop.f32.mrb[0].mxu0
        %v5489 = vadd.f32 %v4318, %v5488
        %v5490 = vpop.f32.mrb[0].mxu0
        %v5491 = vadd.f32 %v4322, %v5490
        %5492 = vmatprep.mubr.bf16.mxu0 %v4161
        %5493 = vmatmul.mubr.bf16.gmra.mrb[0].mxu0 %v4160
        %v5494 = vpop.f32.mrb[0].mxu0
        %v5495 = vadd.f32 %v4318, %v5494
        %v5496 = vpop.f32.mrb[0].mxu0
        %v5497 = vadd.f32 %v4322, %v5496
        %v5498 = vpop.f32.mrb[0].mxu0
        %v5499 = vadd.f32 %v4318, %v5498
        %v5500 = vpop.f32.mrb[0].mxu0
        %v5501 = vadd.f32 %v4322, %v5500
        %5502 = vdwg.mxu0
        %v5503 = vmul.f32 %v5006, 1.702
        %v5504 = vmul.f32 %v5008, 1.702
        %v5505 = vmul.f32 %v5139, 1.702
        %v5506 = vmul.f32 %v5141, 1.702
        %v5507 = vmul.f32 %v5272, 1.702
        %v5508 = vmul.f32 %v5274, 1.702
        %v5509 = vmul.f32 %v5405, 1.702
        %v5510 = vmul.f32 %v5407, 1.702
        %v5511 = vmul.f32 %v5010, 1.702
        %v5512 = vmul.f32 %v5012, 1.702
        %v5513 = vmul.f32 %v5143, 1.702
        %v5514 = vmul.f32 %v5145, 1.702
        %v5515 = vmul.f32 %v5276, 1.702
        %v5516 = vmul.f32 %v5278, 1.702
        %v5517 = vmul.f32 %v5409, 1.702
        %v5518 = vmul.f32 %v5411, 1.702
        %v5519 = vmul.f32 %v5016, 1.702
        %v5520 = vmul.f32 %v5018, 1.702
        %v5521 = vmul.f32 %v5149, 1.702
        %v5522 = vmul.f32 %v5151, 1.702
        %v5523 = vmul.f32 %v5282, 1.702
        %v5524 = vmul.f32 %v5284, 1.702
        %v5525 = vmul.f32 %v5415, 1.702
        %v5526 = vmul.f32 %v5417, 1.702
        %v5527 = vmul.f32 %v5020, 1.702
        %v5528 = vmul.f32 %v5022, 1.702
        %v5529 = vmul.f32 %v5153, 1.702
        %v5530 = vmul.f32 %v5155, 1.702
        %v5531 = vmul.f32 %v5286, 1.702
        %v5532 = vmul.f32 %v5288, 1.702
        %v5533 = vmul.f32 %v5419, 1.702
        %v5534 = vmul.f32 %v5421, 1.702
        %v5535 = vmul.f32 %v5026, 1.702
        %v5536 = vmul.f32 %v5028, 1.702
        %v5537 = vmul.f32 %v5159, 1.702
        %v5538 = vmul.f32 %v5161, 1.702
        %v5539 = vmul.f32 %v5292, 1.702
        %v5540 = vmul.f32 %v5294, 1.702
        %v5541 = vmul.f32 %v5425, 1.702
        %v5542 = vmul.f32 %v5427, 1.702
        %v5543 = vmul.f32 %v5030, 1.702
        %v5544 = vmul.f32 %v5032, 1.702
        %v5545 = vmul.f32 %v5163, 1.702
        %v5546 = vmul.f32 %v5165, 1.702
        %v5547 = vmul.f32 %v5296, 1.702
        %v5548 = vmul.f32 %v5298, 1.702
        %v5549 = vmul.f32 %v5429, 1.702
        %v5550 = vmul.f32 %v5431, 1.702
        %v5551 = vmul.f32 %v5036, 1.702
        %v5552 = vmul.f32 %v5038, 1.702
        %v5553 = vmul.f32 %v5169, 1.702
        %v5554 = vmul.f32 %v5171, 1.702
        %v5555 = vmul.f32 %v5302, 1.702
        %v5556 = vmul.f32 %v5304, 1.702
        %v5557 = vmul.f32 %v5435, 1.702
        %v5558 = vmul.f32 %v5437, 1.702
        %v5559 = vmul.f32 %v5040, 1.702
        %v5560 = vmul.f32 %v5042, 1.702
        %v5561 = vmul.f32 %v5173, 1.702
        %v5562 = vmul.f32 %v5175, 1.702
        %v5563 = vmul.f32 %v5306, 1.702
        %v5564 = vmul.f32 %v5308, 1.702
        %v5565 = vmul.f32 %v5439, 1.702
        %v5566 = vmul.f32 %v5441, 1.702
        %v5567 = vmul.f32 %v5046, 1.702
        %v5568 = vmul.f32 %v5048, 1.702
        %v5569 = vmul.f32 %v5179, 1.702
        %v5570 = vmul.f32 %v5181, 1.702
        %v5571 = vmul.f32 %v5312, 1.702
        %v5572 = vmul.f32 %v5314, 1.702
        %v5573 = vmul.f32 %v5445, 1.702
        %v5574 = vmul.f32 %v5447, 1.702
        %v5575 = vmul.f32 %v5050, 1.702
        %v5576 = vmul.f32 %v5052, 1.702
        %v5577 = vmul.f32 %v5183, 1.702
        %v5578 = vmul.f32 %v5185, 1.702
        %v5579 = vmul.f32 %v5316, 1.702
        %v5580 = vmul.f32 %v5318, 1.702
        %v5581 = vmul.f32 %v5449, 1.702
        %v5582 = vmul.f32 %v5451, 1.702
        %v5583 = vmul.f32 %v5056, 1.702
        %v5584 = vmul.f32 %v5058, 1.702
        %v5585 = vmul.f32 %v5189, 1.702
        %v5586 = vmul.f32 %v5191, 1.702
        %v5587 = vmul.f32 %v5322, 1.702
        %v5588 = vmul.f32 %v5324, 1.702
        %v5589 = vmul.f32 %v5455, 1.702
        %v5590 = vmul.f32 %v5457, 1.702
        %v5591 = vmul.f32 %v5060, 1.702
        %v5592 = vmul.f32 %v5062, 1.702
        %v5593 = vmul.f32 %v5193, 1.702
        %v5594 = vmul.f32 %v5195, 1.702
        %v5595 = vmul.f32 %v5326, 1.702
        %v5596 = vmul.f32 %v5328, 1.702
        %v5597 = vmul.f32 %v5459, 1.702
        %v5598 = vmul.f32 %v5461, 1.702
        %v5599 = vmul.f32 %v5066, 1.702
        %v5600 = vmul.f32 %v5068, 1.702
        %v5601 = vmul.f32 %v5199, 1.702
        %v5602 = vmul.f32 %v5201, 1.702
        %v5603 = vmul.f32 %v5332, 1.702
        %v5604 = vmul.f32 %v5334, 1.702
        %v5605 = vmul.f32 %v5465, 1.702
        %v5606 = vmul.f32 %v5467, 1.702
        %v5607 = vmul.f32 %v5070, 1.702
        %v5608 = vmul.f32 %v5072, 1.702
        %v5609 = vmul.f32 %v5203, 1.702
        %v5610 = vmul.f32 %v5205, 1.702
        %v5611 = vmul.f32 %v5336, 1.702
        %v5612 = vmul.f32 %v5338, 1.702
        %v5613 = vmul.f32 %v5469, 1.702
        %v5614 = vmul.f32 %v5471, 1.702
        %v5615 = vmul.f32 %v5076, 1.702
        %v5616 = vmul.f32 %v5078, 1.702
        %v5617 = vmul.f32 %v5209, 1.702
        %v5618 = vmul.f32 %v5211, 1.702
        %v5619 = vmul.f32 %v5342, 1.702
        %v5620 = vmul.f32 %v5344, 1.702
        %v5621 = vmul.f32 %v5475, 1.702
        %v5622 = vmul.f32 %v5477, 1.702
        %v5623 = vmul.f32 %v5080, 1.702
        %v5624 = vmul.f32 %v5082, 1.702
        %v5625 = vmul.f32 %v5213, 1.702
        %v5626 = vmul.f32 %v5215, 1.702
        %v5627 = vmul.f32 %v5346, 1.702
        %v5628 = vmul.f32 %v5348, 1.702
        %v5629 = vmul.f32 %v5479, 1.702
        %v5630 = vmul.f32 %v5481, 1.702
        %v5631 = vmul.f32 %v5086, 1.702
        %v5632 = vmul.f32 %v5088, 1.702
        %v5633 = vmul.f32 %v5219, 1.702
        %v5634 = vmul.f32 %v5221, 1.702
        %v5635 = vmul.f32 %v5352, 1.702
        %v5636 = vmul.f32 %v5354, 1.702
        %v5637 = vmul.f32 %v5485, 1.702
        %v5638 = vmul.f32 %v5487, 1.702
        %v5639 = vmul.f32 %v5090, 1.702
        %v5640 = vmul.f32 %v5092, 1.702
        %v5641 = vmul.f32 %v5223, 1.702
        %v5642 = vmul.f32 %v5225, 1.702
        %v5643 = vmul.f32 %v5356, 1.702
        %v5644 = vmul.f32 %v5358, 1.702
        %v5645 = vmul.f32 %v5489, 1.702
        %v5646 = vmul.f32 %v5491, 1.702
        %v5647 = vmul.f32 %v5096, 1.702
        %v5648 = vmul.f32 %v5098, 1.702
        %v5649 = vmul.f32 %v5229, 1.702
        %v5650 = vmul.f32 %v5231, 1.702
        %v5651 = vmul.f32 %v5362, 1.702
        %v5652 = vmul.f32 %v5364, 1.702
        %v5653 = vmul.f32 %v5495, 1.702
        %v5654 = vmul.f32 %v5497, 1.702
        %v5655 = vmul.f32 %v5100, 1.702
        %v5656 = vmul.f32 %v5102, 1.702
        %v5657 = vmul.f32 %v5233, 1.702
        %v5658 = vmul.f32 %v5235, 1.702
        %v5659 = vmul.f32 %v5366, 1.702
        %v5660 = vmul.f32 %v5368, 1.702
        %v5661 = vmul.f32 %v5499, 1.702
        %v5662 = vmul.f32 %v5501, 1.702
        %v5663 = vxor.u32 %v5503, 2147483648
        %v5664 = vxor.u32 %v5504, 2147483648
        %v5665 = vxor.u32 %v5505, 2147483648
        %v5666 = vxor.u32 %v5506, 2147483648
        %v5667 = vxor.u32 %v5507, 2147483648
        %v5668 = vxor.u32 %v5508, 2147483648
        %v5669 = vxor.u32 %v5509, 2147483648
        %v5670 = vxor.u32 %v5510, 2147483648
        %v5671 = vxor.u32 %v5511, 2147483648
        %v5672 = vxor.u32 %v5512, 2147483648
        %v5673 = vxor.u32 %v5513, 2147483648
        %v5674 = vxor.u32 %v5514, 2147483648
        %v5675 = vxor.u32 %v5515, 2147483648
        %v5676 = vxor.u32 %v5516, 2147483648
        %v5677 = vxor.u32 %v5517, 2147483648
        %v5678 = vxor.u32 %v5518, 2147483648
        %v5679 = vxor.u32 %v5519, 2147483648
        %v5680 = vxor.u32 %v5520, 2147483648
        %v5681 = vxor.u32 %v5521, 2147483648
        %v5682 = vxor.u32 %v5522, 2147483648
        %v5683 = vxor.u32 %v5523, 2147483648
        %v5684 = vxor.u32 %v5524, 2147483648
        %v5685 = vxor.u32 %v5525, 2147483648
        %v5686 = vxor.u32 %v5526, 2147483648
        %v5687 = vxor.u32 %v5527, 2147483648
        %v5688 = vxor.u32 %v5528, 2147483648
        %v5689 = vxor.u32 %v5529, 2147483648
        %v5690 = vxor.u32 %v5530, 2147483648
        %v5691 = vxor.u32 %v5531, 2147483648
        %v5692 = vxor.u32 %v5532, 2147483648
        %v5693 = vxor.u32 %v5533, 2147483648
        %v5694 = vxor.u32 %v5534, 2147483648
        %v5695 = vxor.u32 %v5535, 2147483648
        %v5696 = vxor.u32 %v5536, 2147483648
        %v5697 = vxor.u32 %v5537, 2147483648
        %v5698 = vxor.u32 %v5538, 2147483648
        %v5699 = vxor.u32 %v5539, 2147483648
        %v5700 = vxor.u32 %v5540, 2147483648
        %v5701 = vxor.u32 %v5541, 2147483648
        %v5702 = vxor.u32 %v5542, 2147483648
        %v5703 = vxor.u32 %v5543, 2147483648
        %v5704 = vxor.u32 %v5544, 2147483648
        %v5705 = vxor.u32 %v5545, 2147483648
        %v5706 = vxor.u32 %v5546, 2147483648
        %v5707 = vxor.u32 %v5547, 2147483648
        %v5708 = vxor.u32 %v5548, 2147483648
        %v5709 = vxor.u32 %v5549, 2147483648
        %v5710 = vxor.u32 %v5550, 2147483648
        %v5711 = vxor.u32 %v5551, 2147483648
        %v5712 = vxor.u32 %v5552, 2147483648
        %v5713 = vxor.u32 %v5553, 2147483648
        %v5714 = vxor.u32 %v5554, 2147483648
        %v5715 = vxor.u32 %v5555, 2147483648
        %v5716 = vxor.u32 %v5556, 2147483648
        %v5717 = vxor.u32 %v5557, 2147483648
        %v5718 = vxor.u32 %v5558, 2147483648
        %v5719 = vxor.u32 %v5559, 2147483648
        %v5720 = vxor.u32 %v5560, 2147483648
        %v5721 = vxor.u32 %v5561, 2147483648
        %v5722 = vxor.u32 %v5562, 2147483648
        %v5723 = vxor.u32 %v5563, 2147483648
        %v5724 = vxor.u32 %v5564, 2147483648
        %v5725 = vxor.u32 %v5565, 2147483648
        %v5726 = vxor.u32 %v5566, 2147483648
        %v5727 = vxor.u32 %v5567, 2147483648
        %v5728 = vxor.u32 %v5568, 2147483648
        %v5729 = vxor.u32 %v5569, 2147483648
        %v5730 = vxor.u32 %v5570, 2147483648
        %v5731 = vxor.u32 %v5571, 2147483648
        %v5732 = vxor.u32 %v5572, 2147483648
        %v5733 = vxor.u32 %v5573, 2147483648
        %v5734 = vxor.u32 %v5574, 2147483648
        %v5735 = vxor.u32 %v5575, 2147483648
        %v5736 = vxor.u32 %v5576, 2147483648
        %v5737 = vxor.u32 %v5577, 2147483648
        %v5738 = vxor.u32 %v5578, 2147483648
        %v5739 = vxor.u32 %v5579, 2147483648
        %v5740 = vxor.u32 %v5580, 2147483648
        %v5741 = vxor.u32 %v5581, 2147483648
        %v5742 = vxor.u32 %v5582, 2147483648
        %v5743 = vxor.u32 %v5583, 2147483648
        %v5744 = vxor.u32 %v5584, 2147483648
        %v5745 = vxor.u32 %v5585, 2147483648
        %v5746 = vxor.u32 %v5586, 2147483648
        %v5747 = vxor.u32 %v5587, 2147483648
        %v5748 = vxor.u32 %v5588, 2147483648
        %v5749 = vxor.u32 %v5589, 2147483648
        %v5750 = vxor.u32 %v5590, 2147483648
        %v5751 = vxor.u32 %v5591, 2147483648
        %v5752 = vxor.u32 %v5592, 2147483648
        %v5753 = vxor.u32 %v5593, 2147483648
        %v5754 = vxor.u32 %v5594, 2147483648
        %v5755 = vxor.u32 %v5595, 2147483648
        %v5756 = vxor.u32 %v5596, 2147483648
        %v5757 = vxor.u32 %v5597, 2147483648
        %v5758 = vxor.u32 %v5598, 2147483648
        %v5759 = vxor.u32 %v5599, 2147483648
        %v5760 = vxor.u32 %v5600, 2147483648
        %v5761 = vxor.u32 %v5601, 2147483648
        %v5762 = vxor.u32 %v5602, 2147483648
        %v5763 = vxor.u32 %v5603, 2147483648
        %v5764 = vxor.u32 %v5604, 2147483648
        %v5765 = vxor.u32 %v5605, 2147483648
        %v5766 = vxor.u32 %v5606, 2147483648
        %v5767 = vxor.u32 %v5607, 2147483648
        %v5768 = vxor.u32 %v5608, 2147483648
        %v5769 = vxor.u32 %v5609, 2147483648
        %v5770 = vxor.u32 %v5610, 2147483648
        %v5771 = vxor.u32 %v5611, 2147483648
        %v5772 = vxor.u32 %v5612, 2147483648
        %v5773 = vxor.u32 %v5613, 2147483648
        %v5774 = vxor.u32 %v5614, 2147483648
        %v5775 = vxor.u32 %v5615, 2147483648
        %v5776 = vxor.u32 %v5616, 2147483648
        %v5777 = vxor.u32 %v5617, 2147483648
        %v5778 = vxor.u32 %v5618, 2147483648
        %v5779 = vxor.u32 %v5619, 2147483648
        %v5780 = vxor.u32 %v5620, 2147483648
        %v5781 = vxor.u32 %v5621, 2147483648
        %v5782 = vxor.u32 %v5622, 2147483648
        %v5783 = vxor.u32 %v5623, 2147483648
        %v5784 = vxor.u32 %v5624, 2147483648
        %v5785 = vxor.u32 %v5625, 2147483648
        %v5786 = vxor.u32 %v5626, 2147483648
        %v5787 = vxor.u32 %v5627, 2147483648
        %v5788 = vxor.u32 %v5628, 2147483648
        %v5789 = vxor.u32 %v5629, 2147483648
        %v5790 = vxor.u32 %v5630, 2147483648
        %v5791 = vxor.u32 %v5631, 2147483648
        %v5792 = vxor.u32 %v5632, 2147483648
        %v5793 = vxor.u32 %v5633, 2147483648
        %v5794 = vxor.u32 %v5634, 2147483648
        %v5795 = vxor.u32 %v5635, 2147483648
        %v5796 = vxor.u32 %v5636, 2147483648
        %v5797 = vxor.u32 %v5637, 2147483648
        %v5798 = vxor.u32 %v5638, 2147483648
        %v5799 = vxor.u32 %v5639, 2147483648
        %v5800 = vxor.u32 %v5640, 2147483648
        %v5801 = vxor.u32 %v5641, 2147483648
        %v5802 = vxor.u32 %v5642, 2147483648
        %v5803 = vxor.u32 %v5643, 2147483648
        %v5804 = vxor.u32 %v5644, 2147483648
        %v5805 = vxor.u32 %v5645, 2147483648
        %v5806 = vxor.u32 %v5646, 2147483648
        %v5807 = vxor.u32 %v5647, 2147483648
        %v5808 = vxor.u32 %v5648, 2147483648
        %v5809 = vxor.u32 %v5649, 2147483648
        %v5810 = vxor.u32 %v5650, 2147483648
        %v5811 = vxor.u32 %v5651, 2147483648
        %v5812 = vxor.u32 %v5652, 2147483648
        %v5813 = vxor.u32 %v5653, 2147483648
        %v5814 = vxor.u32 %v5654, 2147483648
        %v5815 = vxor.u32 %v5655, 2147483648
        %v5816 = vxor.u32 %v5656, 2147483648
        %v5817 = vxor.u32 %v5657, 2147483648
        %v5818 = vxor.u32 %v5658, 2147483648
        %v5819 = vxor.u32 %v5659, 2147483648
        %v5820 = vxor.u32 %v5660, 2147483648
        %v5821 = vxor.u32 %v5661, 2147483648
        %v5822 = vxor.u32 %v5662, 2147483648
        %v5823 = vmul.f32 %v5663, 1.442695
        %v5824 = vpow.pop %v5823
        %v5825 = vmul.f32 %v5664, 1.442695
        %v5826 = vpow.pop %v5825
        %v5827 = vmul.f32 %v5665, 1.442695
        %v5828 = vpow.pop %v5827
        %v5829 = vmul.f32 %v5666, 1.442695
        %v5830 = vpow.pop %v5829
        %v5831 = vmul.f32 %v5667, 1.442695
        %v5832 = vpow.pop %v5831
        %v5833 = vmul.f32 %v5668, 1.442695
        %v5834 = vpow.pop %v5833
        %v5835 = vmul.f32 %v5669, 1.442695
        %v5836 = vpow.pop %v5835
        %v5837 = vmul.f32 %v5670, 1.442695
        %v5838 = vpow.pop %v5837
        %v5839 = vmul.f32 %v5671, 1.442695
        %v5840 = vpow.pop %v5839
        %v5841 = vmul.f32 %v5672, 1.442695
        %v5842 = vpow.pop %v5841
        %v5843 = vmul.f32 %v5673, 1.442695
        %v5844 = vpow.pop %v5843
        %v5845 = vmul.f32 %v5674, 1.442695
        %v5846 = vpow.pop %v5845
        %v5847 = vmul.f32 %v5675, 1.442695
        %v5848 = vpow.pop %v5847
        %v5849 = vmul.f32 %v5676, 1.442695
        %v5850 = vpow.pop %v5849
        %v5851 = vmul.f32 %v5677, 1.442695
        %v5852 = vpow.pop %v5851
        %v5853 = vmul.f32 %v5678, 1.442695
        %v5854 = vpow.pop %v5853
        %v5855 = vmul.f32 %v5679, 1.442695
        %v5856 = vpow.pop %v5855
        %v5857 = vmul.f32 %v5680, 1.442695
        %v5858 = vpow.pop %v5857
        %v5859 = vmul.f32 %v5681, 1.442695
        %v5860 = vpow.pop %v5859
        %v5861 = vmul.f32 %v5682, 1.442695
        %v5862 = vpow.pop %v5861
        %v5863 = vmul.f32 %v5683, 1.442695
        %v5864 = vpow.pop %v5863
        %v5865 = vmul.f32 %v5684, 1.442695
        %v5866 = vpow.pop %v5865
        %v5867 = vmul.f32 %v5685, 1.442695
        %v5868 = vpow.pop %v5867
        %v5869 = vmul.f32 %v5686, 1.442695
        %v5870 = vpow.pop %v5869
        %v5871 = vmul.f32 %v5687, 1.442695
        %v5872 = vpow.pop %v5871
        %v5873 = vmul.f32 %v5688, 1.442695
        %v5874 = vpow.pop %v5873
        %v5875 = vmul.f32 %v5689, 1.442695
        %v5876 = vpow.pop %v5875
        %v5877 = vmul.f32 %v5690, 1.442695
        %v5878 = vpow.pop %v5877
        %v5879 = vmul.f32 %v5691, 1.442695
        %v5880 = vpow.pop %v5879
        %v5881 = vmul.f32 %v5692, 1.442695
        %v5882 = vpow.pop %v5881
        %v5883 = vmul.f32 %v5693, 1.442695
        %v5884 = vpow.pop %v5883
        %v5885 = vmul.f32 %v5694, 1.442695
        %v5886 = vpow.pop %v5885
        %v5887 = vmul.f32 %v5695, 1.442695
        %v5888 = vpow.pop %v5887
        %v5889 = vmul.f32 %v5696, 1.442695
        %v5890 = vpow.pop %v5889
        %v5891 = vmul.f32 %v5697, 1.442695
        %v5892 = vpow.pop %v5891
        %v5893 = vmul.f32 %v5698, 1.442695
        %v5894 = vpow.pop %v5893
        %v5895 = vmul.f32 %v5699, 1.442695
        %v5896 = vpow.pop %v5895
        %v5897 = vmul.f32 %v5700, 1.442695
        %v5898 = vpow.pop %v5897
        %v5899 = vmul.f32 %v5701, 1.442695
        %v5900 = vpow.pop %v5899
        %v5901 = vmul.f32 %v5702, 1.442695
        %v5902 = vpow.pop %v5901
        %v5903 = vmul.f32 %v5703, 1.442695
        %v5904 = vpow.pop %v5903
        %v5905 = vmul.f32 %v5704, 1.442695
        %v5906 = vpow.pop %v5905
        %v5907 = vmul.f32 %v5705, 1.442695
        %v5908 = vpow.pop %v5907
        %v5909 = vmul.f32 %v5706, 1.442695
        %v5910 = vpow.pop %v5909
        %v5911 = vmul.f32 %v5707, 1.442695
        %v5912 = vpow.pop %v5911
        %v5913 = vmul.f32 %v5708, 1.442695
        %v5914 = vpow.pop %v5913
        %v5915 = vmul.f32 %v5709, 1.442695
        %v5916 = vpow.pop %v5915
        %v5917 = vmul.f32 %v5710, 1.442695
        %v5918 = vpow.pop %v5917
        %v5919 = vmul.f32 %v5711, 1.442695
        %v5920 = vpow.pop %v5919
        %v5921 = vmul.f32 %v5712, 1.442695
        %v5922 = vpow.pop %v5921
        %v5923 = vmul.f32 %v5713, 1.442695
        %v5924 = vpow.pop %v5923
        %v5925 = vmul.f32 %v5714, 1.442695
        %v5926 = vpow.pop %v5925
        %v5927 = vmul.f32 %v5715, 1.442695
        %v5928 = vpow.pop %v5927
        %v5929 = vmul.f32 %v5716, 1.442695
        %v5930 = vpow.pop %v5929
        %v5931 = vmul.f32 %v5717, 1.442695
        %v5932 = vpow.pop %v5931
        %v5933 = vmul.f32 %v5718, 1.442695
        %v5934 = vpow.pop %v5933
        %v5935 = vmul.f32 %v5719, 1.442695
        %v5936 = vpow.pop %v5935
        %v5937 = vmul.f32 %v5720, 1.442695
        %v5938 = vpow.pop %v5937
        %v5939 = vmul.f32 %v5721, 1.442695
        %v5940 = vpow.pop %v5939
        %v5941 = vmul.f32 %v5722, 1.442695
        %v5942 = vpow.pop %v5941
        %v5943 = vmul.f32 %v5723, 1.442695
        %v5944 = vpow.pop %v5943
        %v5945 = vmul.f32 %v5724, 1.442695
        %v5946 = vpow.pop %v5945
        %v5947 = vmul.f32 %v5725, 1.442695
        %v5948 = vpow.pop %v5947
        %v5949 = vmul.f32 %v5726, 1.442695
        %v5950 = vpow.pop %v5949
        %v5951 = vmul.f32 %v5727, 1.442695
        %v5952 = vpow.pop %v5951
        %v5953 = vmul.f32 %v5728, 1.442695
        %v5954 = vpow.pop %v5953
        %v5955 = vmul.f32 %v5729, 1.442695
        %v5956 = vpow.pop %v5955
        %v5957 = vmul.f32 %v5730, 1.442695
        %v5958 = vpow.pop %v5957
        %v5959 = vmul.f32 %v5731, 1.442695
        %v5960 = vpow.pop %v5959
        %v5961 = vmul.f32 %v5732, 1.442695
        %v5962 = vpow.pop %v5961
        %v5963 = vmul.f32 %v5733, 1.442695
        %v5964 = vpow.pop %v5963
        %v5965 = vmul.f32 %v5734, 1.442695
        %v5966 = vpow.pop %v5965
        %v5967 = vmul.f32 %v5735, 1.442695
        %v5968 = vpow.pop %v5967
        %v5969 = vmul.f32 %v5736, 1.442695
        %v5970 = vpow.pop %v5969
        %v5971 = vmul.f32 %v5737, 1.442695
        %v5972 = vpow.pop %v5971
        %v5973 = vmul.f32 %v5738, 1.442695
        %v5974 = vpow.pop %v5973
        %v5975 = vmul.f32 %v5739, 1.442695
        %v5976 = vpow.pop %v5975
        %v5977 = vmul.f32 %v5740, 1.442695
        %v5978 = vpow.pop %v5977
        %v5979 = vmul.f32 %v5741, 1.442695
        %v5980 = vpow.pop %v5979
        %v5981 = vmul.f32 %v5742, 1.442695
        %v5982 = vpow.pop %v5981
        %v5983 = vmul.f32 %v5743, 1.442695
        %v5984 = vpow.pop %v5983
        %v5985 = vmul.f32 %v5744, 1.442695
        %v5986 = vpow.pop %v5985
        %v5987 = vmul.f32 %v5745, 1.442695
        %v5988 = vpow.pop %v5987
        %v5989 = vmul.f32 %v5746, 1.442695
        %v5990 = vpow.pop %v5989
        %v5991 = vmul.f32 %v5747, 1.442695
        %v5992 = vpow.pop %v5991
        %v5993 = vmul.f32 %v5748, 1.442695
        %v5994 = vpow.pop %v5993
        %v5995 = vmul.f32 %v5749, 1.442695
        %v5996 = vpow.pop %v5995
        %v5997 = vmul.f32 %v5750, 1.442695
        %v5998 = vpow.pop %v5997
        %v5999 = vmul.f32 %v5751, 1.442695
        %v6000 = vpow.pop %v5999
        %v6001 = vmul.f32 %v5752, 1.442695
        %v6002 = vpow.pop %v6001
        %v6003 = vmul.f32 %v5753, 1.442695
        %v6004 = vpow.pop %v6003
        %v6005 = vmul.f32 %v5754, 1.442695
        %v6006 = vpow.pop %v6005
        %v6007 = vmul.f32 %v5755, 1.442695
        %v6008 = vpow.pop %v6007
        %v6009 = vmul.f32 %v5756, 1.442695
        %v6010 = vpow.pop %v6009
        %v6011 = vmul.f32 %v5757, 1.442695
        %v6012 = vpow.pop %v6011
        %v6013 = vmul.f32 %v5758, 1.442695
        %v6014 = vpow.pop %v6013
        %v6015 = vmul.f32 %v5759, 1.442695
        %v6016 = vpow.pop %v6015
        %v6017 = vmul.f32 %v5760, 1.442695
        %v6018 = vpow.pop %v6017
        %v6019 = vmul.f32 %v5761, 1.442695
        %v6020 = vpow.pop %v6019
        %v6021 = vmul.f32 %v5762, 1.442695
        %v6022 = vpow.pop %v6021
        %v6023 = vmul.f32 %v5763, 1.442695
        %v6024 = vpow.pop %v6023
        %v6025 = vmul.f32 %v5764, 1.442695
        %v6026 = vpow.pop %v6025
        %v6027 = vmul.f32 %v5765, 1.442695
        %v6028 = vpow.pop %v6027
        %v6029 = vmul.f32 %v5766, 1.442695
        %v6030 = vpow.pop %v6029
        %v6031 = vmul.f32 %v5767, 1.442695
        %v6032 = vpow.pop %v6031
        %v6033 = vmul.f32 %v5768, 1.442695
        %v6034 = vpow.pop %v6033
        %v6035 = vmul.f32 %v5769, 1.442695
        %v6036 = vpow.pop %v6035
        %v6037 = vmul.f32 %v5770, 1.442695
        %v6038 = vpow.pop %v6037
        %v6039 = vmul.f32 %v5771, 1.442695
        %v6040 = vpow.pop %v6039
        %v6041 = vmul.f32 %v5772, 1.442695
        %v6042 = vpow.pop %v6041
        %v6043 = vmul.f32 %v5773, 1.442695
        %v6044 = vpow.pop %v6043
        %v6045 = vmul.f32 %v5774, 1.442695
        %v6046 = vpow.pop %v6045
        %v6047 = vmul.f32 %v5775, 1.442695
        %v6048 = vpow.pop %v6047
        %v6049 = vmul.f32 %v5776, 1.442695
        %v6050 = vpow.pop %v6049
        %v6051 = vmul.f32 %v5777, 1.442695
        %v6052 = vpow.pop %v6051
        %v6053 = vmul.f32 %v5778, 1.442695
        %v6054 = vpow.pop %v6053
        %v6055 = vmul.f32 %v5779, 1.442695
        %v6056 = vpow.pop %v6055
        %v6057 = vmul.f32 %v5780, 1.442695
        %v6058 = vpow.pop %v6057
        %v6059 = vmul.f32 %v5781, 1.442695
        %v6060 = vpow.pop %v6059
        %v6061 = vmul.f32 %v5782, 1.442695
        %v6062 = vpow.pop %v6061
        %v6063 = vmul.f32 %v5783, 1.442695
        %v6064 = vpow.pop %v6063
        %v6065 = vmul.f32 %v5784, 1.442695
        %v6066 = vpow.pop %v6065
        %v6067 = vmul.f32 %v5785, 1.442695
        %v6068 = vpow.pop %v6067
        %v6069 = vmul.f32 %v5786, 1.442695
        %v6070 = vpow.pop %v6069
        %v6071 = vmul.f32 %v5787, 1.442695
        %v6072 = vpow.pop %v6071
        %v6073 = vmul.f32 %v5788, 1.442695
        %v6074 = vpow.pop %v6073
        %v6075 = vmul.f32 %v5789, 1.442695
        %v6076 = vpow.pop %v6075
        %v6077 = vmul.f32 %v5790, 1.442695
        %v6078 = vpow.pop %v6077
        %v6079 = vmul.f32 %v5791, 1.442695
        %v6080 = vpow.pop %v6079
        %v6081 = vmul.f32 %v5792, 1.442695
        %v6082 = vpow.pop %v6081
        %v6083 = vmul.f32 %v5793, 1.442695
        %v6084 = vpow.pop %v6083
        %v6085 = vmul.f32 %v5794, 1.442695
        %v6086 = vpow.pop %v6085
        %v6087 = vmul.f32 %v5795, 1.442695
        %v6088 = vpow.pop %v6087
        %v6089 = vmul.f32 %v5796, 1.442695
        %v6090 = vpow.pop %v6089
        %v6091 = vmul.f32 %v5797, 1.442695
        %v6092 = vpow.pop %v6091
        %v6093 = vmul.f32 %v5798, 1.442695
        %v6094 = vpow.pop %v6093
        %v6095 = vmul.f32 %v5799, 1.442695
        %v6096 = vpow.pop %v6095
        %v6097 = vmul.f32 %v5800, 1.442695
        %v6098 = vpow.pop %v6097
        %v6099 = vmul.f32 %v5801, 1.442695
        %v6100 = vpow.pop %v6099
        %v6101 = vmul.f32 %v5802, 1.442695
        %v6102 = vpow.pop %v6101
        %v6103 = vmul.f32 %v5803, 1.442695
        %v6104 = vpow.pop %v6103
        %v6105 = vmul.f32 %v5804, 1.442695
        %v6106 = vpow.pop %v6105
        %v6107 = vmul.f32 %v5805, 1.442695
        %v6108 = vpow.pop %v6107
        %v6109 = vmul.f32 %v5806, 1.442695
        %v6110 = vpow.pop %v6109
        %v6111 = vmul.f32 %v5807, 1.442695
        %v6112 = vpow.pop %v6111
        %v6113 = vmul.f32 %v5808, 1.442695
        %v6114 = vpow.pop %v6113
        %v6115 = vmul.f32 %v5809, 1.442695
        %v6116 = vpow.pop %v6115
        %v6117 = vmul.f32 %v5810, 1.442695
        %v6118 = vpow.pop %v6117
        %v6119 = vmul.f32 %v5811, 1.442695
        %v6120 = vpow.pop %v6119
        %v6121 = vmul.f32 %v5812, 1.442695
        %v6122 = vpow.pop %v6121
        %v6123 = vmul.f32 %v5813, 1.442695
        %v6124 = vpow.pop %v6123
        %v6125 = vmul.f32 %v5814, 1.442695
        %v6126 = vpow.pop %v6125
        %v6127 = vmul.f32 %v5815, 1.442695
        %v6128 = vpow.pop %v6127
        %v6129 = vmul.f32 %v5816, 1.442695
        %v6130 = vpow.pop %v6129
        %v6131 = vmul.f32 %v5817, 1.442695
        %v6132 = vpow.pop %v6131
        %v6133 = vmul.f32 %v5818, 1.442695
        %v6134 = vpow.pop %v6133
        %v6135 = vmul.f32 %v5819, 1.442695
        %v6136 = vpow.pop %v6135
        %v6137 = vmul.f32 %v5820, 1.442695
        %v6138 = vpow.pop %v6137
        %v6139 = vmul.f32 %v5821, 1.442695
        %v6140 = vpow.pop %v6139
        %v6141 = vmul.f32 %v5822, 1.442695
        %v6142 = vpow.pop %v6141
        %v6143 = vadd.f32 %v5824, 1.0
        %v6144 = vadd.f32 %v5826, 1.0
        %v6145 = vadd.f32 %v5828, 1.0
        %v6146 = vadd.f32 %v5830, 1.0
        %v6147 = vadd.f32 %v5832, 1.0
        %v6148 = vadd.f32 %v5834, 1.0
        %v6149 = vadd.f32 %v5836, 1.0
        %v6150 = vadd.f32 %v5838, 1.0
        %v6151 = vadd.f32 %v5840, 1.0
        %v6152 = vadd.f32 %v5842, 1.0
        %v6153 = vadd.f32 %v5844, 1.0
        %v6154 = vadd.f32 %v5846, 1.0
        %v6155 = vadd.f32 %v5848, 1.0
        %v6156 = vadd.f32 %v5850, 1.0
        %v6157 = vadd.f32 %v5852, 1.0
        %v6158 = vadd.f32 %v5854, 1.0
        %v6159 = vadd.f32 %v5856, 1.0
        %v6160 = vadd.f32 %v5858, 1.0
        %v6161 = vadd.f32 %v5860, 1.0
        %v6162 = vadd.f32 %v5862, 1.0
        %v6163 = vadd.f32 %v5864, 1.0
        %v6164 = vadd.f32 %v5866, 1.0
        %v6165 = vadd.f32 %v5868, 1.0
        %v6166 = vadd.f32 %v5870, 1.0
        %v6167 = vadd.f32 %v5872, 1.0
        %v6168 = vadd.f32 %v5874, 1.0
        %v6169 = vadd.f32 %v5876, 1.0
        %v6170 = vadd.f32 %v5878, 1.0
        %v6171 = vadd.f32 %v5880, 1.0
        %v6172 = vadd.f32 %v5882, 1.0
        %v6173 = vadd.f32 %v5884, 1.0
        %v6174 = vadd.f32 %v5886, 1.0
        %v6175 = vadd.f32 %v5888, 1.0
        %v6176 = vadd.f32 %v5890, 1.0
        %v6177 = vadd.f32 %v5892, 1.0
        %v6178 = vadd.f32 %v5894, 1.0
        %v6179 = vadd.f32 %v5896, 1.0
        %v6180 = vadd.f32 %v5898, 1.0
        %v6181 = vadd.f32 %v5900, 1.0
        %v6182 = vadd.f32 %v5902, 1.0
        %v6183 = vadd.f32 %v5904, 1.0
        %v6184 = vadd.f32 %v5906, 1.0
        %v6185 = vadd.f32 %v5908, 1.0
        %v6186 = vadd.f32 %v5910, 1.0
        %v6187 = vadd.f32 %v5912, 1.0
        %v6188 = vadd.f32 %v5914, 1.0
        %v6189 = vadd.f32 %v5916, 1.0
        %v6190 = vadd.f32 %v5918, 1.0
        %v6191 = vadd.f32 %v5920, 1.0
        %v6192 = vadd.f32 %v5922, 1.0
        %v6193 = vadd.f32 %v5924, 1.0
        %v6194 = vadd.f32 %v5926, 1.0
        %v6195 = vadd.f32 %v5928, 1.0
        %v6196 = vadd.f32 %v5930, 1.0
        %v6197 = vadd.f32 %v5932, 1.0
        %v6198 = vadd.f32 %v5934, 1.0
        %v6199 = vadd.f32 %v5936, 1.0
        %v6200 = vadd.f32 %v5938, 1.0
        %v6201 = vadd.f32 %v5940, 1.0
        %v6202 = vadd.f32 %v5942, 1.0
        %v6203 = vadd.f32 %v5944, 1.0
        %v6204 = vadd.f32 %v5946, 1.0
        %v6205 = vadd.f32 %v5948, 1.0
        %v6206 = vadd.f32 %v5950, 1.0
        %v6207 = vadd.f32 %v5952, 1.0
        %v6208 = vadd.f32 %v5954, 1.0
        %v6209 = vadd.f32 %v5956, 1.0
        %v6210 = vadd.f32 %v5958, 1.0
        %v6211 = vadd.f32 %v5960, 1.0
        %v6212 = vadd.f32 %v5962, 1.0
        %v6213 = vadd.f32 %v5964, 1.0
        %v6214 = vadd.f32 %v5966, 1.0
        %v6215 = vadd.f32 %v5968, 1.0
        %v6216 = vadd.f32 %v5970, 1.0
        %v6217 = vadd.f32 %v5972, 1.0
        %v6218 = vadd.f32 %v5974, 1.0
        %v6219 = vadd.f32 %v5976, 1.0
        %v6220 = vadd.f32 %v5978, 1.0
        %v6221 = vadd.f32 %v5980, 1.0
        %v6222 = vadd.f32 %v5982, 1.0
        %v6223 = vadd.f32 %v5984, 1.0
        %v6224 = vadd.f32 %v5986, 1.0
        %v6225 = vadd.f32 %v5988, 1.0
        %v6226 = vadd.f32 %v5990, 1.0
        %v6227 = vadd.f32 %v5992, 1.0
        %v6228 = vadd.f32 %v5994, 1.0
        %v6229 = vadd.f32 %v5996, 1.0
        %v6230 = vadd.f32 %v5998, 1.0
        %v6231 = vadd.f32 %v6000, 1.0
        %v6232 = vadd.f32 %v6002, 1.0
        %v6233 = vadd.f32 %v6004, 1.0
        %v6234 = vadd.f32 %v6006, 1.0
        %v6235 = vadd.f32 %v6008, 1.0
        %v6236 = vadd.f32 %v6010, 1.0
        %v6237 = vadd.f32 %v6012, 1.0
        %v6238 = vadd.f32 %v6014, 1.0
        %v6239 = vadd.f32 %v6016, 1.0
        %v6240 = vadd.f32 %v6018, 1.0
        %v6241 = vadd.f32 %v6020, 1.0
        %v6242 = vadd.f32 %v6022, 1.0
        %v6243 = vadd.f32 %v6024, 1.0
        %v6244 = vadd.f32 %v6026, 1.0
        %v6245 = vadd.f32 %v6028, 1.0
        %v6246 = vadd.f32 %v6030, 1.0
        %v6247 = vadd.f32 %v6032, 1.0
        %v6248 = vadd.f32 %v6034, 1.0
        %v6249 = vadd.f32 %v6036, 1.0
        %v6250 = vadd.f32 %v6038, 1.0
        %v6251 = vadd.f32 %v6040, 1.0
        %v6252 = vadd.f32 %v6042, 1.0
        %v6253 = vadd.f32 %v6044, 1.0
        %v6254 = vadd.f32 %v6046, 1.0
        %v6255 = vadd.f32 %v6048, 1.0
        %v6256 = vadd.f32 %v6050, 1.0
        %v6257 = vadd.f32 %v6052, 1.0
        %v6258 = vadd.f32 %v6054, 1.0
        %v6259 = vadd.f32 %v6056, 1.0
        %v6260 = vadd.f32 %v6058, 1.0
        %v6261 = vadd.f32 %v6060, 1.0
        %v6262 = vadd.f32 %v6062, 1.0
        %v6263 = vadd.f32 %v6064, 1.0
        %v6264 = vadd.f32 %v6066, 1.0
        %v6265 = vadd.f32 %v6068, 1.0
        %v6266 = vadd.f32 %v6070, 1.0
        %v6267 = vadd.f32 %v6072, 1.0
        %v6268 = vadd.f32 %v6074, 1.0
        %v6269 = vadd.f32 %v6076, 1.0
        %v6270 = vadd.f32 %v6078, 1.0
        %v6271 = vadd.f32 %v6080, 1.0
        %v6272 = vadd.f32 %v6082, 1.0
        %v6273 = vadd.f32 %v6084, 1.0
        %v6274 = vadd.f32 %v6086, 1.0
        %v6275 = vadd.f32 %v6088, 1.0
        %v6276 = vadd.f32 %v6090, 1.0
        %v6277 = vadd.f32 %v6092, 1.0
        %v6278 = vadd.f32 %v6094, 1.0
        %v6279 = vadd.f32 %v6096, 1.0
        %v6280 = vadd.f32 %v6098, 1.0
        %v6281 = vadd.f32 %v6100, 1.0
        %v6282 = vadd.f32 %v6102, 1.0
        %v6283 = vadd.f32 %v6104, 1.0
        %v6284 = vadd.f32 %v6106, 1.0
        %v6285 = vadd.f32 %v6108, 1.0
        %v6286 = vadd.f32 %v6110, 1.0
        %v6287 = vadd.f32 %v6112, 1.0
        %v6288 = vadd.f32 %v6114, 1.0
        %v6289 = vadd.f32 %v6116, 1.0
        %v6290 = vadd.f32 %v6118, 1.0
        %v6291 = vadd.f32 %v6120, 1.0
        %v6292 = vadd.f32 %v6122, 1.0
        %v6293 = vadd.f32 %v6124, 1.0
        %v6294 = vadd.f32 %v6126, 1.0
        %v6295 = vadd.f32 %v6128, 1.0
        %v6296 = vadd.f32 %v6130, 1.0
        %v6297 = vadd.f32 %v6132, 1.0
        %v6298 = vadd.f32 %v6134, 1.0
        %v6299 = vadd.f32 %v6136, 1.0
        %v6300 = vadd.f32 %v6138, 1.0
        %v6301 = vadd.f32 %v6140, 1.0
        %v6302 = vadd.f32 %v6142, 1.0
        %v6303 = vrcp.pop %v6143
        %v6304 = vmul.f32 1.0, %v6303
        %v6305 = vrcp.pop %v6144
        %v6306 = vmul.f32 1.0, %v6305
        %v6307 = vrcp.pop %v6145
        %v6308 = vmul.f32 1.0, %v6307
        %v6309 = vrcp.pop %v6146
        %v6310 = vmul.f32 1.0, %v6309
        %v6311 = vrcp.pop %v6147
        %v6312 = vmul.f32 1.0, %v6311
        %v6313 = vrcp.pop %v6148
        %v6314 = vmul.f32 1.0, %v6313
        %v6315 = vrcp.pop %v6149
        %v6316 = vmul.f32 1.0, %v6315
        %v6317 = vrcp.pop %v6150
        %v6318 = vmul.f32 1.0, %v6317
        %v6319 = vrcp.pop %v6151
        %v6320 = vmul.f32 1.0, %v6319
        %v6321 = vrcp.pop %v6152
        %v6322 = vmul.f32 1.0, %v6321
        %v6323 = vrcp.pop %v6153
        %v6324 = vmul.f32 1.0, %v6323
        %v6325 = vrcp.pop %v6154
        %v6326 = vmul.f32 1.0, %v6325
        %v6327 = vrcp.pop %v6155
        %v6328 = vmul.f32 1.0, %v6327
        %v6329 = vrcp.pop %v6156
        %v6330 = vmul.f32 1.0, %v6329
        %v6331 = vrcp.pop %v6157
        %v6332 = vmul.f32 1.0, %v6331
        %v6333 = vrcp.pop %v6158
        %v6334 = vmul.f32 1.0, %v6333
        %v6335 = vrcp.pop %v6159
        %v6336 = vmul.f32 1.0, %v6335
        %v6337 = vrcp.pop %v6160
        %v6338 = vmul.f32 1.0, %v6337
        %v6339 = vrcp.pop %v6161
        %v6340 = vmul.f32 1.0, %v6339
        %v6341 = vrcp.pop %v6162
        %v6342 = vmul.f32 1.0, %v6341
        %v6343 = vrcp.pop %v6163
        %v6344 = vmul.f32 1.0, %v6343
        %v6345 = vrcp.pop %v6164
        %v6346 = vmul.f32 1.0, %v6345
        %v6347 = vrcp.pop %v6165
        %v6348 = vmul.f32 1.0, %v6347
        %v6349 = vrcp.pop %v6166
        %v6350 = vmul.f32 1.0, %v6349
        %v6351 = vrcp.pop %v6167
        %v6352 = vmul.f32 1.0, %v6351
        %v6353 = vrcp.pop %v6168
        %v6354 = vmul.f32 1.0, %v6353
        %v6355 = vrcp.pop %v6169
        %v6356 = vmul.f32 1.0, %v6355
        %v6357 = vrcp.pop %v6170
        %v6358 = vmul.f32 1.0, %v6357
        %v6359 = vrcp.pop %v6171
        %v6360 = vmul.f32 1.0, %v6359
        %v6361 = vrcp.pop %v6172
        %v6362 = vmul.f32 1.0, %v6361
        %v6363 = vrcp.pop %v6173
        %v6364 = vmul.f32 1.0, %v6363
        %v6365 = vrcp.pop %v6174
        %v6366 = vmul.f32 1.0, %v6365
        %v6367 = vrcp.pop %v6175
        %v6368 = vmul.f32 1.0, %v6367
        %v6369 = vrcp.pop %v6176
        %v6370 = vmul.f32 1.0, %v6369
        %v6371 = vrcp.pop %v6177
        %v6372 = vmul.f32 1.0, %v6371
        %v6373 = vrcp.pop %v6178
        %v6374 = vmul.f32 1.0, %v6373
        %v6375 = vrcp.pop %v6179
        %v6376 = vmul.f32 1.0, %v6375
        %v6377 = vrcp.pop %v6180
        %v6378 = vmul.f32 1.0, %v6377
        %v6379 = vrcp.pop %v6181
        %v6380 = vmul.f32 1.0, %v6379
        %v6381 = vrcp.pop %v6182
        %v6382 = vmul.f32 1.0, %v6381
        %v6383 = vrcp.pop %v6183
        %v6384 = vmul.f32 1.0, %v6383
        %v6385 = vrcp.pop %v6184
        %v6386 = vmul.f32 1.0, %v6385
        %v6387 = vrcp.pop %v6185
        %v6388 = vmul.f32 1.0, %v6387
        %v6389 = vrcp.pop %v6186
        %v6390 = vmul.f32 1.0, %v6389
        %v6391 = vrcp.pop %v6187
        %v6392 = vmul.f32 1.0, %v6391
        %v6393 = vrcp.pop %v6188
        %v6394 = vmul.f32 1.0, %v6393
        %v6395 = vrcp.pop %v6189
        %v6396 = vmul.f32 1.0, %v6395
        %v6397 = vrcp.pop %v6190
        %v6398 = vmul.f32 1.0, %v6397
        %v6399 = vrcp.pop %v6191
        %v6400 = vmul.f32 1.0, %v6399
        %v6401 = vrcp.pop %v6192
        %v6402 = vmul.f32 1.0, %v6401
        %v6403 = vrcp.pop %v6193
        %v6404 = vmul.f32 1.0, %v6403
        %v6405 = vrcp.pop %v6194
        %v6406 = vmul.f32 1.0, %v6405
        %v6407 = vrcp.pop %v6195
        %v6408 = vmul.f32 1.0, %v6407
        %v6409 = vrcp.pop %v6196
        %v6410 = vmul.f32 1.0, %v6409
        %v6411 = vrcp.pop %v6197
        %v6412 = vmul.f32 1.0, %v6411
        %v6413 = vrcp.pop %v6198
        %v6414 = vmul.f32 1.0, %v6413
        %v6415 = vrcp.pop %v6199
        %v6416 = vmul.f32 1.0, %v6415
        %v6417 = vrcp.pop %v6200
        %v6418 = vmul.f32 1.0, %v6417
        %v6419 = vrcp.pop %v6201
        %v6420 = vmul.f32 1.0, %v6419
        %v6421 = vrcp.pop %v6202
        %v6422 = vmul.f32 1.0, %v6421
        %v6423 = vrcp.pop %v6203
        %v6424 = vmul.f32 1.0, %v6423
        %v6425 = vrcp.pop %v6204
        %v6426 = vmul.f32 1.0, %v6425
        %v6427 = vrcp.pop %v6205
        %v6428 = vmul.f32 1.0, %v6427
        %v6429 = vrcp.pop %v6206
        %v6430 = vmul.f32 1.0, %v6429
        %v6431 = vrcp.pop %v6207
        %v6432 = vmul.f32 1.0, %v6431
        %v6433 = vrcp.pop %v6208
        %v6434 = vmul.f32 1.0, %v6433
        %v6435 = vrcp.pop %v6209
        %v6436 = vmul.f32 1.0, %v6435
        %v6437 = vrcp.pop %v6210
        %v6438 = vmul.f32 1.0, %v6437
        %v6439 = vrcp.pop %v6211
        %v6440 = vmul.f32 1.0, %v6439
        %v6441 = vrcp.pop %v6212
        %v6442 = vmul.f32 1.0, %v6441
        %v6443 = vrcp.pop %v6213
        %v6444 = vmul.f32 1.0, %v6443
        %v6445 = vrcp.pop %v6214
        %v6446 = vmul.f32 1.0, %v6445
        %v6447 = vrcp.pop %v6215
        %v6448 = vmul.f32 1.0, %v6447
        %v6449 = vrcp.pop %v6216
        %v6450 = vmul.f32 1.0, %v6449
        %v6451 = vrcp.pop %v6217
        %v6452 = vmul.f32 1.0, %v6451
        %v6453 = vrcp.pop %v6218
        %v6454 = vmul.f32 1.0, %v6453
        %v6455 = vrcp.pop %v6219
        %v6456 = vmul.f32 1.0, %v6455
        %v6457 = vrcp.pop %v6220
        %v6458 = vmul.f32 1.0, %v6457
        %v6459 = vrcp.pop %v6221
        %v6460 = vmul.f32 1.0, %v6459
        %v6461 = vrcp.pop %v6222
        %v6462 = vmul.f32 1.0, %v6461
        %v6463 = vrcp.pop %v6223
        %v6464 = vmul.f32 1.0, %v6463
        %v6465 = vrcp.pop %v6224
        %v6466 = vmul.f32 1.0, %v6465
        %v6467 = vrcp.pop %v6225
        %v6468 = vmul.f32 1.0, %v6467
        %v6469 = vrcp.pop %v6226
        %v6470 = vmul.f32 1.0, %v6469
        %v6471 = vrcp.pop %v6227
        %v6472 = vmul.f32 1.0, %v6471
        %v6473 = vrcp.pop %v6228
        %v6474 = vmul.f32 1.0, %v6473
        %v6475 = vrcp.pop %v6229
        %v6476 = vmul.f32 1.0, %v6475
        %v6477 = vrcp.pop %v6230
        %v6478 = vmul.f32 1.0, %v6477
        %v6479 = vrcp.pop %v6231
        %v6480 = vmul.f32 1.0, %v6479
        %v6481 = vrcp.pop %v6232
        %v6482 = vmul.f32 1.0, %v6481
        %v6483 = vrcp.pop %v6233
        %v6484 = vmul.f32 1.0, %v6483
        %v6485 = vrcp.pop %v6234
        %v6486 = vmul.f32 1.0, %v6485
        %v6487 = vrcp.pop %v6235
        %v6488 = vmul.f32 1.0, %v6487
        %v6489 = vrcp.pop %v6236
        %v6490 = vmul.f32 1.0, %v6489
        %v6491 = vrcp.pop %v6237
        %v6492 = vmul.f32 1.0, %v6491
        %v6493 = vrcp.pop %v6238
        %v6494 = vmul.f32 1.0, %v6493
        %v6495 = vrcp.pop %v6239
        %v6496 = vmul.f32 1.0, %v6495
        %v6497 = vrcp.pop %v6240
        %v6498 = vmul.f32 1.0, %v6497
        %v6499 = vrcp.pop %v6241
        %v6500 = vmul.f32 1.0, %v6499
        %v6501 = vrcp.pop %v6242
        %v6502 = vmul.f32 1.0, %v6501
        %v6503 = vrcp.pop %v6243
        %v6504 = vmul.f32 1.0, %v6503
        %v6505 = vrcp.pop %v6244
        %v6506 = vmul.f32 1.0, %v6505
        %v6507 = vrcp.pop %v6245
        %v6508 = vmul.f32 1.0, %v6507
        %v6509 = vrcp.pop %v6246
        %v6510 = vmul.f32 1.0, %v6509
        %v6511 = vrcp.pop %v6247
        %v6512 = vmul.f32 1.0, %v6511
        %v6513 = vrcp.pop %v6248
        %v6514 = vmul.f32 1.0, %v6513
        %v6515 = vrcp.pop %v6249
        %v6516 = vmul.f32 1.0, %v6515
        %v6517 = vrcp.pop %v6250
        %v6518 = vmul.f32 1.0, %v6517
        %v6519 = vrcp.pop %v6251
        %v6520 = vmul.f32 1.0, %v6519
        %v6521 = vrcp.pop %v6252
        %v6522 = vmul.f32 1.0, %v6521
        %v6523 = vrcp.pop %v6253
        %v6524 = vmul.f32 1.0, %v6523
        %v6525 = vrcp.pop %v6254
        %v6526 = vmul.f32 1.0, %v6525
        %v6527 = vrcp.pop %v6255
        %v6528 = vmul.f32 1.0, %v6527
        %v6529 = vrcp.pop %v6256
        %v6530 = vmul.f32 1.0, %v6529
        %v6531 = vrcp.pop %v6257
        %v6532 = vmul.f32 1.0, %v6531
        %v6533 = vrcp.pop %v6258
        %v6534 = vmul.f32 1.0, %v6533
        %v6535 = vrcp.pop %v6259
        %v6536 = vmul.f32 1.0, %v6535
        %v6537 = vrcp.pop %v6260
        %v6538 = vmul.f32 1.0, %v6537
        %v6539 = vrcp.pop %v6261
        %v6540 = vmul.f32 1.0, %v6539
        %v6541 = vrcp.pop %v6262
        %v6542 = vmul.f32 1.0, %v6541
        %v6543 = vrcp.pop %v6263
        %v6544 = vmul.f32 1.0, %v6543
        %v6545 = vrcp.pop %v6264
        %v6546 = vmul.f32 1.0, %v6545
        %v6547 = vrcp.pop %v6265
        %v6548 = vmul.f32 1.0, %v6547
        %v6549 = vrcp.pop %v6266
        %v6550 = vmul.f32 1.0, %v6549
        %v6551 = vrcp.pop %v6267
        %v6552 = vmul.f32 1.0, %v6551
        %v6553 = vrcp.pop %v6268
        %v6554 = vmul.f32 1.0, %v6553
        %v6555 = vrcp.pop %v6269
        %v6556 = vmul.f32 1.0, %v6555
        %v6557 = vrcp.pop %v6270
        %v6558 = vmul.f32 1.0, %v6557
        %v6559 = vrcp.pop %v6271
        %v6560 = vmul.f32 1.0, %v6559
        %v6561 = vrcp.pop %v6272
        %v6562 = vmul.f32 1.0, %v6561
        %v6563 = vrcp.pop %v6273
        %v6564 = vmul.f32 1.0, %v6563
        %v6565 = vrcp.pop %v6274
        %v6566 = vmul.f32 1.0, %v6565
        %v6567 = vrcp.pop %v6275
        %v6568 = vmul.f32 1.0, %v6567
        %v6569 = vrcp.pop %v6276
        %v6570 = vmul.f32 1.0, %v6569
        %v6571 = vrcp.pop %v6277
        %v6572 = vmul.f32 1.0, %v6571
        %v6573 = vrcp.pop %v6278
        %v6574 = vmul.f32 1.0, %v6573
        %v6575 = vrcp.pop %v6279
        %v6576 = vmul.f32 1.0, %v6575
        %v6577 = vrcp.pop %v6280
        %v6578 = vmul.f32 1.0, %v6577
        %v6579 = vrcp.pop %v6281
        %v6580 = vmul.f32 1.0, %v6579
        %v6581 = vrcp.pop %v6282
        %v6582 = vmul.f32 1.0, %v6581
        %v6583 = vrcp.pop %v6283
        %v6584 = vmul.f32 1.0, %v6583
        %v6585 = vrcp.pop %v6284
        %v6586 = vmul.f32 1.0, %v6585
        %v6587 = vrcp.pop %v6285
        %v6588 = vmul.f32 1.0, %v6587
        %v6589 = vrcp.pop %v6286
        %v6590 = vmul.f32 1.0, %v6589
        %v6591 = vrcp.pop %v6287
        %v6592 = vmul.f32 1.0, %v6591
        %v6593 = vrcp.pop %v6288
        %v6594 = vmul.f32 1.0, %v6593
        %v6595 = vrcp.pop %v6289
        %v6596 = vmul.f32 1.0, %v6595
        %v6597 = vrcp.pop %v6290
        %v6598 = vmul.f32 1.0, %v6597
        %v6599 = vrcp.pop %v6291
        %v6600 = vmul.f32 1.0, %v6599
        %v6601 = vrcp.pop %v6292
        %v6602 = vmul.f32 1.0, %v6601
        %v6603 = vrcp.pop %v6293
        %v6604 = vmul.f32 1.0, %v6603
        %v6605 = vrcp.pop %v6294
        %v6606 = vmul.f32 1.0, %v6605
        %v6607 = vrcp.pop %v6295
        %v6608 = vmul.f32 1.0, %v6607
        %v6609 = vrcp.pop %v6296
        %v6610 = vmul.f32 1.0, %v6609
        %v6611 = vrcp.pop %v6297
        %v6612 = vmul.f32 1.0, %v6611
        %v6613 = vrcp.pop %v6298
        %v6614 = vmul.f32 1.0, %v6613
        %v6615 = vrcp.pop %v6299
        %v6616 = vmul.f32 1.0, %v6615
        %v6617 = vrcp.pop %v6300
        %v6618 = vmul.f32 1.0, %v6617
        %v6619 = vrcp.pop %v6301
        %v6620 = vmul.f32 1.0, %v6619
        %v6621 = vrcp.pop %v6302
        %v6622 = vmul.f32 1.0, %v6621
        %v6623 = vmul.f32 %v5006, %v6304
        %v6624 = vmul.f32 %v5008, %v6306
        %v6625 = vmul.f32 %v5139, %v6308
        %v6626 = vmul.f32 %v5141, %v6310
        %v6627 = vmul.f32 %v5272, %v6312
        %v6628 = vmul.f32 %v5274, %v6314
        %v6629 = vmul.f32 %v5405, %v6316
        %v6630 = vmul.f32 %v5407, %v6318
        %v6631 = vmul.f32 %v5010, %v6320
        %v6632 = vmul.f32 %v5012, %v6322
        %v6633 = vmul.f32 %v5143, %v6324
        %v6634 = vmul.f32 %v5145, %v6326
        %v6635 = vmul.f32 %v5276, %v6328
        %v6636 = vmul.f32 %v5278, %v6330
        %v6637 = vmul.f32 %v5409, %v6332
        %v6638 = vmul.f32 %v5411, %v6334
        %v6639 = vmul.f32 %v5016, %v6336
        %v6640 = vmul.f32 %v5018, %v6338
        %v6641 = vmul.f32 %v5149, %v6340
        %v6642 = vmul.f32 %v5151, %v6342
        %v6643 = vmul.f32 %v5282, %v6344
        %v6644 = vmul.f32 %v5284, %v6346
        %v6645 = vmul.f32 %v5415, %v6348
        %v6646 = vmul.f32 %v5417, %v6350
        %v6647 = vmul.f32 %v5020, %v6352
        %v6648 = vmul.f32 %v5022, %v6354
        %v6649 = vmul.f32 %v5153, %v6356
        %v6650 = vmul.f32 %v5155, %v6358
        %v6651 = vmul.f32 %v5286, %v6360
        %v6652 = vmul.f32 %v5288, %v6362
        %v6653 = vmul.f32 %v5419, %v6364
        %v6654 = vmul.f32 %v5421, %v6366
        %v6655 = vmul.f32 %v5026, %v6368
        %v6656 = vmul.f32 %v5028, %v6370
        %v6657 = vmul.f32 %v5159, %v6372
        %v6658 = vmul.f32 %v5161, %v6374
        %v6659 = vmul.f32 %v5292, %v6376
        %v6660 = vmul.f32 %v5294, %v6378
        %v6661 = vmul.f32 %v5425, %v6380
        %v6662 = vmul.f32 %v5427, %v6382
        %v6663 = vmul.f32 %v5030, %v6384
        %v6664 = vmul.f32 %v5032, %v6386
        %v6665 = vmul.f32 %v5163, %v6388
        %v6666 = vmul.f32 %v5165, %v6390
        %v6667 = vmul.f32 %v5296, %v6392
        %v6668 = vmul.f32 %v5298, %v6394
        %v6669 = vmul.f32 %v5429, %v6396
        %v6670 = vmul.f32 %v5431, %v6398
        %v6671 = vmul.f32 %v5036, %v6400
        %v6672 = vmul.f32 %v5038, %v6402
        %v6673 = vmul.f32 %v5169, %v6404
        %v6674 = vmul.f32 %v5171, %v6406
        %v6675 = vmul.f32 %v5302, %v6408
        %v6676 = vmul.f32 %v5304, %v6410
        %v6677 = vmul.f32 %v5435, %v6412
        %v6678 = vmul.f32 %v5437, %v6414
        %v6679 = vmul.f32 %v5040, %v6416
        %v6680 = vmul.f32 %v5042, %v6418
        %v6681 = vmul.f32 %v5173, %v6420
        %v6682 = vmul.f32 %v5175, %v6422
        %v6683 = vmul.f32 %v5306, %v6424
        %v6684 = vmul.f32 %v5308, %v6426
        %v6685 = vmul.f32 %v5439, %v6428
        %v6686 = vmul.f32 %v5441, %v6430
        %v6687 = vmul.f32 %v5046, %v6432
        %v6688 = vmul.f32 %v5048, %v6434
        %v6689 = vmul.f32 %v5179, %v6436
        %v6690 = vmul.f32 %v5181, %v6438
        %v6691 = vmul.f32 %v5312, %v6440
        %v6692 = vmul.f32 %v5314, %v6442
        %v6693 = vmul.f32 %v5445, %v6444
        %v6694 = vmul.f32 %v5447, %v6446
        %v6695 = vmul.f32 %v5050, %v6448
        %v6696 = vmul.f32 %v5052, %v6450
        %v6697 = vmul.f32 %v5183, %v6452
        %v6698 = vmul.f32 %v5185, %v6454
        %v6699 = vmul.f32 %v5316, %v6456
        %v6700 = vmul.f32 %v5318, %v6458
        %v6701 = vmul.f32 %v5449, %v6460
        %v6702 = vmul.f32 %v5451, %v6462
        %v6703 = vmul.f32 %v5056, %v6464
        %v6704 = vmul.f32 %v5058, %v6466
        %v6705 = vmul.f32 %v5189, %v6468
        %v6706 = vmul.f32 %v5191, %v6470
        %v6707 = vmul.f32 %v5322, %v6472
        %v6708 = vmul.f32 %v5324, %v6474
        %v6709 = vmul.f32 %v5455, %v6476
        %v6710 = vmul.f32 %v5457, %v6478
        %v6711 = vmul.f32 %v5060, %v6480
        %v6712 = vmul.f32 %v5062, %v6482
        %v6713 = vmul.f32 %v5193, %v6484
        %v6714 = vmul.f32 %v5195, %v6486
        %v6715 = vmul.f32 %v5326, %v6488
        %v6716 = vmul.f32 %v5328, %v6490
        %v6717 = vmul.f32 %v5459, %v6492
        %v6718 = vmul.f32 %v5461, %v6494
        %v6719 = vmul.f32 %v5066, %v6496
        %v6720 = vmul.f32 %v5068, %v6498
        %v6721 = vmul.f32 %v5199, %v6500
        %v6722 = vmul.f32 %v5201, %v6502
        %v6723 = vmul.f32 %v5332, %v6504
        %v6724 = vmul.f32 %v5334, %v6506
        %v6725 = vmul.f32 %v5465, %v6508
        %v6726 = vmul.f32 %v5467, %v6510
        %v6727 = vmul.f32 %v5070, %v6512
        %v6728 = vmul.f32 %v5072, %v6514
        %v6729 = vmul.f32 %v5203, %v6516
        %v6730 = vmul.f32 %v5205, %v6518
        %v6731 = vmul.f32 %v5336, %v6520
        %v6732 = vmul.f32 %v5338, %v6522
        %v6733 = vmul.f32 %v5469, %v6524
        %v6734 = vmul.f32 %v5471, %v6526
        %v6735 = vmul.f32 %v5076, %v6528
        %v6736 = vmul.f32 %v5078, %v6530
        %v6737 = vmul.f32 %v5209, %v6532
        %v6738 = vmul.f32 %v5211, %v6534
        %v6739 = vmul.f32 %v5342, %v6536
        %v6740 = vmul.f32 %v5344, %v6538
        %v6741 = vmul.f32 %v5475, %v6540
        %v6742 = vmul.f32 %v5477, %v6542
        %v6743 = vmul.f32 %v5080, %v6544
        %v6744 = vmul.f32 %v5082, %v6546
        %v6745 = vmul.f32 %v5213, %v6548
        %v6746 = vmul.f32 %v5215, %v6550
        %v6747 = vmul.f32 %v5346, %v6552
        %v6748 = vmul.f32 %v5348, %v6554
        %v6749 = vmul.f32 %v5479, %v6556
        %v6750 = vmul.f32 %v5481, %v6558
        %v6751 = vmul.f32 %v5086, %v6560
        %v6752 = vmul.f32 %v5088, %v6562
        %v6753 = vmul.f32 %v5219, %v6564
        %v6754 = vmul.f32 %v5221, %v6566
        %v6755 = vmul.f32 %v5352, %v6568
        %v6756 = vmul.f32 %v5354, %v6570
        %v6757 = vmul.f32 %v5485, %v6572
        %v6758 = vmul.f32 %v5487, %v6574
        %v6759 = vmul.f32 %v5090, %v6576
        %v6760 = vmul.f32 %v5092, %v6578
        %v6761 = vmul.f32 %v5223, %v6580
        %v6762 = vmul.f32 %v5225, %v6582
        %v6763 = vmul.f32 %v5356, %v6584
        %v6764 = vmul.f32 %v5358, %v6586
        %v6765 = vmul.f32 %v5489, %v6588
        %v6766 = vmul.f32 %v5491, %v6590
        %v6767 = vmul.f32 %v5096, %v6592
        %v6768 = vmul.f32 %v5098, %v6594
        %v6769 = vmul.f32 %v5229, %v6596
        %v6770 = vmul.f32 %v5231, %v6598
        %v6771 = vmul.f32 %v5362, %v6600
        %v6772 = vmul.f32 %v5364, %v6602
        %v6773 = vmul.f32 %v5495, %v6604
        %v6774 = vmul.f32 %v5497, %v6606
        %v6775 = vmul.f32 %v5100, %v6608
        %v6776 = vmul.f32 %v5102, %v6610
        %v6777 = vmul.f32 %v5233, %v6612
        %v6778 = vmul.f32 %v5235, %v6614
        %v6779 = vmul.f32 %v5366, %v6616
        %v6780 = vmul.f32 %v5368, %v6618
        %v6781 = vmul.f32 %v5499, %v6620
        %v6782 = vmul.f32 %v5501, %v6622
        %v6783 = vpack.c.bf16 %v6631, %v6623
        %v6784 = vpack.c.bf16 %v6632, %v6624
        %v6785 = vpack.c.bf16 %v6633, %v6625
        %v6786 = vpack.c.bf16 %v6634, %v6626
        %v6787 = vpack.c.bf16 %v6635, %v6627
        %v6788 = vpack.c.bf16 %v6636, %v6628
        %v6789 = vpack.c.bf16 %v6637, %v6629
        %v6790 = vpack.c.bf16 %v6638, %v6630
        %v6791 = vpack.c.bf16 %v6647, %v6639
        %v6792 = vpack.c.bf16 %v6648, %v6640
        %v6793 = vpack.c.bf16 %v6649, %v6641
        %v6794 = vpack.c.bf16 %v6650, %v6642
        %v6795 = vpack.c.bf16 %v6651, %v6643
        %v6796 = vpack.c.bf16 %v6652, %v6644
        %v6797 = vpack.c.bf16 %v6653, %v6645
        %v6798 = vpack.c.bf16 %v6654, %v6646
        %v6799 = vpack.c.bf16 %v6663, %v6655
        %v6800 = vpack.c.bf16 %v6664, %v6656
        %v6801 = vpack.c.bf16 %v6665, %v6657
        %v6802 = vpack.c.bf16 %v6666, %v6658
        %v6803 = vpack.c.bf16 %v6667, %v6659
        %v6804 = vpack.c.bf16 %v6668, %v6660
        %v6805 = vpack.c.bf16 %v6669, %v6661
        %v6806 = vpack.c.bf16 %v6670, %v6662
        %v6807 = vpack.c.bf16 %v6679, %v6671
        %v6808 = vpack.c.bf16 %v6680, %v6672
        %v6809 = vpack.c.bf16 %v6681, %v6673
        %v6810 = vpack.c.bf16 %v6682, %v6674
        %v6811 = vpack.c.bf16 %v6683, %v6675
        %v6812 = vpack.c.bf16 %v6684, %v6676
        %v6813 = vpack.c.bf16 %v6685, %v6677
        %v6814 = vpack.c.bf16 %v6686, %v6678
        %v6815 = vpack.c.bf16 %v6695, %v6687
        %v6816 = vpack.c.bf16 %v6696, %v6688
        %v6817 = vpack.c.bf16 %v6697, %v6689
        %v6818 = vpack.c.bf16 %v6698, %v6690
        %v6819 = vpack.c.bf16 %v6699, %v6691
        %v6820 = vpack.c.bf16 %v6700, %v6692
        %v6821 = vpack.c.bf16 %v6701, %v6693
        %v6822 = vpack.c.bf16 %v6702, %v6694
        %v6823 = vpack.c.bf16 %v6711, %v6703
        %v6824 = vpack.c.bf16 %v6712, %v6704
        %v6825 = vpack.c.bf16 %v6713, %v6705
        %v6826 = vpack.c.bf16 %v6714, %v6706
        %v6827 = vpack.c.bf16 %v6715, %v6707
        %v6828 = vpack.c.bf16 %v6716, %v6708
        %v6829 = vpack.c.bf16 %v6717, %v6709
        %v6830 = vpack.c.bf16 %v6718, %v6710
        %v6831 = vpack.c.bf16 %v6727, %v6719
        %v6832 = vpack.c.bf16 %v6728, %v6720
        %v6833 = vpack.c.bf16 %v6729, %v6721
        %v6834 = vpack.c.bf16 %v6730, %v6722
        %v6835 = vpack.c.bf16 %v6731, %v6723
        %v6836 = vpack.c.bf16 %v6732, %v6724
        %v6837 = vpack.c.bf16 %v6733, %v6725
        %v6838 = vpack.c.bf16 %v6734, %v6726
        %v6839 = vpack.c.bf16 %v6743, %v6735
        %v6840 = vpack.c.bf16 %v6744, %v6736
        %v6841 = vpack.c.bf16 %v6745, %v6737
        %v6842 = vpack.c.bf16 %v6746, %v6738
        %v6843 = vpack.c.bf16 %v6747, %v6739
        %v6844 = vpack.c.bf16 %v6748, %v6740
        %v6845 = vpack.c.bf16 %v6749, %v6741
        %v6846 = vpack.c.bf16 %v6750, %v6742
        %v6847 = vpack.c.bf16 %v6759, %v6751
        %v6848 = vpack.c.bf16 %v6760, %v6752
        %v6849 = vpack.c.bf16 %v6761, %v6753
        %v6850 = vpack.c.bf16 %v6762, %v6754
        %v6851 = vpack.c.bf16 %v6763, %v6755
        %v6852 = vpack.c.bf16 %v6764, %v6756
        %v6853 = vpack.c.bf16 %v6765, %v6757
        %v6854 = vpack.c.bf16 %v6766, %v6758
        %v6855 = vpack.c.bf16 %v6775, %v6767
        %v6856 = vpack.c.bf16 %v6776, %v6768
        %v6857 = vpack.c.bf16 %v6777, %v6769
        %v6858 = vpack.c.bf16 %v6778, %v6770
        %v6859 = vpack.c.bf16 %v6779, %v6771
        %v6860 = vpack.c.bf16 %v6780, %v6772
        %v6861 = vpack.c.bf16 %v6781, %v6773
        %v6862 = vpack.c.bf16 %v6782, %v6774
        %v6863 = vld [vmem:[%s436] sm:$0xff]
        %v6864 = vld [vmem:[%s436 + $0x8] sm:$0xff]
        %v6865 = vld [vmem:[%s436 + $0x10] sm:$0xff]
        %v6866 = vld [vmem:[%s436 + $0x18] sm:$0xff]
        %v6867 = vld [vmem:[%s436 + $0x20] sm:$0xff]
        %v6868 = vld [vmem:[%s436 + $0x28] sm:$0xff]
        %v6869 = vld [vmem:[%s436 + $0x30] sm:$0xff]
        %v6870 = vld [vmem:[%s436 + $0x38] sm:$0xff]
        %v6871 = vld [vmem:[%s436 + $0x40] sm:$0xff]
        %v6872 = vld [vmem:[%s436 + $0x48] sm:$0xff]
        %v6873 = vld [vmem:[%s436 + $0x50] sm:$0xff]
        %v6874 = vld [vmem:[%s436 + $0x58] sm:$0xff]
        %v6875 = vld [vmem:[%s436 + $0x60] sm:$0xff]
        %v6876 = vld [vmem:[%s436 + $0x68] sm:$0xff]
        %v6877 = vld [vmem:[%s436 + $0x70] sm:$0xff]
        %v6878 = vld [vmem:[%s436 + $0x78] sm:$0xff]
        %v6879 = vld [vmem:[%s436 + $0x80] sm:$0xff]
        %v6880 = vld [vmem:[%s436 + $0x88] sm:$0xff]
        %v6881 = vld [vmem:[%s436 + $0x90] sm:$0xff]
        %v6882 = vld [vmem:[%s436 + $0x98] sm:$0xff]
        %v6883 = vld [vmem:[%s436 + $0xa0] sm:$0xff]
        %v6884 = vld [vmem:[%s436 + $0xa8] sm:$0xff]
        %v6885 = vld [vmem:[%s436 + $0xb0] sm:$0xff]
        %v6886 = vld [vmem:[%s436 + $0xb8] sm:$0xff]
        %v6887 = vld [vmem:[%s436 + $0xc0] sm:$0xff]
        %v6888 = vld [vmem:[%s436 + $0xc8] sm:$0xff]
        %v6889 = vld [vmem:[%s436 + $0xd0] sm:$0xff]
        %v6890 = vld [vmem:[%s436 + $0xd8] sm:$0xff]
        %v6891 = vld [vmem:[%s436 + $0xe0] sm:$0xff]
        %v6892 = vld [vmem:[%s436 + $0xe8] sm:$0xff]
        %v6893 = vld [vmem:[%s436 + $0xf0] sm:$0xff]
        %v6894 = vld [vmem:[%s436 + $0xf8] sm:$0xff]
        %v6895 = vld [vmem:[%s436 + $0x100] sm:$0xff]
        %v6896 = vld [vmem:[%s436 + $0x108] sm:$0xff]
        %v6897 = vld [vmem:[%s436 + $0x110] sm:$0xff]
        %v6898 = vld [vmem:[%s436 + $0x118] sm:$0xff]
        %v6899 = vld [vmem:[%s436 + $0x120] sm:$0xff]
        %v6900 = vld [vmem:[%s436 + $0x128] sm:$0xff]
        %v6901 = vld [vmem:[%s436 + $0x130] sm:$0xff]
        %v6902 = vld [vmem:[%s436 + $0x138] sm:$0xff]
        %v6903 = vld [vmem:[%s436 + $0x140] sm:$0xff]
        %v6904 = vld [vmem:[%s436 + $0x148] sm:$0xff]
        %v6905 = vld [vmem:[%s436 + $0x150] sm:$0xff]
        %v6906 = vld [vmem:[%s436 + $0x158] sm:$0xff]
        %v6907 = vld [vmem:[%s436 + $0x160] sm:$0xff]
        %v6908 = vld [vmem:[%s436 + $0x168] sm:$0xff]
        %v6909 = vld [vmem:[%s436 + $0x170] sm:$0xff]
        %v6910 = vld [vmem:[%s436 + $0x178] sm:$0xff]
        %v6911 = vld [vmem:[%s436 + $0x180] sm:$0xff]
        %v6912 = vld [vmem:[%s436 + $0x188] sm:$0xff]
        %v6913 = vld [vmem:[%s436 + $0x190] sm:$0xff]
        %v6914 = vld [vmem:[%s436 + $0x198] sm:$0xff]
        %v6915 = vld [vmem:[%s436 + $0x1a0] sm:$0xff]
        %v6916 = vld [vmem:[%s436 + $0x1a8] sm:$0xff]
        %v6917 = vld [vmem:[%s436 + $0x1b0] sm:$0xff]
        %v6918 = vld [vmem:[%s436 + $0x1b8] sm:$0xff]
        %v6919 = vld [vmem:[%s436 + $0x1c0] sm:$0xff]
        %v6920 = vld [vmem:[%s436 + $0x1c8] sm:$0xff]
        %v6921 = vld [vmem:[%s436 + $0x1d0] sm:$0xff]
        %v6922 = vld [vmem:[%s436 + $0x1d8] sm:$0xff]
        %v6923 = vld [vmem:[%s436 + $0x1e0] sm:$0xff]
        %v6924 = vld [vmem:[%s436 + $0x1e8] sm:$0xff]
        %v6925 = vld [vmem:[%s436 + $0x1f0] sm:$0xff]
        %v6926 = vld [vmem:[%s436 + $0x1f8] sm:$0xff]
        %v6927 = vld [vmem:[%s436 + $0x200] sm:$0xff]
        %v6928 = vld [vmem:[%s436 + $0x208] sm:$0xff]
        %v6929 = vld [vmem:[%s436 + $0x210] sm:$0xff]
        %v6930 = vld [vmem:[%s436 + $0x218] sm:$0xff]
        %v6931 = vld [vmem:[%s436 + $0x220] sm:$0xff]
        %v6932 = vld [vmem:[%s436 + $0x228] sm:$0xff]
        %v6933 = vld [vmem:[%s436 + $0x230] sm:$0xff]
        %v6934 = vld [vmem:[%s436 + $0x238] sm:$0xff]
        %v6935 = vld [vmem:[%s436 + $0x240] sm:$0xff]
        %v6936 = vld [vmem:[%s436 + $0x248] sm:$0xff]
        %v6937 = vld [vmem:[%s436 + $0x250] sm:$0xff]
        %v6938 = vld [vmem:[%s436 + $0x258] sm:$0xff]
        %v6939 = vld [vmem:[%s436 + $0x260] sm:$0xff]
        %v6940 = vld [vmem:[%s436 + $0x268] sm:$0xff]
        %v6941 = vld [vmem:[%s436 + $0x270] sm:$0xff]
        %v6942 = vld [vmem:[%s436 + $0x278] sm:$0xff]
        %v6943 = vld [vmem:[%s436 + $0x280] sm:$0xff]
        %v6944 = vld [vmem:[%s436 + $0x288] sm:$0xff]
        %v6945 = vld [vmem:[%s436 + $0x290] sm:$0xff]
        %v6946 = vld [vmem:[%s436 + $0x298] sm:$0xff]
        %v6947 = vld [vmem:[%s436 + $0x2a0] sm:$0xff]
        %v6948 = vld [vmem:[%s436 + $0x2a8] sm:$0xff]
        %v6949 = vld [vmem:[%s436 + $0x2b0] sm:$0xff]
        %v6950 = vld [vmem:[%s436 + $0x2b8] sm:$0xff]
        %v6951 = vld [vmem:[%s436 + $0x2c0] sm:$0xff]
        %v6952 = vld [vmem:[%s436 + $0x2c8] sm:$0xff]
        %v6953 = vld [vmem:[%s436 + $0x2d0] sm:$0xff]
        %v6954 = vld [vmem:[%s436 + $0x2d8] sm:$0xff]
        %v6955 = vld [vmem:[%s436 + $0x2e0] sm:$0xff]
        %v6956 = vld [vmem:[%s436 + $0x2e8] sm:$0xff]
        %v6957 = vld [vmem:[%s436 + $0x2f0] sm:$0xff]
        %v6958 = vld [vmem:[%s436 + $0x2f8] sm:$0xff]
        %v6959 = vld [vmem:[%s436 + $0x300] sm:$0xff]
        %v6960 = vld [vmem:[%s436 + $0x308] sm:$0xff]
        %v6961 = vld [vmem:[%s436 + $0x310] sm:$0xff]
        %v6962 = vld [vmem:[%s436 + $0x318] sm:$0xff]
        %v6963 = vld [vmem:[%s436 + $0x320] sm:$0xff]
        %v6964 = vld [vmem:[%s436 + $0x328] sm:$0xff]
        %v6965 = vld [vmem:[%s436 + $0x330] sm:$0xff]
        %v6966 = vld [vmem:[%s436 + $0x338] sm:$0xff]
        %v6967 = vld [vmem:[%s436 + $0x340] sm:$0xff]
        %v6968 = vld [vmem:[%s436 + $0x348] sm:$0xff]
        %v6969 = vld [vmem:[%s436 + $0x350] sm:$0xff]
        %v6970 = vld [vmem:[%s436 + $0x358] sm:$0xff]
        %v6971 = vld [vmem:[%s436 + $0x360] sm:$0xff]
        %v6972 = vld [vmem:[%s436 + $0x368] sm:$0xff]
        %v6973 = vld [vmem:[%s436 + $0x370] sm:$0xff]
        %v6974 = vld [vmem:[%s436 + $0x378] sm:$0xff]
        %v6975 = vld [vmem:[%s436 + $0x380] sm:$0xff]
        %v6976 = vld [vmem:[%s436 + $0x388] sm:$0xff]
        %v6977 = vld [vmem:[%s436 + $0x390] sm:$0xff]
        %v6978 = vld [vmem:[%s436 + $0x398] sm:$0xff]
        %v6979 = vld [vmem:[%s436 + $0x3a0] sm:$0xff]
        %v6980 = vld [vmem:[%s436 + $0x3a8] sm:$0xff]
        %v6981 = vld [vmem:[%s436 + $0x3b0] sm:$0xff]
        %v6982 = vld [vmem:[%s436 + $0x3b8] sm:$0xff]
        %v6983 = vld [vmem:[%s436 + $0x3c0] sm:$0xff]
        %v6984 = vld [vmem:[%s436 + $0x3c8] sm:$0xff]
        %v6985 = vld [vmem:[%s436 + $0x3d0] sm:$0xff]
        %v6986 = vld [vmem:[%s436 + $0x3d8] sm:$0xff]
        %v6987 = vld [vmem:[%s436 + $0x3e0] sm:$0xff]
        %v6988 = vld [vmem:[%s436 + $0x3e8] sm:$0xff]
        %v6989 = vld [vmem:[%s436 + $0x3f0] sm:$0xff]
        %v6990 = vld [vmem:[%s436 + $0x3f8] sm:$0xff]
        %v6991 = vlaneseq
        %v6992 = vshrl.u32 %v6991, 7
        %v6993 = vsub.s32 0, %v6992
        %v6994 = vrot.slane %v643, %v6993
        %v6995 = vlaneseq
        %v6996 = vshrl.u32 %v6995, 7
        %v6997 = vsub.s32 0, %v6996
        %v6998 = vrot.slane %v644, %v6997
        %v7127 = vunpack.c.l.b16 %v6863
        %v7128 = vunpack.c.h.b16 %v6863
        %v7129 = vunpack.c.l.b16 %v6864
        %v7130 = vunpack.c.h.b16 %v6864
        %v7131 = vunpack.c.l.b16 %v6865
        %v7132 = vunpack.c.h.b16 %v6865
        %v7133 = vunpack.c.l.b16 %v6866
        %v7134 = vunpack.c.h.b16 %v6866
        %v7135 = vunpack.c.l.b16 %v6867
        %v7136 = vunpack.c.h.b16 %v6867
        %v7137 = vunpack.c.l.b16 %v6868
        %v7138 = vunpack.c.h.b16 %v6868
        %v7139 = vunpack.c.l.b16 %v6869
        %v7140 = vunpack.c.h.b16 %v6869
        %v7141 = vunpack.c.l.b16 %v6870
        %v7142 = vunpack.c.h.b16 %v6870
        %v7143 = vunpack.c.l.b16 %v6871
        %v7144 = vunpack.c.h.b16 %v6871
        %v7145 = vunpack.c.l.b16 %v6872
        %v7146 = vunpack.c.h.b16 %v6872
        %v7147 = vunpack.c.l.b16 %v6873
        %v7148 = vunpack.c.h.b16 %v6873
        %v7149 = vunpack.c.l.b16 %v6874
        %v7150 = vunpack.c.h.b16 %v6874
        %v7151 = vunpack.c.l.b16 %v6875
        %v7152 = vunpack.c.h.b16 %v6875
        %v7153 = vunpack.c.l.b16 %v6876
        %v7154 = vunpack.c.h.b16 %v6876
        %v7155 = vunpack.c.l.b16 %v6877
        %v7156 = vunpack.c.h.b16 %v6877
        %v7157 = vunpack.c.l.b16 %v6878
        %v7158 = vunpack.c.h.b16 %v6878
        %v7159 = vunpack.c.l.b16 %v6879
        %v7160 = vunpack.c.h.b16 %v6879
        %v7161 = vunpack.c.l.b16 %v6880
        %v7162 = vunpack.c.h.b16 %v6880
        %v7163 = vunpack.c.l.b16 %v6881
        %v7164 = vunpack.c.h.b16 %v6881
        %v7165 = vunpack.c.l.b16 %v6882
        %v7166 = vunpack.c.h.b16 %v6882
        %v7167 = vunpack.c.l.b16 %v6883
        %v7168 = vunpack.c.h.b16 %v6883
        %v7169 = vunpack.c.l.b16 %v6884
        %v7170 = vunpack.c.h.b16 %v6884
        %v7171 = vunpack.c.l.b16 %v6885
        %v7172 = vunpack.c.h.b16 %v6885
        %v7173 = vunpack.c.l.b16 %v6886
        %v7174 = vunpack.c.h.b16 %v6886
        %v7175 = vunpack.c.l.b16 %v6887
        %v7176 = vunpack.c.h.b16 %v6887
        %v7177 = vunpack.c.l.b16 %v6888
        %v7178 = vunpack.c.h.b16 %v6888
        %v7179 = vunpack.c.l.b16 %v6889
        %v7180 = vunpack.c.h.b16 %v6889
        %v7181 = vunpack.c.l.b16 %v6890
        %v7182 = vunpack.c.h.b16 %v6890
        %v7183 = vunpack.c.l.b16 %v6891
        %v7184 = vunpack.c.h.b16 %v6891
        %v7185 = vunpack.c.l.b16 %v6892
        %v7186 = vunpack.c.h.b16 %v6892
        %v7187 = vunpack.c.l.b16 %v6893
        %v7188 = vunpack.c.h.b16 %v6893
        %v7189 = vunpack.c.l.b16 %v6894
        %v7190 = vunpack.c.h.b16 %v6894
        %v7191 = vunpack.c.l.b16 %v6895
        %v7192 = vunpack.c.h.b16 %v6895
        %v7193 = vunpack.c.l.b16 %v6896
        %v7194 = vunpack.c.h.b16 %v6896
        %v7195 = vunpack.c.l.b16 %v6897
        %v7196 = vunpack.c.h.b16 %v6897
        %v7197 = vunpack.c.l.b16 %v6898
        %v7198 = vunpack.c.h.b16 %v6898
        %v7199 = vunpack.c.l.b16 %v6899
        %v7200 = vunpack.c.h.b16 %v6899
        %v7201 = vunpack.c.l.b16 %v6900
        %v7202 = vunpack.c.h.b16 %v6900
        %v7203 = vunpack.c.l.b16 %v6901
        %v7204 = vunpack.c.h.b16 %v6901
        %v7205 = vunpack.c.l.b16 %v6902
        %v7206 = vunpack.c.h.b16 %v6902
        %v7207 = vunpack.c.l.b16 %v6903
        %v7208 = vunpack.c.h.b16 %v6903
        %v7209 = vunpack.c.l.b16 %v6904
        %v7210 = vunpack.c.h.b16 %v6904
        %v7211 = vunpack.c.l.b16 %v6905
        %v7212 = vunpack.c.h.b16 %v6905
        %v7213 = vunpack.c.l.b16 %v6906
        %v7214 = vunpack.c.h.b16 %v6906
        %v7215 = vunpack.c.l.b16 %v6907
        %v7216 = vunpack.c.h.b16 %v6907
        %v7217 = vunpack.c.l.b16 %v6908
        %v7218 = vunpack.c.h.b16 %v6908
        %v7219 = vunpack.c.l.b16 %v6909
        %v7220 = vunpack.c.h.b16 %v6909
        %v7221 = vunpack.c.l.b16 %v6910
        %v7222 = vunpack.c.h.b16 %v6910
        %v7223 = vunpack.c.l.b16 %v6911
        %v7224 = vunpack.c.h.b16 %v6911
        %v7225 = vunpack.c.l.b16 %v6912
        %v7226 = vunpack.c.h.b16 %v6912
        %v7227 = vunpack.c.l.b16 %v6913
        %v7228 = vunpack.c.h.b16 %v6913
        %v7229 = vunpack.c.l.b16 %v6914
        %v7230 = vunpack.c.h.b16 %v6914
        %v7231 = vunpack.c.l.b16 %v6915
        %v7232 = vunpack.c.h.b16 %v6915
        %v7233 = vunpack.c.l.b16 %v6916
        %v7234 = vunpack.c.h.b16 %v6916
        %v7235 = vunpack.c.l.b16 %v6917
        %v7236 = vunpack.c.h.b16 %v6917
        %v7237 = vunpack.c.l.b16 %v6918
        %v7238 = vunpack.c.h.b16 %v6918
        %v7239 = vunpack.c.l.b16 %v6919
        %v7240 = vunpack.c.h.b16 %v6919
        %v7241 = vunpack.c.l.b16 %v6920
        %v7242 = vunpack.c.h.b16 %v6920
        %v7243 = vunpack.c.l.b16 %v6921
        %v7244 = vunpack.c.h.b16 %v6921
        %v7245 = vunpack.c.l.b16 %v6922
        %v7246 = vunpack.c.h.b16 %v6922
        %v7247 = vunpack.c.l.b16 %v6923
        %v7248 = vunpack.c.h.b16 %v6923
        %v7249 = vunpack.c.l.b16 %v6924
        %v7250 = vunpack.c.h.b16 %v6924
        %v7251 = vunpack.c.l.b16 %v6925
        %v7252 = vunpack.c.h.b16 %v6925
        %v7253 = vunpack.c.l.b16 %v6926
        %v7254 = vunpack.c.h.b16 %v6926
        %v7255 = vunpack.c.l.b16 %v6927
        %v7256 = vunpack.c.h.b16 %v6927
        %v7257 = vunpack.c.l.b16 %v6928
        %v7258 = vunpack.c.h.b16 %v6928
        %v7259 = vunpack.c.l.b16 %v6929
        %v7260 = vunpack.c.h.b16 %v6929
        %v7261 = vunpack.c.l.b16 %v6930
        %v7262 = vunpack.c.h.b16 %v6930
        %v7263 = vunpack.c.l.b16 %v6931
        %v7264 = vunpack.c.h.b16 %v6931
        %v7265 = vunpack.c.l.b16 %v6932
        %v7266 = vunpack.c.h.b16 %v6932
        %v7267 = vunpack.c.l.b16 %v6933
        %v7268 = vunpack.c.h.b16 %v6933
        %v7269 = vunpack.c.l.b16 %v6934
        %v7270 = vunpack.c.h.b16 %v6934
        %v7271 = vunpack.c.l.b16 %v6935
        %v7272 = vunpack.c.h.b16 %v6935
        %v7273 = vunpack.c.l.b16 %v6936
        %v7274 = vunpack.c.h.b16 %v6936
        %v7275 = vunpack.c.l.b16 %v6937
        %v7276 = vunpack.c.h.b16 %v6937
        %v7277 = vunpack.c.l.b16 %v6938
        %v7278 = vunpack.c.h.b16 %v6938
        %v7279 = vunpack.c.l.b16 %v6939
        %v7280 = vunpack.c.h.b16 %v6939
        %v7281 = vunpack.c.l.b16 %v6940
        %v7282 = vunpack.c.h.b16 %v6940
        %v7283 = vunpack.c.l.b16 %v6941
        %v7284 = vunpack.c.h.b16 %v6941
        %v7285 = vunpack.c.l.b16 %v6942
        %v7286 = vunpack.c.h.b16 %v6942
        %v7287 = vunpack.c.l.b16 %v6943
        %v7288 = vunpack.c.h.b16 %v6943
        %v7289 = vunpack.c.l.b16 %v6944
        %v7290 = vunpack.c.h.b16 %v6944
        %v7291 = vunpack.c.l.b16 %v6945
        %v7292 = vunpack.c.h.b16 %v6945
        %v7293 = vunpack.c.l.b16 %v6946
        %v7294 = vunpack.c.h.b16 %v6946
        %v7295 = vunpack.c.l.b16 %v6947
        %v7296 = vunpack.c.h.b16 %v6947
        %v7297 = vunpack.c.l.b16 %v6948
        %v7298 = vunpack.c.h.b16 %v6948
        %v7299 = vunpack.c.l.b16 %v6949
        %v7300 = vunpack.c.h.b16 %v6949
        %v7301 = vunpack.c.l.b16 %v6950
        %v7302 = vunpack.c.h.b16 %v6950
        %v7303 = vunpack.c.l.b16 %v6951
        %v7304 = vunpack.c.h.b16 %v6951
        %v7305 = vunpack.c.l.b16 %v6952
        %v7306 = vunpack.c.h.b16 %v6952
        %v7307 = vunpack.c.l.b16 %v6953
        %v7308 = vunpack.c.h.b16 %v6953
        %v7309 = vunpack.c.l.b16 %v6954
        %v7310 = vunpack.c.h.b16 %v6954
        %v7311 = vunpack.c.l.b16 %v6955
        %v7312 = vunpack.c.h.b16 %v6955
        %v7313 = vunpack.c.l.b16 %v6956
        %v7314 = vunpack.c.h.b16 %v6956
        %v7315 = vunpack.c.l.b16 %v6957
        %v7316 = vunpack.c.h.b16 %v6957
        %v7317 = vunpack.c.l.b16 %v6958
        %v7318 = vunpack.c.h.b16 %v6958
        %v7319 = vunpack.c.l.b16 %v6959
        %v7320 = vunpack.c.h.b16 %v6959
        %v7321 = vunpack.c.l.b16 %v6960
        %v7322 = vunpack.c.h.b16 %v6960
        %v7323 = vunpack.c.l.b16 %v6961
        %v7324 = vunpack.c.h.b16 %v6961
        %v7325 = vunpack.c.l.b16 %v6962
        %v7326 = vunpack.c.h.b16 %v6962
        %v7327 = vunpack.c.l.b16 %v6963
        %v7328 = vunpack.c.h.b16 %v6963
        %v7329 = vunpack.c.l.b16 %v6964
        %v7330 = vunpack.c.h.b16 %v6964
        %v7331 = vunpack.c.l.b16 %v6965
        %v7332 = vunpack.c.h.b16 %v6965
        %v7333 = vunpack.c.l.b16 %v6966
        %v7334 = vunpack.c.h.b16 %v6966
        %v7335 = vunpack.c.l.b16 %v6967
        %v7336 = vunpack.c.h.b16 %v6967
        %v7337 = vunpack.c.l.b16 %v6968
        %v7338 = vunpack.c.h.b16 %v6968
        %v7339 = vunpack.c.l.b16 %v6969
        %v7340 = vunpack.c.h.b16 %v6969
        %v7341 = vunpack.c.l.b16 %v6970
        %v7342 = vunpack.c.h.b16 %v6970
        %v7343 = vunpack.c.l.b16 %v6971
        %v7344 = vunpack.c.h.b16 %v6971
        %v7345 = vunpack.c.l.b16 %v6972
        %v7346 = vunpack.c.h.b16 %v6972
        %v7347 = vunpack.c.l.b16 %v6973
        %v7348 = vunpack.c.h.b16 %v6973
        %v7349 = vunpack.c.l.b16 %v6974
        %v7350 = vunpack.c.h.b16 %v6974
        %v7351 = vunpack.c.l.b16 %v6975
        %v7352 = vunpack.c.h.b16 %v6975
        %v7353 = vunpack.c.l.b16 %v6976
        %v7354 = vunpack.c.h.b16 %v6976
        %v7355 = vunpack.c.l.b16 %v6977
        %v7356 = vunpack.c.h.b16 %v6977
        %v7357 = vunpack.c.l.b16 %v6978
        %v7358 = vunpack.c.h.b16 %v6978
        %v7359 = vunpack.c.l.b16 %v6979
        %v7360 = vunpack.c.h.b16 %v6979
        %v7361 = vunpack.c.l.b16 %v6980
        %v7362 = vunpack.c.h.b16 %v6980
        %v7363 = vunpack.c.l.b16 %v6981
        %v7364 = vunpack.c.h.b16 %v6981
        %v7365 = vunpack.c.l.b16 %v6982
        %v7366 = vunpack.c.h.b16 %v6982
        %v7367 = vunpack.c.l.b16 %v6983
        %v7368 = vunpack.c.h.b16 %v6983
        %v7369 = vunpack.c.l.b16 %v6984
        %v7370 = vunpack.c.h.b16 %v6984
        %v7371 = vunpack.c.l.b16 %v6985
        %v7372 = vunpack.c.h.b16 %v6985
        %v7373 = vunpack.c.l.b16 %v6986
        %v7374 = vunpack.c.h.b16 %v6986
        %v7375 = vunpack.c.l.b16 %v6987
        %v7376 = vunpack.c.h.b16 %v6987
        %v7377 = vunpack.c.l.b16 %v6988
        %v7378 = vunpack.c.h.b16 %v6988
        %v7379 = vunpack.c.l.b16 %v6989
        %v7380 = vunpack.c.h.b16 %v6989
        %v7381 = vunpack.c.l.b16 %v6990
        %v7382 = vunpack.c.h.b16 %v6990
        %v7383 = vpack.c.b16 %v7129, %v7127
        %v7384 = vpack.c.b16 %v7130, %v7128
        %v7385 = vpack.c.b16 %v7133, %v7131
        %v7386 = vpack.c.b16 %v7134, %v7132
        %v7387 = vpack.c.b16 %v7137, %v7135
        %v7388 = vpack.c.b16 %v7138, %v7136
        %v7389 = vpack.c.b16 %v7141, %v7139
        %v7390 = vpack.c.b16 %v7142, %v7140
        %v7391 = vpack.c.b16 %v7145, %v7143
        %v7392 = vpack.c.b16 %v7146, %v7144
        %v7393 = vpack.c.b16 %v7149, %v7147
        %v7394 = vpack.c.b16 %v7150, %v7148
        %v7395 = vpack.c.b16 %v7153, %v7151
        %v7396 = vpack.c.b16 %v7154, %v7152
        %v7397 = vpack.c.b16 %v7157, %v7155
        %v7398 = vpack.c.b16 %v7158, %v7156
        %v7399 = vpack.c.b16 %v7161, %v7159
        %v7400 = vpack.c.b16 %v7162, %v7160
        %v7401 = vpack.c.b16 %v7165, %v7163
        %v7402 = vpack.c.b16 %v7166, %v7164
        %v7403 = vpack.c.b16 %v7169, %v7167
        %v7404 = vpack.c.b16 %v7170, %v7168
        %v7405 = vpack.c.b16 %v7173, %v7171
        %v7406 = vpack.c.b16 %v7174, %v7172
        %v7407 = vpack.c.b16 %v7177, %v7175
        %v7408 = vpack.c.b16 %v7178, %v7176
        %v7409 = vpack.c.b16 %v7181, %v7179
        %v7410 = vpack.c.b16 %v7182, %v7180
        %v7411 = vpack.c.b16 %v7185, %v7183
        %v7412 = vpack.c.b16 %v7186, %v7184
        %v7413 = vpack.c.b16 %v7189, %v7187
        %v7414 = vpack.c.b16 %v7190, %v7188
        %v7415 = vpack.c.b16 %v7193, %v7191
        %v7416 = vpack.c.b16 %v7194, %v7192
        %v7417 = vpack.c.b16 %v7197, %v7195
        %v7418 = vpack.c.b16 %v7198, %v7196
        %v7419 = vpack.c.b16 %v7201, %v7199
        %v7420 = vpack.c.b16 %v7202, %v7200
        %v7421 = vpack.c.b16 %v7205, %v7203
        %v7422 = vpack.c.b16 %v7206, %v7204
        %v7423 = vpack.c.b16 %v7209, %v7207
        %v7424 = vpack.c.b16 %v7210, %v7208
        %v7425 = vpack.c.b16 %v7213, %v7211
        %v7426 = vpack.c.b16 %v7214, %v7212
        %v7427 = vpack.c.b16 %v7217, %v7215
        %v7428 = vpack.c.b16 %v7218, %v7216
        %v7429 = vpack.c.b16 %v7221, %v7219
        %v7430 = vpack.c.b16 %v7222, %v7220
        %v7431 = vpack.c.b16 %v7225, %v7223
        %v7432 = vpack.c.b16 %v7226, %v7224
        %v7433 = vpack.c.b16 %v7229, %v7227
        %v7434 = vpack.c.b16 %v7230, %v7228
        %v7435 = vpack.c.b16 %v7233, %v7231
        %v7436 = vpack.c.b16 %v7234, %v7232
        %v7437 = vpack.c.b16 %v7237, %v7235
        %v7438 = vpack.c.b16 %v7238, %v7236
        %v7439 = vpack.c.b16 %v7241, %v7239
        %v7440 = vpack.c.b16 %v7242, %v7240
        %v7441 = vpack.c.b16 %v7245, %v7243
        %v7442 = vpack.c.b16 %v7246, %v7244
        %v7443 = vpack.c.b16 %v7249, %v7247
        %v7444 = vpack.c.b16 %v7250, %v7248
        %v7445 = vpack.c.b16 %v7253, %v7251
        %v7446 = vpack.c.b16 %v7254, %v7252
        %v7447 = vpack.c.b16 %v7257, %v7255
        %v7448 = vpack.c.b16 %v7258, %v7256
        %v7449 = vpack.c.b16 %v7261, %v7259
        %v7450 = vpack.c.b16 %v7262, %v7260
        %v7451 = vpack.c.b16 %v7265, %v7263
        %v7452 = vpack.c.b16 %v7266, %v7264
        %v7453 = vpack.c.b16 %v7269, %v7267
        %v7454 = vpack.c.b16 %v7270, %v7268
        %v7455 = vpack.c.b16 %v7273, %v7271
        %v7456 = vpack.c.b16 %v7274, %v7272
        %v7457 = vpack.c.b16 %v7277, %v7275
        %v7458 = vpack.c.b16 %v7278, %v7276
        %v7459 = vpack.c.b16 %v7281, %v7279
        %v7460 = vpack.c.b16 %v7282, %v7280
        %v7461 = vpack.c.b16 %v7285, %v7283
        %v7462 = vpack.c.b16 %v7286, %v7284
        %v7463 = vpack.c.b16 %v7289, %v7287
        %v7464 = vpack.c.b16 %v7290, %v7288
        %v7465 = vpack.c.b16 %v7293, %v7291
        %v7466 = vpack.c.b16 %v7294, %v7292
        %v7467 = vpack.c.b16 %v7297, %v7295
        %v7468 = vpack.c.b16 %v7298, %v7296
        %v7469 = vpack.c.b16 %v7301, %v7299
        %v7470 = vpack.c.b16 %v7302, %v7300
        %v7471 = vpack.c.b16 %v7305, %v7303
        %v7472 = vpack.c.b16 %v7306, %v7304
        %v7473 = vpack.c.b16 %v7309, %v7307
        %v7474 = vpack.c.b16 %v7310, %v7308
        %v7475 = vpack.c.b16 %v7313, %v7311
        %v7476 = vpack.c.b16 %v7314, %v7312
        %v7477 = vpack.c.b16 %v7317, %v7315
        %v7478 = vpack.c.b16 %v7318, %v7316
        %v7479 = vpack.c.b16 %v7321, %v7319
        %v7480 = vpack.c.b16 %v7322, %v7320
        %v7481 = vpack.c.b16 %v7325, %v7323
        %v7482 = vpack.c.b16 %v7326, %v7324
        %v7483 = vpack.c.b16 %v7329, %v7327
        %v7484 = vpack.c.b16 %v7330, %v7328
        %v7485 = vpack.c.b16 %v7333, %v7331
        %v7486 = vpack.c.b16 %v7334, %v7332
        %v7487 = vpack.c.b16 %v7337, %v7335
        %v7488 = vpack.c.b16 %v7338, %v7336
        %v7489 = vpack.c.b16 %v7341, %v7339
        %v7490 = vpack.c.b16 %v7342, %v7340
        %v7491 = vpack.c.b16 %v7345, %v7343
        %v7492 = vpack.c.b16 %v7346, %v7344
        %v7493 = vpack.c.b16 %v7349, %v7347
        %v7494 = vpack.c.b16 %v7350, %v7348
        %v7495 = vpack.c.b16 %v7353, %v7351
        %v7496 = vpack.c.b16 %v7354, %v7352
        %v7497 = vpack.c.b16 %v7357, %v7355
        %v7498 = vpack.c.b16 %v7358, %v7356
        %v7499 = vpack.c.b16 %v7361, %v7359
        %v7500 = vpack.c.b16 %v7362, %v7360
        %v7501 = vpack.c.b16 %v7365, %v7363
        %v7502 = vpack.c.b16 %v7366, %v7364
        %v7503 = vpack.c.b16 %v7369, %v7367
        %v7504 = vpack.c.b16 %v7370, %v7368
        %v7505 = vpack.c.b16 %v7373, %v7371
        %v7506 = vpack.c.b16 %v7374, %v7372
        %v7507 = vpack.c.b16 %v7377, %v7375
        %v7508 = vpack.c.b16 %v7378, %v7376
        %v7509 = vpack.c.b16 %v7381, %v7379
        %v7510 = vpack.c.b16 %v7382, %v7380
        %7639 = vmatprep.subr.bf16.mxu0 %v7384
        %7640 = vmatpush1.bf16.msra.mxu0 %v7383
        %7641 = vmatprep.subr.bf16.mxu0 %v7386
        %7642 = vmatpush1.bf16.msra.mxu0 %v7385
        %7643 = vmatprep.subr.bf16.mxu0 %v7388
        %7644 = vmatpush1.bf16.msra.mxu0 %v7387
        %7645 = vmatprep.subr.bf16.mxu0 %v7390
        %7646 = vmatpush1.bf16.msra.mxu0 %v7389
        %7647 = vmatprep.subr.bf16.mxu0 %v7392
        %7648 = vmatpush1.bf16.msra.mxu0 %v7391
        %7649 = vmatprep.subr.bf16.mxu0 %v7394
        %7650 = vmatpush1.bf16.msra.mxu0 %v7393
        %7651 = vmatprep.subr.bf16.mxu0 %v7396
        %7652 = vmatpush1.bf16.msra.mxu0 %v7395
        %7653 = vmatprep.subr.bf16.mxu0 %v7398
        %7654 = vmatpush1.bf16.msra.mxu0 %v7397
        %7655 = vmatprep.subr.bf16.mxu0 %v7400
        %7656 = vmatpush1.bf16.msra.mxu0 %v7399
        %7657 = vmatprep.subr.bf16.mxu0 %v7402
        %7658 = vmatpush1.bf16.msra.mxu0 %v7401
        %7659 = vmatprep.subr.bf16.mxu0 %v7404
        %7660 = vmatpush1.bf16.msra.mxu0 %v7403
        %7661 = vmatprep.subr.bf16.mxu0 %v7406
        %7662 = vmatpush1.bf16.msra.mxu0 %v7405
        %7663 = vmatprep.subr.bf16.mxu0 %v7408
        %7664 = vmatpush1.bf16.msra.mxu0 %v7407
        %7665 = vmatprep.subr.bf16.mxu0 %v7410
        %7666 = vmatpush1.bf16.msra.mxu0 %v7409
        %7667 = vmatprep.subr.bf16.mxu0 %v7412
        %7668 = vmatpush1.bf16.msra.mxu0 %v7411
        %7669 = vmatprep.subr.bf16.mxu0 %v7414
        %7670 = vmatpush1.bf16.msra.mxu0 %v7413
        %7671 = vmatprep.mubr.bf16.mxu0 %v6784
        %7672 = vmatmul.mubr.bf16.gmra.mrb[0].mxu0 %v6783
        %v7673 = vpop.f32.mrb[0].mxu0
        %v7674 = vadd.f32 %v6994, %v7673
        %v7675 = vpop.f32.mrb[0].mxu0
        %v7676 = vadd.f32 %v6998, %v7675
        %v7677 = vpop.f32.mrb[0].mxu0
        %v7678 = vadd.f32 %v6994, %v7677
        %v7679 = vpop.f32.mrb[0].mxu0
        %v7680 = vadd.f32 %v6998, %v7679
        %7681 = vmatprep.mubr.bf16.mxu0 %v6792
        %7682 = vmatmul.mubr.bf16.gmra.mrb[0].mxu0 %v6791
        %v7683 = vpop.f32.mrb[0].mxu0
        %v7684 = vadd.f32 %v6994, %v7683
        %v7685 = vpop.f32.mrb[0].mxu0
        %v7686 = vadd.f32 %v6998, %v7685
        %v7687 = vpop.f32.mrb[0].mxu0
        %v7688 = vadd.f32 %v6994, %v7687
        %v7689 = vpop.f32.mrb[0].mxu0
        %v7690 = vadd.f32 %v6998, %v7689
        %7691 = vmatprep.mubr.bf16.mxu0 %v6800
        %7692 = vmatmul.mubr.bf16.gmra.mrb[0].mxu0 %v6799
        %v7693 = vpop.f32.mrb[0].mxu0
        %v7694 = vadd.f32 %v6994, %v7693
        %v7695 = vpop.f32.mrb[0].mxu0
        %v7696 = vadd.f32 %v6998, %v7695
        %v7697 = vpop.f32.mrb[0].mxu0
        %v7698 = vadd.f32 %v6994, %v7697
        %v7699 = vpop.f32.mrb[0].mxu0
        %v7700 = vadd.f32 %v6998, %v7699
        %7701 = vmatprep.mubr.bf16.mxu0 %v6808
        %7702 = vmatmul.mubr.bf16.gmra.mrb[0].mxu0 %v6807
        %v7703 = vpop.f32.mrb[0].mxu0
        %v7704 = vadd.f32 %v6994, %v7703
        %v7705 = vpop.f32.mrb[0].mxu0
        %v7706 = vadd.f32 %v6998, %v7705
        %v7707 = vpop.f32.mrb[0].mxu0
        %v7708 = vadd.f32 %v6994, %v7707
        %v7709 = vpop.f32.mrb[0].mxu0
        %v7710 = vadd.f32 %v6998, %v7709
        %7711 = vmatprep.mubr.bf16.mxu0 %v6816
        %7712 = vmatmul.mubr.bf16.gmra.mrb[0].mxu0 %v6815
        %v7713 = vpop.f32.mrb[0].mxu0
        %v7714 = vadd.f32 %v6994, %v7713
        %v7715 = vpop.f32.mrb[0].mxu0
        %v7716 = vadd.f32 %v6998, %v7715
        %v7717 = vpop.f32.mrb[0].mxu0
        %v7718 = vadd.f32 %v6994, %v7717
        %v7719 = vpop.f32.mrb[0].mxu0
        %v7720 = vadd.f32 %v6998, %v7719
        %7721 = vmatprep.mubr.bf16.mxu0 %v6824
        %7722 = vmatmul.mubr.bf16.gmra.mrb[0].mxu0 %v6823
        %v7723 = vpop.f32.mrb[0].mxu0
        %v7724 = vadd.f32 %v6994, %v7723
        %v7725 = vpop.f32.mrb[0].mxu0
        %v7726 = vadd.f32 %v6998, %v7725
        %v7727 = vpop.f32.mrb[0].mxu0
        %v7728 = vadd.f32 %v6994, %v7727
        %v7729 = vpop.f32.mrb[0].mxu0
        %v7730 = vadd.f32 %v6998, %v7729
        %7731 = vmatprep.mubr.bf16.mxu0 %v6832
        %7732 = vmatmul.mubr.bf16.gmra.mrb[0].mxu0 %v6831
        %v7733 = vpop.f32.mrb[0].mxu0
        %v7734 = vadd.f32 %v6994, %v7733
        %v7735 = vpop.f32.mrb[0].mxu0
        %v7736 = vadd.f32 %v6998, %v7735
        %v7737 = vpop.f32.mrb[0].mxu0
        %v7738 = vadd.f32 %v6994, %v7737
        %v7739 = vpop.f32.mrb[0].mxu0
        %v7740 = vadd.f32 %v6998, %v7739
        %7741 = vmatprep.mubr.bf16.mxu0 %v6840
        %7742 = vmatmul.mubr.bf16.gmra.mrb[0].mxu0 %v6839
        %v7743 = vpop.f32.mrb[0].mxu0
        %v7744 = vadd.f32 %v6994, %v7743
        %v7745 = vpop.f32.mrb[0].mxu0
        %v7746 = vadd.f32 %v6998, %v7745
        %v7747 = vpop.f32.mrb[0].mxu0
        %v7748 = vadd.f32 %v6994, %v7747
        %v7749 = vpop.f32.mrb[0].mxu0
        %v7750 = vadd.f32 %v6998, %v7749
        %7751 = vmatprep.mubr.bf16.mxu0 %v6848
        %7752 = vmatmul.mubr.bf16.gmra.mrb[0].mxu0 %v6847
        %v7753 = vpop.f32.mrb[0].mxu0
        %v7754 = vadd.f32 %v6994, %v7753
        %v7755 = vpop.f32.mrb[0].mxu0
        %v7756 = vadd.f32 %v6998, %v7755
        %v7757 = vpop.f32.mrb[0].mxu0
        %v7758 = vadd.f32 %v6994, %v7757
        %v7759 = vpop.f32.mrb[0].mxu0
        %v7760 = vadd.f32 %v6998, %v7759
        %7761 = vmatprep.mubr.bf16.mxu0 %v6856
        %7762 = vmatmul.mubr.bf16.gmra.mrb[0].mxu0 %v6855
        %v7763 = vpop.f32.mrb[0].mxu0
        %v7764 = vadd.f32 %v6994, %v7763
        %v7765 = vpop.f32.mrb[0].mxu0
        %v7766 = vadd.f32 %v6998, %v7765
        %v7767 = vpop.f32.mrb[0].mxu0
        %v7768 = vadd.f32 %v6994, %v7767
        %v7769 = vpop.f32.mrb[0].mxu0
        %v7770 = vadd.f32 %v6998, %v7769
        %7771 = vdwg.mxu0
        %7772 = vmatprep.subr.bf16.mxu0 %v7416
        %7773 = vmatpush1.bf16.msra.mxu0 %v7415
        %7774 = vmatprep.subr.bf16.mxu0 %v7418
        %7775 = vmatpush1.bf16.msra.mxu0 %v7417
        %7776 = vmatprep.subr.bf16.mxu0 %v7420
        %7777 = vmatpush1.bf16.msra.mxu0 %v7419
        %7778 = vmatprep.subr.bf16.mxu0 %v7422
        %7779 = vmatpush1.bf16.msra.mxu0 %v7421
        %7780 = vmatprep.subr.bf16.mxu0 %v7424
        %7781 = vmatpush1.bf16.msra.mxu0 %v7423
        %7782 = vmatprep.subr.bf16.mxu0 %v7426
        %7783 = vmatpush1.bf16.msra.mxu0 %v7425
        %7784 = vmatprep.subr.bf16.mxu0 %v7428
        %7785 = vmatpush1.bf16.msra.mxu0 %v7427
        %7786 = vmatprep.subr.bf16.mxu0 %v7430
        %7787 = vmatpush1.bf16.msra.mxu0 %v7429
        %7788 = vmatprep.subr.bf16.mxu0 %v7432
        %7789 = vmatpush1.bf16.msra.mxu0 %v7431
        %7790 = vmatprep.subr.bf16.mxu0 %v7434
        %7791 = vmatpush1.bf16.msra.mxu0 %v7433
        %7792 = vmatprep.subr.bf16.mxu0 %v7436
        %7793 = vmatpush1.bf16.msra.mxu0 %v7435
        %7794 = vmatprep.subr.bf16.mxu0 %v7438
        %7795 = vmatpush1.bf16.msra.mxu0 %v7437
        %7796 = vmatprep.subr.bf16.mxu0 %v7440
        %7797 = vmatpush1.bf16.msra.mxu0 %v7439
        %7798 = vmatprep.subr.bf16.mxu0 %v7442
        %7799 = vmatpush1.bf16.msra.mxu0 %v7441
        %7800 = vmatprep.subr.bf16.mxu0 %v7444
        %7801 = vmatpush1.bf16.msra.mxu0 %v7443
        %7802 = vmatprep.subr.bf16.mxu0 %v7446
        %7803 = vmatpush1.bf16.msra.mxu0 %v7445
        %7804 = vmatprep.mubr.bf16.mxu0 %v6786
        %7805 = vmatmul.mubr.bf16.gmra.mrb[0].mxu0 %v6785
        %v7806 = vpop.f32.mrb[0].mxu0
        %v7807 = vadd.f32 %v7674, %v7806
        %v7808 = vpop.f32.mrb[0].mxu0
        %v7809 = vadd.f32 %v7676, %v7808
        %v7810 = vpop.f32.mrb[0].mxu0
        %v7811 = vadd.f32 %v7678, %v7810
        %v7812 = vpop.f32.mrb[0].mxu0
        %v7813 = vadd.f32 %v7680, %v7812
        %7814 = vmatprep.mubr.bf16.mxu0 %v6794
        %7815 = vmatmul.mubr.bf16.gmra.mrb[0].mxu0 %v6793
        %v7816 = vpop.f32.mrb[0].mxu0
        %v7817 = vadd.f32 %v7684, %v7816
        %v7818 = vpop.f32.mrb[0].mxu0
        %v7819 = vadd.f32 %v7686, %v7818
        %v7820 = vpop.f32.mrb[0].mxu0
        %v7821 = vadd.f32 %v7688, %v7820
        %v7822 = vpop.f32.mrb[0].mxu0
        %v7823 = vadd.f32 %v7690, %v7822
        %7824 = vmatprep.mubr.bf16.mxu0 %v6802
        %7825 = vmatmul.mubr.bf16.gmra.mrb[0].mxu0 %v6801
        %v7826 = vpop.f32.mrb[0].mxu0
        %v7827 = vadd.f32 %v7694, %v7826
        %v7828 = vpop.f32.mrb[0].mxu0
        %v7829 = vadd.f32 %v7696, %v7828
        %v7830 = vpop.f32.mrb[0].mxu0
        %v7831 = vadd.f32 %v7698, %v7830
        %v7832 = vpop.f32.mrb[0].mxu0
        %v7833 = vadd.f32 %v7700, %v7832
        %7834 = vmatprep.mubr.bf16.mxu0 %v6810
        %7835 = vmatmul.mubr.bf16.gmra.mrb[0].mxu0 %v6809
        %v7836 = vpop.f32.mrb[0].mxu0
        %v7837 = vadd.f32 %v7704, %v7836
        %v7838 = vpop.f32.mrb[0].mxu0
        %v7839 = vadd.f32 %v7706, %v7838
        %v7840 = vpop.f32.mrb[0].mxu0
        %v7841 = vadd.f32 %v7708, %v7840
        %v7842 = vpop.f32.mrb[0].mxu0
        %v7843 = vadd.f32 %v7710, %v7842
        %7844 = vmatprep.mubr.bf16.mxu0 %v6818
        %7845 = vmatmul.mubr.bf16.gmra.mrb[0].mxu0 %v6817
        %v7846 = vpop.f32.mrb[0].mxu0
        %v7847 = vadd.f32 %v7714, %v7846
        %v7848 = vpop.f32.mrb[0].mxu0
        %v7849 = vadd.f32 %v7716, %v7848
        %v7850 = vpop.f32.mrb[0].mxu0
        %v7851 = vadd.f32 %v7718, %v7850
        %v7852 = vpop.f32.mrb[0].mxu0
        %v7853 = vadd.f32 %v7720, %v7852
        %7854 = vmatprep.mubr.bf16.mxu0 %v6826
        %7855 = vmatmul.mubr.bf16.gmra.mrb[0].mxu0 %v6825
        %v7856 = vpop.f32.mrb[0].mxu0
        %v7857 = vadd.f32 %v7724, %v7856
        %v7858 = vpop.f32.mrb[0].mxu0
        %v7859 = vadd.f32 %v7726, %v7858
        %v7860 = vpop.f32.mrb[0].mxu0
        %v7861 = vadd.f32 %v7728, %v7860
        %v7862 = vpop.f32.mrb[0].mxu0
        %v7863 = vadd.f32 %v7730, %v7862
        %7864 = vmatprep.mubr.bf16.mxu0 %v6834
        %7865 = vmatmul.mubr.bf16.gmra.mrb[0].mxu0 %v6833
        %v7866 = vpop.f32.mrb[0].mxu0
        %v7867 = vadd.f32 %v7734, %v7866
        %v7868 = vpop.f32.mrb[0].mxu0
        %v7869 = vadd.f32 %v7736, %v7868
        %v7870 = vpop.f32.mrb[0].mxu0
        %v7871 = vadd.f32 %v7738, %v7870
        %v7872 = vpop.f32.mrb[0].mxu0
        %v7873 = vadd.f32 %v7740, %v7872
        %7874 = vmatprep.mubr.bf16.mxu0 %v6842
        %7875 = vmatmul.mubr.bf16.gmra.mrb[0].mxu0 %v6841
        %v7876 = vpop.f32.mrb[0].mxu0
        %v7877 = vadd.f32 %v7744, %v7876
        %v7878 = vpop.f32.mrb[0].mxu0
        %v7879 = vadd.f32 %v7746, %v7878
        %v7880 = vpop.f32.mrb[0].mxu0
        %v7881 = vadd.f32 %v7748, %v7880
        %v7882 = vpop.f32.mrb[0].mxu0
        %v7883 = vadd.f32 %v7750, %v7882
        %7884 = vmatprep.mubr.bf16.mxu0 %v6850
        %7885 = vmatmul.mubr.bf16.gmra.mrb[0].mxu0 %v6849
        %v7886 = vpop.f32.mrb[0].mxu0
        %v7887 = vadd.f32 %v7754, %v7886
        %v7888 = vpop.f32.mrb[0].mxu0
        %v7889 = vadd.f32 %v7756, %v7888
        %v7890 = vpop.f32.mrb[0].mxu0
        %v7891 = vadd.f32 %v7758, %v7890
        %v7892 = vpop.f32.mrb[0].mxu0
        %v7893 = vadd.f32 %v7760, %v7892
        %7894 = vmatprep.mubr.bf16.mxu0 %v6858
        %7895 = vmatmul.mubr.bf16.gmra.mrb[0].mxu0 %v6857
        %v7896 = vpop.f32.mrb[0].mxu0
        %v7897 = vadd.f32 %v7764, %v7896
        %v7898 = vpop.f32.mrb[0].mxu0
        %v7899 = vadd.f32 %v7766, %v7898
        %v7900 = vpop.f32.mrb[0].mxu0
        %v7901 = vadd.f32 %v7768, %v7900
        %v7902 = vpop.f32.mrb[0].mxu0
        %v7903 = vadd.f32 %v7770, %v7902
        %7904 = vdwg.mxu0
        %7905 = vmatprep.subr.bf16.mxu0 %v7448
        %7906 = vmatpush1.bf16.msra.mxu0 %v7447
        %7907 = vmatprep.subr.bf16.mxu0 %v7450
        %7908 = vmatpush1.bf16.msra.mxu0 %v7449
        %7909 = vmatprep.subr.bf16.mxu0 %v7452
        %7910 = vmatpush1.bf16.msra.mxu0 %v7451
        %7911 = vmatprep.subr.bf16.mxu0 %v7454
        %7912 = vmatpush1.bf16.msra.mxu0 %v7453
        %7913 = vmatprep.subr.bf16.mxu0 %v7456
        %7914 = vmatpush1.bf16.msra.mxu0 %v7455
        %7915 = vmatprep.subr.bf16.mxu0 %v7458
        %7916 = vmatpush1.bf16.msra.mxu0 %v7457
        %7917 = vmatprep.subr.bf16.mxu0 %v7460
        %7918 = vmatpush1.bf16.msra.mxu0 %v7459
        %7919 = vmatprep.subr.bf16.mxu0 %v7462
        %7920 = vmatpush1.bf16.msra.mxu0 %v7461
        %7921 = vmatprep.subr.bf16.mxu0 %v7464
        %7922 = vmatpush1.bf16.msra.mxu0 %v7463
        %7923 = vmatprep.subr.bf16.mxu0 %v7466
        %7924 = vmatpush1.bf16.msra.mxu0 %v7465
        %7925 = vmatprep.subr.bf16.mxu0 %v7468
        %7926 = vmatpush1.bf16.msra.mxu0 %v7467
        %7927 = vmatprep.subr.bf16.mxu0 %v7470
        %7928 = vmatpush1.bf16.msra.mxu0 %v7469
        %7929 = vmatprep.subr.bf16.mxu0 %v7472
        %7930 = vmatpush1.bf16.msra.mxu0 %v7471
        %7931 = vmatprep.subr.bf16.mxu0 %v7474
        %7932 = vmatpush1.bf16.msra.mxu0 %v7473
        %7933 = vmatprep.subr.bf16.mxu0 %v7476
        %7934 = vmatpush1.bf16.msra.mxu0 %v7475
        %7935 = vmatprep.subr.bf16.mxu0 %v7478
        %7936 = vmatpush1.bf16.msra.mxu0 %v7477
        %7937 = vmatprep.mubr.bf16.mxu0 %v6788
        %7938 = vmatmul.mubr.bf16.gmra.mrb[0].mxu0 %v6787
        %v7939 = vpop.f32.mrb[0].mxu0
        %v7940 = vadd.f32 %v7807, %v7939
        %v7941 = vpop.f32.mrb[0].mxu0
        %v7942 = vadd.f32 %v7809, %v7941
        %v7943 = vpop.f32.mrb[0].mxu0
        %v7944 = vadd.f32 %v7811, %v7943
        %v7945 = vpop.f32.mrb[0].mxu0
        %v7946 = vadd.f32 %v7813, %v7945
        %7947 = vmatprep.mubr.bf16.mxu0 %v6796
        %7948 = vmatmul.mubr.bf16.gmra.mrb[0].mxu0 %v6795
        %v7949 = vpop.f32.mrb[0].mxu0
        %v7950 = vadd.f32 %v7817, %v7949
        %v7951 = vpop.f32.mrb[0].mxu0
        %v7952 = vadd.f32 %v7819, %v7951
        %v7953 = vpop.f32.mrb[0].mxu0
        %v7954 = vadd.f32 %v7821, %v7953
        %v7955 = vpop.f32.mrb[0].mxu0
        %v7956 = vadd.f32 %v7823, %v7955
        %7957 = vmatprep.mubr.bf16.mxu0 %v6804
        %7958 = vmatmul.mubr.bf16.gmra.mrb[0].mxu0 %v6803
        %v7959 = vpop.f32.mrb[0].mxu0
        %v7960 = vadd.f32 %v7827, %v7959
        %v7961 = vpop.f32.mrb[0].mxu0
        %v7962 = vadd.f32 %v7829, %v7961
        %v7963 = vpop.f32.mrb[0].mxu0
        %v7964 = vadd.f32 %v7831, %v7963
        %v7965 = vpop.f32.mrb[0].mxu0
        %v7966 = vadd.f32 %v7833, %v7965
        %7967 = vmatprep.mubr.bf16.mxu0 %v6812
        %7968 = vmatmul.mubr.bf16.gmra.mrb[0].mxu0 %v6811
        %v7969 = vpop.f32.mrb[0].mxu0
        %v7970 = vadd.f32 %v7837, %v7969
        %v7971 = vpop.f32.mrb[0].mxu0
        %v7972 = vadd.f32 %v7839, %v7971
        %v7973 = vpop.f32.mrb[0].mxu0
        %v7974 = vadd.f32 %v7841, %v7973
        %v7975 = vpop.f32.mrb[0].mxu0
        %v7976 = vadd.f32 %v7843, %v7975
        %7977 = vmatprep.mubr.bf16.mxu0 %v6820
        %7978 = vmatmul.mubr.bf16.gmra.mrb[0].mxu0 %v6819
        %v7979 = vpop.f32.mrb[0].mxu0
        %v7980 = vadd.f32 %v7847, %v7979
        %v7981 = vpop.f32.mrb[0].mxu0
        %v7982 = vadd.f32 %v7849, %v7981
        %v7983 = vpop.f32.mrb[0].mxu0
        %v7984 = vadd.f32 %v7851, %v7983
        %v7985 = vpop.f32.mrb[0].mxu0
        %v7986 = vadd.f32 %v7853, %v7985
        %7987 = vmatprep.mubr.bf16.mxu0 %v6828
        %7988 = vmatmul.mubr.bf16.gmra.mrb[0].mxu0 %v6827
        %v7989 = vpop.f32.mrb[0].mxu0
        %v7990 = vadd.f32 %v7857, %v7989
        %v7991 = vpop.f32.mrb[0].mxu0
        %v7992 = vadd.f32 %v7859, %v7991
        %v7993 = vpop.f32.mrb[0].mxu0
        %v7994 = vadd.f32 %v7861, %v7993
        %v7995 = vpop.f32.mrb[0].mxu0
        %v7996 = vadd.f32 %v7863, %v7995
        %7997 = vmatprep.mubr.bf16.mxu0 %v6836
        %7998 = vmatmul.mubr.bf16.gmra.mrb[0].mxu0 %v6835
        %v7999 = vpop.f32.mrb[0].mxu0
        %v8000 = vadd.f32 %v7867, %v7999
        %v8001 = vpop.f32.mrb[0].mxu0
        %v8002 = vadd.f32 %v7869, %v8001
        %v8003 = vpop.f32.mrb[0].mxu0
        %v8004 = vadd.f32 %v7871, %v8003
        %v8005 = vpop.f32.mrb[0].mxu0
        %v8006 = vadd.f32 %v7873, %v8005
        %8007 = vmatprep.mubr.bf16.mxu0 %v6844
        %8008 = vmatmul.mubr.bf16.gmra.mrb[0].mxu0 %v6843
        %v8009 = vpop.f32.mrb[0].mxu0
        %v8010 = vadd.f32 %v7877, %v8009
        %v8011 = vpop.f32.mrb[0].mxu0
        %v8012 = vadd.f32 %v7879, %v8011
        %v8013 = vpop.f32.mrb[0].mxu0
        %v8014 = vadd.f32 %v7881, %v8013
        %v8015 = vpop.f32.mrb[0].mxu0
        %v8016 = vadd.f32 %v7883, %v8015
        %8017 = vmatprep.mubr.bf16.mxu0 %v6852
        %8018 = vmatmul.mubr.bf16.gmra.mrb[0].mxu0 %v6851
        %v8019 = vpop.f32.mrb[0].mxu0
        %v8020 = vadd.f32 %v7887, %v8019
        %v8021 = vpop.f32.mrb[0].mxu0
        %v8022 = vadd.f32 %v7889, %v8021
        %v8023 = vpop.f32.mrb[0].mxu0
        %v8024 = vadd.f32 %v7891, %v8023
        %v8025 = vpop.f32.mrb[0].mxu0
        %v8026 = vadd.f32 %v7893, %v8025
        %8027 = vmatprep.mubr.bf16.mxu0 %v6860
        %8028 = vmatmul.mubr.bf16.gmra.mrb[0].mxu0 %v6859
        %v8029 = vpop.f32.mrb[0].mxu0
        %v8030 = vadd.f32 %v7897, %v8029
        %v8031 = vpop.f32.mrb[0].mxu0
        %v8032 = vadd.f32 %v7899, %v8031
        %v8033 = vpop.f32.mrb[0].mxu0
        %v8034 = vadd.f32 %v7901, %v8033
        %v8035 = vpop.f32.mrb[0].mxu0
        %v8036 = vadd.f32 %v7903, %v8035
        %8037 = vdwg.mxu0
        %8038 = vmatprep.subr.bf16.mxu0 %v7480
        %8039 = vmatpush1.bf16.msra.mxu0 %v7479
        %8040 = vmatprep.subr.bf16.mxu0 %v7482
        %8041 = vmatpush1.bf16.msra.mxu0 %v7481
        %8042 = vmatprep.subr.bf16.mxu0 %v7484
        %8043 = vmatpush1.bf16.msra.mxu0 %v7483
        %8044 = vmatprep.subr.bf16.mxu0 %v7486
        %8045 = vmatpush1.bf16.msra.mxu0 %v7485
        %8046 = vmatprep.subr.bf16.mxu0 %v7488
        %8047 = vmatpush1.bf16.msra.mxu0 %v7487
        %8048 = vmatprep.subr.bf16.mxu0 %v7490
        %8049 = vmatpush1.bf16.msra.mxu0 %v7489
        %8050 = vmatprep.subr.bf16.mxu0 %v7492
        %8051 = vmatpush1.bf16.msra.mxu0 %v7491
        %8052 = vmatprep.subr.bf16.mxu0 %v7494
        %8053 = vmatpush1.bf16.msra.mxu0 %v7493
        %8054 = vmatprep.subr.bf16.mxu0 %v7496
        %8055 = vmatpush1.bf16.msra.mxu0 %v7495
        %8056 = vmatprep.subr.bf16.mxu0 %v7498
        %8057 = vmatpush1.bf16.msra.mxu0 %v7497
        %8058 = vmatprep.subr.bf16.mxu0 %v7500
        %8059 = vmatpush1.bf16.msra.mxu0 %v7499
        %8060 = vmatprep.subr.bf16.mxu0 %v7502
        %8061 = vmatpush1.bf16.msra.mxu0 %v7501
        %8062 = vmatprep.subr.bf16.mxu0 %v7504
        %8063 = vmatpush1.bf16.msra.mxu0 %v7503
        %8064 = vmatprep.subr.bf16.mxu0 %v7506
        %8065 = vmatpush1.bf16.msra.mxu0 %v7505
        %8066 = vmatprep.subr.bf16.mxu0 %v7508
        %8067 = vmatpush1.bf16.msra.mxu0 %v7507
        %8068 = vmatprep.subr.bf16.mxu0 %v7510
        %8069 = vmatpush1.bf16.msra.mxu0 %v7509
        %8070 = vmatprep.mubr.bf16.mxu0 %v6790
        %8071 = vmatmul.mubr.bf16.gmra.mrb[0].mxu0 %v6789
        %v8072 = vpop.f32.mrb[0].mxu0
        %v8073 = vadd.f32 %v7940, %v8072
        %v8074 = vpop.f32.mrb[0].mxu0
        %v8075 = vadd.f32 %v7942, %v8074
        %v8076 = vpop.f32.mrb[0].mxu0
        %v8077 = vadd.f32 %v7944, %v8076
        %v8078 = vpop.f32.mrb[0].mxu0
        %v8079 = vadd.f32 %v7946, %v8078
        %8080 = vmatprep.mubr.bf16.mxu0 %v6798
        %8081 = vmatmul.mubr.bf16.gmra.mrb[0].mxu0 %v6797
        %v8082 = vpop.f32.mrb[0].mxu0
        %v8083 = vadd.f32 %v7950, %v8082
        %v8084 = vpop.f32.mrb[0].mxu0
        %v8085 = vadd.f32 %v7952, %v8084
        %v8086 = vpop.f32.mrb[0].mxu0
        %v8087 = vadd.f32 %v7954, %v8086
        %v8088 = vpop.f32.mrb[0].mxu0
        %v8089 = vadd.f32 %v7956, %v8088
        %8090 = vmatprep.mubr.bf16.mxu0 %v6806
        %8091 = vmatmul.mubr.bf16.gmra.mrb[0].mxu0 %v6805
        %v8092 = vpop.f32.mrb[0].mxu0
        %v8093 = vadd.f32 %v7960, %v8092
        %v8094 = vpop.f32.mrb[0].mxu0
        %v8095 = vadd.f32 %v7962, %v8094
        %v8096 = vpop.f32.mrb[0].mxu0
        %v8097 = vadd.f32 %v7964, %v8096
        %v8098 = vpop.f32.mrb[0].mxu0
        %v8099 = vadd.f32 %v7966, %v8098
        %8100 = vmatprep.mubr.bf16.mxu0 %v6814
        %8101 = vmatmul.mubr.bf16.gmra.mrb[0].mxu0 %v6813
        %v8102 = vpop.f32.mrb[0].mxu0
        %v8103 = vadd.f32 %v7970, %v8102
        %v8104 = vpop.f32.mrb[0].mxu0
        %v8105 = vadd.f32 %v7972, %v8104
        %v8106 = vpop.f32.mrb[0].mxu0
        %v8107 = vadd.f32 %v7974, %v8106
        %v8108 = vpop.f32.mrb[0].mxu0
        %v8109 = vadd.f32 %v7976, %v8108
        %8110 = vmatprep.mubr.bf16.mxu0 %v6822
        %8111 = vmatmul.mubr.bf16.gmra.mrb[0].mxu0 %v6821
        %v8112 = vpop.f32.mrb[0].mxu0
        %v8113 = vadd.f32 %v7980, %v8112
        %v8114 = vpop.f32.mrb[0].mxu0
        %v8115 = vadd.f32 %v7982, %v8114
        %v8116 = vpop.f32.mrb[0].mxu0
        %v8117 = vadd.f32 %v7984, %v8116
        %v8118 = vpop.f32.mrb[0].mxu0
        %v8119 = vadd.f32 %v7986, %v8118
        %8120 = vmatprep.mubr.bf16.mxu0 %v6830
        %8121 = vmatmul.mubr.bf16.gmra.mrb[0].mxu0 %v6829
        %v8122 = vpop.f32.mrb[0].mxu0
        %v8123 = vadd.f32 %v7990, %v8122
        %v8124 = vpop.f32.mrb[0].mxu0
        %v8125 = vadd.f32 %v7992, %v8124
        %v8126 = vpop.f32.mrb[0].mxu0
        %v8127 = vadd.f32 %v7994, %v8126
        %v8128 = vpop.f32.mrb[0].mxu0
        %v8129 = vadd.f32 %v7996, %v8128
        %8130 = vmatprep.mubr.bf16.mxu0 %v6838
        %8131 = vmatmul.mubr.bf16.gmra.mrb[0].mxu0 %v6837
        %v8132 = vpop.f32.mrb[0].mxu0
        %v8133 = vadd.f32 %v8000, %v8132
        %v8134 = vpop.f32.mrb[0].mxu0
        %v8135 = vadd.f32 %v8002, %v8134
        %v8136 = vpop.f32.mrb[0].mxu0
        %v8137 = vadd.f32 %v8004, %v8136
        %v8138 = vpop.f32.mrb[0].mxu0
        %v8139 = vadd.f32 %v8006, %v8138
        %8140 = vmatprep.mubr.bf16.mxu0 %v6846
        %8141 = vmatmul.mubr.bf16.gmra.mrb[0].mxu0 %v6845
        %v8142 = vpop.f32.mrb[0].mxu0
        %v8143 = vadd.f32 %v8010, %v8142
        %v8144 = vpop.f32.mrb[0].mxu0
        %v8145 = vadd.f32 %v8012, %v8144
        %v8146 = vpop.f32.mrb[0].mxu0
        %v8147 = vadd.f32 %v8014, %v8146
        %v8148 = vpop.f32.mrb[0].mxu0
        %v8149 = vadd.f32 %v8016, %v8148
        %8150 = vmatprep.mubr.bf16.mxu0 %v6854
        %8151 = vmatmul.mubr.bf16.gmra.mrb[0].mxu0 %v6853
        %v8152 = vpop.f32.mrb[0].mxu0
        %v8153 = vadd.f32 %v8020, %v8152
        %v8154 = vpop.f32.mrb[0].mxu0
        %v8155 = vadd.f32 %v8022, %v8154
        %v8156 = vpop.f32.mrb[0].mxu0
        %v8157 = vadd.f32 %v8024, %v8156
        %v8158 = vpop.f32.mrb[0].mxu0
        %v8159 = vadd.f32 %v8026, %v8158
        %8160 = vmatprep.mubr.bf16.mxu0 %v6862
        %8161 = vmatmul.mubr.bf16.gmra.mrb[0].mxu0 %v6861
        %v8162 = vpop.f32.mrb[0].mxu0
        %v8163 = vadd.f32 %v8030, %v8162
        %v8164 = vpop.f32.mrb[0].mxu0
        %v8165 = vadd.f32 %v8032, %v8164
        %v8166 = vpop.f32.mrb[0].mxu0
        %v8167 = vadd.f32 %v8034, %v8166
        %v8168 = vpop.f32.mrb[0].mxu0
        %v8169 = vadd.f32 %v8036, %v8168
        %8170 = vdwg.mxu0
        %v8171 = vadd.f32 %v3686, %v8073
        %v8172 = vadd.f32 %v3687, %v8075
        %v8173 = vadd.f32 %v3688, %v8077
        %v8174 = vadd.f32 %v3689, %v8079
        %v8175 = vadd.f32 %v3690, %v8083
        %v8176 = vadd.f32 %v3691, %v8085
        %v8177 = vadd.f32 %v3692, %v8087
        %v8178 = vadd.f32 %v3693, %v8089
        %v8179 = vadd.f32 %v3694, %v8093
        %v8180 = vadd.f32 %v3695, %v8095
        %v8181 = vadd.f32 %v3696, %v8097
        %v8182 = vadd.f32 %v3697, %v8099
        %v8183 = vadd.f32 %v3698, %v8103
        %v8184 = vadd.f32 %v3699, %v8105
        %v8185 = vadd.f32 %v3700, %v8107
        %v8186 = vadd.f32 %v3701, %v8109
        %v8187 = vadd.f32 %v3702, %v8113
        %v8188 = vadd.f32 %v3703, %v8115
        %v8189 = vadd.f32 %v3704, %v8117
        %v8190 = vadd.f32 %v3705, %v8119
        %v8191 = vadd.f32 %v3706, %v8123
        %v8192 = vadd.f32 %v3707, %v8125
        %v8193 = vadd.f32 %v3708, %v8127
        %v8194 = vadd.f32 %v3709, %v8129
        %v8195 = vadd.f32 %v3710, %v8133
        %v8196 = vadd.f32 %v3711, %v8135
        %v8197 = vadd.f32 %v3712, %v8137
        %v8198 = vadd.f32 %v3713, %v8139
        %v8199 = vadd.f32 %v3714, %v8143
        %v8200 = vadd.f32 %v3715, %v8145
        %v8201 = vadd.f32 %v3716, %v8147
        %v8202 = vadd.f32 %v3717, %v8149
        %v8203 = vadd.f32 %v3718, %v8153
        %v8204 = vadd.f32 %v3719, %v8155
        %v8205 = vadd.f32 %v3720, %v8157
        %v8206 = vadd.f32 %v3721, %v8159
        %v8207 = vadd.f32 %v3722, %v8163
        %v8208 = vadd.f32 %v3723, %v8165
        %v8209 = vadd.f32 %v3724, %v8167
        %v8210 = vadd.f32 %v3725, %v8169
        %p8211 = scmp.lt.s32.totalorder %s38, 1
        // Predicated region
        $region81: #{tpu_custom_call.1} parent=47 // pred_check
          %p8212 = pneg %p8211
        $region82: #{tpu_custom_call.1} parent=47 // pred_check_branch
          %8214 = sbr.rel (%p8212) target = $region84
        $region83: #{tpu_custom_call.1} parent=47 // pred_region
          %8215 = vst [vmem:[%s513] sm:$0xff] %v8171
          %8216 = vst [vmem:[%s513 + $0x8] sm:$0xff] %v8172
          %8217 = vst [vmem:[%s513 + $0x10] sm:$0xff] %v8173
          %8218 = vst [vmem:[%s513 + $0x18] sm:$0xff] %v8174
          %8219 = vst [vmem:[%s513 + $0x20] sm:$0xff] %v8175
          %8220 = vst [vmem:[%s513 + $0x28] sm:$0xff] %v8176
          %8221 = vst [vmem:[%s513 + $0x30] sm:$0xff] %v8177
          %8222 = vst [vmem:[%s513 + $0x38] sm:$0xff] %v8178
          %8223 = vst [vmem:[%s513 + $0x40] sm:$0xff] %v8179
          %8224 = vst [vmem:[%s513 + $0x48] sm:$0xff] %v8180
          %8225 = vst [vmem:[%s513 + $0x50] sm:$0xff] %v8181
          %8226 = vst [vmem:[%s513 + $0x58] sm:$0xff] %v8182
          %8227 = vst [vmem:[%s513 + $0x60] sm:$0xff] %v8183
          %8228 = vst [vmem:[%s513 + $0x68] sm:$0xff] %v8184
          %8229 = vst [vmem:[%s513 + $0x70] sm:$0xff] %v8185
          %8230 = vst [vmem:[%s513 + $0x78] sm:$0xff] %v8186
          %8231 = vst [vmem:[%s513 + $0x80] sm:$0xff] %v8187
          %8232 = vst [vmem:[%s513 + $0x88] sm:$0xff] %v8188
          %8233 = vst [vmem:[%s513 + $0x90] sm:$0xff] %v8189
          %8234 = vst [vmem:[%s513 + $0x98] sm:$0xff] %v8190
          %8235 = vst [vmem:[%s513 + $0xa0] sm:$0xff] %v8191
          %8236 = vst [vmem:[%s513 + $0xa8] sm:$0xff] %v8192
          %8237 = vst [vmem:[%s513 + $0xb0] sm:$0xff] %v8193
          %8238 = vst [vmem:[%s513 + $0xb8] sm:$0xff] %v8194
          %8239 = vst [vmem:[%s513 + $0xc0] sm:$0xff] %v8195
          %8240 = vst [vmem:[%s513 + $0xc8] sm:$0xff] %v8196
          %8241 = vst [vmem:[%s513 + $0xd0] sm:$0xff] %v8197
          %8242 = vst [vmem:[%s513 + $0xd8] sm:$0xff] %v8198
          %8243 = vst [vmem:[%s513 + $0xe0] sm:$0xff] %v8199
          %8244 = vst [vmem:[%s513 + $0xe8] sm:$0xff] %v8200
          %8245 = vst [vmem:[%s513 + $0xf0] sm:$0xff] %v8201
          %8246 = vst [vmem:[%s513 + $0xf8] sm:$0xff] %v8202
          %8247 = vst [vmem:[%s513 + $0x100] sm:$0xff] %v8203
          %8248 = vst [vmem:[%s513 + $0x108] sm:$0xff] %v8204
          %8249 = vst [vmem:[%s513 + $0x110] sm:$0xff] %v8205
          %8250 = vst [vmem:[%s513 + $0x118] sm:$0xff] %v8206
          %8251 = vst [vmem:[%s513 + $0x120] sm:$0xff] %v8207
          %8252 = vst [vmem:[%s513 + $0x128] sm:$0xff] %v8208
          %8253 = vst [vmem:[%s513 + $0x130] sm:$0xff] %v8209
          %8254 = vst [vmem:[%s513 + $0x138] sm:$0xff] %v8210
        $region84: #{tpu_custom_call.1} parent=47 // pred_fallthru
          _
        %p8255 = scmp.eq.s32.totalorder %s38, 1
        // Predicated region
        $region85: #{tpu_custom_call.1} parent=47 // pred_check
          %p8256 = pneg %p8255
        $region86: #{tpu_custom_call.1} parent=47 // pred_check_branch
          %8258 = sbr.rel (%p8256) target = $region88
        $region87: #{tpu_custom_call.1} parent=47 // pred_region
          %v8259 = vld [vmem:[#allocation13] sm:$0xf]
          %v8260 = vadd.f32 %v8171, %v8172
          %8261 = vadd.xlane.f32.xlu0 %v8260
          %v8262 = vpop.xlane.xlu0 %8261
          %v8263 = vadd.f32 %v8173, %v8174
          %8264 = vadd.xlane.f32.xlu0 %v8263
          %v8265 = vpop.xlane.xlu0 %8264
          %v8266 = vadd.f32 %v8175, %v8176
          %8267 = vadd.xlane.f32.xlu0 %v8266
          %v8268 = vpop.xlane.xlu0 %8267
          %v8269 = vadd.f32 %v8177, %v8178
          %8270 = vadd.xlane.f32.xlu0 %v8269
          %v8271 = vpop.xlane.xlu0 %8270
          %v8272 = vadd.f32 %v8179, %v8180
          %8273 = vadd.xlane.f32.xlu0 %v8272
          %v8274 = vpop.xlane.xlu0 %8273
          %v8275 = vadd.f32 %v8181, %v8182
          %8276 = vadd.xlane.f32.xlu0 %v8275
          %v8277 = vpop.xlane.xlu0 %8276
          %v8278 = vadd.f32 %v8183, %v8184
          %8279 = vadd.xlane.f32.xlu0 %v8278
          %v8280 = vpop.xlane.xlu0 %8279
          %v8281 = vadd.f32 %v8185, %v8186
          %8282 = vadd.xlane.f32.xlu0 %v8281
          %v8283 = vpop.xlane.xlu0 %8282
          %v8284 = vadd.f32 %v8187, %v8188
          %8285 = vadd.xlane.f32.xlu0 %v8284
          %v8286 = vpop.xlane.xlu0 %8285
          %v8287 = vadd.f32 %v8189, %v8190
          %8288 = vadd.xlane.f32.xlu0 %v8287
          %v8289 = vpop.xlane.xlu0 %8288
          %v8290 = vadd.f32 %v8191, %v8192
          %8291 = vadd.xlane.f32.xlu0 %v8290
          %v8292 = vpop.xlane.xlu0 %8291
          %v8293 = vadd.f32 %v8193, %v8194
          %8294 = vadd.xlane.f32.xlu0 %v8293
          %v8295 = vpop.xlane.xlu0 %8294
          %v8296 = vadd.f32 %v8195, %v8196
          %8297 = vadd.xlane.f32.xlu0 %v8296
          %v8298 = vpop.xlane.xlu0 %8297
          %v8299 = vadd.f32 %v8197, %v8198
          %8300 = vadd.xlane.f32.xlu0 %v8299
          %v8301 = vpop.xlane.xlu0 %8300
          %v8302 = vadd.f32 %v8199, %v8200
          %8303 = vadd.xlane.f32.xlu0 %v8302
          %v8304 = vpop.xlane.xlu0 %8303
          %v8305 = vadd.f32 %v8201, %v8202
          %8306 = vadd.xlane.f32.xlu0 %v8305
          %v8307 = vpop.xlane.xlu0 %8306
          %v8308 = vadd.f32 %v8203, %v8204
          %8309 = vadd.xlane.f32.xlu0 %v8308
          %v8310 = vpop.xlane.xlu0 %8309
          %v8311 = vadd.f32 %v8205, %v8206
          %8312 = vadd.xlane.f32.xlu0 %v8311
          %v8313 = vpop.xlane.xlu0 %8312
          %v8314 = vadd.f32 %v8207, %v8208
          %8315 = vadd.xlane.f32.xlu0 %v8314
          %v8316 = vpop.xlane.xlu0 %8315
          %v8317 = vadd.f32 %v8209, %v8210
          %8318 = vadd.xlane.f32.xlu0 %v8317
          %v8319 = vpop.xlane.xlu0 %8318
          %v8320 = vmul.f32 %v8262, %v729
          %v8321 = vmul.f32 %v8265, %v729
          %v8322 = vmul.f32 %v8268, %v729
          %v8323 = vmul.f32 %v8271, %v729
          %v8324 = vmul.f32 %v8274, %v729
          %v8325 = vmul.f32 %v8277, %v729
          %v8326 = vmul.f32 %v8280, %v729
          %v8327 = vmul.f32 %v8283, %v729
          %v8328 = vmul.f32 %v8286, %v729
          %v8329 = vmul.f32 %v8289, %v729
          %v8330 = vmul.f32 %v8292, %v729
          %v8331 = vmul.f32 %v8295, %v729
          %v8332 = vmul.f32 %v8298, %v729
          %v8333 = vmul.f32 %v8301, %v729
          %v8334 = vmul.f32 %v8304, %v729
          %v8335 = vmul.f32 %v8307, %v729
          %v8336 = vmul.f32 %v8310, %v729
          %v8337 = vmul.f32 %v8313, %v729
          %v8338 = vmul.f32 %v8316, %v729
          %v8339 = vmul.f32 %v8319, %v729
          %v8340 = vsub.f32 %v8171, %v8320
          %v8341 = vsub.f32 %v8172, %v8320
          %v8342 = vsub.f32 %v8173, %v8321
          %v8343 = vsub.f32 %v8174, %v8321
          %v8344 = vsub.f32 %v8175, %v8322
          %v8345 = vsub.f32 %v8176, %v8322
          %v8346 = vsub.f32 %v8177, %v8323
          %v8347 = vsub.f32 %v8178, %v8323
          %v8348 = vsub.f32 %v8179, %v8324
          %v8349 = vsub.f32 %v8180, %v8324
          %v8350 = vsub.f32 %v8181, %v8325
          %v8351 = vsub.f32 %v8182, %v8325
          %v8352 = vsub.f32 %v8183, %v8326
          %v8353 = vsub.f32 %v8184, %v8326
          %v8354 = vsub.f32 %v8185, %v8327
          %v8355 = vsub.f32 %v8186, %v8327
          %v8356 = vsub.f32 %v8187, %v8328
          %v8357 = vsub.f32 %v8188, %v8328
          %v8358 = vsub.f32 %v8189, %v8329
          %v8359 = vsub.f32 %v8190, %v8329
          %v8360 = vsub.f32 %v8191, %v8330
          %v8361 = vsub.f32 %v8192, %v8330
          %v8362 = vsub.f32 %v8193, %v8331
          %v8363 = vsub.f32 %v8194, %v8331
          %v8364 = vsub.f32 %v8195, %v8332
          %v8365 = vsub.f32 %v8196, %v8332
          %v8366 = vsub.f32 %v8197, %v8333
          %v8367 = vsub.f32 %v8198, %v8333
          %v8368 = vsub.f32 %v8199, %v8334
          %v8369 = vsub.f32 %v8200, %v8334
          %v8370 = vsub.f32 %v8201, %v8335
          %v8371 = vsub.f32 %v8202, %v8335
          %v8372 = vsub.f32 %v8203, %v8336
          %v8373 = vsub.f32 %v8204, %v8336
          %v8374 = vsub.f32 %v8205, %v8337
          %v8375 = vsub.f32 %v8206, %v8337
          %v8376 = vsub.f32 %v8207, %v8338
          %v8377 = vsub.f32 %v8208, %v8338
          %v8378 = vsub.f32 %v8209, %v8339
          %v8379 = vsub.f32 %v8210, %v8339
          %v8380 = vmul.f32 %v8340, %v8340
          %v8381 = vmul.f32 %v8341, %v8341
          %v8382 = vmul.f32 %v8342, %v8342
          %v8383 = vmul.f32 %v8343, %v8343
          %v8384 = vmul.f32 %v8344, %v8344
          %v8385 = vmul.f32 %v8345, %v8345
          %v8386 = vmul.f32 %v8346, %v8346
          %v8387 = vmul.f32 %v8347, %v8347
          %v8388 = vmul.f32 %v8348, %v8348
          %v8389 = vmul.f32 %v8349, %v8349
          %v8390 = vmul.f32 %v8350, %v8350
          %v8391 = vmul.f32 %v8351, %v8351
          %v8392 = vmul.f32 %v8352, %v8352
          %v8393 = vmul.f32 %v8353, %v8353
          %v8394 = vmul.f32 %v8354, %v8354
          %v8395 = vmul.f32 %v8355, %v8355
          %v8396 = vmul.f32 %v8356, %v8356
          %v8397 = vmul.f32 %v8357, %v8357
          %v8398 = vmul.f32 %v8358, %v8358
          %v8399 = vmul.f32 %v8359, %v8359
          %v8400 = vmul.f32 %v8360, %v8360
          %v8401 = vmul.f32 %v8361, %v8361
          %v8402 = vmul.f32 %v8362, %v8362
          %v8403 = vmul.f32 %v8363, %v8363
          %v8404 = vmul.f32 %v8364, %v8364
          %v8405 = vmul.f32 %v8365, %v8365
          %v8406 = vmul.f32 %v8366, %v8366
          %v8407 = vmul.f32 %v8367, %v8367
          %v8408 = vmul.f32 %v8368, %v8368
          %v8409 = vmul.f32 %v8369, %v8369
          %v8410 = vmul.f32 %v8370, %v8370
          %v8411 = vmul.f32 %v8371, %v8371
          %v8412 = vmul.f32 %v8372, %v8372
          %v8413 = vmul.f32 %v8373, %v8373
          %v8414 = vmul.f32 %v8374, %v8374
          %v8415 = vmul.f32 %v8375, %v8375
          %v8416 = vmul.f32 %v8376, %v8376
          %v8417 = vmul.f32 %v8377, %v8377
          %v8418 = vmul.f32 %v8378, %v8378
          %v8419 = vmul.f32 %v8379, %v8379
          %v8420 = vadd.f32 %v8380, %v8381
          %8421 = vadd.xlane.f32.xlu0 %v8420
          %v8422 = vpop.xlane.xlu0 %8421
          %v8423 = vadd.f32 %v8382, %v8383
          %8424 = vadd.xlane.f32.xlu0 %v8423
          %v8425 = vpop.xlane.xlu0 %8424
          %v8426 = vadd.f32 %v8384, %v8385
          %8427 = vadd.xlane.f32.xlu0 %v8426
          %v8428 = vpop.xlane.xlu0 %8427
          %v8429 = vadd.f32 %v8386, %v8387
          %8430 = vadd.xlane.f32.xlu0 %v8429
          %v8431 = vpop.xlane.xlu0 %8430
          %v8432 = vadd.f32 %v8388, %v8389
          %8433 = vadd.xlane.f32.xlu0 %v8432
          %v8434 = vpop.xlane.xlu0 %8433
          %v8435 = vadd.f32 %v8390, %v8391
          %8436 = vadd.xlane.f32.xlu0 %v8435
          %v8437 = vpop.xlane.xlu0 %8436
          %v8438 = vadd.f32 %v8392, %v8393
          %8439 = vadd.xlane.f32.xlu0 %v8438
          %v8440 = vpop.xlane.xlu0 %8439
          %v8441 = vadd.f32 %v8394, %v8395
          %8442 = vadd.xlane.f32.xlu0 %v8441
          %v8443 = vpop.xlane.xlu0 %8442
          %v8444 = vadd.f32 %v8396, %v8397
          %8445 = vadd.xlane.f32.xlu0 %v8444
          %v8446 = vpop.xlane.xlu0 %8445
          %v8447 = vadd.f32 %v8398, %v8399
          %8448 = vadd.xlane.f32.xlu0 %v8447
          %v8449 = vpop.xlane.xlu0 %8448
          %v8450 = vadd.f32 %v8400, %v8401
          %8451 = vadd.xlane.f32.xlu0 %v8450
          %v8452 = vpop.xlane.xlu0 %8451
          %v8453 = vadd.f32 %v8402, %v8403
          %8454 = vadd.xlane.f32.xlu0 %v8453
          %v8455 = vpop.xlane.xlu0 %8454
          %v8456 = vadd.f32 %v8404, %v8405
          %8457 = vadd.xlane.f32.xlu0 %v8456
          %v8458 = vpop.xlane.xlu0 %8457
          %v8459 = vadd.f32 %v8406, %v8407
          %8460 = vadd.xlane.f32.xlu0 %v8459
          %v8461 = vpop.xlane.xlu0 %8460
          %v8462 = vadd.f32 %v8408, %v8409
          %8463 = vadd.xlane.f32.xlu0 %v8462
          %v8464 = vpop.xlane.xlu0 %8463
          %v8465 = vadd.f32 %v8410, %v8411
          %8466 = vadd.xlane.f32.xlu0 %v8465
          %v8467 = vpop.xlane.xlu0 %8466
          %v8468 = vadd.f32 %v8412, %v8413
          %8469 = vadd.xlane.f32.xlu0 %v8468
          %v8470 = vpop.xlane.xlu0 %8469
          %v8471 = vadd.f32 %v8414, %v8415
          %8472 = vadd.xlane.f32.xlu0 %v8471
          %v8473 = vpop.xlane.xlu0 %8472
          %v8474 = vadd.f32 %v8416, %v8417
          %8475 = vadd.xlane.f32.xlu0 %v8474
          %v8476 = vpop.xlane.xlu0 %8475
          %v8477 = vadd.f32 %v8418, %v8419
          %8478 = vadd.xlane.f32.xlu0 %v8477
          %v8479 = vpop.xlane.xlu0 %8478
          %v8480 = vmul.f32 %v8422, %v729
          %v8481 = vmul.f32 %v8425, %v729
          %v8482 = vmul.f32 %v8428, %v729
          %v8483 = vmul.f32 %v8431, %v729
          %v8484 = vmul.f32 %v8434, %v729
          %v8485 = vmul.f32 %v8437, %v729
          %v8486 = vmul.f32 %v8440, %v729
          %v8487 = vmul.f32 %v8443, %v729
          %v8488 = vmul.f32 %v8446, %v729
          %v8489 = vmul.f32 %v8449, %v729
          %v8490 = vmul.f32 %v8452, %v729
          %v8491 = vmul.f32 %v8455, %v729
          %v8492 = vmul.f32 %v8458, %v729
          %v8493 = vmul.f32 %v8461, %v729
          %v8494 = vmul.f32 %v8464, %v729
          %v8495 = vmul.f32 %v8467, %v729
          %v8496 = vmul.f32 %v8470, %v729
          %v8497 = vmul.f32 %v8473, %v729
          %v8498 = vmul.f32 %v8476, %v729
          %v8499 = vmul.f32 %v8479, %v729
          %v8500 = vadd.f32 %v8480, 1e-05
          %v8501 = vadd.f32 %v8481, 1e-05
          %v8502 = vadd.f32 %v8482, 1e-05
          %v8503 = vadd.f32 %v8483, 1e-05
          %v8504 = vadd.f32 %v8484, 1e-05
          %v8505 = vadd.f32 %v8485, 1e-05
          %v8506 = vadd.f32 %v8486, 1e-05
          %v8507 = vadd.f32 %v8487, 1e-05
          %v8508 = vadd.f32 %v8488, 1e-05
          %v8509 = vadd.f32 %v8489, 1e-05
          %v8510 = vadd.f32 %v8490, 1e-05
          %v8511 = vadd.f32 %v8491, 1e-05
          %v8512 = vadd.f32 %v8492, 1e-05
          %v8513 = vadd.f32 %v8493, 1e-05
          %v8514 = vadd.f32 %v8494, 1e-05
          %v8515 = vadd.f32 %v8495, 1e-05
          %v8516 = vadd.f32 %v8496, 1e-05
          %v8517 = vadd.f32 %v8497, 1e-05
          %v8518 = vadd.f32 %v8498, 1e-05
          %v8519 = vadd.f32 %v8499, 1e-05
          %v8520 = vrsqrt.pop %v8500
          %v8521 = vrsqrt.pop %v8501
          %v8522 = vrsqrt.pop %v8502
          %v8523 = vrsqrt.pop %v8503
          %v8524 = vrsqrt.pop %v8504
          %v8525 = vrsqrt.pop %v8505
          %v8526 = vrsqrt.pop %v8506
          %v8527 = vrsqrt.pop %v8507
          %v8528 = vrsqrt.pop %v8508
          %v8529 = vrsqrt.pop %v8509
          %v8530 = vrsqrt.pop %v8510
          %v8531 = vrsqrt.pop %v8511
          %v8532 = vrsqrt.pop %v8512
          %v8533 = vrsqrt.pop %v8513
          %v8534 = vrsqrt.pop %v8514
          %v8535 = vrsqrt.pop %v8515
          %v8536 = vrsqrt.pop %v8516
          %v8537 = vrsqrt.pop %v8517
          %v8538 = vrsqrt.pop %v8518
          %v8539 = vrsqrt.pop %v8519
          %v8540 = vmul.f32 %v8340, %v8520
          %v8541 = vmul.f32 %v8341, %v8520
          %v8542 = vmul.f32 %v8342, %v8521
          %v8543 = vmul.f32 %v8343, %v8521
          %v8544 = vmul.f32 %v8344, %v8522
          %v8545 = vmul.f32 %v8345, %v8522
          %v8546 = vmul.f32 %v8346, %v8523
          %v8547 = vmul.f32 %v8347, %v8523
          %v8548 = vmul.f32 %v8348, %v8524
          %v8549 = vmul.f32 %v8349, %v8524
          %v8550 = vmul.f32 %v8350, %v8525
          %v8551 = vmul.f32 %v8351, %v8525
          %v8552 = vmul.f32 %v8352, %v8526
          %v8553 = vmul.f32 %v8353, %v8526
          %v8554 = vmul.f32 %v8354, %v8527
          %v8555 = vmul.f32 %v8355, %v8527
          %v8556 = vmul.f32 %v8356, %v8528
          %v8557 = vmul.f32 %v8357, %v8528
          %v8558 = vmul.f32 %v8358, %v8529
          %v8559 = vmul.f32 %v8359, %v8529
          %v8560 = vmul.f32 %v8360, %v8530
          %v8561 = vmul.f32 %v8361, %v8530
          %v8562 = vmul.f32 %v8362, %v8531
          %v8563 = vmul.f32 %v8363, %v8531
          %v8564 = vmul.f32 %v8364, %v8532
          %v8565 = vmul.f32 %v8365, %v8532
          %v8566 = vmul.f32 %v8366, %v8533
          %v8567 = vmul.f32 %v8367, %v8533
          %v8568 = vmul.f32 %v8368, %v8534
          %v8569 = vmul.f32 %v8369, %v8534
          %v8570 = vmul.f32 %v8370, %v8535
          %v8571 = vmul.f32 %v8371, %v8535
          %v8572 = vmul.f32 %v8372, %v8536
          %v8573 = vmul.f32 %v8373, %v8536
          %v8574 = vmul.f32 %v8374, %v8537
          %v8575 = vmul.f32 %v8375, %v8537
          %v8576 = vmul.f32 %v8376, %v8538
          %v8577 = vmul.f32 %v8377, %v8538
          %v8578 = vmul.f32 %v8378, %v8539
          %v8579 = vmul.f32 %v8379, %v8539
          %v8581 = vlaneseq
          %v8582 = vshrl.u32 %v8581, 7
          %v8583 = vsub.s32 0, %v8582
          %v8584 = vrot.slane %v8259, %v8583
          %v8585 = vlaneseq
          %v8586 = vshrl.u32 %v8585, 7
          %v8587 = vsub.s32 2, %v8586
          %v8588 = vrot.slane %v8259, %v8587
          %v8591 = vlaneseq
          %v8592 = vshrl.u32 %v8591, 7
          %v8593 = vsub.s32 0, %v8592
          %v8594 = vrot.slane %v8584, %v8593
          %v8595 = vlaneseq
          %v8596 = vshrl.u32 %v8595, 7
          %v8597 = vsub.s32 0, %v8596
          %v8598 = vrot.slane %v8588, %v8597
          %v8599 = vmul.f32 %v8540, %v8594
          %v8600 = vmul.f32 %v8541, %v8598
          %v8601 = vmul.f32 %v8542, %v8594
          %v8602 = vmul.f32 %v8543, %v8598
          %v8603 = vmul.f32 %v8544, %v8594
          %v8604 = vmul.f32 %v8545, %v8598
          %v8605 = vmul.f32 %v8546, %v8594
          %v8606 = vmul.f32 %v8547, %v8598
          %v8607 = vmul.f32 %v8548, %v8594
          %v8608 = vmul.f32 %v8549, %v8598
          %v8609 = vmul.f32 %v8550, %v8594
          %v8610 = vmul.f32 %v8551, %v8598
          %v8611 = vmul.f32 %v8552, %v8594
          %v8612 = vmul.f32 %v8553, %v8598
          %v8613 = vmul.f32 %v8554, %v8594
          %v8614 = vmul.f32 %v8555, %v8598
          %v8615 = vmul.f32 %v8556, %v8594
          %v8616 = vmul.f32 %v8557, %v8598
          %v8617 = vmul.f32 %v8558, %v8594
          %v8618 = vmul.f32 %v8559, %v8598
          %v8619 = vmul.f32 %v8560, %v8594
          %v8620 = vmul.f32 %v8561, %v8598
          %v8621 = vmul.f32 %v8562, %v8594
          %v8622 = vmul.f32 %v8563, %v8598
          %v8623 = vmul.f32 %v8564, %v8594
          %v8624 = vmul.f32 %v8565, %v8598
          %v8625 = vmul.f32 %v8566, %v8594
          %v8626 = vmul.f32 %v8567, %v8598
          %v8627 = vmul.f32 %v8568, %v8594
          %v8628 = vmul.f32 %v8569, %v8598
          %v8629 = vmul.f32 %v8570, %v8594
          %v8630 = vmul.f32 %v8571, %v8598
          %v8631 = vmul.f32 %v8572, %v8594
          %v8632 = vmul.f32 %v8573, %v8598
          %v8633 = vmul.f32 %v8574, %v8594
          %v8634 = vmul.f32 %v8575, %v8598
          %v8635 = vmul.f32 %v8576, %v8594
          %v8636 = vmul.f32 %v8577, %v8598
          %v8637 = vmul.f32 %v8578, %v8594
          %v8638 = vmul.f32 %v8579, %v8598
          %v8639 = vlaneseq
          %v8640 = vshrl.u32 %v8639, 7
          %v8641 = vsub.s32 1, %v8640
          %v8642 = vrot.slane %v8259, %v8641
          %v8643 = vlaneseq
          %v8644 = vshrl.u32 %v8643, 7
          %v8645 = vsub.s32 3, %v8644
          %v8646 = vrot.slane %v8259, %v8645
          %v8649 = vlaneseq
          %v8650 = vshrl.u32 %v8649, 7
          %v8651 = vsub.s32 1, %v8650
          %v8652 = vrot.slane %v8642, %v8651
          %v8653 = vlaneseq
          %v8654 = vshrl.u32 %v8653, 7
          %v8655 = vsub.s32 1, %v8654
          %v8656 = vrot.slane %v8646, %v8655
          %v8657 = vadd.f32 %v8599, %v8652
          %v8658 = vadd.f32 %v8600, %v8656
          %v8659 = vadd.f32 %v8601, %v8652
          %v8660 = vadd.f32 %v8602, %v8656
          %v8661 = vadd.f32 %v8603, %v8652
          %v8662 = vadd.f32 %v8604, %v8656
          %v8663 = vadd.f32 %v8605, %v8652
          %v8664 = vadd.f32 %v8606, %v8656
          %v8665 = vadd.f32 %v8607, %v8652
          %v8666 = vadd.f32 %v8608, %v8656
          %v8667 = vadd.f32 %v8609, %v8652
          %v8668 = vadd.f32 %v8610, %v8656
          %v8669 = vadd.f32 %v8611, %v8652
          %v8670 = vadd.f32 %v8612, %v8656
          %v8671 = vadd.f32 %v8613, %v8652
          %v8672 = vadd.f32 %v8614, %v8656
          %v8673 = vadd.f32 %v8615, %v8652
          %v8674 = vadd.f32 %v8616, %v8656
          %v8675 = vadd.f32 %v8617, %v8652
          %v8676 = vadd.f32 %v8618, %v8656
          %v8677 = vadd.f32 %v8619, %v8652
          %v8678 = vadd.f32 %v8620, %v8656
          %v8679 = vadd.f32 %v8621, %v8652
          %v8680 = vadd.f32 %v8622, %v8656
          %v8681 = vadd.f32 %v8623, %v8652
          %v8682 = vadd.f32 %v8624, %v8656
          %v8683 = vadd.f32 %v8625, %v8652
          %v8684 = vadd.f32 %v8626, %v8656
          %v8685 = vadd.f32 %v8627, %v8652
          %v8686 = vadd.f32 %v8628, %v8656
          %v8687 = vadd.f32 %v8629, %v8652
          %v8688 = vadd.f32 %v8630, %v8656
          %v8689 = vadd.f32 %v8631, %v8652
          %v8690 = vadd.f32 %v8632, %v8656
          %v8691 = vadd.f32 %v8633, %v8652
          %v8692 = vadd.f32 %v8634, %v8656
          %v8693 = vadd.f32 %v8635, %v8652
          %v8694 = vadd.f32 %v8636, %v8656
          %v8695 = vadd.f32 %v8637, %v8652
          %v8696 = vadd.f32 %v8638, %v8656
          %8697 = vst [vmem:[%s513] sm:$0xff] %v8657
          %8698 = vst [vmem:[%s513 + $0x8] sm:$0xff] %v8658
          %8699 = vst [vmem:[%s513 + $0x10] sm:$0xff] %v8659
          %8700 = vst [vmem:[%s513 + $0x18] sm:$0xff] %v8660
          %8701 = vst [vmem:[%s513 + $0x20] sm:$0xff] %v8661
          %8702 = vst [vmem:[%s513 + $0x28] sm:$0xff] %v8662
          %8703 = vst [vmem:[%s513 + $0x30] sm:$0xff] %v8663
          %8704 = vst [vmem:[%s513 + $0x38] sm:$0xff] %v8664
          %8705 = vst [vmem:[%s513 + $0x40] sm:$0xff] %v8665
          %8706 = vst [vmem:[%s513 + $0x48] sm:$0xff] %v8666
          %8707 = vst [vmem:[%s513 + $0x50] sm:$0xff] %v8667
          %8708 = vst [vmem:[%s513 + $0x58] sm:$0xff] %v8668
          %8709 = vst [vmem:[%s513 + $0x60] sm:$0xff] %v8669
          %8710 = vst [vmem:[%s513 + $0x68] sm:$0xff] %v8670
          %8711 = vst [vmem:[%s513 + $0x70] sm:$0xff] %v8671
          %8712 = vst [vmem:[%s513 + $0x78] sm:$0xff] %v8672
          %8713 = vst [vmem:[%s513 + $0x80] sm:$0xff] %v8673
          %8714 = vst [vmem:[%s513 + $0x88] sm:$0xff] %v8674
          %8715 = vst [vmem:[%s513 + $0x90] sm:$0xff] %v8675
          %8716 = vst [vmem:[%s513 + $0x98] sm:$0xff] %v8676
          %8717 = vst [vmem:[%s513 + $0xa0] sm:$0xff] %v8677
          %8718 = vst [vmem:[%s513 + $0xa8] sm:$0xff] %v8678
          %8719 = vst [vmem:[%s513 + $0xb0] sm:$0xff] %v8679
          %8720 = vst [vmem:[%s513 + $0xb8] sm:$0xff] %v8680
          %8721 = vst [vmem:[%s513 + $0xc0] sm:$0xff] %v8681
          %8722 = vst [vmem:[%s513 + $0xc8] sm:$0xff] %v8682
          %8723 = vst [vmem:[%s513 + $0xd0] sm:$0xff] %v8683
          %8724 = vst [vmem:[%s513 + $0xd8] sm:$0xff] %v8684
          %8725 = vst [vmem:[%s513 + $0xe0] sm:$0xff] %v8685
          %8726 = vst [vmem:[%s513 + $0xe8] sm:$0xff] %v8686
          %8727 = vst [vmem:[%s513 + $0xf0] sm:$0xff] %v8687
          %8728 = vst [vmem:[%s513 + $0xf8] sm:$0xff] %v8688
          %8729 = vst [vmem:[%s513 + $0x100] sm:$0xff] %v8689
          %8730 = vst [vmem:[%s513 + $0x108] sm:$0xff] %v8690
          %8731 = vst [vmem:[%s513 + $0x110] sm:$0xff] %v8691
          %8732 = vst [vmem:[%s513 + $0x118] sm:$0xff] %v8692
          %8733 = vst [vmem:[%s513 + $0x120] sm:$0xff] %v8693
          %8734 = vst [vmem:[%s513 + $0x128] sm:$0xff] %v8694
          %8735 = vst [vmem:[%s513 + $0x130] sm:$0xff] %v8695
          %8736 = vst [vmem:[%s513 + $0x138] sm:$0xff] %v8696
        $region88: #{tpu_custom_call.1} parent=47 // pred_fallthru
          _
        %s8737 = sand.u32 %s230, 1
        %s8738 = scalar_lea.sflag [#allocation4], %s8737
        %s8739 = sand.u32 %s230, 1
        %s8740 = smul.addr %s8739, 320
        %s8741 = scalar_lea.vmem [#allocation14], %s8740
        // Predicated region
        $region89: #{tpu_custom_call.1} parent=47 // pred_check
          %p8742 = pneg %p240
        $region90: #{tpu_custom_call.1} parent=47 // pred_check_branch
          %8744 = sbr.rel (%p8742) target = $region92
        $region91: #{tpu_custom_call.1} parent=47 // pred_region
          %s8745 = smul.u32 2, %s37
          %s8747 = ssub.s32 5120, 5120
          %8748 = vsyncadd %s8738, %s8747
          %s8749 = smul.addr %s8745, 20
          %s8750 = smul.addr %s8749, 128
          %s8751 = scalar_lea.hbm %s7, %s8750
          %s8752 = sshll.u32 %s8741, 4
          %s8753 = int_to_ptr.vmem [resolvable:$true] %s8752
          %8758 = dma.vmem_to_hbm [thread:$0]  %s8753, 5120, %s8751, %s8738, 256, 256, 16
        $region92: #{tpu_custom_call.1} parent=47 // pred_fallthru
          _
      $region48: #{tpu_custom_call.1} parent=5 // pred_fallthru
        _
      %p8759 = scmp.le.s32.totalorder 2, %s28
      // Predicated region
      $region93: #{tpu_custom_call.1} parent=5 // pred_check
        %p8760 = pneg %p8759
      $region94: #{tpu_custom_call.1} parent=5 // pred_check_branch
        %8762 = sbr.rel (%p8760) target = $region96
      $region95: #{tpu_custom_call.1} parent=5 // pred_region
        %s8763 = ssub.s32 %s28, 2
        // Predicated region
        $region97: #{tpu_custom_call.1} parent=95 // pred_check
          %p8764 = pneg %p246
        $region98: #{tpu_custom_call.1} parent=95 // pred_check_branch
          %8766 = sbr.rel (%p8764) target = $region100
        $region99: #{tpu_custom_call.1} parent=95 // pred_region
          %s8767 = sand.u32 %s231, 1
          %s8768 = scalar_lea.sflag [#allocation4], %s8767
          %s8769 = sand.u32 %s231, 1
          %s8770 = smul.addr %s8769, 320
          %s8771 = scalar_lea.vmem [#allocation14], %s8770
          %8772 = dma.done %s8768, 5120
        $region100: #{tpu_custom_call.1} parent=95 // pred_fallthru
          _
      $region96: #{tpu_custom_call.1} parent=5 // pred_fallthru
        _
    $region6: #{tpu_custom_call.1} parent=1 // loop_footer
      %s32 = sadd.s32 1, %s28
    $region7: #{tpu_custom_call.1} parent=1 // loop_footer_branch
      %27 = sbr.rel target = $region3
    $region8: #{tpu_custom_call.1} parent=1 // loop_exit
      _
    %8773 = vsyncpa [#allocation3], 1
    %s8774 = scalar_lea.sflag [#allocation3], 1
    %8775 = vsyncpa %s8774, 1
    %8776 = vsyncpa [#allocation6], 1
    %s8777 = scalar_lea.sflag [#allocation6], 1
    %8778 = vsyncpa %s8777, 1
    %8779 = vsyncpa [#allocation9], 1
    %s8780 = scalar_lea.sflag [#allocation9], 1
    %8781 = vsyncpa %s8780, 1
    %8782 = vsyncpa [#allocation12], 1
    %s8783 = scalar_lea.sflag [#allocation12], 1
    %8784 = vsyncpa %s8783, 1
    %8785 = vsyncpa [#allocation4], 1
    %s8786 = scalar_lea.sflag [#allocation4], 1
    %8787 = vsyncpa %s8786, 1

</llo_original>
